<compile_context>
chip_gen: v5e
topology: v5e:2x2
jax: 0.10.0
libtpu: 0.0.40
codegen_flags: <defaults>
</compile_context>

<pallas_src>
import jax
import jax.numpy as jnp
from jax import lax
from jax.experimental import pallas as pl
from jax.experimental.pallas import tpu as pltpu


def _even_ceil(x):
    return x + (x % 2)


# ------------------------------- Pallas kernel ------------------------------- #
def _stage_kernel(ph_ref, w1_ref, b1_ref, w2_ref, b2_ref, w3_ref, b3_ref,
                  out_ref, s1_ref, s2_ref):
    """Fused 3-conv PWCNet stage for one batch element.

    ph_ref : (1, Hq, 4, Cin, Wq)  2x2 phase split of the zero-padded input;
                                  phase index p = 2*(dy%2) + (dx%2)
    w*_ref : (3, 3, Cout, Cin*)   per-tap weights, already transposed to (Co,Ci)
    b*_ref : (Cout, 1)            f32 bias
    out_ref: (1, Ho, Cout, Wo)    stage output block
    s*_ref : (Ho+2, Cout, Wo+2)   f32 VMEM scratch; zero border == conv padding
    """
    Ho = out_ref.shape[1]
    Wo = out_ref.shape[3]
    Cout = out_ref.shape[2]

    # Zero scratches so their borders provide the padding=1 of conv2 / conv3.
    s1_ref[...] = jnp.zeros_like(s1_ref)
    s2_ref[...] = jnp.zeros_like(s2_ref)

    # Hoist loop-invariant weights / biases out of the row loops.
    w1 = [[w1_ref[dy, dx].astype(jnp.float32) for dx in range(3)] for dy in range(3)]
    w2 = [[w2_ref[dy, dx].astype(jnp.float32) for dx in range(3)] for dy in range(3)]
    w3 = [[w3_ref[dy, dx].astype(jnp.float32) for dx in range(3)] for dy in range(3)]
    b1 = b1_ref[...]
    b2 = b2_ref[...]
    b3 = b3_ref[...]

    # ---- conv1: 3x3, stride 2 (reads the phase images) ---------------------- #
    def conv1_row(ho, carry):
        acc = jnp.zeros((Cout, Wo), jnp.float32)
        for dy in range(3):
            for dx in range(3):
                p = 2 * (dy % 2) + (dx % 2)
                row = ph_ref[0, ho + dy // 2, p].astype(jnp.float32)   # (Cin, Wq)
                xsl = row[:, dx // 2:dx // 2 + Wo]                     # (Cin, Wo)
                acc = acc + jnp.dot(w1[dy][dx], xsl,
                                    preferred_element_type=jnp.float32)
        s1_ref[ho + 1, :, pl.ds(1, Wo)] = acc + b1
        return carry

    lax.fori_loop(0, Ho, conv1_row, 0)

    # ---- conv2: 3x3, stride 1 (reads zero-bordered s1) ---------------------- #
    def conv2_row(ho, carry):
        acc = jnp.zeros((Cout, Wo), jnp.float32)
        for dy in range(3):
            row = s1_ref[ho + dy]                                      # (Cout, Wo+2)
            for dx in range(3):
                acc = acc + jnp.dot(w2[dy][dx], row[:, dx:dx + Wo],
                                    preferred_element_type=jnp.float32)
        s2_ref[ho + 1, :, pl.ds(1, Wo)] = acc + b2
        return carry

    lax.fori_loop(0, Ho, conv2_row, 0)

    # ---- conv3: 3x3, stride 1 (reads s2, writes the stage output) ----------- #
    def conv3_row(ho, carry):
        acc = jnp.zeros((Cout, Wo), jnp.float32)
        for dy in range(3):
            row = s2_ref[ho + dy]
            for dx in range(3):
                acc = acc + jnp.dot(w3[dy][dx], row[:, dx:dx + Wo],
                                    preferred_element_type=jnp.float32)
        out_ref[0, ho] = (acc + b3).astype(out_ref.dtype)
        return carry

    lax.fori_loop(0, Ho, conv3_row, 0)


# ------------------------------- stage wrapper ------------------------------- #
def _pwcnet_stage(x_nchw, stage_params, *, compute_dtype=jnp.float32):
    """One PWCNet pyramid stage (conv s=2 -> conv s=1 -> conv s=1), fused.

    x_nchw: (B, Cin, H, W) -> (B, Cout, Ho, Wo) in compute_dtype.
    """
    (w1, b1, st1), (w2, b2, st2), (w3, b3, st3) = stage_params
    assert (st1, st2, st3) == (2, 1, 1)
    B, Cin, H, W = x_nchw.shape
    Cout = w1.shape[-1]

    Ho = (H - 1) // 2 + 1
    Wo = (W - 1) // 2 + 1
    Hp = _even_ceil(H + 2)
    Wp = _even_ceil(W + 2)
    Hq, Wq = Hp // 2, Wp // 2

    # Zero-pad (conv padding=1, plus parity row/col) and 2x2 phase-split so the
    # stride-2 taps become unit-stride slices inside the kernel (no im2col).
    xp = jnp.pad(x_nchw.astype(compute_dtype),
                 ((0, 0), (0, 0), (1, Hp - H - 1), (1, Wp - W - 1)))
    ph = (xp.reshape(B, Cin, Hq, 2, Wq, 2)
            .transpose(0, 2, 3, 5, 1, 4)           # (B, Hq, rp, cp, Cin, Wq)
            .reshape(B, Hq, 4, Cin, Wq))           # phase p = 2*rp + cp

    def wt(w):   # HWIO (3,3,Ci,Co) -> per-tap (3,3,Co,Ci), f32 resident weights
        return jnp.transpose(w, (0, 1, 3, 2)).astype(jnp.float32)

    def bt(b):
        return b.reshape(-1, 1).astype(jnp.float32)

    out = pl.pallas_call(
        _stage_kernel,
        out_shape=jax.ShapeDtypeStruct((B, Ho, Cout, Wo), compute_dtype),
        grid_spec=pltpu.PrefetchScalarGridSpec(
            num_scalar_prefetch=0,
            grid=(B,),
            in_specs=[
                pl.BlockSpec((1, Hq, 4, Cin, Wq), lambda b: (b, 0, 0, 0, 0)),
                pl.BlockSpec((3, 3, Cout, Cin), lambda b: (0, 0, 0, 0)),
                pl.BlockSpec((Cout, 1), lambda b: (0, 0)),
                pl.BlockSpec((3, 3, Cout, Cout), lambda b: (0, 0, 0, 0)),
                pl.BlockSpec((Cout, 1), lambda b: (0, 0)),
                pl.BlockSpec((3, 3, Cout, Cout), lambda b: (0, 0, 0, 0)),
                pl.BlockSpec((Cout, 1), lambda b: (0, 0)),
            ],
            out_specs=pl.BlockSpec((1, Ho, Cout, Wo), lambda b: (b, 0, 0, 0)),
            scratch_shapes=[
                pltpu.VMEM((Ho + 2, Cout, Wo + 2), jnp.float32),
                pltpu.VMEM((Ho + 2, Cout, Wo + 2), jnp.float32),
            ],
        ),
        compiler_params=pltpu.CompilerParams(
            dimension_semantics=("parallel",),
        ),
    )(ph, wt(w1), bt(b1), wt(w2), bt(b2), wt(w3), bt(b3))

    return jnp.transpose(out, (0, 2, 1, 3))        # -> NCHW


# --------------------------- parameter construction ------------------------- #
def init_pwcnet_neck_params(key, out_channels):
    """Kaiming-normal (fan_in, relu) conv weights, zero bias — as init_weights()."""
    params = []
    in_c = 3
    for out_c in out_channels:
        stage = []
        for ci, co, s in [(in_c, out_c, 2), (out_c, out_c, 1), (out_c, out_c, 1)]:
            key, sub = jax.random.split(key)
            fan_in = ci * 3 * 3
            std = (2.0 / fan_in) ** 0.5
            w = std * jax.random.normal(sub, (3, 3, ci, co), jnp.float32)  # HWIO
            b = jnp.zeros((co,), jnp.float32)
            stage.append((w, b, s))
        params.append(stage)
        in_c = out_c
    return params


# --------------------------------- forward ---------------------------------- #
def pwcnet_neck_forward(x_nchw, params, *, compute_dtype=jnp.float32):
    """Replicates PwcNetNeck.forward: split the 6-ch input into two 3-ch images,
    run the shared pyramid on both, return [output1, output2] (lists of NCHW).
    The two images are batched so every shared stage runs once.
    QuantStub(scale=1/128) is identity in float mode.
    TODO(synk): the QAT fake-quant path of QuantStub is not modeled.
    """
    N = x_nchw.shape[0]
    cur = jnp.concatenate([x_nchw[:, :3], x_nchw[:, 3:]], axis=0)   # (2N,3,H,W)
    output1, output2 = [], []
    for stage in params:
        cur = _pwcnet_stage(cur, stage, compute_dtype=compute_dtype)
        output1.append(cur[:N])
        output2.append(cur[N:])
    return [output1, output2]


# ------------------------------ reference check ----------------------------- #
def _conv3x3_ref(x_nhwc, w, b, stride):
    out = lax.conv_general_dilated(
        x_nhwc, w, window_strides=(stride, stride), padding=((1, 1), (1, 1)),
        dimension_numbers=("NHWC", "HWIO", "NHWC"))
    return out + b


def _forward_ref(x_nchw, params):
    x = jnp.transpose(x_nchw, (0, 2, 3, 1))
    x1, x2 = x[..., :3], x[..., 3:]
    o1, o2 = [], []
    for stage in params:
        for (w, b, s) in stage:
            x1 = _conv3x3_ref(x1, w, b, s)
        for (w, b, s) in stage:
            x2 = _conv3x3_ref(x2, w, b, s)
        o1.append(jnp.transpose(x1, (0, 3, 1, 2)))
        o2.append(jnp.transpose(x2, (0, 3, 1, 2)))
    return [o1, o2]


if __name__ == "__main__":
    key = jax.random.PRNGKey(0)
    k_x, k_p = jax.random.split(key)

    # Small shapes: batch=2, 6 input channels (two RGB frames), 16x16 spatial.
    x = jax.random.normal(k_x, (2, 6, 16, 16), jnp.float32)
    out_channels = [4, 8, 8, 16, 16, 16]        # one entry per level (pyr_lvls=6)
    params = init_pwcnet_neck_params(k_p, out_channels)

    refs = _forward_ref(x, params)

    # --- f32 path: value-checked against a pure-JAX conv reference. --------- #
    fwd_f32 = jax.jit(lambda inp: pwcnet_neck_forward(inp, params,
                                                      compute_dtype=jnp.float32))
    outs = jax.block_until_ready(fwd_f32(x))
    for branch_p, branch_r in zip(outs, refs):
        for a, r in zip(branch_p, branch_r):
            assert a.shape == r.shape and a.dtype == r.dtype
            assert jnp.allclose(a, r, atol=1e-2, rtol=2e-3), \
                float(jnp.max(jnp.abs(a - r)))

    # --- bf16 HBM-I/O path (f32 accumulation + f32 VMEM intermediates). ----- #
    fwd_bf16 = jax.jit(lambda inp: pwcnet_neck_forward(inp, params,
                                                       compute_dtype=jnp.bfloat16))
    outs_bf16 = jax.block_until_ready(fwd_bf16(x))
    for branch_p, branch_r in zip(outs_bf16, refs):
        for a, r in zip(branch_p, branch_r):
            assert a.shape == r.shape
            err = float(jnp.max(jnp.abs(a.astype(jnp.float32) - r)))
            scale = float(jnp.max(jnp.abs(r))) + 1e-6
            assert err <= 0.08 * scale, (err, scale)

    print("KERNEL_OK")
</pallas_src>

<mosaic_0001>
module attributes {stable_mosaic.version = 11 : i64} {
  func.func @_stage_kernel(%arg0: i32, %arg1: memref<1x9x4x3x9xf32, #tpu.memory_space<vmem>>, %arg2: memref<3x3x4x3xf32, #tpu.memory_space<vmem>>, %arg3: memref<4x1xf32, #tpu.memory_space<vmem>>, %arg4: memref<3x3x4x4xf32, #tpu.memory_space<vmem>>, %arg5: memref<4x1xf32, #tpu.memory_space<vmem>>, %arg6: memref<3x3x4x4xf32, #tpu.memory_space<vmem>>, %arg7: memref<4x1xf32, #tpu.memory_space<vmem>>, %arg8: memref<1x8x4x8xf32, #tpu.memory_space<vmem>>, %arg9: memref<10x4x10xf32, #tpu.memory_space<vmem>>, %arg10: memref<10x4x10xf32, #tpu.memory_space<vmem>>) attributes {dimension_semantics = [#tpu.dimension_semantics<parallel>], iteration_bounds = array<i64: 4>, scalar_prefetch = 0 : i64, scratch_operands = 2 : i64, tpu.core_type = #tpu.core_type<tc>, window_params = [{transform_indices = @transform_0, window_bounds = array<i64: 1, 9, 4, 3, 9>}, {pipeline_mode = #tpu.pipeline_mode<synchronous>, transform_indices = @transform_1, window_bounds = array<i64: 3, 3, 4, 3>}, {pipeline_mode = #tpu.pipeline_mode<synchronous>, transform_indices = @transform_2, window_bounds = array<i64: 4, 1>}, {pipeline_mode = #tpu.pipeline_mode<synchronous>, transform_indices = @transform_3, window_bounds = array<i64: 3, 3, 4, 4>}, {pipeline_mode = #tpu.pipeline_mode<synchronous>, transform_indices = @transform_4, window_bounds = array<i64: 4, 1>}, {pipeline_mode = #tpu.pipeline_mode<synchronous>, transform_indices = @transform_5, window_bounds = array<i64: 3, 3, 4, 4>}, {pipeline_mode = #tpu.pipeline_mode<synchronous>, transform_indices = @transform_6, window_bounds = array<i64: 4, 1>}, {transform_indices = @transform_7, window_bounds = array<i64: 1, 8, 4, 8>}]} {
    %cst = arith.constant 0.000000e+00 : f32
    %0 = vector.broadcast %cst : f32 to vector<10x4x10xf32>
    %c0 = arith.constant 0 : index
    %c0_0 = arith.constant 0 : index
    %c0_1 = arith.constant 0 : index
    %1 = vector.load %arg9[%c0, %c0_0, %c0_1] : memref<10x4x10xf32, #tpu.memory_space<vmem>>, vector<10x4x10xf32>
    tpu.vector_store %arg9[%c0, %c0_0, %c0_1], %0 {strides = array<i32>} : memref<10x4x10xf32, #tpu.memory_space<vmem>>, vector<10x4x10xf32>,
    %cst_2 = arith.constant 0.000000e+00 : f32
    %2 = vector.broadcast %cst_2 : f32 to vector<10x4x10xf32>
    %c0_3 = arith.constant 0 : index
    %c0_4 = arith.constant 0 : index
    %c0_5 = arith.constant 0 : index
    %3 = vector.load %arg10[%c0_3, %c0_4, %c0_5] : memref<10x4x10xf32, #tpu.memory_space<vmem>>, vector<10x4x10xf32>
    tpu.vector_store %arg10[%c0_3, %c0_4, %c0_5], %2 {strides = array<i32>} : memref<10x4x10xf32, #tpu.memory_space<vmem>>, vector<10x4x10xf32>,
    %c0_6 = arith.constant 0 : index
    %c0_7 = arith.constant 0 : index
    %c0_8 = arith.constant 0 : index
    %c0_9 = arith.constant 0 : index
    %4 = vector.load %arg2[%c0_6, %c0_7, %c0_8, %c0_9] : memref<3x3x4x3xf32, #tpu.memory_space<vmem>>, vector<1x1x4x3xf32>
    %5 = vector.shape_cast %4 : vector<1x1x4x3xf32> to vector<4x3xf32>
    %c0_10 = arith.constant 0 : index
    %c1 = arith.constant 1 : index
    %c0_11 = arith.constant 0 : index
    %c0_12 = arith.constant 0 : index
    %6 = vector.load %arg2[%c0_10, %c1, %c0_11, %c0_12] : memref<3x3x4x3xf32, #tpu.memory_space<vmem>>, vector<1x1x4x3xf32>
    %7 = vector.shape_cast %6 : vector<1x1x4x3xf32> to vector<4x3xf32>
    %c0_13 = arith.constant 0 : index
    %c2 = arith.constant 2 : index
    %c0_14 = arith.constant 0 : index
    %c0_15 = arith.constant 0 : index
    %8 = vector.load %arg2[%c0_13, %c2, %c0_14, %c0_15] : memref<3x3x4x3xf32, #tpu.memory_space<vmem>>, vector<1x1x4x3xf32>
    %9 = vector.shape_cast %8 : vector<1x1x4x3xf32> to vector<4x3xf32>
    %c1_16 = arith.constant 1 : index
    %c0_17 = arith.constant 0 : index
    %c0_18 = arith.constant 0 : index
    %c0_19 = arith.constant 0 : index
    %10 = vector.load %arg2[%c1_16, %c0_17, %c0_18, %c0_19] : memref<3x3x4x3xf32, #tpu.memory_space<vmem>>, vector<1x1x4x3xf32>
    %11 = vector.shape_cast %10 : vector<1x1x4x3xf32> to vector<4x3xf32>
    %c1_20 = arith.constant 1 : index
    %c1_21 = arith.constant 1 : index
    %c0_22 = arith.constant 0 : index
    %c0_23 = arith.constant 0 : index
    %12 = vector.load %arg2[%c1_20, %c1_21, %c0_22, %c0_23] : memref<3x3x4x3xf32, #tpu.memory_space<vmem>>, vector<1x1x4x3xf32>
    %13 = vector.shape_cast %12 : vector<1x1x4x3xf32> to vector<4x3xf32>
    %c1_24 = arith.constant 1 : index
    %c2_25 = arith.constant 2 : index
    %c0_26 = arith.constant 0 : index
    %c0_27 = arith.constant 0 : index
    %14 = vector.load %arg2[%c1_24, %c2_25, %c0_26, %c0_27] : memref<3x3x4x3xf32, #tpu.memory_space<vmem>>, vector<1x1x4x3xf32>
    %15 = vector.shape_cast %14 : vector<1x1x4x3xf32> to vector<4x3xf32>
    %c2_28 = arith.constant 2 : index
    %c0_29 = arith.constant 0 : index
    %c0_30 = arith.constant 0 : index
    %c0_31 = arith.constant 0 : index
    %16 = vector.load %arg2[%c2_28, %c0_29, %c0_30, %c0_31] : memref<3x3x4x3xf32, #tpu.memory_space<vmem>>, vector<1x1x4x3xf32>
    %17 = vector.shape_cast %16 : vector<1x1x4x3xf32> to vector<4x3xf32>
    %c2_32 = arith.constant 2 : index
    %c1_33 = arith.constant 1 : index
    %c0_34 = arith.constant 0 : index
    %c0_35 = arith.constant 0 : index
    %18 = vector.load %arg2[%c2_32, %c1_33, %c0_34, %c0_35] : memref<3x3x4x3xf32, #tpu.memory_space<vmem>>, vector<1x1x4x3xf32>
    %19 = vector.shape_cast %18 : vector<1x1x4x3xf32> to vector<4x3xf32>
    %c2_36 = arith.constant 2 : index
    %c2_37 = arith.constant 2 : index
    %c0_38 = arith.constant 0 : index
    %c0_39 = arith.constant 0 : index
    %20 = vector.load %arg2[%c2_36, %c2_37, %c0_38, %c0_39] : memref<3x3x4x3xf32, #tpu.memory_space<vmem>>, vector<1x1x4x3xf32>
    %21 = vector.shape_cast %20 : vector<1x1x4x3xf32> to vector<4x3xf32>
    %c0_40 = arith.constant 0 : index
    %c0_41 = arith.constant 0 : index
    %c0_42 = arith.constant 0 : index
    %c0_43 = arith.constant 0 : index
    %22 = vector.load %arg4[%c0_40, %c0_41, %c0_42, %c0_43] : memref<3x3x4x4xf32, #tpu.memory_space<vmem>>, vector<1x1x4x4xf32>
    %23 = vector.shape_cast %22 : vector<1x1x4x4xf32> to vector<4x4xf32>
    %c0_44 = arith.constant 0 : index
    %c1_45 = arith.constant 1 : index
    %c0_46 = arith.constant 0 : index
    %c0_47 = arith.constant 0 : index
    %24 = vector.load %arg4[%c0_44, %c1_45, %c0_46, %c0_47] : memref<3x3x4x4xf32, #tpu.memory_space<vmem>>, vector<1x1x4x4xf32>
    %25 = vector.shape_cast %24 : vector<1x1x4x4xf32> to vector<4x4xf32>
    %c0_48 = arith.constant 0 : index
    %c2_49 = arith.constant 2 : index
    %c0_50 = arith.constant 0 : index
    %c0_51 = arith.constant 0 : index
    %26 = vector.load %arg4[%c0_48, %c2_49, %c0_50, %c0_51] : memref<3x3x4x4xf32, #tpu.memory_space<vmem>>, vector<1x1x4x4xf32>
    %27 = vector.shape_cast %26 : vector<1x1x4x4xf32> to vector<4x4xf32>
    %c1_52 = arith.constant 1 : index
    %c0_53 = arith.constant 0 : index
    %c0_54 = arith.constant 0 : index
    %c0_55 = arith.constant 0 : index
    %28 = vector.load %arg4[%c1_52, %c0_53, %c0_54, %c0_55] : memref<3x3x4x4xf32, #tpu.memory_space<vmem>>, vector<1x1x4x4xf32>
    %29 = vector.shape_cast %28 : vector<1x1x4x4xf32> to vector<4x4xf32>
    %c1_56 = arith.constant 1 : index
    %c1_57 = arith.constant 1 : index
    %c0_58 = arith.constant 0 : index
    %c0_59 = arith.constant 0 : index
    %30 = vector.load %arg4[%c1_56, %c1_57, %c0_58, %c0_59] : memref<3x3x4x4xf32, #tpu.memory_space<vmem>>, vector<1x1x4x4xf32>
    %31 = vector.shape_cast %30 : vector<1x1x4x4xf32> to vector<4x4xf32>
    %c1_60 = arith.constant 1 : index
    %c2_61 = arith.constant 2 : index
    %c0_62 = arith.constant 0 : index
    %c0_63 = arith.constant 0 : index
    %32 = vector.load %arg4[%c1_60, %c2_61, %c0_62, %c0_63] : memref<3x3x4x4xf32, #tpu.memory_space<vmem>>, vector<1x1x4x4xf32>
    %33 = vector.shape_cast %32 : vector<1x1x4x4xf32> to vector<4x4xf32>
    %c2_64 = arith.constant 2 : index
    %c0_65 = arith.constant 0 : index
    %c0_66 = arith.constant 0 : index
    %c0_67 = arith.constant 0 : index
    %34 = vector.load %arg4[%c2_64, %c0_65, %c0_66, %c0_67] : memref<3x3x4x4xf32, #tpu.memory_space<vmem>>, vector<1x1x4x4xf32>
    %35 = vector.shape_cast %34 : vector<1x1x4x4xf32> to vector<4x4xf32>
    %c2_68 = arith.constant 2 : index
    %c1_69 = arith.constant 1 : index
    %c0_70 = arith.constant 0 : index
    %c0_71 = arith.constant 0 : index
    %36 = vector.load %arg4[%c2_68, %c1_69, %c0_70, %c0_71] : memref<3x3x4x4xf32, #tpu.memory_space<vmem>>, vector<1x1x4x4xf32>
    %37 = vector.shape_cast %36 : vector<1x1x4x4xf32> to vector<4x4xf32>
    %c2_72 = arith.constant 2 : index
    %c2_73 = arith.constant 2 : index
    %c0_74 = arith.constant 0 : index
    %c0_75 = arith.constant 0 : index
    %38 = vector.load %arg4[%c2_72, %c2_73, %c0_74, %c0_75] : memref<3x3x4x4xf32, #tpu.memory_space<vmem>>, vector<1x1x4x4xf32>
    %39 = vector.shape_cast %38 : vector<1x1x4x4xf32> to vector<4x4xf32>
    %c0_76 = arith.constant 0 : index
    %c0_77 = arith.constant 0 : index
    %c0_78 = arith.constant 0 : index
    %c0_79 = arith.constant 0 : index
    %40 = vector.load %arg6[%c0_76, %c0_77, %c0_78, %c0_79] : memref<3x3x4x4xf32, #tpu.memory_space<vmem>>, vector<1x1x4x4xf32>
    %41 = vector.shape_cast %40 : vector<1x1x4x4xf32> to vector<4x4xf32>
    %c0_80 = arith.constant 0 : index
    %c1_81 = arith.constant 1 : index
    %c0_82 = arith.constant 0 : index
    %c0_83 = arith.constant 0 : index
    %42 = vector.load %arg6[%c0_80, %c1_81, %c0_82, %c0_83] : memref<3x3x4x4xf32, #tpu.memory_space<vmem>>, vector<1x1x4x4xf32>
    %43 = vector.shape_cast %42 : vector<1x1x4x4xf32> to vector<4x4xf32>
    %c0_84 = arith.constant 0 : index
    %c2_85 = arith.constant 2 : index
    %c0_86 = arith.constant 0 : index
    %c0_87 = arith.constant 0 : index
    %44 = vector.load %arg6[%c0_84, %c2_85, %c0_86, %c0_87] : memref<3x3x4x4xf32, #tpu.memory_space<vmem>>, vector<1x1x4x4xf32>
    %45 = vector.shape_cast %44 : vector<1x1x4x4xf32> to vector<4x4xf32>
    %c1_88 = arith.constant 1 : index
    %c0_89 = arith.constant 0 : index
    %c0_90 = arith.constant 0 : index
    %c0_91 = arith.constant 0 : index
    %46 = vector.load %arg6[%c1_88, %c0_89, %c0_90, %c0_91] : memref<3x3x4x4xf32, #tpu.memory_space<vmem>>, vector<1x1x4x4xf32>
    %47 = vector.shape_cast %46 : vector<1x1x4x4xf32> to vector<4x4xf32>
    %c1_92 = arith.constant 1 : index
    %c1_93 = arith.constant 1 : index
    %c0_94 = arith.constant 0 : index
    %c0_95 = arith.constant 0 : index
    %48 = vector.load %arg6[%c1_92, %c1_93, %c0_94, %c0_95] : memref<3x3x4x4xf32, #tpu.memory_space<vmem>>, vector<1x1x4x4xf32>
    %49 = vector.shape_cast %48 : vector<1x1x4x4xf32> to vector<4x4xf32>
    %c1_96 = arith.constant 1 : index
    %c2_97 = arith.constant 2 : index
    %c0_98 = arith.constant 0 : index
    %c0_99 = arith.constant 0 : index
    %50 = vector.load %arg6[%c1_96, %c2_97, %c0_98, %c0_99] : memref<3x3x4x4xf32, #tpu.memory_space<vmem>>, vector<1x1x4x4xf32>
    %51 = vector.shape_cast %50 : vector<1x1x4x4xf32> to vector<4x4xf32>
    %c2_100 = arith.constant 2 : index
    %c0_101 = arith.constant 0 : index
    %c0_102 = arith.constant 0 : index
    %c0_103 = arith.constant 0 : index
    %52 = vector.load %arg6[%c2_100, %c0_101, %c0_102, %c0_103] : memref<3x3x4x4xf32, #tpu.memory_space<vmem>>, vector<1x1x4x4xf32>
    %53 = vector.shape_cast %52 : vector<1x1x4x4xf32> to vector<4x4xf32>
    %c2_104 = arith.constant 2 : index
    %c1_105 = arith.constant 1 : index
    %c0_106 = arith.constant 0 : index
    %c0_107 = arith.constant 0 : index
    %54 = vector.load %arg6[%c2_104, %c1_105, %c0_106, %c0_107] : memref<3x3x4x4xf32, #tpu.memory_space<vmem>>, vector<1x1x4x4xf32>
    %55 = vector.shape_cast %54 : vector<1x1x4x4xf32> to vector<4x4xf32>
    %c2_108 = arith.constant 2 : index
    %c2_109 = arith.constant 2 : index
    %c0_110 = arith.constant 0 : index
    %c0_111 = arith.constant 0 : index
    %56 = vector.load %arg6[%c2_108, %c2_109, %c0_110, %c0_111] : memref<3x3x4x4xf32, #tpu.memory_space<vmem>>, vector<1x1x4x4xf32>
    %57 = vector.shape_cast %56 : vector<1x1x4x4xf32> to vector<4x4xf32>
    %c0_112 = arith.constant 0 : index
    %c0_113 = arith.constant 0 : index
    %58 = vector.load %arg3[%c0_112, %c0_113] : memref<4x1xf32, #tpu.memory_space<vmem>>, vector<4x1xf32>
    %c0_114 = arith.constant 0 : index
    %c0_115 = arith.constant 0 : index
    %59 = vector.load %arg5[%c0_114, %c0_115] : memref<4x1xf32, #tpu.memory_space<vmem>>, vector<4x1xf32>
    %c0_116 = arith.constant 0 : index
    %c0_117 = arith.constant 0 : index
    %60 = vector.load %arg7[%c0_116, %c0_117] : memref<4x1xf32, #tpu.memory_space<vmem>>, vector<4x1xf32>
    %c0_i32 = arith.constant 0 : i32
    %c8_i32 = arith.constant 8 : i32
    %61 = arith.addi %c0_i32, %c8_i32 : i32
    %c1_i32 = arith.constant 1 : i32
    scf.for %arg11 = %c0_i32 to %61 step %c1_i32  : i32 {
      %cst_127 = arith.constant 0.000000e+00 : f32
      %64 = vector.broadcast %cst_127 : f32 to vector<4x8xf32>
      %c0_i32_128 = arith.constant 0 : i32
      %65 = arith.addi %arg11, %c0_i32_128 : i32
      %c0_129 = arith.constant 0 : index
      %66 = arith.index_cast %65 : i32 to index
      %c0_130 = arith.constant 0 : index
      %c0_131 = arith.constant 0 : index
      %c0_132 = arith.constant 0 : index
      %67 = vector.load %arg1[%c0_129, %66, %c0_130, %c0_131, %c0_132] : memref<1x9x4x3x9xf32, #tpu.memory_space<vmem>>, vector<1x1x1x3x9xf32>
      %68 = vector.shape_cast %67 : vector<1x1x1x3x9xf32> to vector<3x9xf32>
      %69 = vector.extract_strided_slice %68 {offsets = [0, 0], sizes = [3, 8], strides = [1, 1]} : vector<3x9xf32> to vector<3x8xf32>
      %cst_133 = arith.constant dense<0.000000e+00> : vector<4x8xf32>
      %70 = tpu.matmul %5, %69, %cst_133 {dimension_numbers = #tpu.dot_dimension_numbers<[1], [0], [0], [1], [0, 0, 1, 1], [], []>} : vector<4x3xf32>, vector<3x8xf32>, vector<4x8xf32> -> vector<4x8xf32>
      %71 = arith.addf %64, %70 : vector<4x8xf32>
      %c0_i32_134 = arith.constant 0 : i32
      %72 = arith.addi %arg11, %c0_i32_134 : i32
      %c0_135 = arith.constant 0 : index
      %73 = arith.index_cast %72 : i32 to index
      %c1_136 = arith.constant 1 : index
      %c0_137 = arith.constant 0 : index
      %c0_138 = arith.constant 0 : index
      %74 = vector.load %arg1[%c0_135, %73, %c1_136, %c0_137, %c0_138] : memref<1x9x4x3x9xf32, #tpu.memory_space<vmem>>, vector<1x1x1x3x9xf32>
      %75 = vector.shape_cast %74 : vector<1x1x1x3x9xf32> to vector<3x9xf32>
      %76 = vector.extract_strided_slice %75 {offsets = [0, 0], sizes = [3, 8], strides = [1, 1]} : vector<3x9xf32> to vector<3x8xf32>
      %cst_139 = arith.constant dense<0.000000e+00> : vector<4x8xf32>
      %77 = tpu.matmul %7, %76, %cst_139 {dimension_numbers = #tpu.dot_dimension_numbers<[1], [0], [0], [1], [0, 0, 1, 1], [], []>} : vector<4x3xf32>, vector<3x8xf32>, vector<4x8xf32> -> vector<4x8xf32>
      %78 = arith.addf %71, %77 : vector<4x8xf32>
      %c0_i32_140 = arith.constant 0 : i32
      %79 = arith.addi %arg11, %c0_i32_140 : i32
      %c0_141 = arith.constant 0 : index
      %80 = arith.index_cast %79 : i32 to index
      %c0_142 = arith.constant 0 : index
      %c0_143 = arith.constant 0 : index
      %c0_144 = arith.constant 0 : index
      %81 = vector.load %arg1[%c0_141, %80, %c0_142, %c0_143, %c0_144] : memref<1x9x4x3x9xf32, #tpu.memory_space<vmem>>, vector<1x1x1x3x9xf32>
      %82 = vector.shape_cast %81 : vector<1x1x1x3x9xf32> to vector<3x9xf32>
      %83 = vector.extract_strided_slice %82 {offsets = [0, 1], sizes = [3, 8], strides = [1, 1]} : vector<3x9xf32> to vector<3x8xf32>
      %cst_145 = arith.constant dense<0.000000e+00> : vector<4x8xf32>
      %84 = tpu.matmul %9, %83, %cst_145 {dimension_numbers = #tpu.dot_dimension_numbers<[1], [0], [0], [1], [0, 0, 1, 1], [], []>} : vector<4x3xf32>, vector<3x8xf32>, vector<4x8xf32> -> vector<4x8xf32>
      %85 = arith.addf %78, %84 : vector<4x8xf32>
      %c0_i32_146 = arith.constant 0 : i32
      %86 = arith.addi %arg11, %c0_i32_146 : i32
      %c0_147 = arith.constant 0 : index
      %87 = arith.index_cast %86 : i32 to index
      %c2_148 = arith.constant 2 : index
      %c0_149 = arith.constant 0 : index
      %c0_150 = arith.constant 0 : index
      %88 = vector.load %arg1[%c0_147, %87, %c2_148, %c0_149, %c0_150] : memref<1x9x4x3x9xf32, #tpu.memory_space<vmem>>, vector<1x1x1x3x9xf32>
      %89 = vector.shape_cast %88 : vector<1x1x1x3x9xf32> to vector<3x9xf32>
      %90 = vector.extract_strided_slice %89 {offsets = [0, 0], sizes = [3, 8], strides = [1, 1]} : vector<3x9xf32> to vector<3x8xf32>
      %cst_151 = arith.constant dense<0.000000e+00> : vector<4x8xf32>
      %91 = tpu.matmul %11, %90, %cst_151 {dimension_numbers = #tpu.dot_dimension_numbers<[1], [0], [0], [1], [0, 0, 1, 1], [], []>} : vector<4x3xf32>, vector<3x8xf32>, vector<4x8xf32> -> vector<4x8xf32>
      %92 = arith.addf %85, %91 : vector<4x8xf32>
      %c0_i32_152 = arith.constant 0 : i32
      %93 = arith.addi %arg11, %c0_i32_152 : i32
      %c0_153 = arith.constant 0 : index
      %94 = arith.index_cast %93 : i32 to index
      %c3 = arith.constant 3 : index
      %c0_154 = arith.constant 0 : index
      %c0_155 = arith.constant 0 : index
      %95 = vector.load %arg1[%c0_153, %94, %c3, %c0_154, %c0_155] : memref<1x9x4x3x9xf32, #tpu.memory_space<vmem>>, vector<1x1x1x3x9xf32>
      %96 = vector.shape_cast %95 : vector<1x1x1x3x9xf32> to vector<3x9xf32>
      %97 = vector.extract_strided_slice %96 {offsets = [0, 0], sizes = [3, 8], strides = [1, 1]} : vector<3x9xf32> to vector<3x8xf32>
      %cst_156 = arith.constant dense<0.000000e+00> : vector<4x8xf32>
      %98 = tpu.matmul %13, %97, %cst_156 {dimension_numbers = #tpu.dot_dimension_numbers<[1], [0], [0], [1], [0, 0, 1, 1], [], []>} : vector<4x3xf32>, vector<3x8xf32>, vector<4x8xf32> -> vector<4x8xf32>
      %99 = arith.addf %92, %98 : vector<4x8xf32>
      %c0_i32_157 = arith.constant 0 : i32
      %100 = arith.addi %arg11, %c0_i32_157 : i32
      %c0_158 = arith.constant 0 : index
      %101 = arith.index_cast %100 : i32 to index
      %c2_159 = arith.constant 2 : index
      %c0_160 = arith.constant 0 : index
      %c0_161 = arith.constant 0 : index
      %102 = vector.load %arg1[%c0_158, %101, %c2_159, %c0_160, %c0_161] : memref<1x9x4x3x9xf32, #tpu.memory_space<vmem>>, vector<1x1x1x3x9xf32>
      %103 = vector.shape_cast %102 : vector<1x1x1x3x9xf32> to vector<3x9xf32>
      %104 = vector.extract_strided_slice %103 {offsets = [0, 1], sizes = [3, 8], strides = [1, 1]} : vector<3x9xf32> to vector<3x8xf32>
      %cst_162 = arith.constant dense<0.000000e+00> : vector<4x8xf32>
      %105 = tpu.matmul %15, %104, %cst_162 {dimension_numbers = #tpu.dot_dimension_numbers<[1], [0], [0], [1], [0, 0, 1, 1], [], []>} : vector<4x3xf32>, vector<3x8xf32>, vector<4x8xf32> -> vector<4x8xf32>
      %106 = arith.addf %99, %105 : vector<4x8xf32>
      %c1_i32_163 = arith.constant 1 : i32
      %107 = arith.addi %arg11, %c1_i32_163 : i32
      %c0_164 = arith.constant 0 : index
      %108 = arith.index_cast %107 : i32 to index
      %c0_165 = arith.constant 0 : index
      %c0_166 = arith.constant 0 : index
      %c0_167 = arith.constant 0 : index
      %109 = vector.load %arg1[%c0_164, %108, %c0_165, %c0_166, %c0_167] : memref<1x9x4x3x9xf32, #tpu.memory_space<vmem>>, vector<1x1x1x3x9xf32>
      %110 = vector.shape_cast %109 : vector<1x1x1x3x9xf32> to vector<3x9xf32>
      %111 = vector.extract_strided_slice %110 {offsets = [0, 0], sizes = [3, 8], strides = [1, 1]} : vector<3x9xf32> to vector<3x8xf32>
      %cst_168 = arith.constant dense<0.000000e+00> : vector<4x8xf32>
      %112 = tpu.matmul %17, %111, %cst_168 {dimension_numbers = #tpu.dot_dimension_numbers<[1], [0], [0], [1], [0, 0, 1, 1], [], []>} : vector<4x3xf32>, vector<3x8xf32>, vector<4x8xf32> -> vector<4x8xf32>
      %113 = arith.addf %106, %112 : vector<4x8xf32>
      %c1_i32_169 = arith.constant 1 : i32
      %114 = arith.addi %arg11, %c1_i32_169 : i32
      %c0_170 = arith.constant 0 : index
      %115 = arith.index_cast %114 : i32 to index
      %c1_171 = arith.constant 1 : index
      %c0_172 = arith.constant 0 : index
      %c0_173 = arith.constant 0 : index
      %116 = vector.load %arg1[%c0_170, %115, %c1_171, %c0_172, %c0_173] : memref<1x9x4x3x9xf32, #tpu.memory_space<vmem>>, vector<1x1x1x3x9xf32>
      %117 = vector.shape_cast %116 : vector<1x1x1x3x9xf32> to vector<3x9xf32>
      %118 = vector.extract_strided_slice %117 {offsets = [0, 0], sizes = [3, 8], strides = [1, 1]} : vector<3x9xf32> to vector<3x8xf32>
      %cst_174 = arith.constant dense<0.000000e+00> : vector<4x8xf32>
      %119 = tpu.matmul %19, %118, %cst_174 {dimension_numbers = #tpu.dot_dimension_numbers<[1], [0], [0], [1], [0, 0, 1, 1], [], []>} : vector<4x3xf32>, vector<3x8xf32>, vector<4x8xf32> -> vector<4x8xf32>
      %120 = arith.addf %113, %119 : vector<4x8xf32>
      %c1_i32_175 = arith.constant 1 : i32
      %121 = arith.addi %arg11, %c1_i32_175 : i32
      %c0_176 = arith.constant 0 : index
      %122 = arith.index_cast %121 : i32 to index
      %c0_177 = arith.constant 0 : index
      %c0_178 = arith.constant 0 : index
      %c0_179 = arith.constant 0 : index
      %123 = vector.load %arg1[%c0_176, %122, %c0_177, %c0_178, %c0_179] : memref<1x9x4x3x9xf32, #tpu.memory_space<vmem>>, vector<1x1x1x3x9xf32>
      %124 = vector.shape_cast %123 : vector<1x1x1x3x9xf32> to vector<3x9xf32>
      %125 = vector.extract_strided_slice %124 {offsets = [0, 1], sizes = [3, 8], strides = [1, 1]} : vector<3x9xf32> to vector<3x8xf32>
      %cst_180 = arith.constant dense<0.000000e+00> : vector<4x8xf32>
      %126 = tpu.matmul %21, %125, %cst_180 {dimension_numbers = #tpu.dot_dimension_numbers<[1], [0], [0], [1], [0, 0, 1, 1], [], []>} : vector<4x3xf32>, vector<3x8xf32>, vector<4x8xf32> -> vector<4x8xf32>
      %127 = arith.addf %120, %126 : vector<4x8xf32>
      %128 = vector.broadcast %58 : vector<4x1xf32> to vector<4x8xf32>
      %129 = arith.addf %127, %128 : vector<4x8xf32>
      %c1_i32_181 = arith.constant 1 : i32
      %130 = arith.addi %arg11, %c1_i32_181 : i32
      %131 = arith.index_cast %130 : i32 to index
      %c0_182 = arith.constant 0 : index
      %c1_183 = arith.constant 1 : index
      %132 = vector.load %arg9[%131, %c0_182, %c1_183] : memref<10x4x10xf32, #tpu.memory_space<vmem>>, vector<1x4x8xf32>
      %133 = vector.shape_cast %132 : vector<1x4x8xf32> to vector<4x8xf32>
      %134 = vector.shape_cast %129 : vector<4x8xf32> to vector<1x4x8xf32>
      tpu.vector_store %arg9[%131, %c0_182, %c1_183], %134 {strides = array<i32>} : memref<10x4x10xf32, #tpu.memory_space<vmem>>, vector<1x4x8xf32>,
    }
    %c8_i32_118 = arith.constant 8 : i32
    %c0_i32_119 = arith.constant 0 : i32
    %c8_i32_120 = arith.constant 8 : i32
    %62 = arith.addi %c0_i32_119, %c8_i32_120 : i32
    %c1_i32_121 = arith.constant 1 : i32
    scf.for %arg11 = %c0_i32_119 to %62 step %c1_i32_121  : i32 {
      %cst_127 = arith.constant 0.000000e+00 : f32
      %64 = vector.broadcast %cst_127 : f32 to vector<4x8xf32>
      %c0_i32_128 = arith.constant 0 : i32
      %65 = arith.addi %arg11, %c0_i32_128 : i32
      %66 = arith.index_cast %65 : i32 to index
      %c0_129 = arith.constant 0 : index
      %c0_130 = arith.constant 0 : index
      %67 = vector.load %arg9[%66, %c0_129, %c0_130] : memref<10x4x10xf32, #tpu.memory_space<vmem>>, vector<1x4x10xf32>
      %68 = vector.shape_cast %67 : vector<1x4x10xf32> to vector<4x10xf32>
      %69 = vector.extract_strided_slice %68 {offsets = [0, 0], sizes = [4, 8], strides = [1, 1]} : vector<4x10xf32> to vector<4x8xf32>
      %cst_131 = arith.constant dense<0.000000e+00> : vector<4x8xf32>
      %70 = tpu.matmul %23, %69, %cst_131 {dimension_numbers = #tpu.dot_dimension_numbers<[1], [0], [0], [1], [0, 0, 1, 1], [], []>} : vector<4x4xf32>, vector<4x8xf32>, vector<4x8xf32> -> vector<4x8xf32>
      %71 = arith.addf %64, %70 : vector<4x8xf32>
      %72 = vector.extract_strided_slice %68 {offsets = [0, 1], sizes = [4, 8], strides = [1, 1]} : vector<4x10xf32> to vector<4x8xf32>
      %cst_132 = arith.constant dense<0.000000e+00> : vector<4x8xf32>
      %73 = tpu.matmul %25, %72, %cst_132 {dimension_numbers = #tpu.dot_dimension_numbers<[1], [0], [0], [1], [0, 0, 1, 1], [], []>} : vector<4x4xf32>, vector<4x8xf32>, vector<4x8xf32> -> vector<4x8xf32>
      %74 = arith.addf %71, %73 : vector<4x8xf32>
      %75 = vector.extract_strided_slice %68 {offsets = [0, 2], sizes = [4, 8], strides = [1, 1]} : vector<4x10xf32> to vector<4x8xf32>
      %cst_133 = arith.constant dense<0.000000e+00> : vector<4x8xf32>
      %76 = tpu.matmul %27, %75, %cst_133 {dimension_numbers = #tpu.dot_dimension_numbers<[1], [0], [0], [1], [0, 0, 1, 1], [], []>} : vector<4x4xf32>, vector<4x8xf32>, vector<4x8xf32> -> vector<4x8xf32>
      %77 = arith.addf %74, %76 : vector<4x8xf32>
      %c1_i32_134 = arith.constant 1 : i32
      %78 = arith.addi %arg11, %c1_i32_134 : i32
      %79 = arith.index_cast %78 : i32 to index
      %c0_135 = arith.constant 0 : index
      %c0_136 = arith.constant 0 : index
      %80 = vector.load %arg9[%79, %c0_135, %c0_136] : memref<10x4x10xf32, #tpu.memory_space<vmem>>, vector<1x4x10xf32>
      %81 = vector.shape_cast %80 : vector<1x4x10xf32> to vector<4x10xf32>
      %82 = vector.extract_strided_slice %81 {offsets = [0, 0], sizes = [4, 8], strides = [1, 1]} : vector<4x10xf32> to vector<4x8xf32>
      %cst_137 = arith.constant dense<0.000000e+00> : vector<4x8xf32>
      %83 = tpu.matmul %29, %82, %cst_137 {dimension_numbers = #tpu.dot_dimension_numbers<[1], [0], [0], [1], [0, 0, 1, 1], [], []>} : vector<4x4xf32>, vector<4x8xf32>, vector<4x8xf32> -> vector<4x8xf32>
      %84 = arith.addf %77, %83 : vector<4x8xf32>
      %85 = vector.extract_strided_slice %81 {offsets = [0, 1], sizes = [4, 8], strides = [1, 1]} : vector<4x10xf32> to vector<4x8xf32>
      %cst_138 = arith.constant dense<0.000000e+00> : vector<4x8xf32>
      %86 = tpu.matmul %31, %85, %cst_138 {dimension_numbers = #tpu.dot_dimension_numbers<[1], [0], [0], [1], [0, 0, 1, 1], [], []>} : vector<4x4xf32>, vector<4x8xf32>, vector<4x8xf32> -> vector<4x8xf32>
      %87 = arith.addf %84, %86 : vector<4x8xf32>
      %88 = vector.extract_strided_slice %81 {offsets = [0, 2], sizes = [4, 8], strides = [1, 1]} : vector<4x10xf32> to vector<4x8xf32>
      %cst_139 = arith.constant dense<0.000000e+00> : vector<4x8xf32>
      %89 = tpu.matmul %33, %88, %cst_139 {dimension_numbers = #tpu.dot_dimension_numbers<[1], [0], [0], [1], [0, 0, 1, 1], [], []>} : vector<4x4xf32>, vector<4x8xf32>, vector<4x8xf32> -> vector<4x8xf32>
      %90 = arith.addf %87, %89 : vector<4x8xf32>
      %c2_i32 = arith.constant 2 : i32
      %91 = arith.addi %arg11, %c2_i32 : i32
      %92 = arith.index_cast %91 : i32 to index
      %c0_140 = arith.constant 0 : index
      %c0_141 = arith.constant 0 : index
      %93 = vector.load %arg9[%92, %c0_140, %c0_141] : memref<10x4x10xf32, #tpu.memory_space<vmem>>, vector<1x4x10xf32>
      %94 = vector.shape_cast %93 : vector<1x4x10xf32> to vector<4x10xf32>
      %95 = vector.extract_strided_slice %94 {offsets = [0, 0], sizes = [4, 8], strides = [1, 1]} : vector<4x10xf32> to vector<4x8xf32>
      %cst_142 = arith.constant dense<0.000000e+00> : vector<4x8xf32>
      %96 = tpu.matmul %35, %95, %cst_142 {dimension_numbers = #tpu.dot_dimension_numbers<[1], [0], [0], [1], [0, 0, 1, 1], [], []>} : vector<4x4xf32>, vector<4x8xf32>, vector<4x8xf32> -> vector<4x8xf32>
      %97 = arith.addf %90, %96 : vector<4x8xf32>
      %98 = vector.extract_strided_slice %94 {offsets = [0, 1], sizes = [4, 8], strides = [1, 1]} : vector<4x10xf32> to vector<4x8xf32>
      %cst_143 = arith.constant dense<0.000000e+00> : vector<4x8xf32>
      %99 = tpu.matmul %37, %98, %cst_143 {dimension_numbers = #tpu.dot_dimension_numbers<[1], [0], [0], [1], [0, 0, 1, 1], [], []>} : vector<4x4xf32>, vector<4x8xf32>, vector<4x8xf32> -> vector<4x8xf32>
      %100 = arith.addf %97, %99 : vector<4x8xf32>
      %101 = vector.extract_strided_slice %94 {offsets = [0, 2], sizes = [4, 8], strides = [1, 1]} : vector<4x10xf32> to vector<4x8xf32>
      %cst_144 = arith.constant dense<0.000000e+00> : vector<4x8xf32>
      %102 = tpu.matmul %39, %101, %cst_144 {dimension_numbers = #tpu.dot_dimension_numbers<[1], [0], [0], [1], [0, 0, 1, 1], [], []>} : vector<4x4xf32>, vector<4x8xf32>, vector<4x8xf32> -> vector<4x8xf32>
      %103 = arith.addf %100, %102 : vector<4x8xf32>
      %104 = vector.broadcast %59 : vector<4x1xf32> to vector<4x8xf32>
      %105 = arith.addf %103, %104 : vector<4x8xf32>
      %c1_i32_145 = arith.constant 1 : i32
      %106 = arith.addi %arg11, %c1_i32_145 : i32
      %107 = arith.index_cast %106 : i32 to index
      %c0_146 = arith.constant 0 : index
      %c1_147 = arith.constant 1 : index
      %108 = vector.load %arg10[%107, %c0_146, %c1_147] : memref<10x4x10xf32, #tpu.memory_space<vmem>>, vector<1x4x8xf32>
      %109 = vector.shape_cast %108 : vector<1x4x8xf32> to vector<4x8xf32>
      %110 = vector.shape_cast %105 : vector<4x8xf32> to vector<1x4x8xf32>
      tpu.vector_store %arg10[%107, %c0_146, %c1_147], %110 {strides = array<i32>} : memref<10x4x10xf32, #tpu.memory_space<vmem>>, vector<1x4x8xf32>,
    }
    %c8_i32_122 = arith.constant 8 : i32
    %c0_i32_123 = arith.constant 0 : i32
    %c8_i32_124 = arith.constant 8 : i32
    %63 = arith.addi %c0_i32_123, %c8_i32_124 : i32
    %c1_i32_125 = arith.constant 1 : i32
    scf.for %arg11 = %c0_i32_123 to %63 step %c1_i32_125  : i32 {
      %cst_127 = arith.constant 0.000000e+00 : f32
      %64 = vector.broadcast %cst_127 : f32 to vector<4x8xf32>
      %c0_i32_128 = arith.constant 0 : i32
      %65 = arith.addi %arg11, %c0_i32_128 : i32
      %66 = arith.index_cast %65 : i32 to index
      %c0_129 = arith.constant 0 : index
      %c0_130 = arith.constant 0 : index
      %67 = vector.load %arg10[%66, %c0_129, %c0_130] : memref<10x4x10xf32, #tpu.memory_space<vmem>>, vector<1x4x10xf32>
      %68 = vector.shape_cast %67 : vector<1x4x10xf32> to vector<4x10xf32>
      %69 = vector.extract_strided_slice %68 {offsets = [0, 0], sizes = [4, 8], strides = [1, 1]} : vector<4x10xf32> to vector<4x8xf32>
      %cst_131 = arith.constant dense<0.000000e+00> : vector<4x8xf32>
      %70 = tpu.matmul %41, %69, %cst_131 {dimension_numbers = #tpu.dot_dimension_numbers<[1], [0], [0], [1], [0, 0, 1, 1], [], []>} : vector<4x4xf32>, vector<4x8xf32>, vector<4x8xf32> -> vector<4x8xf32>
      %71 = arith.addf %64, %70 : vector<4x8xf32>
      %72 = vector.extract_strided_slice %68 {offsets = [0, 1], sizes = [4, 8], strides = [1, 1]} : vector<4x10xf32> to vector<4x8xf32>
      %cst_132 = arith.constant dense<0.000000e+00> : vector<4x8xf32>
      %73 = tpu.matmul %43, %72, %cst_132 {dimension_numbers = #tpu.dot_dimension_numbers<[1], [0], [0], [1], [0, 0, 1, 1], [], []>} : vector<4x4xf32>, vector<4x8xf32>, vector<4x8xf32> -> vector<4x8xf32>
      %74 = arith.addf %71, %73 : vector<4x8xf32>
      %75 = vector.extract_strided_slice %68 {offsets = [0, 2], sizes = [4, 8], strides = [1, 1]} : vector<4x10xf32> to vector<4x8xf32>
      %cst_133 = arith.constant dense<0.000000e+00> : vector<4x8xf32>
      %76 = tpu.matmul %45, %75, %cst_133 {dimension_numbers = #tpu.dot_dimension_numbers<[1], [0], [0], [1], [0, 0, 1, 1], [], []>} : vector<4x4xf32>, vector<4x8xf32>, vector<4x8xf32> -> vector<4x8xf32>
      %77 = arith.addf %74, %76 : vector<4x8xf32>
      %c1_i32_134 = arith.constant 1 : i32
      %78 = arith.addi %arg11, %c1_i32_134 : i32
      %79 = arith.index_cast %78 : i32 to index
      %c0_135 = arith.constant 0 : index
      %c0_136 = arith.constant 0 : index
      %80 = vector.load %arg10[%79, %c0_135, %c0_136] : memref<10x4x10xf32, #tpu.memory_space<vmem>>, vector<1x4x10xf32>
      %81 = vector.shape_cast %80 : vector<1x4x10xf32> to vector<4x10xf32>
      %82 = vector.extract_strided_slice %81 {offsets = [0, 0], sizes = [4, 8], strides = [1, 1]} : vector<4x10xf32> to vector<4x8xf32>
      %cst_137 = arith.constant dense<0.000000e+00> : vector<4x8xf32>
      %83 = tpu.matmul %47, %82, %cst_137 {dimension_numbers = #tpu.dot_dimension_numbers<[1], [0], [0], [1], [0, 0, 1, 1], [], []>} : vector<4x4xf32>, vector<4x8xf32>, vector<4x8xf32> -> vector<4x8xf32>
      %84 = arith.addf %77, %83 : vector<4x8xf32>
      %85 = vector.extract_strided_slice %81 {offsets = [0, 1], sizes = [4, 8], strides = [1, 1]} : vector<4x10xf32> to vector<4x8xf32>
      %cst_138 = arith.constant dense<0.000000e+00> : vector<4x8xf32>
      %86 = tpu.matmul %49, %85, %cst_138 {dimension_numbers = #tpu.dot_dimension_numbers<[1], [0], [0], [1], [0, 0, 1, 1], [], []>} : vector<4x4xf32>, vector<4x8xf32>, vector<4x8xf32> -> vector<4x8xf32>
      %87 = arith.addf %84, %86 : vector<4x8xf32>
      %88 = vector.extract_strided_slice %81 {offsets = [0, 2], sizes = [4, 8], strides = [1, 1]} : vector<4x10xf32> to vector<4x8xf32>
      %cst_139 = arith.constant dense<0.000000e+00> : vector<4x8xf32>
      %89 = tpu.matmul %51, %88, %cst_139 {dimension_numbers = #tpu.dot_dimension_numbers<[1], [0], [0], [1], [0, 0, 1, 1], [], []>} : vector<4x4xf32>, vector<4x8xf32>, vector<4x8xf32> -> vector<4x8xf32>
      %90 = arith.addf %87, %89 : vector<4x8xf32>
      %c2_i32 = arith.constant 2 : i32
      %91 = arith.addi %arg11, %c2_i32 : i32
      %92 = arith.index_cast %91 : i32 to index
      %c0_140 = arith.constant 0 : index
      %c0_141 = arith.constant 0 : index
      %93 = vector.load %arg10[%92, %c0_140, %c0_141] : memref<10x4x10xf32, #tpu.memory_space<vmem>>, vector<1x4x10xf32>
      %94 = vector.shape_cast %93 : vector<1x4x10xf32> to vector<4x10xf32>
      %95 = vector.extract_strided_slice %94 {offsets = [0, 0], sizes = [4, 8], strides = [1, 1]} : vector<4x10xf32> to vector<4x8xf32>
      %cst_142 = arith.constant dense<0.000000e+00> : vector<4x8xf32>
      %96 = tpu.matmul %53, %95, %cst_142 {dimension_numbers = #tpu.dot_dimension_numbers<[1], [0], [0], [1], [0, 0, 1, 1], [], []>} : vector<4x4xf32>, vector<4x8xf32>, vector<4x8xf32> -> vector<4x8xf32>
      %97 = arith.addf %90, %96 : vector<4x8xf32>
      %98 = vector.extract_strided_slice %94 {offsets = [0, 1], sizes = [4, 8], strides = [1, 1]} : vector<4x10xf32> to vector<4x8xf32>
      %cst_143 = arith.constant dense<0.000000e+00> : vector<4x8xf32>
      %99 = tpu.matmul %55, %98, %cst_143 {dimension_numbers = #tpu.dot_dimension_numbers<[1], [0], [0], [1], [0, 0, 1, 1], [], []>} : vector<4x4xf32>, vector<4x8xf32>, vector<4x8xf32> -> vector<4x8xf32>
      %100 = arith.addf %97, %99 : vector<4x8xf32>
      %101 = vector.extract_strided_slice %94 {offsets = [0, 2], sizes = [4, 8], strides = [1, 1]} : vector<4x10xf32> to vector<4x8xf32>
      %cst_144 = arith.constant dense<0.000000e+00> : vector<4x8xf32>
      %102 = tpu.matmul %57, %101, %cst_144 {dimension_numbers = #tpu.dot_dimension_numbers<[1], [0], [0], [1], [0, 0, 1, 1], [], []>} : vector<4x4xf32>, vector<4x8xf32>, vector<4x8xf32> -> vector<4x8xf32>
      %103 = arith.addf %100, %102 : vector<4x8xf32>
      %104 = vector.broadcast %60 : vector<4x1xf32> to vector<4x8xf32>
      %105 = arith.addf %103, %104 : vector<4x8xf32>
      %c0_145 = arith.constant 0 : index
      %106 = arith.index_cast %arg11 : i32 to index
      %c0_146 = arith.constant 0 : index
      %c0_147 = arith.constant 0 : index
      %107 = vector.load %arg8[%c0_145, %106, %c0_146, %c0_147] : memref<1x8x4x8xf32, #tpu.memory_space<vmem>>, vector<1x1x4x8xf32>
      %108 = vector.shape_cast %107 : vector<1x1x4x8xf32> to vector<4x8xf32>
      %109 = vector.shape_cast %105 : vector<4x8xf32> to vector<1x1x4x8xf32>
      tpu.vector_store %arg8[%c0_145, %106, %c0_146, %c0_147], %109 {strides = array<i32>} : memref<1x8x4x8xf32, #tpu.memory_space<vmem>>, vector<1x1x4x8xf32>,
    }
    %c8_i32_126 = arith.constant 8 : i32
    return
  }
  func.func @transform_0(%arg0: i32) -> (i32, i32, i32, i32, i32) {
    %c0_i32 = arith.constant 0 : i32
    %c0_i32_0 = arith.constant 0 : i32
    %c0_i32_1 = arith.constant 0 : i32
    %c0_i32_2 = arith.constant 0 : i32
    %c0_i32_3 = arith.constant 0 : i32
    return %arg0, %c0_i32, %c0_i32_0, %c0_i32_1, %c0_i32_2 : i32, i32, i32, i32, i32
  }
  func.func @transform_1(%arg0: i32) -> (i32, i32, i32, i32) {
    %c0_i32 = arith.constant 0 : i32
    %c0_i32_0 = arith.constant 0 : i32
    %c0_i32_1 = arith.constant 0 : i32
    %c0_i32_2 = arith.constant 0 : i32
    %c0_i32_3 = arith.constant 0 : i32
    return %c0_i32, %c0_i32_0, %c0_i32_1, %c0_i32_2 : i32, i32, i32, i32
  }
  func.func @transform_2(%arg0: i32) -> (i32, i32) {
    %c0_i32 = arith.constant 0 : i32
    %c0_i32_0 = arith.constant 0 : i32
    %c0_i32_1 = arith.constant 0 : i32
    return %c0_i32, %c0_i32_0 : i32, i32
  }
  func.func @transform_3(%arg0: i32) -> (i32, i32, i32, i32) {
    %c0_i32 = arith.constant 0 : i32
    %c0_i32_0 = arith.constant 0 : i32
    %c0_i32_1 = arith.constant 0 : i32
    %c0_i32_2 = arith.constant 0 : i32
    %c0_i32_3 = arith.constant 0 : i32
    return %c0_i32, %c0_i32_0, %c0_i32_1, %c0_i32_2 : i32, i32, i32, i32
  }
  func.func @transform_4(%arg0: i32) -> (i32, i32) {
    %c0_i32 = arith.constant 0 : i32
    %c0_i32_0 = arith.constant 0 : i32
    %c0_i32_1 = arith.constant 0 : i32
    return %c0_i32, %c0_i32_0 : i32, i32
  }
  func.func @transform_5(%arg0: i32) -> (i32, i32, i32, i32) {
    %c0_i32 = arith.constant 0 : i32
    %c0_i32_0 = arith.constant 0 : i32
    %c0_i32_1 = arith.constant 0 : i32
    %c0_i32_2 = arith.constant 0 : i32
    %c0_i32_3 = arith.constant 0 : i32
    return %c0_i32, %c0_i32_0, %c0_i32_1, %c0_i32_2 : i32, i32, i32, i32
  }
  func.func @transform_6(%arg0: i32) -> (i32, i32) {
    %c0_i32 = arith.constant 0 : i32
    %c0_i32_0 = arith.constant 0 : i32
    %c0_i32_1 = arith.constant 0 : i32
    return %c0_i32, %c0_i32_0 : i32, i32
  }
  func.func @transform_7(%arg0: i32) -> (i32, i32, i32, i32) {
    %c0_i32 = arith.constant 0 : i32
    %c0_i32_0 = arith.constant 0 : i32
    %c0_i32_1 = arith.constant 0 : i32
    %c0_i32_2 = arith.constant 0 : i32
    return %arg0, %c0_i32, %c0_i32_0, %c0_i32_1 : i32, i32, i32, i32
  }
}

module attributes {stable_mosaic.version = 11 : i64} {
  func.func @_stage_kernel(%arg0: i32, %arg1: memref<1x5x4x4x5xf32, #tpu.memory_space<vmem>>, %arg2: memref<3x3x8x4xf32, #tpu.memory_space<vmem>>, %arg3: memref<8x1xf32, #tpu.memory_space<vmem>>, %arg4: memref<3x3x8x8xf32, #tpu.memory_space<vmem>>, %arg5: memref<8x1xf32, #tpu.memory_space<vmem>>, %arg6: memref<3x3x8x8xf32, #tpu.memory_space<vmem>>, %arg7: memref<8x1xf32, #tpu.memory_space<vmem>>, %arg8: memref<1x4x8x4xf32, #tpu.memory_space<vmem>>, %arg9: memref<6x8x6xf32, #tpu.memory_space<vmem>>, %arg10: memref<6x8x6xf32, #tpu.memory_space<vmem>>) attributes {dimension_semantics = [#tpu.dimension_semantics<parallel>], iteration_bounds = array<i64: 4>, scalar_prefetch = 0 : i64, scratch_operands = 2 : i64, tpu.core_type = #tpu.core_type<tc>, window_params = [{transform_indices = @transform_0, window_bounds = array<i64: 1, 5, 4, 4, 5>}, {pipeline_mode = #tpu.pipeline_mode<synchronous>, transform_indices = @transform_1, window_bounds = array<i64: 3, 3, 8, 4>}, {pipeline_mode = #tpu.pipeline_mode<synchronous>, transform_indices = @transform_2, window_bounds = array<i64: 8, 1>}, {pipeline_mode = #tpu.pipeline_mode<synchronous>, transform_indices = @transform_3, window_bounds = array<i64: 3, 3, 8, 8>}, {pipeline_mode = #tpu.pipeline_mode<synchronous>, transform_indices = @transform_4, window_bounds = array<i64: 8, 1>}, {pipeline_mode = #tpu.pipeline_mode<synchronous>, transform_indices = @transform_5, window_bounds = array<i64: 3, 3, 8, 8>}, {pipeline_mode = #tpu.pipeline_mode<synchronous>, transform_indices = @transform_6, window_bounds = array<i64: 8, 1>}, {transform_indices = @transform_7, window_bounds = array<i64: 1, 4, 8, 4>}]} {
    %cst = arith.constant 0.000000e+00 : f32
    %0 = vector.broadcast %cst : f32 to vector<6x8x6xf32>
    %c0 = arith.constant 0 : index
    %c0_0 = arith.constant 0 : index
    %c0_1 = arith.constant 0 : index
    %1 = vector.load %arg9[%c0, %c0_0, %c0_1] : memref<6x8x6xf32, #tpu.memory_space<vmem>>, vector<6x8x6xf32>
    tpu.vector_store %arg9[%c0, %c0_0, %c0_1], %0 {strides = array<i32>} : memref<6x8x6xf32, #tpu.memory_space<vmem>>, vector<6x8x6xf32>,
    %cst_2 = arith.constant 0.000000e+00 : f32
    %2 = vector.broadcast %cst_2 : f32 to vector<6x8x6xf32>
    %c0_3 = arith.constant 0 : index
    %c0_4 = arith.constant 0 : index
    %c0_5 = arith.constant 0 : index
    %3 = vector.load %arg10[%c0_3, %c0_4, %c0_5] : memref<6x8x6xf32, #tpu.memory_space<vmem>>, vector<6x8x6xf32>
    tpu.vector_store %arg10[%c0_3, %c0_4, %c0_5], %2 {strides = array<i32>} : memref<6x8x6xf32, #tpu.memory_space<vmem>>, vector<6x8x6xf32>,
    %c0_6 = arith.constant 0 : index
    %c0_7 = arith.constant 0 : index
    %c0_8 = arith.constant 0 : index
    %c0_9 = arith.constant 0 : index
    %4 = vector.load %arg2[%c0_6, %c0_7, %c0_8, %c0_9] : memref<3x3x8x4xf32, #tpu.memory_space<vmem>>, vector<1x1x8x4xf32>
    %5 = vector.shape_cast %4 : vector<1x1x8x4xf32> to vector<8x4xf32>
    %c0_10 = arith.constant 0 : index
    %c1 = arith.constant 1 : index
    %c0_11 = arith.constant 0 : index
    %c0_12 = arith.constant 0 : index
    %6 = vector.load %arg2[%c0_10, %c1, %c0_11, %c0_12] : memref<3x3x8x4xf32, #tpu.memory_space<vmem>>, vector<1x1x8x4xf32>
    %7 = vector.shape_cast %6 : vector<1x1x8x4xf32> to vector<8x4xf32>
    %c0_13 = arith.constant 0 : index
    %c2 = arith.constant 2 : index
    %c0_14 = arith.constant 0 : index
    %c0_15 = arith.constant 0 : index
    %8 = vector.load %arg2[%c0_13, %c2, %c0_14, %c0_15] : memref<3x3x8x4xf32, #tpu.memory_space<vmem>>, vector<1x1x8x4xf32>
    %9 = vector.shape_cast %8 : vector<1x1x8x4xf32> to vector<8x4xf32>
    %c1_16 = arith.constant 1 : index
    %c0_17 = arith.constant 0 : index
    %c0_18 = arith.constant 0 : index
    %c0_19 = arith.constant 0 : index
    %10 = vector.load %arg2[%c1_16, %c0_17, %c0_18, %c0_19] : memref<3x3x8x4xf32, #tpu.memory_space<vmem>>, vector<1x1x8x4xf32>
    %11 = vector.shape_cast %10 : vector<1x1x8x4xf32> to vector<8x4xf32>
    %c1_20 = arith.constant 1 : index
    %c1_21 = arith.constant 1 : index
    %c0_22 = arith.constant 0 : index
    %c0_23 = arith.constant 0 : index
    %12 = vector.load %arg2[%c1_20, %c1_21, %c0_22, %c0_23] : memref<3x3x8x4xf32, #tpu.memory_space<vmem>>, vector<1x1x8x4xf32>
    %13 = vector.shape_cast %12 : vector<1x1x8x4xf32> to vector<8x4xf32>
    %c1_24 = arith.constant 1 : index
    %c2_25 = arith.constant 2 : index
    %c0_26 = arith.constant 0 : index
    %c0_27 = arith.constant 0 : index
    %14 = vector.load %arg2[%c1_24, %c2_25, %c0_26, %c0_27] : memref<3x3x8x4xf32, #tpu.memory_space<vmem>>, vector<1x1x8x4xf32>
    %15 = vector.shape_cast %14 : vector<1x1x8x4xf32> to vector<8x4xf32>
    %c2_28 = arith.constant 2 : index
    %c0_29 = arith.constant 0 : index
    %c0_30 = arith.constant 0 : index
    %c0_31 = arith.constant 0 : index
    %16 = vector.load %arg2[%c2_28, %c0_29, %c0_30, %c0_31] : memref<3x3x8x4xf32, #tpu.memory_space<vmem>>, vector<1x1x8x4xf32>
    %17 = vector.shape_cast %16 : vector<1x1x8x4xf32> to vector<8x4xf32>
    %c2_32 = arith.constant 2 : index
    %c1_33 = arith.constant 1 : index
    %c0_34 = arith.constant 0 : index
    %c0_35 = arith.constant 0 : index
    %18 = vector.load %arg2[%c2_32, %c1_33, %c0_34, %c0_35] : memref<3x3x8x4xf32, #tpu.memory_space<vmem>>, vector<1x1x8x4xf32>
    %19 = vector.shape_cast %18 : vector<1x1x8x4xf32> to vector<8x4xf32>
    %c2_36 = arith.constant 2 : index
    %c2_37 = arith.constant 2 : index
    %c0_38 = arith.constant 0 : index
    %c0_39 = arith.constant 0 : index
    %20 = vector.load %arg2[%c2_36, %c2_37, %c0_38, %c0_39] : memref<3x3x8x4xf32, #tpu.memory_space<vmem>>, vector<1x1x8x4xf32>
    %21 = vector.shape_cast %20 : vector<1x1x8x4xf32> to vector<8x4xf32>
    %c0_40 = arith.constant 0 : index
    %c0_41 = arith.constant 0 : index
    %c0_42 = arith.constant 0 : index
    %c0_43 = arith.constant 0 : index
    %22 = vector.load %arg4[%c0_40, %c0_41, %c0_42, %c0_43] : memref<3x3x8x8xf32, #tpu.memory_space<vmem>>, vector<1x1x8x8xf32>
    %23 = vector.shape_cast %22 : vector<1x1x8x8xf32> to vector<8x8xf32>
    %c0_44 = arith.constant 0 : index
    %c1_45 = arith.constant 1 : index
    %c0_46 = arith.constant 0 : index
    %c0_47 = arith.constant 0 : index
    %24 = vector.load %arg4[%c0_44, %c1_45, %c0_46, %c0_47] : memref<3x3x8x8xf32, #tpu.memory_space<vmem>>, vector<1x1x8x8xf32>
    %25 = vector.shape_cast %24 : vector<1x1x8x8xf32> to vector<8x8xf32>
    %c0_48 = arith.constant 0 : index
    %c2_49 = arith.constant 2 : index
    %c0_50 = arith.constant 0 : index
    %c0_51 = arith.constant 0 : index
    %26 = vector.load %arg4[%c0_48, %c2_49, %c0_50, %c0_51] : memref<3x3x8x8xf32, #tpu.memory_space<vmem>>, vector<1x1x8x8xf32>
    %27 = vector.shape_cast %26 : vector<1x1x8x8xf32> to vector<8x8xf32>
    %c1_52 = arith.constant 1 : index
    %c0_53 = arith.constant 0 : index
    %c0_54 = arith.constant 0 : index
    %c0_55 = arith.constant 0 : index
    %28 = vector.load %arg4[%c1_52, %c0_53, %c0_54, %c0_55] : memref<3x3x8x8xf32, #tpu.memory_space<vmem>>, vector<1x1x8x8xf32>
    %29 = vector.shape_cast %28 : vector<1x1x8x8xf32> to vector<8x8xf32>
    %c1_56 = arith.constant 1 : index
    %c1_57 = arith.constant 1 : index
    %c0_58 = arith.constant 0 : index
    %c0_59 = arith.constant 0 : index
    %30 = vector.load %arg4[%c1_56, %c1_57, %c0_58, %c0_59] : memref<3x3x8x8xf32, #tpu.memory_space<vmem>>, vector<1x1x8x8xf32>
    %31 = vector.shape_cast %30 : vector<1x1x8x8xf32> to vector<8x8xf32>
    %c1_60 = arith.constant 1 : index
    %c2_61 = arith.constant 2 : index
    %c0_62 = arith.constant 0 : index
    %c0_63 = arith.constant 0 : index
    %32 = vector.load %arg4[%c1_60, %c2_61, %c0_62, %c0_63] : memref<3x3x8x8xf32, #tpu.memory_space<vmem>>, vector<1x1x8x8xf32>
    %33 = vector.shape_cast %32 : vector<1x1x8x8xf32> to vector<8x8xf32>
    %c2_64 = arith.constant 2 : index
    %c0_65 = arith.constant 0 : index
    %c0_66 = arith.constant 0 : index
    %c0_67 = arith.constant 0 : index
    %34 = vector.load %arg4[%c2_64, %c0_65, %c0_66, %c0_67] : memref<3x3x8x8xf32, #tpu.memory_space<vmem>>, vector<1x1x8x8xf32>
    %35 = vector.shape_cast %34 : vector<1x1x8x8xf32> to vector<8x8xf32>
    %c2_68 = arith.constant 2 : index
    %c1_69 = arith.constant 1 : index
    %c0_70 = arith.constant 0 : index
    %c0_71 = arith.constant 0 : index
    %36 = vector.load %arg4[%c2_68, %c1_69, %c0_70, %c0_71] : memref<3x3x8x8xf32, #tpu.memory_space<vmem>>, vector<1x1x8x8xf32>
    %37 = vector.shape_cast %36 : vector<1x1x8x8xf32> to vector<8x8xf32>
    %c2_72 = arith.constant 2 : index
    %c2_73 = arith.constant 2 : index
    %c0_74 = arith.constant 0 : index
    %c0_75 = arith.constant 0 : index
    %38 = vector.load %arg4[%c2_72, %c2_73, %c0_74, %c0_75] : memref<3x3x8x8xf32, #tpu.memory_space<vmem>>, vector<1x1x8x8xf32>
    %39 = vector.shape_cast %38 : vector<1x1x8x8xf32> to vector<8x8xf32>
    %c0_76 = arith.constant 0 : index
    %c0_77 = arith.constant 0 : index
    %c0_78 = arith.constant 0 : index
    %c0_79 = arith.constant 0 : index
    %40 = vector.load %arg6[%c0_76, %c0_77, %c0_78, %c0_79] : memref<3x3x8x8xf32, #tpu.memory_space<vmem>>, vector<1x1x8x8xf32>
    %41 = vector.shape_cast %40 : vector<1x1x8x8xf32> to vector<8x8xf32>
    %c0_80 = arith.constant 0 : index
    %c1_81 = arith.constant 1 : index
    %c0_82 = arith.constant 0 : index
    %c0_83 = arith.constant 0 : index
    %42 = vector.load %arg6[%c0_80, %c1_81, %c0_82, %c0_83] : memref<3x3x8x8xf32, #tpu.memory_space<vmem>>, vector<1x1x8x8xf32>
    %43 = vector.shape_cast %42 : vector<1x1x8x8xf32> to vector<8x8xf32>
    %c0_84 = arith.constant 0 : index
    %c2_85 = arith.constant 2 : index
    %c0_86 = arith.constant 0 : index
    %c0_87 = arith.constant 0 : index
    %44 = vector.load %arg6[%c0_84, %c2_85, %c0_86, %c0_87] : memref<3x3x8x8xf32, #tpu.memory_space<vmem>>, vector<1x1x8x8xf32>
    %45 = vector.shape_cast %44 : vector<1x1x8x8xf32> to vector<8x8xf32>
    %c1_88 = arith.constant 1 : index
    %c0_89 = arith.constant 0 : index
    %c0_90 = arith.constant 0 : index
    %c0_91 = arith.constant 0 : index
    %46 = vector.load %arg6[%c1_88, %c0_89, %c0_90, %c0_91] : memref<3x3x8x8xf32, #tpu.memory_space<vmem>>, vector<1x1x8x8xf32>
    %47 = vector.shape_cast %46 : vector<1x1x8x8xf32> to vector<8x8xf32>
    %c1_92 = arith.constant 1 : index
    %c1_93 = arith.constant 1 : index
    %c0_94 = arith.constant 0 : index
    %c0_95 = arith.constant 0 : index
    %48 = vector.load %arg6[%c1_92, %c1_93, %c0_94, %c0_95] : memref<3x3x8x8xf32, #tpu.memory_space<vmem>>, vector<1x1x8x8xf32>
    %49 = vector.shape_cast %48 : vector<1x1x8x8xf32> to vector<8x8xf32>
    %c1_96 = arith.constant 1 : index
    %c2_97 = arith.constant 2 : index
    %c0_98 = arith.constant 0 : index
    %c0_99 = arith.constant 0 : index
    %50 = vector.load %arg6[%c1_96, %c2_97, %c0_98, %c0_99] : memref<3x3x8x8xf32, #tpu.memory_space<vmem>>, vector<1x1x8x8xf32>
    %51 = vector.shape_cast %50 : vector<1x1x8x8xf32> to vector<8x8xf32>
    %c2_100 = arith.constant 2 : index
    %c0_101 = arith.constant 0 : index
    %c0_102 = arith.constant 0 : index
    %c0_103 = arith.constant 0 : index
    %52 = vector.load %arg6[%c2_100, %c0_101, %c0_102, %c0_103] : memref<3x3x8x8xf32, #tpu.memory_space<vmem>>, vector<1x1x8x8xf32>
    %53 = vector.shape_cast %52 : vector<1x1x8x8xf32> to vector<8x8xf32>
    %c2_104 = arith.constant 2 : index
    %c1_105 = arith.constant 1 : index
    %c0_106 = arith.constant 0 : index
    %c0_107 = arith.constant 0 : index
    %54 = vector.load %arg6[%c2_104, %c1_105, %c0_106, %c0_107] : memref<3x3x8x8xf32, #tpu.memory_space<vmem>>, vector<1x1x8x8xf32>
    %55 = vector.shape_cast %54 : vector<1x1x8x8xf32> to vector<8x8xf32>
    %c2_108 = arith.constant 2 : index
    %c2_109 = arith.constant 2 : index
    %c0_110 = arith.constant 0 : index
    %c0_111 = arith.constant 0 : index
    %56 = vector.load %arg6[%c2_108, %c2_109, %c0_110, %c0_111] : memref<3x3x8x8xf32, #tpu.memory_space<vmem>>, vector<1x1x8x8xf32>
    %57 = vector.shape_cast %56 : vector<1x1x8x8xf32> to vector<8x8xf32>
    %c0_112 = arith.constant 0 : index
    %c0_113 = arith.constant 0 : index
    %58 = vector.load %arg3[%c0_112, %c0_113] : memref<8x1xf32, #tpu.memory_space<vmem>>, vector<8x1xf32>
    %c0_114 = arith.constant 0 : index
    %c0_115 = arith.constant 0 : index
    %59 = vector.load %arg5[%c0_114, %c0_115] : memref<8x1xf32, #tpu.memory_space<vmem>>, vector<8x1xf32>
    %c0_116 = arith.constant 0 : index
    %c0_117 = arith.constant 0 : index
    %60 = vector.load %arg7[%c0_116, %c0_117] : memref<8x1xf32, #tpu.memory_space<vmem>>, vector<8x1xf32>
    %c0_i32 = arith.constant 0 : i32
    %c4_i32 = arith.constant 4 : i32
    %61 = arith.addi %c0_i32, %c4_i32 : i32
    %c1_i32 = arith.constant 1 : i32
    scf.for %arg11 = %c0_i32 to %61 step %c1_i32  : i32 {
      %cst_127 = arith.constant 0.000000e+00 : f32
      %64 = vector.broadcast %cst_127 : f32 to vector<8x4xf32>
      %c0_i32_128 = arith.constant 0 : i32
      %65 = arith.addi %arg11, %c0_i32_128 : i32
      %c0_129 = arith.constant 0 : index
      %66 = arith.index_cast %65 : i32 to index
      %c0_130 = arith.constant 0 : index
      %c0_131 = arith.constant 0 : index
      %c0_132 = arith.constant 0 : index
      %67 = vector.load %arg1[%c0_129, %66, %c0_130, %c0_131, %c0_132] : memref<1x5x4x4x5xf32, #tpu.memory_space<vmem>>, vector<1x1x1x4x5xf32>
      %68 = vector.shape_cast %67 : vector<1x1x1x4x5xf32> to vector<4x5xf32>
      %69 = vector.extract_strided_slice %68 {offsets = [0, 0], sizes = [4, 4], strides = [1, 1]} : vector<4x5xf32> to vector<4x4xf32>
      %cst_133 = arith.constant dense<0.000000e+00> : vector<8x4xf32>
      %70 = tpu.matmul %5, %69, %cst_133 {dimension_numbers = #tpu.dot_dimension_numbers<[1], [0], [0], [1], [0, 0, 1, 1], [], []>} : vector<8x4xf32>, vector<4x4xf32>, vector<8x4xf32> -> vector<8x4xf32>
      %71 = arith.addf %64, %70 : vector<8x4xf32>
      %c0_i32_134 = arith.constant 0 : i32
      %72 = arith.addi %arg11, %c0_i32_134 : i32
      %c0_135 = arith.constant 0 : index
      %73 = arith.index_cast %72 : i32 to index
      %c1_136 = arith.constant 1 : index
      %c0_137 = arith.constant 0 : index
      %c0_138 = arith.constant 0 : index
      %74 = vector.load %arg1[%c0_135, %73, %c1_136, %c0_137, %c0_138] : memref<1x5x4x4x5xf32, #tpu.memory_space<vmem>>, vector<1x1x1x4x5xf32>
      %75 = vector.shape_cast %74 : vector<1x1x1x4x5xf32> to vector<4x5xf32>
      %76 = vector.extract_strided_slice %75 {offsets = [0, 0], sizes = [4, 4], strides = [1, 1]} : vector<4x5xf32> to vector<4x4xf32>
      %cst_139 = arith.constant dense<0.000000e+00> : vector<8x4xf32>
      %77 = tpu.matmul %7, %76, %cst_139 {dimension_numbers = #tpu.dot_dimension_numbers<[1], [0], [0], [1], [0, 0, 1, 1], [], []>} : vector<8x4xf32>, vector<4x4xf32>, vector<8x4xf32> -> vector<8x4xf32>
      %78 = arith.addf %71, %77 : vector<8x4xf32>
      %c0_i32_140 = arith.constant 0 : i32
      %79 = arith.addi %arg11, %c0_i32_140 : i32
      %c0_141 = arith.constant 0 : index
      %80 = arith.index_cast %79 : i32 to index
      %c0_142 = arith.constant 0 : index
      %c0_143 = arith.constant 0 : index
      %c0_144 = arith.constant 0 : index
      %81 = vector.load %arg1[%c0_141, %80, %c0_142, %c0_143, %c0_144] : memref<1x5x4x4x5xf32, #tpu.memory_space<vmem>>, vector<1x1x1x4x5xf32>
      %82 = vector.shape_cast %81 : vector<1x1x1x4x5xf32> to vector<4x5xf32>
      %83 = vector.extract_strided_slice %82 {offsets = [0, 1], sizes = [4, 4], strides = [1, 1]} : vector<4x5xf32> to vector<4x4xf32>
      %cst_145 = arith.constant dense<0.000000e+00> : vector<8x4xf32>
      %84 = tpu.matmul %9, %83, %cst_145 {dimension_numbers = #tpu.dot_dimension_numbers<[1], [0], [0], [1], [0, 0, 1, 1], [], []>} : vector<8x4xf32>, vector<4x4xf32>, vector<8x4xf32> -> vector<8x4xf32>
      %85 = arith.addf %78, %84 : vector<8x4xf32>
      %c0_i32_146 = arith.constant 0 : i32
      %86 = arith.addi %arg11, %c0_i32_146 : i32
      %c0_147 = arith.constant 0 : index
      %87 = arith.index_cast %86 : i32 to index
      %c2_148 = arith.constant 2 : index
      %c0_149 = arith.constant 0 : index
      %c0_150 = arith.constant 0 : index
      %88 = vector.load %arg1[%c0_147, %87, %c2_148, %c0_149, %c0_150] : memref<1x5x4x4x5xf32, #tpu.memory_space<vmem>>, vector<1x1x1x4x5xf32>
      %89 = vector.shape_cast %88 : vector<1x1x1x4x5xf32> to vector<4x5xf32>
      %90 = vector.extract_strided_slice %89 {offsets = [0, 0], sizes = [4, 4], strides = [1, 1]} : vector<4x5xf32> to vector<4x4xf32>
      %cst_151 = arith.constant dense<0.000000e+00> : vector<8x4xf32>
      %91 = tpu.matmul %11, %90, %cst_151 {dimension_numbers = #tpu.dot_dimension_numbers<[1], [0], [0], [1], [0, 0, 1, 1], [], []>} : vector<8x4xf32>, vector<4x4xf32>, vector<8x4xf32> -> vector<8x4xf32>
      %92 = arith.addf %85, %91 : vector<8x4xf32>
      %c0_i32_152 = arith.constant 0 : i32
      %93 = arith.addi %arg11, %c0_i32_152 : i32
      %c0_153 = arith.constant 0 : index
      %94 = arith.index_cast %93 : i32 to index
      %c3 = arith.constant 3 : index
      %c0_154 = arith.constant 0 : index
      %c0_155 = arith.constant 0 : index
      %95 = vector.load %arg1[%c0_153, %94, %c3, %c0_154, %c0_155] : memref<1x5x4x4x5xf32, #tpu.memory_space<vmem>>, vector<1x1x1x4x5xf32>
      %96 = vector.shape_cast %95 : vector<1x1x1x4x5xf32> to vector<4x5xf32>
      %97 = vector.extract_strided_slice %96 {offsets = [0, 0], sizes = [4, 4], strides = [1, 1]} : vector<4x5xf32> to vector<4x4xf32>
      %cst_156 = arith.constant dense<0.000000e+00> : vector<8x4xf32>
      %98 = tpu.matmul %13, %97, %cst_156 {dimension_numbers = #tpu.dot_dimension_numbers<[1], [0], [0], [1], [0, 0, 1, 1], [], []>} : vector<8x4xf32>, vector<4x4xf32>, vector<8x4xf32> -> vector<8x4xf32>
      %99 = arith.addf %92, %98 : vector<8x4xf32>
      %c0_i32_157 = arith.constant 0 : i32
      %100 = arith.addi %arg11, %c0_i32_157 : i32
      %c0_158 = arith.constant 0 : index
      %101 = arith.index_cast %100 : i32 to index
      %c2_159 = arith.constant 2 : index
      %c0_160 = arith.constant 0 : index
      %c0_161 = arith.constant 0 : index
      %102 = vector.load %arg1[%c0_158, %101, %c2_159, %c0_160, %c0_161] : memref<1x5x4x4x5xf32, #tpu.memory_space<vmem>>, vector<1x1x1x4x5xf32>
      %103 = vector.shape_cast %102 : vector<1x1x1x4x5xf32> to vector<4x5xf32>
      %104 = vector.extract_strided_slice %103 {offsets = [0, 1], sizes = [4, 4], strides = [1, 1]} : vector<4x5xf32> to vector<4x4xf32>
      %cst_162 = arith.constant dense<0.000000e+00> : vector<8x4xf32>
      %105 = tpu.matmul %15, %104, %cst_162 {dimension_numbers = #tpu.dot_dimension_numbers<[1], [0], [0], [1], [0, 0, 1, 1], [], []>} : vector<8x4xf32>, vector<4x4xf32>, vector<8x4xf32> -> vector<8x4xf32>
      %106 = arith.addf %99, %105 : vector<8x4xf32>
      %c1_i32_163 = arith.constant 1 : i32
      %107 = arith.addi %arg11, %c1_i32_163 : i32
      %c0_164 = arith.constant 0 : index
      %108 = arith.index_cast %107 : i32 to index
      %c0_165 = arith.constant 0 : index
      %c0_166 = arith.constant 0 : index
      %c0_167 = arith.constant 0 : index
      %109 = vector.load %arg1[%c0_164, %108, %c0_165, %c0_166, %c0_167] : memref<1x5x4x4x5xf32, #tpu.memory_space<vmem>>, vector<1x1x1x4x5xf32>
      %110 = vector.shape_cast %109 : vector<1x1x1x4x5xf32> to vector<4x5xf32>
      %111 = vector.extract_strided_slice %110 {offsets = [0, 0], sizes = [4, 4], strides = [1, 1]} : vector<4x5xf32> to vector<4x4xf32>
      %cst_168 = arith.constant dense<0.000000e+00> : vector<8x4xf32>
      %112 = tpu.matmul %17, %111, %cst_168 {dimension_numbers = #tpu.dot_dimension_numbers<[1], [0], [0], [1], [0, 0, 1, 1], [], []>} : vector<8x4xf32>, vector<4x4xf32>, vector<8x4xf32> -> vector<8x4xf32>
      %113 = arith.addf %106, %112 : vector<8x4xf32>
      %c1_i32_169 = arith.constant 1 : i32
      %114 = arith.addi %arg11, %c1_i32_169 : i32
      %c0_170 = arith.constant 0 : index
      %115 = arith.index_cast %114 : i32 to index
      %c1_171 = arith.constant 1 : index
      %c0_172 = arith.constant 0 : index
      %c0_173 = arith.constant 0 : index
      %116 = vector.load %arg1[%c0_170, %115, %c1_171, %c0_172, %c0_173] : memref<1x5x4x4x5xf32, #tpu.memory_space<vmem>>, vector<1x1x1x4x5xf32>
      %117 = vector.shape_cast %116 : vector<1x1x1x4x5xf32> to vector<4x5xf32>
      %118 = vector.extract_strided_slice %117 {offsets = [0, 0], sizes = [4, 4], strides = [1, 1]} : vector<4x5xf32> to vector<4x4xf32>
      %cst_174 = arith.constant dense<0.000000e+00> : vector<8x4xf32>
      %119 = tpu.matmul %19, %118, %cst_174 {dimension_numbers = #tpu.dot_dimension_numbers<[1], [0], [0], [1], [0, 0, 1, 1], [], []>} : vector<8x4xf32>, vector<4x4xf32>, vector<8x4xf32> -> vector<8x4xf32>
      %120 = arith.addf %113, %119 : vector<8x4xf32>
      %c1_i32_175 = arith.constant 1 : i32
      %121 = arith.addi %arg11, %c1_i32_175 : i32
      %c0_176 = arith.constant 0 : index
      %122 = arith.index_cast %121 : i32 to index
      %c0_177 = arith.constant 0 : index
      %c0_178 = arith.constant 0 : index
      %c0_179 = arith.constant 0 : index
      %123 = vector.load %arg1[%c0_176, %122, %c0_177, %c0_178, %c0_179] : memref<1x5x4x4x5xf32, #tpu.memory_space<vmem>>, vector<1x1x1x4x5xf32>
      %124 = vector.shape_cast %123 : vector<1x1x1x4x5xf32> to vector<4x5xf32>
      %125 = vector.extract_strided_slice %124 {offsets = [0, 1], sizes = [4, 4], strides = [1, 1]} : vector<4x5xf32> to vector<4x4xf32>
      %cst_180 = arith.constant dense<0.000000e+00> : vector<8x4xf32>
      %126 = tpu.matmul %21, %125, %cst_180 {dimension_numbers = #tpu.dot_dimension_numbers<[1], [0], [0], [1], [0, 0, 1, 1], [], []>} : vector<8x4xf32>, vector<4x4xf32>, vector<8x4xf32> -> vector<8x4xf32>
      %127 = arith.addf %120, %126 : vector<8x4xf32>
      %128 = vector.broadcast %58 : vector<8x1xf32> to vector<8x4xf32>
      %129 = arith.addf %127, %128 : vector<8x4xf32>
      %c1_i32_181 = arith.constant 1 : i32
      %130 = arith.addi %arg11, %c1_i32_181 : i32
      %131 = arith.index_cast %130 : i32 to index
      %c0_182 = arith.constant 0 : index
      %c1_183 = arith.constant 1 : index
      %132 = vector.load %arg9[%131, %c0_182, %c1_183] : memref<6x8x6xf32, #tpu.memory_space<vmem>>, vector<1x8x4xf32>
      %133 = vector.shape_cast %132 : vector<1x8x4xf32> to vector<8x4xf32>
      %134 = vector.shape_cast %129 : vector<8x4xf32> to vector<1x8x4xf32>
      tpu.vector_store %arg9[%131, %c0_182, %c1_183], %134 {strides = array<i32>} : memref<6x8x6xf32, #tpu.memory_space<vmem>>, vector<1x8x4xf32>,
    }
    %c4_i32_118 = arith.constant 4 : i32
    %c0_i32_119 = arith.constant 0 : i32
    %c4_i32_120 = arith.constant 4 : i32
    %62 = arith.addi %c0_i32_119, %c4_i32_120 : i32
    %c1_i32_121 = arith.constant 1 : i32
    scf.for %arg11 = %c0_i32_119 to %62 step %c1_i32_121  : i32 {
      %cst_127 = arith.constant 0.000000e+00 : f32
      %64 = vector.broadcast %cst_127 : f32 to vector<8x4xf32>
      %c0_i32_128 = arith.constant 0 : i32
      %65 = arith.addi %arg11, %c0_i32_128 : i32
      %66 = arith.index_cast %65 : i32 to index
      %c0_129 = arith.constant 0 : index
      %c0_130 = arith.constant 0 : index
      %67 = vector.load %arg9[%66, %c0_129, %c0_130] : memref<6x8x6xf32, #tpu.memory_space<vmem>>, vector<1x8x6xf32>
      %68 = vector.shape_cast %67 : vector<1x8x6xf32> to vector<8x6xf32>
      %69 = vector.extract_strided_slice %68 {offsets = [0, 0], sizes = [8, 4], strides = [1, 1]} : vector<8x6xf32> to vector<8x4xf32>
      %cst_131 = arith.constant dense<0.000000e+00> : vector<8x4xf32>
      %70 = tpu.matmul %23, %69, %cst_131 {dimension_numbers = #tpu.dot_dimension_numbers<[1], [0], [0], [1], [0, 0, 1, 1], [], []>} : vector<8x8xf32>, vector<8x4xf32>, vector<8x4xf32> -> vector<8x4xf32>
      %71 = arith.addf %64, %70 : vector<8x4xf32>
      %72 = vector.extract_strided_slice %68 {offsets = [0, 1], sizes = [8, 4], strides = [1, 1]} : vector<8x6xf32> to vector<8x4xf32>
      %cst_132 = arith.constant dense<0.000000e+00> : vector<8x4xf32>
      %73 = tpu.matmul %25, %72, %cst_132 {dimension_numbers = #tpu.dot_dimension_numbers<[1], [0], [0], [1], [0, 0, 1, 1], [], []>} : vector<8x8xf32>, vector<8x4xf32>, vector<8x4xf32> -> vector<8x4xf32>
      %74 = arith.addf %71, %73 : vector<8x4xf32>
      %75 = vector.extract_strided_slice %68 {offsets = [0, 2], sizes = [8, 4], strides = [1, 1]} : vector<8x6xf32> to vector<8x4xf32>
      %cst_133 = arith.constant dense<0.000000e+00> : vector<8x4xf32>
      %76 = tpu.matmul %27, %75, %cst_133 {dimension_numbers = #tpu.dot_dimension_numbers<[1], [0], [0], [1], [0, 0, 1, 1], [], []>} : vector<8x8xf32>, vector<8x4xf32>, vector<8x4xf32> -> vector<8x4xf32>
      %77 = arith.addf %74, %76 : vector<8x4xf32>
      %c1_i32_134 = arith.constant 1 : i32
      %78 = arith.addi %arg11, %c1_i32_134 : i32
      %79 = arith.index_cast %78 : i32 to index
      %c0_135 = arith.constant 0 : index
      %c0_136 = arith.constant 0 : index
      %80 = vector.load %arg9[%79, %c0_135, %c0_136] : memref<6x8x6xf32, #tpu.memory_space<vmem>>, vector<1x8x6xf32>
      %81 = vector.shape_cast %80 : vector<1x8x6xf32> to vector<8x6xf32>
      %82 = vector.extract_strided_slice %81 {offsets = [0, 0], sizes = [8, 4], strides = [1, 1]} : vector<8x6xf32> to vector<8x4xf32>
      %cst_137 = arith.constant dense<0.000000e+00> : vector<8x4xf32>
      %83 = tpu.matmul %29, %82, %cst_137 {dimension_numbers = #tpu.dot_dimension_numbers<[1], [0], [0], [1], [0, 0, 1, 1], [], []>} : vector<8x8xf32>, vector<8x4xf32>, vector<8x4xf32> -> vector<8x4xf32>
      %84 = arith.addf %77, %83 : vector<8x4xf32>
      %85 = vector.extract_strided_slice %81 {offsets = [0, 1], sizes = [8, 4], strides = [1, 1]} : vector<8x6xf32> to vector<8x4xf32>
      %cst_138 = arith.constant dense<0.000000e+00> : vector<8x4xf32>
      %86 = tpu.matmul %31, %85, %cst_138 {dimension_numbers = #tpu.dot_dimension_numbers<[1], [0], [0], [1], [0, 0, 1, 1], [], []>} : vector<8x8xf32>, vector<8x4xf32>, vector<8x4xf32> -> vector<8x4xf32>
      %87 = arith.addf %84, %86 : vector<8x4xf32>
      %88 = vector.extract_strided_slice %81 {offsets = [0, 2], sizes = [8, 4], strides = [1, 1]} : vector<8x6xf32> to vector<8x4xf32>
      %cst_139 = arith.constant dense<0.000000e+00> : vector<8x4xf32>
      %89 = tpu.matmul %33, %88, %cst_139 {dimension_numbers = #tpu.dot_dimension_numbers<[1], [0], [0], [1], [0, 0, 1, 1], [], []>} : vector<8x8xf32>, vector<8x4xf32>, vector<8x4xf32> -> vector<8x4xf32>
      %90 = arith.addf %87, %89 : vector<8x4xf32>
      %c2_i32 = arith.constant 2 : i32
      %91 = arith.addi %arg11, %c2_i32 : i32
      %92 = arith.index_cast %91 : i32 to index
      %c0_140 = arith.constant 0 : index
      %c0_141 = arith.constant 0 : index
      %93 = vector.load %arg9[%92, %c0_140, %c0_141] : memref<6x8x6xf32, #tpu.memory_space<vmem>>, vector<1x8x6xf32>
      %94 = vector.shape_cast %93 : vector<1x8x6xf32> to vector<8x6xf32>
      %95 = vector.extract_strided_slice %94 {offsets = [0, 0], sizes = [8, 4], strides = [1, 1]} : vector<8x6xf32> to vector<8x4xf32>
      %cst_142 = arith.constant dense<0.000000e+00> : vector<8x4xf32>
      %96 = tpu.matmul %35, %95, %cst_142 {dimension_numbers = #tpu.dot_dimension_numbers<[1], [0], [0], [1], [0, 0, 1, 1], [], []>} : vector<8x8xf32>, vector<8x4xf32>, vector<8x4xf32> -> vector<8x4xf32>
      %97 = arith.addf %90, %96 : vector<8x4xf32>
      %98 = vector.extract_strided_slice %94 {offsets = [0, 1], sizes = [8, 4], strides = [1, 1]} : vector<8x6xf32> to vector<8x4xf32>
      %cst_143 = arith.constant dense<0.000000e+00> : vector<8x4xf32>
      %99 = tpu.matmul %37, %98, %cst_143 {dimension_numbers = #tpu.dot_dimension_numbers<[1], [0], [0], [1], [0, 0, 1, 1], [], []>} : vector<8x8xf32>, vector<8x4xf32>, vector<8x4xf32> -> vector<8x4xf32>
      %100 = arith.addf %97, %99 : vector<8x4xf32>
      %101 = vector.extract_strided_slice %94 {offsets = [0, 2], sizes = [8, 4], strides = [1, 1]} : vector<8x6xf32> to vector<8x4xf32>
      %cst_144 = arith.constant dense<0.000000e+00> : vector<8x4xf32>
      %102 = tpu.matmul %39, %101, %cst_144 {dimension_numbers = #tpu.dot_dimension_numbers<[1], [0], [0], [1], [0, 0, 1, 1], [], []>} : vector<8x8xf32>, vector<8x4xf32>, vector<8x4xf32> -> vector<8x4xf32>
      %103 = arith.addf %100, %102 : vector<8x4xf32>
      %104 = vector.broadcast %59 : vector<8x1xf32> to vector<8x4xf32>
      %105 = arith.addf %103, %104 : vector<8x4xf32>
      %c1_i32_145 = arith.constant 1 : i32
      %106 = arith.addi %arg11, %c1_i32_145 : i32
      %107 = arith.index_cast %106 : i32 to index
      %c0_146 = arith.constant 0 : index
      %c1_147 = arith.constant 1 : index
      %108 = vector.load %arg10[%107, %c0_146, %c1_147] : memref<6x8x6xf32, #tpu.memory_space<vmem>>, vector<1x8x4xf32>
      %109 = vector.shape_cast %108 : vector<1x8x4xf32> to vector<8x4xf32>
      %110 = vector.shape_cast %105 : vector<8x4xf32> to vector<1x8x4xf32>
      tpu.vector_store %arg10[%107, %c0_146, %c1_147], %110 {strides = array<i32>} : memref<6x8x6xf32, #tpu.memory_space<vmem>>, vector<1x8x4xf32>,
    }
    %c4_i32_122 = arith.constant 4 : i32
    %c0_i32_123 = arith.constant 0 : i32
    %c4_i32_124 = arith.constant 4 : i32
    %63 = arith.addi %c0_i32_123, %c4_i32_124 : i32
    %c1_i32_125 = arith.constant 1 : i32
    scf.for %arg11 = %c0_i32_123 to %63 step %c1_i32_125  : i32 {
      %cst_127 = arith.constant 0.000000e+00 : f32
      %64 = vector.broadcast %cst_127 : f32 to vector<8x4xf32>
      %c0_i32_128 = arith.constant 0 : i32
      %65 = arith.addi %arg11, %c0_i32_128 : i32
      %66 = arith.index_cast %65 : i32 to index
      %c0_129 = arith.constant 0 : index
      %c0_130 = arith.constant 0 : index
      %67 = vector.load %arg10[%66, %c0_129, %c0_130] : memref<6x8x6xf32, #tpu.memory_space<vmem>>, vector<1x8x6xf32>
      %68 = vector.shape_cast %67 : vector<1x8x6xf32> to vector<8x6xf32>
      %69 = vector.extract_strided_slice %68 {offsets = [0, 0], sizes = [8, 4], strides = [1, 1]} : vector<8x6xf32> to vector<8x4xf32>
      %cst_131 = arith.constant dense<0.000000e+00> : vector<8x4xf32>
      %70 = tpu.matmul %41, %69, %cst_131 {dimension_numbers = #tpu.dot_dimension_numbers<[1], [0], [0], [1], [0, 0, 1, 1], [], []>} : vector<8x8xf32>, vector<8x4xf32>, vector<8x4xf32> -> vector<8x4xf32>
      %71 = arith.addf %64, %70 : vector<8x4xf32>
      %72 = vector.extract_strided_slice %68 {offsets = [0, 1], sizes = [8, 4], strides = [1, 1]} : vector<8x6xf32> to vector<8x4xf32>
      %cst_132 = arith.constant dense<0.000000e+00> : vector<8x4xf32>
      %73 = tpu.matmul %43, %72, %cst_132 {dimension_numbers = #tpu.dot_dimension_numbers<[1], [0], [0], [1], [0, 0, 1, 1], [], []>} : vector<8x8xf32>, vector<8x4xf32>, vector<8x4xf32> -> vector<8x4xf32>
      %74 = arith.addf %71, %73 : vector<8x4xf32>
      %75 = vector.extract_strided_slice %68 {offsets = [0, 2], sizes = [8, 4], strides = [1, 1]} : vector<8x6xf32> to vector<8x4xf32>
      %cst_133 = arith.constant dense<0.000000e+00> : vector<8x4xf32>
      %76 = tpu.matmul %45, %75, %cst_133 {dimension_numbers = #tpu.dot_dimension_numbers<[1], [0], [0], [1], [0, 0, 1, 1], [], []>} : vector<8x8xf32>, vector<8x4xf32>, vector<8x4xf32> -> vector<8x4xf32>
      %77 = arith.addf %74, %76 : vector<8x4xf32>
      %c1_i32_134 = arith.constant 1 : i32
      %78 = arith.addi %arg11, %c1_i32_134 : i32
      %79 = arith.index_cast %78 : i32 to index
      %c0_135 = arith.constant 0 : index
      %c0_136 = arith.constant 0 : index
      %80 = vector.load %arg10[%79, %c0_135, %c0_136] : memref<6x8x6xf32, #tpu.memory_space<vmem>>, vector<1x8x6xf32>
      %81 = vector.shape_cast %80 : vector<1x8x6xf32> to vector<8x6xf32>
      %82 = vector.extract_strided_slice %81 {offsets = [0, 0], sizes = [8, 4], strides = [1, 1]} : vector<8x6xf32> to vector<8x4xf32>
      %cst_137 = arith.constant dense<0.000000e+00> : vector<8x4xf32>
      %83 = tpu.matmul %47, %82, %cst_137 {dimension_numbers = #tpu.dot_dimension_numbers<[1], [0], [0], [1], [0, 0, 1, 1], [], []>} : vector<8x8xf32>, vector<8x4xf32>, vector<8x4xf32> -> vector<8x4xf32>
      %84 = arith.addf %77, %83 : vector<8x4xf32>
      %85 = vector.extract_strided_slice %81 {offsets = [0, 1], sizes = [8, 4], strides = [1, 1]} : vector<8x6xf32> to vector<8x4xf32>
      %cst_138 = arith.constant dense<0.000000e+00> : vector<8x4xf32>
      %86 = tpu.matmul %49, %85, %cst_138 {dimension_numbers = #tpu.dot_dimension_numbers<[1], [0], [0], [1], [0, 0, 1, 1], [], []>} : vector<8x8xf32>, vector<8x4xf32>, vector<8x4xf32> -> vector<8x4xf32>
      %87 = arith.addf %84, %86 : vector<8x4xf32>
      %88 = vector.extract_strided_slice %81 {offsets = [0, 2], sizes = [8, 4], strides = [1, 1]} : vector<8x6xf32> to vector<8x4xf32>
      %cst_139 = arith.constant dense<0.000000e+00> : vector<8x4xf32>
      %89 = tpu.matmul %51, %88, %cst_139 {dimension_numbers = #tpu.dot_dimension_numbers<[1], [0], [0], [1], [0, 0, 1, 1], [], []>} : vector<8x8xf32>, vector<8x4xf32>, vector<8x4xf32> -> vector<8x4xf32>
      %90 = arith.addf %87, %89 : vector<8x4xf32>
      %c2_i32 = arith.constant 2 : i32
      %91 = arith.addi %arg11, %c2_i32 : i32
      %92 = arith.index_cast %91 : i32 to index
      %c0_140 = arith.constant 0 : index
      %c0_141 = arith.constant 0 : index
      %93 = vector.load %arg10[%92, %c0_140, %c0_141] : memref<6x8x6xf32, #tpu.memory_space<vmem>>, vector<1x8x6xf32>
      %94 = vector.shape_cast %93 : vector<1x8x6xf32> to vector<8x6xf32>
      %95 = vector.extract_strided_slice %94 {offsets = [0, 0], sizes = [8, 4], strides = [1, 1]} : vector<8x6xf32> to vector<8x4xf32>
      %cst_142 = arith.constant dense<0.000000e+00> : vector<8x4xf32>
      %96 = tpu.matmul %53, %95, %cst_142 {dimension_numbers = #tpu.dot_dimension_numbers<[1], [0], [0], [1], [0, 0, 1, 1], [], []>} : vector<8x8xf32>, vector<8x4xf32>, vector<8x4xf32> -> vector<8x4xf32>
      %97 = arith.addf %90, %96 : vector<8x4xf32>
      %98 = vector.extract_strided_slice %94 {offsets = [0, 1], sizes = [8, 4], strides = [1, 1]} : vector<8x6xf32> to vector<8x4xf32>
      %cst_143 = arith.constant dense<0.000000e+00> : vector<8x4xf32>
      %99 = tpu.matmul %55, %98, %cst_143 {dimension_numbers = #tpu.dot_dimension_numbers<[1], [0], [0], [1], [0, 0, 1, 1], [], []>} : vector<8x8xf32>, vector<8x4xf32>, vector<8x4xf32> -> vector<8x4xf32>
      %100 = arith.addf %97, %99 : vector<8x4xf32>
      %101 = vector.extract_strided_slice %94 {offsets = [0, 2], sizes = [8, 4], strides = [1, 1]} : vector<8x6xf32> to vector<8x4xf32>
      %cst_144 = arith.constant dense<0.000000e+00> : vector<8x4xf32>
      %102 = tpu.matmul %57, %101, %cst_144 {dimension_numbers = #tpu.dot_dimension_numbers<[1], [0], [0], [1], [0, 0, 1, 1], [], []>} : vector<8x8xf32>, vector<8x4xf32>, vector<8x4xf32> -> vector<8x4xf32>
      %103 = arith.addf %100, %102 : vector<8x4xf32>
      %104 = vector.broadcast %60 : vector<8x1xf32> to vector<8x4xf32>
      %105 = arith.addf %103, %104 : vector<8x4xf32>
      %c0_145 = arith.constant 0 : index
      %106 = arith.index_cast %arg11 : i32 to index
      %c0_146 = arith.constant 0 : index
      %c0_147 = arith.constant 0 : index
      %107 = vector.load %arg8[%c0_145, %106, %c0_146, %c0_147] : memref<1x4x8x4xf32, #tpu.memory_space<vmem>>, vector<1x1x8x4xf32>
      %108 = vector.shape_cast %107 : vector<1x1x8x4xf32> to vector<8x4xf32>
      %109 = vector.shape_cast %105 : vector<8x4xf32> to vector<1x1x8x4xf32>
      tpu.vector_store %arg8[%c0_145, %106, %c0_146, %c0_147], %109 {strides = array<i32>} : memref<1x4x8x4xf32, #tpu.memory_space<vmem>>, vector<1x1x8x4xf32>,
    }
    %c4_i32_126 = arith.constant 4 : i32
    return
  }
  func.func @transform_0(%arg0: i32) -> (i32, i32, i32, i32, i32) {
    %c0_i32 = arith.constant 0 : i32
    %c0_i32_0 = arith.constant 0 : i32
    %c0_i32_1 = arith.constant 0 : i32
    %c0_i32_2 = arith.constant 0 : i32
    %c0_i32_3 = arith.constant 0 : i32
    return %arg0, %c0_i32, %c0_i32_0, %c0_i32_1, %c0_i32_2 : i32, i32, i32, i32, i32
  }
  func.func @transform_1(%arg0: i32) -> (i32, i32, i32, i32) {
    %c0_i32 = arith.constant 0 : i32
    %c0_i32_0 = arith.constant 0 : i32
    %c0_i32_1 = arith.constant 0 : i32
    %c0_i32_2 = arith.constant 0 : i32
    %c0_i32_3 = arith.constant 0 : i32
    return %c0_i32, %c0_i32_0, %c0_i32_1, %c0_i32_2 : i32, i32, i32, i32
  }
  func.func @transform_2(%arg0: i32) -> (i32, i32) {
    %c0_i32 = arith.constant 0 : i32
    %c0_i32_0 = arith.constant 0 : i32
    %c0_i32_1 = arith.constant 0 : i32
    return %c0_i32, %c0_i32_0 : i32, i32
  }
  func.func @transform_3(%arg0: i32) -> (i32, i32, i32, i32) {
    %c0_i32 = arith.constant 0 : i32
    %c0_i32_0 = arith.constant 0 : i32
    %c0_i32_1 = arith.constant 0 : i32
    %c0_i32_2 = arith.constant 0 : i32
    %c0_i32_3 = arith.constant 0 : i32
    return %c0_i32, %c0_i32_0, %c0_i32_1, %c0_i32_2 : i32, i32, i32, i32
  }
  func.func @transform_4(%arg0: i32) -> (i32, i32) {
    %c0_i32 = arith.constant 0 : i32
    %c0_i32_0 = arith.constant 0 : i32
    %c0_i32_1 = arith.constant 0 : i32
    return %c0_i32, %c0_i32_0 : i32, i32
  }
  func.func @transform_5(%arg0: i32) -> (i32, i32, i32, i32) {
    %c0_i32 = arith.constant 0 : i32
    %c0_i32_0 = arith.constant 0 : i32
    %c0_i32_1 = arith.constant 0 : i32
    %c0_i32_2 = arith.constant 0 : i32
    %c0_i32_3 = arith.constant 0 : i32
    return %c0_i32, %c0_i32_0, %c0_i32_1, %c0_i32_2 : i32, i32, i32, i32
  }
  func.func @transform_6(%arg0: i32) -> (i32, i32) {
    %c0_i32 = arith.constant 0 : i32
    %c0_i32_0 = arith.constant 0 : i32
    %c0_i32_1 = arith.constant 0 : i32
    return %c0_i32, %c0_i32_0 : i32, i32
  }
  func.func @transform_7(%arg0: i32) -> (i32, i32, i32, i32) {
    %c0_i32 = arith.constant 0 : i32
    %c0_i32_0 = arith.constant 0 : i32
    %c0_i32_1 = arith.constant 0 : i32
    %c0_i32_2 = arith.constant 0 : i32
    return %arg0, %c0_i32, %c0_i32_0, %c0_i32_1 : i32, i32, i32, i32
  }
}

module attributes {stable_mosaic.version = 11 : i64} {
  func.func @_stage_kernel(%arg0: i32, %arg1: memref<1x3x4x8x3xf32, #tpu.memory_space<vmem>>, %arg2: memref<3x3x8x8xf32, #tpu.memory_space<vmem>>, %arg3: memref<8x1xf32, #tpu.memory_space<vmem>>, %arg4: memref<3x3x8x8xf32, #tpu.memory_space<vmem>>, %arg5: memref<8x1xf32, #tpu.memory_space<vmem>>, %arg6: memref<3x3x8x8xf32, #tpu.memory_space<vmem>>, %arg7: memref<8x1xf32, #tpu.memory_space<vmem>>, %arg8: memref<1x2x8x2xf32, #tpu.memory_space<vmem>>, %arg9: memref<4x8x4xf32, #tpu.memory_space<vmem>>, %arg10: memref<4x8x4xf32, #tpu.memory_space<vmem>>) attributes {dimension_semantics = [#tpu.dimension_semantics<parallel>], iteration_bounds = array<i64: 4>, scalar_prefetch = 0 : i64, scratch_operands = 2 : i64, tpu.core_type = #tpu.core_type<tc>, window_params = [{transform_indices = @transform_0, window_bounds = array<i64: 1, 3, 4, 8, 3>}, {pipeline_mode = #tpu.pipeline_mode<synchronous>, transform_indices = @transform_1, window_bounds = array<i64: 3, 3, 8, 8>}, {pipeline_mode = #tpu.pipeline_mode<synchronous>, transform_indices = @transform_2, window_bounds = array<i64: 8, 1>}, {pipeline_mode = #tpu.pipeline_mode<synchronous>, transform_indices = @transform_3, window_bounds = array<i64: 3, 3, 8, 8>}, {pipeline_mode = #tpu.pipeline_mode<synchronous>, transform_indices = @transform_4, window_bounds = array<i64: 8, 1>}, {pipeline_mode = #tpu.pipeline_mode<synchronous>, transform_indices = @transform_5, window_bounds = array<i64: 3, 3, 8, 8>}, {pipeline_mode = #tpu.pipeline_mode<synchronous>, transform_indices = @transform_6, window_bounds = array<i64: 8, 1>}, {transform_indices = @transform_7, window_bounds = array<i64: 1, 2, 8, 2>}]} {
    %cst = arith.constant 0.000000e+00 : f32
    %0 = vector.broadcast %cst : f32 to vector<4x8x4xf32>
    %c0 = arith.constant 0 : index
    %c0_0 = arith.constant 0 : index
    %c0_1 = arith.constant 0 : index
    %1 = vector.load %arg9[%c0, %c0_0, %c0_1] : memref<4x8x4xf32, #tpu.memory_space<vmem>>, vector<4x8x4xf32>
    tpu.vector_store %arg9[%c0, %c0_0, %c0_1], %0 {strides = array<i32>} : memref<4x8x4xf32, #tpu.memory_space<vmem>>, vector<4x8x4xf32>,
    %cst_2 = arith.constant 0.000000e+00 : f32
    %2 = vector.broadcast %cst_2 : f32 to vector<4x8x4xf32>
    %c0_3 = arith.constant 0 : index
    %c0_4 = arith.constant 0 : index
    %c0_5 = arith.constant 0 : index
    %3 = vector.load %arg10[%c0_3, %c0_4, %c0_5] : memref<4x8x4xf32, #tpu.memory_space<vmem>>, vector<4x8x4xf32>
    tpu.vector_store %arg10[%c0_3, %c0_4, %c0_5], %2 {strides = array<i32>} : memref<4x8x4xf32, #tpu.memory_space<vmem>>, vector<4x8x4xf32>,
    %c0_6 = arith.constant 0 : index
    %c0_7 = arith.constant 0 : index
    %c0_8 = arith.constant 0 : index
    %c0_9 = arith.constant 0 : index
    %4 = vector.load %arg2[%c0_6, %c0_7, %c0_8, %c0_9] : memref<3x3x8x8xf32, #tpu.memory_space<vmem>>, vector<1x1x8x8xf32>
    %5 = vector.shape_cast %4 : vector<1x1x8x8xf32> to vector<8x8xf32>
    %c0_10 = arith.constant 0 : index
    %c1 = arith.constant 1 : index
    %c0_11 = arith.constant 0 : index
    %c0_12 = arith.constant 0 : index
    %6 = vector.load %arg2[%c0_10, %c1, %c0_11, %c0_12] : memref<3x3x8x8xf32, #tpu.memory_space<vmem>>, vector<1x1x8x8xf32>
    %7 = vector.shape_cast %6 : vector<1x1x8x8xf32> to vector<8x8xf32>
    %c0_13 = arith.constant 0 : index
    %c2 = arith.constant 2 : index
    %c0_14 = arith.constant 0 : index
    %c0_15 = arith.constant 0 : index
    %8 = vector.load %arg2[%c0_13, %c2, %c0_14, %c0_15] : memref<3x3x8x8xf32, #tpu.memory_space<vmem>>, vector<1x1x8x8xf32>
    %9 = vector.shape_cast %8 : vector<1x1x8x8xf32> to vector<8x8xf32>
    %c1_16 = arith.constant 1 : index
    %c0_17 = arith.constant 0 : index
    %c0_18 = arith.constant 0 : index
    %c0_19 = arith.constant 0 : index
    %10 = vector.load %arg2[%c1_16, %c0_17, %c0_18, %c0_19] : memref<3x3x8x8xf32, #tpu.memory_space<vmem>>, vector<1x1x8x8xf32>
    %11 = vector.shape_cast %10 : vector<1x1x8x8xf32> to vector<8x8xf32>
    %c1_20 = arith.constant 1 : index
    %c1_21 = arith.constant 1 : index
    %c0_22 = arith.constant 0 : index
    %c0_23 = arith.constant 0 : index
    %12 = vector.load %arg2[%c1_20, %c1_21, %c0_22, %c0_23] : memref<3x3x8x8xf32, #tpu.memory_space<vmem>>, vector<1x1x8x8xf32>
    %13 = vector.shape_cast %12 : vector<1x1x8x8xf32> to vector<8x8xf32>
    %c1_24 = arith.constant 1 : index
    %c2_25 = arith.constant 2 : index
    %c0_26 = arith.constant 0 : index
    %c0_27 = arith.constant 0 : index
    %14 = vector.load %arg2[%c1_24, %c2_25, %c0_26, %c0_27] : memref<3x3x8x8xf32, #tpu.memory_space<vmem>>, vector<1x1x8x8xf32>
    %15 = vector.shape_cast %14 : vector<1x1x8x8xf32> to vector<8x8xf32>
    %c2_28 = arith.constant 2 : index
    %c0_29 = arith.constant 0 : index
    %c0_30 = arith.constant 0 : index
    %c0_31 = arith.constant 0 : index
    %16 = vector.load %arg2[%c2_28, %c0_29, %c0_30, %c0_31] : memref<3x3x8x8xf32, #tpu.memory_space<vmem>>, vector<1x1x8x8xf32>
    %17 = vector.shape_cast %16 : vector<1x1x8x8xf32> to vector<8x8xf32>
    %c2_32 = arith.constant 2 : index
    %c1_33 = arith.constant 1 : index
    %c0_34 = arith.constant 0 : index
    %c0_35 = arith.constant 0 : index
    %18 = vector.load %arg2[%c2_32, %c1_33, %c0_34, %c0_35] : memref<3x3x8x8xf32, #tpu.memory_space<vmem>>, vector<1x1x8x8xf32>
    %19 = vector.shape_cast %18 : vector<1x1x8x8xf32> to vector<8x8xf32>
    %c2_36 = arith.constant 2 : index
    %c2_37 = arith.constant 2 : index
    %c0_38 = arith.constant 0 : index
    %c0_39 = arith.constant 0 : index
    %20 = vector.load %arg2[%c2_36, %c2_37, %c0_38, %c0_39] : memref<3x3x8x8xf32, #tpu.memory_space<vmem>>, vector<1x1x8x8xf32>
    %21 = vector.shape_cast %20 : vector<1x1x8x8xf32> to vector<8x8xf32>
    %c0_40 = arith.constant 0 : index
    %c0_41 = arith.constant 0 : index
    %c0_42 = arith.constant 0 : index
    %c0_43 = arith.constant 0 : index
    %22 = vector.load %arg4[%c0_40, %c0_41, %c0_42, %c0_43] : memref<3x3x8x8xf32, #tpu.memory_space<vmem>>, vector<1x1x8x8xf32>
    %23 = vector.shape_cast %22 : vector<1x1x8x8xf32> to vector<8x8xf32>
    %c0_44 = arith.constant 0 : index
    %c1_45 = arith.constant 1 : index
    %c0_46 = arith.constant 0 : index
    %c0_47 = arith.constant 0 : index
    %24 = vector.load %arg4[%c0_44, %c1_45, %c0_46, %c0_47] : memref<3x3x8x8xf32, #tpu.memory_space<vmem>>, vector<1x1x8x8xf32>
    %25 = vector.shape_cast %24 : vector<1x1x8x8xf32> to vector<8x8xf32>
    %c0_48 = arith.constant 0 : index
    %c2_49 = arith.constant 2 : index
    %c0_50 = arith.constant 0 : index
    %c0_51 = arith.constant 0 : index
    %26 = vector.load %arg4[%c0_48, %c2_49, %c0_50, %c0_51] : memref<3x3x8x8xf32, #tpu.memory_space<vmem>>, vector<1x1x8x8xf32>
    %27 = vector.shape_cast %26 : vector<1x1x8x8xf32> to vector<8x8xf32>
    %c1_52 = arith.constant 1 : index
    %c0_53 = arith.constant 0 : index
    %c0_54 = arith.constant 0 : index
    %c0_55 = arith.constant 0 : index
    %28 = vector.load %arg4[%c1_52, %c0_53, %c0_54, %c0_55] : memref<3x3x8x8xf32, #tpu.memory_space<vmem>>, vector<1x1x8x8xf32>
    %29 = vector.shape_cast %28 : vector<1x1x8x8xf32> to vector<8x8xf32>
    %c1_56 = arith.constant 1 : index
    %c1_57 = arith.constant 1 : index
    %c0_58 = arith.constant 0 : index
    %c0_59 = arith.constant 0 : index
    %30 = vector.load %arg4[%c1_56, %c1_57, %c0_58, %c0_59] : memref<3x3x8x8xf32, #tpu.memory_space<vmem>>, vector<1x1x8x8xf32>
    %31 = vector.shape_cast %30 : vector<1x1x8x8xf32> to vector<8x8xf32>
    %c1_60 = arith.constant 1 : index
    %c2_61 = arith.constant 2 : index
    %c0_62 = arith.constant 0 : index
    %c0_63 = arith.constant 0 : index
    %32 = vector.load %arg4[%c1_60, %c2_61, %c0_62, %c0_63] : memref<3x3x8x8xf32, #tpu.memory_space<vmem>>, vector<1x1x8x8xf32>
    %33 = vector.shape_cast %32 : vector<1x1x8x8xf32> to vector<8x8xf32>
    %c2_64 = arith.constant 2 : index
    %c0_65 = arith.constant 0 : index
    %c0_66 = arith.constant 0 : index
    %c0_67 = arith.constant 0 : index
    %34 = vector.load %arg4[%c2_64, %c0_65, %c0_66, %c0_67] : memref<3x3x8x8xf32, #tpu.memory_space<vmem>>, vector<1x1x8x8xf32>
    %35 = vector.shape_cast %34 : vector<1x1x8x8xf32> to vector<8x8xf32>
    %c2_68 = arith.constant 2 : index
    %c1_69 = arith.constant 1 : index
    %c0_70 = arith.constant 0 : index
    %c0_71 = arith.constant 0 : index
    %36 = vector.load %arg4[%c2_68, %c1_69, %c0_70, %c0_71] : memref<3x3x8x8xf32, #tpu.memory_space<vmem>>, vector<1x1x8x8xf32>
    %37 = vector.shape_cast %36 : vector<1x1x8x8xf32> to vector<8x8xf32>
    %c2_72 = arith.constant 2 : index
    %c2_73 = arith.constant 2 : index
    %c0_74 = arith.constant 0 : index
    %c0_75 = arith.constant 0 : index
    %38 = vector.load %arg4[%c2_72, %c2_73, %c0_74, %c0_75] : memref<3x3x8x8xf32, #tpu.memory_space<vmem>>, vector<1x1x8x8xf32>
    %39 = vector.shape_cast %38 : vector<1x1x8x8xf32> to vector<8x8xf32>
    %c0_76 = arith.constant 0 : index
    %c0_77 = arith.constant 0 : index
    %c0_78 = arith.constant 0 : index
    %c0_79 = arith.constant 0 : index
    %40 = vector.load %arg6[%c0_76, %c0_77, %c0_78, %c0_79] : memref<3x3x8x8xf32, #tpu.memory_space<vmem>>, vector<1x1x8x8xf32>
    %41 = vector.shape_cast %40 : vector<1x1x8x8xf32> to vector<8x8xf32>
    %c0_80 = arith.constant 0 : index
    %c1_81 = arith.constant 1 : index
    %c0_82 = arith.constant 0 : index
    %c0_83 = arith.constant 0 : index
    %42 = vector.load %arg6[%c0_80, %c1_81, %c0_82, %c0_83] : memref<3x3x8x8xf32, #tpu.memory_space<vmem>>, vector<1x1x8x8xf32>
    %43 = vector.shape_cast %42 : vector<1x1x8x8xf32> to vector<8x8xf32>
    %c0_84 = arith.constant 0 : index
    %c2_85 = arith.constant 2 : index
    %c0_86 = arith.constant 0 : index
    %c0_87 = arith.constant 0 : index
    %44 = vector.load %arg6[%c0_84, %c2_85, %c0_86, %c0_87] : memref<3x3x8x8xf32, #tpu.memory_space<vmem>>, vector<1x1x8x8xf32>
    %45 = vector.shape_cast %44 : vector<1x1x8x8xf32> to vector<8x8xf32>
    %c1_88 = arith.constant 1 : index
    %c0_89 = arith.constant 0 : index
    %c0_90 = arith.constant 0 : index
    %c0_91 = arith.constant 0 : index
    %46 = vector.load %arg6[%c1_88, %c0_89, %c0_90, %c0_91] : memref<3x3x8x8xf32, #tpu.memory_space<vmem>>, vector<1x1x8x8xf32>
    %47 = vector.shape_cast %46 : vector<1x1x8x8xf32> to vector<8x8xf32>
    %c1_92 = arith.constant 1 : index
    %c1_93 = arith.constant 1 : index
    %c0_94 = arith.constant 0 : index
    %c0_95 = arith.constant 0 : index
    %48 = vector.load %arg6[%c1_92, %c1_93, %c0_94, %c0_95] : memref<3x3x8x8xf32, #tpu.memory_space<vmem>>, vector<1x1x8x8xf32>
    %49 = vector.shape_cast %48 : vector<1x1x8x8xf32> to vector<8x8xf32>
    %c1_96 = arith.constant 1 : index
    %c2_97 = arith.constant 2 : index
    %c0_98 = arith.constant 0 : index
    %c0_99 = arith.constant 0 : index
    %50 = vector.load %arg6[%c1_96, %c2_97, %c0_98, %c0_99] : memref<3x3x8x8xf32, #tpu.memory_space<vmem>>, vector<1x1x8x8xf32>
    %51 = vector.shape_cast %50 : vector<1x1x8x8xf32> to vector<8x8xf32>
    %c2_100 = arith.constant 2 : index
    %c0_101 = arith.constant 0 : index
    %c0_102 = arith.constant 0 : index
    %c0_103 = arith.constant 0 : index
    %52 = vector.load %arg6[%c2_100, %c0_101, %c0_102, %c0_103] : memref<3x3x8x8xf32, #tpu.memory_space<vmem>>, vector<1x1x8x8xf32>
    %53 = vector.shape_cast %52 : vector<1x1x8x8xf32> to vector<8x8xf32>
    %c2_104 = arith.constant 2 : index
    %c1_105 = arith.constant 1 : index
    %c0_106 = arith.constant 0 : index
    %c0_107 = arith.constant 0 : index
    %54 = vector.load %arg6[%c2_104, %c1_105, %c0_106, %c0_107] : memref<3x3x8x8xf32, #tpu.memory_space<vmem>>, vector<1x1x8x8xf32>
    %55 = vector.shape_cast %54 : vector<1x1x8x8xf32> to vector<8x8xf32>
    %c2_108 = arith.constant 2 : index
    %c2_109 = arith.constant 2 : index
    %c0_110 = arith.constant 0 : index
    %c0_111 = arith.constant 0 : index
    %56 = vector.load %arg6[%c2_108, %c2_109, %c0_110, %c0_111] : memref<3x3x8x8xf32, #tpu.memory_space<vmem>>, vector<1x1x8x8xf32>
    %57 = vector.shape_cast %56 : vector<1x1x8x8xf32> to vector<8x8xf32>
    %c0_112 = arith.constant 0 : index
    %c0_113 = arith.constant 0 : index
    %58 = vector.load %arg3[%c0_112, %c0_113] : memref<8x1xf32, #tpu.memory_space<vmem>>, vector<8x1xf32>
    %c0_114 = arith.constant 0 : index
    %c0_115 = arith.constant 0 : index
    %59 = vector.load %arg5[%c0_114, %c0_115] : memref<8x1xf32, #tpu.memory_space<vmem>>, vector<8x1xf32>
    %c0_116 = arith.constant 0 : index
    %c0_117 = arith.constant 0 : index
    %60 = vector.load %arg7[%c0_116, %c0_117] : memref<8x1xf32, #tpu.memory_space<vmem>>, vector<8x1xf32>
    %c0_i32 = arith.constant 0 : i32
    %c2_i32 = arith.constant 2 : i32
    %61 = arith.addi %c0_i32, %c2_i32 : i32
    %c1_i32 = arith.constant 1 : i32
    scf.for %arg11 = %c0_i32 to %61 step %c1_i32  : i32 {
      %cst_127 = arith.constant 0.000000e+00 : f32
      %64 = vector.broadcast %cst_127 : f32 to vector<8x2xf32>
      %c0_i32_128 = arith.constant 0 : i32
      %65 = arith.addi %arg11, %c0_i32_128 : i32
      %c0_129 = arith.constant 0 : index
      %66 = arith.index_cast %65 : i32 to index
      %c0_130 = arith.constant 0 : index
      %c0_131 = arith.constant 0 : index
      %c0_132 = arith.constant 0 : index
      %67 = vector.load %arg1[%c0_129, %66, %c0_130, %c0_131, %c0_132] : memref<1x3x4x8x3xf32, #tpu.memory_space<vmem>>, vector<1x1x1x8x3xf32>
      %68 = vector.shape_cast %67 : vector<1x1x1x8x3xf32> to vector<8x3xf32>
      %69 = vector.extract_strided_slice %68 {offsets = [0, 0], sizes = [8, 2], strides = [1, 1]} : vector<8x3xf32> to vector<8x2xf32>
      %cst_133 = arith.constant dense<0.000000e+00> : vector<8x2xf32>
      %70 = tpu.matmul %5, %69, %cst_133 {dimension_numbers = #tpu.dot_dimension_numbers<[1], [0], [0], [1], [0, 0, 1, 1], [], []>} : vector<8x8xf32>, vector<8x2xf32>, vector<8x2xf32> -> vector<8x2xf32>
      %71 = arith.addf %64, %70 : vector<8x2xf32>
      %c0_i32_134 = arith.constant 0 : i32
      %72 = arith.addi %arg11, %c0_i32_134 : i32
      %c0_135 = arith.constant 0 : index
      %73 = arith.index_cast %72 : i32 to index
      %c1_136 = arith.constant 1 : index
      %c0_137 = arith.constant 0 : index
      %c0_138 = arith.constant 0 : index
      %74 = vector.load %arg1[%c0_135, %73, %c1_136, %c0_137, %c0_138] : memref<1x3x4x8x3xf32, #tpu.memory_space<vmem>>, vector<1x1x1x8x3xf32>
      %75 = vector.shape_cast %74 : vector<1x1x1x8x3xf32> to vector<8x3xf32>
      %76 = vector.extract_strided_slice %75 {offsets = [0, 0], sizes = [8, 2], strides = [1, 1]} : vector<8x3xf32> to vector<8x2xf32>
      %cst_139 = arith.constant dense<0.000000e+00> : vector<8x2xf32>
      %77 = tpu.matmul %7, %76, %cst_139 {dimension_numbers = #tpu.dot_dimension_numbers<[1], [0], [0], [1], [0, 0, 1, 1], [], []>} : vector<8x8xf32>, vector<8x2xf32>, vector<8x2xf32> -> vector<8x2xf32>
      %78 = arith.addf %71, %77 : vector<8x2xf32>
      %c0_i32_140 = arith.constant 0 : i32
      %79 = arith.addi %arg11, %c0_i32_140 : i32
      %c0_141 = arith.constant 0 : index
      %80 = arith.index_cast %79 : i32 to index
      %c0_142 = arith.constant 0 : index
      %c0_143 = arith.constant 0 : index
      %c0_144 = arith.constant 0 : index
      %81 = vector.load %arg1[%c0_141, %80, %c0_142, %c0_143, %c0_144] : memref<1x3x4x8x3xf32, #tpu.memory_space<vmem>>, vector<1x1x1x8x3xf32>
      %82 = vector.shape_cast %81 : vector<1x1x1x8x3xf32> to vector<8x3xf32>
      %83 = vector.extract_strided_slice %82 {offsets = [0, 1], sizes = [8, 2], strides = [1, 1]} : vector<8x3xf32> to vector<8x2xf32>
      %cst_145 = arith.constant dense<0.000000e+00> : vector<8x2xf32>
      %84 = tpu.matmul %9, %83, %cst_145 {dimension_numbers = #tpu.dot_dimension_numbers<[1], [0], [0], [1], [0, 0, 1, 1], [], []>} : vector<8x8xf32>, vector<8x2xf32>, vector<8x2xf32> -> vector<8x2xf32>
      %85 = arith.addf %78, %84 : vector<8x2xf32>
      %c0_i32_146 = arith.constant 0 : i32
      %86 = arith.addi %arg11, %c0_i32_146 : i32
      %c0_147 = arith.constant 0 : index
      %87 = arith.index_cast %86 : i32 to index
      %c2_148 = arith.constant 2 : index
      %c0_149 = arith.constant 0 : index
      %c0_150 = arith.constant 0 : index
      %88 = vector.load %arg1[%c0_147, %87, %c2_148, %c0_149, %c0_150] : memref<1x3x4x8x3xf32, #tpu.memory_space<vmem>>, vector<1x1x1x8x3xf32>
      %89 = vector.shape_cast %88 : vector<1x1x1x8x3xf32> to vector<8x3xf32>
      %90 = vector.extract_strided_slice %89 {offsets = [0, 0], sizes = [8, 2], strides = [1, 1]} : vector<8x3xf32> to vector<8x2xf32>
      %cst_151 = arith.constant dense<0.000000e+00> : vector<8x2xf32>
      %91 = tpu.matmul %11, %90, %cst_151 {dimension_numbers = #tpu.dot_dimension_numbers<[1], [0], [0], [1], [0, 0, 1, 1], [], []>} : vector<8x8xf32>, vector<8x2xf32>, vector<8x2xf32> -> vector<8x2xf32>
      %92 = arith.addf %85, %91 : vector<8x2xf32>
      %c0_i32_152 = arith.constant 0 : i32
      %93 = arith.addi %arg11, %c0_i32_152 : i32
      %c0_153 = arith.constant 0 : index
      %94 = arith.index_cast %93 : i32 to index
      %c3 = arith.constant 3 : index
      %c0_154 = arith.constant 0 : index
      %c0_155 = arith.constant 0 : index
      %95 = vector.load %arg1[%c0_153, %94, %c3, %c0_154, %c0_155] : memref<1x3x4x8x3xf32, #tpu.memory_space<vmem>>, vector<1x1x1x8x3xf32>
      %96 = vector.shape_cast %95 : vector<1x1x1x8x3xf32> to vector<8x3xf32>
      %97 = vector.extract_strided_slice %96 {offsets = [0, 0], sizes = [8, 2], strides = [1, 1]} : vector<8x3xf32> to vector<8x2xf32>
      %cst_156 = arith.constant dense<0.000000e+00> : vector<8x2xf32>
      %98 = tpu.matmul %13, %97, %cst_156 {dimension_numbers = #tpu.dot_dimension_numbers<[1], [0], [0], [1], [0, 0, 1, 1], [], []>} : vector<8x8xf32>, vector<8x2xf32>, vector<8x2xf32> -> vector<8x2xf32>
      %99 = arith.addf %92, %98 : vector<8x2xf32>
      %c0_i32_157 = arith.constant 0 : i32
      %100 = arith.addi %arg11, %c0_i32_157 : i32
      %c0_158 = arith.constant 0 : index
      %101 = arith.index_cast %100 : i32 to index
      %c2_159 = arith.constant 2 : index
      %c0_160 = arith.constant 0 : index
      %c0_161 = arith.constant 0 : index
      %102 = vector.load %arg1[%c0_158, %101, %c2_159, %c0_160, %c0_161] : memref<1x3x4x8x3xf32, #tpu.memory_space<vmem>>, vector<1x1x1x8x3xf32>
      %103 = vector.shape_cast %102 : vector<1x1x1x8x3xf32> to vector<8x3xf32>
      %104 = vector.extract_strided_slice %103 {offsets = [0, 1], sizes = [8, 2], strides = [1, 1]} : vector<8x3xf32> to vector<8x2xf32>
      %cst_162 = arith.constant dense<0.000000e+00> : vector<8x2xf32>
      %105 = tpu.matmul %15, %104, %cst_162 {dimension_numbers = #tpu.dot_dimension_numbers<[1], [0], [0], [1], [0, 0, 1, 1], [], []>} : vector<8x8xf32>, vector<8x2xf32>, vector<8x2xf32> -> vector<8x2xf32>
      %106 = arith.addf %99, %105 : vector<8x2xf32>
      %c1_i32_163 = arith.constant 1 : i32
      %107 = arith.addi %arg11, %c1_i32_163 : i32
      %c0_164 = arith.constant 0 : index
      %108 = arith.index_cast %107 : i32 to index
      %c0_165 = arith.constant 0 : index
      %c0_166 = arith.constant 0 : index
      %c0_167 = arith.constant 0 : index
      %109 = vector.load %arg1[%c0_164, %108, %c0_165, %c0_166, %c0_167] : memref<1x3x4x8x3xf32, #tpu.memory_space<vmem>>, vector<1x1x1x8x3xf32>
      %110 = vector.shape_cast %109 : vector<1x1x1x8x3xf32> to vector<8x3xf32>
      %111 = vector.extract_strided_slice %110 {offsets = [0, 0], sizes = [8, 2], strides = [1, 1]} : vector<8x3xf32> to vector<8x2xf32>
      %cst_168 = arith.constant dense<0.000000e+00> : vector<8x2xf32>
      %112 = tpu.matmul %17, %111, %cst_168 {dimension_numbers = #tpu.dot_dimension_numbers<[1], [0], [0], [1], [0, 0, 1, 1], [], []>} : vector<8x8xf32>, vector<8x2xf32>, vector<8x2xf32> -> vector<8x2xf32>
      %113 = arith.addf %106, %112 : vector<8x2xf32>
      %c1_i32_169 = arith.constant 1 : i32
      %114 = arith.addi %arg11, %c1_i32_169 : i32
      %c0_170 = arith.constant 0 : index
      %115 = arith.index_cast %114 : i32 to index
      %c1_171 = arith.constant 1 : index
      %c0_172 = arith.constant 0 : index
      %c0_173 = arith.constant 0 : index
      %116 = vector.load %arg1[%c0_170, %115, %c1_171, %c0_172, %c0_173] : memref<1x3x4x8x3xf32, #tpu.memory_space<vmem>>, vector<1x1x1x8x3xf32>
      %117 = vector.shape_cast %116 : vector<1x1x1x8x3xf32> to vector<8x3xf32>
      %118 = vector.extract_strided_slice %117 {offsets = [0, 0], sizes = [8, 2], strides = [1, 1]} : vector<8x3xf32> to vector<8x2xf32>
      %cst_174 = arith.constant dense<0.000000e+00> : vector<8x2xf32>
      %119 = tpu.matmul %19, %118, %cst_174 {dimension_numbers = #tpu.dot_dimension_numbers<[1], [0], [0], [1], [0, 0, 1, 1], [], []>} : vector<8x8xf32>, vector<8x2xf32>, vector<8x2xf32> -> vector<8x2xf32>
      %120 = arith.addf %113, %119 : vector<8x2xf32>
      %c1_i32_175 = arith.constant 1 : i32
      %121 = arith.addi %arg11, %c1_i32_175 : i32
      %c0_176 = arith.constant 0 : index
      %122 = arith.index_cast %121 : i32 to index
      %c0_177 = arith.constant 0 : index
      %c0_178 = arith.constant 0 : index
      %c0_179 = arith.constant 0 : index
      %123 = vector.load %arg1[%c0_176, %122, %c0_177, %c0_178, %c0_179] : memref<1x3x4x8x3xf32, #tpu.memory_space<vmem>>, vector<1x1x1x8x3xf32>
      %124 = vector.shape_cast %123 : vector<1x1x1x8x3xf32> to vector<8x3xf32>
      %125 = vector.extract_strided_slice %124 {offsets = [0, 1], sizes = [8, 2], strides = [1, 1]} : vector<8x3xf32> to vector<8x2xf32>
      %cst_180 = arith.constant dense<0.000000e+00> : vector<8x2xf32>
      %126 = tpu.matmul %21, %125, %cst_180 {dimension_numbers = #tpu.dot_dimension_numbers<[1], [0], [0], [1], [0, 0, 1, 1], [], []>} : vector<8x8xf32>, vector<8x2xf32>, vector<8x2xf32> -> vector<8x2xf32>
      %127 = arith.addf %120, %126 : vector<8x2xf32>
      %128 = vector.broadcast %58 : vector<8x1xf32> to vector<8x2xf32>
      %129 = arith.addf %127, %128 : vector<8x2xf32>
      %c1_i32_181 = arith.constant 1 : i32
      %130 = arith.addi %arg11, %c1_i32_181 : i32
      %131 = arith.index_cast %130 : i32 to index
      %c0_182 = arith.constant 0 : index
      %c1_183 = arith.constant 1 : index
      %132 = vector.load %arg9[%131, %c0_182, %c1_183] : memref<4x8x4xf32, #tpu.memory_space<vmem>>, vector<1x8x2xf32>
      %133 = vector.shape_cast %132 : vector<1x8x2xf32> to vector<8x2xf32>
      %134 = vector.shape_cast %129 : vector<8x2xf32> to vector<1x8x2xf32>
      tpu.vector_store %arg9[%131, %c0_182, %c1_183], %134 {strides = array<i32>} : memref<4x8x4xf32, #tpu.memory_space<vmem>>, vector<1x8x2xf32>,
    }
    %c2_i32_118 = arith.constant 2 : i32
    %c0_i32_119 = arith.constant 0 : i32
    %c2_i32_120 = arith.constant 2 : i32
    %62 = arith.addi %c0_i32_119, %c2_i32_120 : i32
    %c1_i32_121 = arith.constant 1 : i32
    scf.for %arg11 = %c0_i32_119 to %62 step %c1_i32_121  : i32 {
      %cst_127 = arith.constant 0.000000e+00 : f32
      %64 = vector.broadcast %cst_127 : f32 to vector<8x2xf32>
      %c0_i32_128 = arith.constant 0 : i32
      %65 = arith.addi %arg11, %c0_i32_128 : i32
      %66 = arith.index_cast %65 : i32 to index
      %c0_129 = arith.constant 0 : index
      %c0_130 = arith.constant 0 : index
      %67 = vector.load %arg9[%66, %c0_129, %c0_130] : memref<4x8x4xf32, #tpu.memory_space<vmem>>, vector<1x8x4xf32>
      %68 = vector.shape_cast %67 : vector<1x8x4xf32> to vector<8x4xf32>
      %69 = vector.extract_strided_slice %68 {offsets = [0, 0], sizes = [8, 2], strides = [1, 1]} : vector<8x4xf32> to vector<8x2xf32>
      %cst_131 = arith.constant dense<0.000000e+00> : vector<8x2xf32>
      %70 = tpu.matmul %23, %69, %cst_131 {dimension_numbers = #tpu.dot_dimension_numbers<[1], [0], [0], [1], [0, 0, 1, 1], [], []>} : vector<8x8xf32>, vector<8x2xf32>, vector<8x2xf32> -> vector<8x2xf32>
      %71 = arith.addf %64, %70 : vector<8x2xf32>
      %72 = vector.extract_strided_slice %68 {offsets = [0, 1], sizes = [8, 2], strides = [1, 1]} : vector<8x4xf32> to vector<8x2xf32>
      %cst_132 = arith.constant dense<0.000000e+00> : vector<8x2xf32>
      %73 = tpu.matmul %25, %72, %cst_132 {dimension_numbers = #tpu.dot_dimension_numbers<[1], [0], [0], [1], [0, 0, 1, 1], [], []>} : vector<8x8xf32>, vector<8x2xf32>, vector<8x2xf32> -> vector<8x2xf32>
      %74 = arith.addf %71, %73 : vector<8x2xf32>
      %75 = vector.extract_strided_slice %68 {offsets = [0, 2], sizes = [8, 2], strides = [1, 1]} : vector<8x4xf32> to vector<8x2xf32>
      %cst_133 = arith.constant dense<0.000000e+00> : vector<8x2xf32>
      %76 = tpu.matmul %27, %75, %cst_133 {dimension_numbers = #tpu.dot_dimension_numbers<[1], [0], [0], [1], [0, 0, 1, 1], [], []>} : vector<8x8xf32>, vector<8x2xf32>, vector<8x2xf32> -> vector<8x2xf32>
      %77 = arith.addf %74, %76 : vector<8x2xf32>
      %c1_i32_134 = arith.constant 1 : i32
      %78 = arith.addi %arg11, %c1_i32_134 : i32
      %79 = arith.index_cast %78 : i32 to index
      %c0_135 = arith.constant 0 : index
      %c0_136 = arith.constant 0 : index
      %80 = vector.load %arg9[%79, %c0_135, %c0_136] : memref<4x8x4xf32, #tpu.memory_space<vmem>>, vector<1x8x4xf32>
      %81 = vector.shape_cast %80 : vector<1x8x4xf32> to vector<8x4xf32>
      %82 = vector.extract_strided_slice %81 {offsets = [0, 0], sizes = [8, 2], strides = [1, 1]} : vector<8x4xf32> to vector<8x2xf32>
      %cst_137 = arith.constant dense<0.000000e+00> : vector<8x2xf32>
      %83 = tpu.matmul %29, %82, %cst_137 {dimension_numbers = #tpu.dot_dimension_numbers<[1], [0], [0], [1], [0, 0, 1, 1], [], []>} : vector<8x8xf32>, vector<8x2xf32>, vector<8x2xf32> -> vector<8x2xf32>
      %84 = arith.addf %77, %83 : vector<8x2xf32>
      %85 = vector.extract_strided_slice %81 {offsets = [0, 1], sizes = [8, 2], strides = [1, 1]} : vector<8x4xf32> to vector<8x2xf32>
      %cst_138 = arith.constant dense<0.000000e+00> : vector<8x2xf32>
      %86 = tpu.matmul %31, %85, %cst_138 {dimension_numbers = #tpu.dot_dimension_numbers<[1], [0], [0], [1], [0, 0, 1, 1], [], []>} : vector<8x8xf32>, vector<8x2xf32>, vector<8x2xf32> -> vector<8x2xf32>
      %87 = arith.addf %84, %86 : vector<8x2xf32>
      %88 = vector.extract_strided_slice %81 {offsets = [0, 2], sizes = [8, 2], strides = [1, 1]} : vector<8x4xf32> to vector<8x2xf32>
      %cst_139 = arith.constant dense<0.000000e+00> : vector<8x2xf32>
      %89 = tpu.matmul %33, %88, %cst_139 {dimension_numbers = #tpu.dot_dimension_numbers<[1], [0], [0], [1], [0, 0, 1, 1], [], []>} : vector<8x8xf32>, vector<8x2xf32>, vector<8x2xf32> -> vector<8x2xf32>
      %90 = arith.addf %87, %89 : vector<8x2xf32>
      %c2_i32_140 = arith.constant 2 : i32
      %91 = arith.addi %arg11, %c2_i32_140 : i32
      %92 = arith.index_cast %91 : i32 to index
      %c0_141 = arith.constant 0 : index
      %c0_142 = arith.constant 0 : index
      %93 = vector.load %arg9[%92, %c0_141, %c0_142] : memref<4x8x4xf32, #tpu.memory_space<vmem>>, vector<1x8x4xf32>
      %94 = vector.shape_cast %93 : vector<1x8x4xf32> to vector<8x4xf32>
      %95 = vector.extract_strided_slice %94 {offsets = [0, 0], sizes = [8, 2], strides = [1, 1]} : vector<8x4xf32> to vector<8x2xf32>
      %cst_143 = arith.constant dense<0.000000e+00> : vector<8x2xf32>
      %96 = tpu.matmul %35, %95, %cst_143 {dimension_numbers = #tpu.dot_dimension_numbers<[1], [0], [0], [1], [0, 0, 1, 1], [], []>} : vector<8x8xf32>, vector<8x2xf32>, vector<8x2xf32> -> vector<8x2xf32>
      %97 = arith.addf %90, %96 : vector<8x2xf32>
      %98 = vector.extract_strided_slice %94 {offsets = [0, 1], sizes = [8, 2], strides = [1, 1]} : vector<8x4xf32> to vector<8x2xf32>
      %cst_144 = arith.constant dense<0.000000e+00> : vector<8x2xf32>
      %99 = tpu.matmul %37, %98, %cst_144 {dimension_numbers = #tpu.dot_dimension_numbers<[1], [0], [0], [1], [0, 0, 1, 1], [], []>} : vector<8x8xf32>, vector<8x2xf32>, vector<8x2xf32> -> vector<8x2xf32>
      %100 = arith.addf %97, %99 : vector<8x2xf32>
      %101 = vector.extract_strided_slice %94 {offsets = [0, 2], sizes = [8, 2], strides = [1, 1]} : vector<8x4xf32> to vector<8x2xf32>
      %cst_145 = arith.constant dense<0.000000e+00> : vector<8x2xf32>
      %102 = tpu.matmul %39, %101, %cst_145 {dimension_numbers = #tpu.dot_dimension_numbers<[1], [0], [0], [1], [0, 0, 1, 1], [], []>} : vector<8x8xf32>, vector<8x2xf32>, vector<8x2xf32> -> vector<8x2xf32>
      %103 = arith.addf %100, %102 : vector<8x2xf32>
      %104 = vector.broadcast %59 : vector<8x1xf32> to vector<8x2xf32>
      %105 = arith.addf %103, %104 : vector<8x2xf32>
      %c1_i32_146 = arith.constant 1 : i32
      %106 = arith.addi %arg11, %c1_i32_146 : i32
      %107 = arith.index_cast %106 : i32 to index
      %c0_147 = arith.constant 0 : index
      %c1_148 = arith.constant 1 : index
      %108 = vector.load %arg10[%107, %c0_147, %c1_148] : memref<4x8x4xf32, #tpu.memory_space<vmem>>, vector<1x8x2xf32>
      %109 = vector.shape_cast %108 : vector<1x8x2xf32> to vector<8x2xf32>
      %110 = vector.shape_cast %105 : vector<8x2xf32> to vector<1x8x2xf32>
      tpu.vector_store %arg10[%107, %c0_147, %c1_148], %110 {strides = array<i32>} : memref<4x8x4xf32, #tpu.memory_space<vmem>>, vector<1x8x2xf32>,
    }
    %c2_i32_122 = arith.constant 2 : i32
    %c0_i32_123 = arith.constant 0 : i32
    %c2_i32_124 = arith.constant 2 : i32
    %63 = arith.addi %c0_i32_123, %c2_i32_124 : i32
    %c1_i32_125 = arith.constant 1 : i32
    scf.for %arg11 = %c0_i32_123 to %63 step %c1_i32_125  : i32 {
      %cst_127 = arith.constant 0.000000e+00 : f32
      %64 = vector.broadcast %cst_127 : f32 to vector<8x2xf32>
      %c0_i32_128 = arith.constant 0 : i32
      %65 = arith.addi %arg11, %c0_i32_128 : i32
      %66 = arith.index_cast %65 : i32 to index
      %c0_129 = arith.constant 0 : index
      %c0_130 = arith.constant 0 : index
      %67 = vector.load %arg10[%66, %c0_129, %c0_130] : memref<4x8x4xf32, #tpu.memory_space<vmem>>, vector<1x8x4xf32>
      %68 = vector.shape_cast %67 : vector<1x8x4xf32> to vector<8x4xf32>
      %69 = vector.extract_strided_slice %68 {offsets = [0, 0], sizes = [8, 2], strides = [1, 1]} : vector<8x4xf32> to vector<8x2xf32>
      %cst_131 = arith.constant dense<0.000000e+00> : vector<8x2xf32>
      %70 = tpu.matmul %41, %69, %cst_131 {dimension_numbers = #tpu.dot_dimension_numbers<[1], [0], [0], [1], [0, 0, 1, 1], [], []>} : vector<8x8xf32>, vector<8x2xf32>, vector<8x2xf32> -> vector<8x2xf32>
      %71 = arith.addf %64, %70 : vector<8x2xf32>
      %72 = vector.extract_strided_slice %68 {offsets = [0, 1], sizes = [8, 2], strides = [1, 1]} : vector<8x4xf32> to vector<8x2xf32>
      %cst_132 = arith.constant dense<0.000000e+00> : vector<8x2xf32>
      %73 = tpu.matmul %43, %72, %cst_132 {dimension_numbers = #tpu.dot_dimension_numbers<[1], [0], [0], [1], [0, 0, 1, 1], [], []>} : vector<8x8xf32>, vector<8x2xf32>, vector<8x2xf32> -> vector<8x2xf32>
      %74 = arith.addf %71, %73 : vector<8x2xf32>
      %75 = vector.extract_strided_slice %68 {offsets = [0, 2], sizes = [8, 2], strides = [1, 1]} : vector<8x4xf32> to vector<8x2xf32>
      %cst_133 = arith.constant dense<0.000000e+00> : vector<8x2xf32>
      %76 = tpu.matmul %45, %75, %cst_133 {dimension_numbers = #tpu.dot_dimension_numbers<[1], [0], [0], [1], [0, 0, 1, 1], [], []>} : vector<8x8xf32>, vector<8x2xf32>, vector<8x2xf32> -> vector<8x2xf32>
      %77 = arith.addf %74, %76 : vector<8x2xf32>
      %c1_i32_134 = arith.constant 1 : i32
      %78 = arith.addi %arg11, %c1_i32_134 : i32
      %79 = arith.index_cast %78 : i32 to index
      %c0_135 = arith.constant 0 : index
      %c0_136 = arith.constant 0 : index
      %80 = vector.load %arg10[%79, %c0_135, %c0_136] : memref<4x8x4xf32, #tpu.memory_space<vmem>>, vector<1x8x4xf32>
      %81 = vector.shape_cast %80 : vector<1x8x4xf32> to vector<8x4xf32>
      %82 = vector.extract_strided_slice %81 {offsets = [0, 0], sizes = [8, 2], strides = [1, 1]} : vector<8x4xf32> to vector<8x2xf32>
      %cst_137 = arith.constant dense<0.000000e+00> : vector<8x2xf32>
      %83 = tpu.matmul %47, %82, %cst_137 {dimension_numbers = #tpu.dot_dimension_numbers<[1], [0], [0], [1], [0, 0, 1, 1], [], []>} : vector<8x8xf32>, vector<8x2xf32>, vector<8x2xf32> -> vector<8x2xf32>
      %84 = arith.addf %77, %83 : vector<8x2xf32>
      %85 = vector.extract_strided_slice %81 {offsets = [0, 1], sizes = [8, 2], strides = [1, 1]} : vector<8x4xf32> to vector<8x2xf32>
      %cst_138 = arith.constant dense<0.000000e+00> : vector<8x2xf32>
      %86 = tpu.matmul %49, %85, %cst_138 {dimension_numbers = #tpu.dot_dimension_numbers<[1], [0], [0], [1], [0, 0, 1, 1], [], []>} : vector<8x8xf32>, vector<8x2xf32>, vector<8x2xf32> -> vector<8x2xf32>
      %87 = arith.addf %84, %86 : vector<8x2xf32>
      %88 = vector.extract_strided_slice %81 {offsets = [0, 2], sizes = [8, 2], strides = [1, 1]} : vector<8x4xf32> to vector<8x2xf32>
      %cst_139 = arith.constant dense<0.000000e+00> : vector<8x2xf32>
      %89 = tpu.matmul %51, %88, %cst_139 {dimension_numbers = #tpu.dot_dimension_numbers<[1], [0], [0], [1], [0, 0, 1, 1], [], []>} : vector<8x8xf32>, vector<8x2xf32>, vector<8x2xf32> -> vector<8x2xf32>
      %90 = arith.addf %87, %89 : vector<8x2xf32>
      %c2_i32_140 = arith.constant 2 : i32
      %91 = arith.addi %arg11, %c2_i32_140 : i32
      %92 = arith.index_cast %91 : i32 to index
      %c0_141 = arith.constant 0 : index
      %c0_142 = arith.constant 0 : index
      %93 = vector.load %arg10[%92, %c0_141, %c0_142] : memref<4x8x4xf32, #tpu.memory_space<vmem>>, vector<1x8x4xf32>
      %94 = vector.shape_cast %93 : vector<1x8x4xf32> to vector<8x4xf32>
      %95 = vector.extract_strided_slice %94 {offsets = [0, 0], sizes = [8, 2], strides = [1, 1]} : vector<8x4xf32> to vector<8x2xf32>
      %cst_143 = arith.constant dense<0.000000e+00> : vector<8x2xf32>
      %96 = tpu.matmul %53, %95, %cst_143 {dimension_numbers = #tpu.dot_dimension_numbers<[1], [0], [0], [1], [0, 0, 1, 1], [], []>} : vector<8x8xf32>, vector<8x2xf32>, vector<8x2xf32> -> vector<8x2xf32>
      %97 = arith.addf %90, %96 : vector<8x2xf32>
      %98 = vector.extract_strided_slice %94 {offsets = [0, 1], sizes = [8, 2], strides = [1, 1]} : vector<8x4xf32> to vector<8x2xf32>
      %cst_144 = arith.constant dense<0.000000e+00> : vector<8x2xf32>
      %99 = tpu.matmul %55, %98, %cst_144 {dimension_numbers = #tpu.dot_dimension_numbers<[1], [0], [0], [1], [0, 0, 1, 1], [], []>} : vector<8x8xf32>, vector<8x2xf32>, vector<8x2xf32> -> vector<8x2xf32>
      %100 = arith.addf %97, %99 : vector<8x2xf32>
      %101 = vector.extract_strided_slice %94 {offsets = [0, 2], sizes = [8, 2], strides = [1, 1]} : vector<8x4xf32> to vector<8x2xf32>
      %cst_145 = arith.constant dense<0.000000e+00> : vector<8x2xf32>
      %102 = tpu.matmul %57, %101, %cst_145 {dimension_numbers = #tpu.dot_dimension_numbers<[1], [0], [0], [1], [0, 0, 1, 1], [], []>} : vector<8x8xf32>, vector<8x2xf32>, vector<8x2xf32> -> vector<8x2xf32>
      %103 = arith.addf %100, %102 : vector<8x2xf32>
      %104 = vector.broadcast %60 : vector<8x1xf32> to vector<8x2xf32>
      %105 = arith.addf %103, %104 : vector<8x2xf32>
      %c0_146 = arith.constant 0 : index
      %106 = arith.index_cast %arg11 : i32 to index
      %c0_147 = arith.constant 0 : index
      %c0_148 = arith.constant 0 : index
      %107 = vector.load %arg8[%c0_146, %106, %c0_147, %c0_148] : memref<1x2x8x2xf32, #tpu.memory_space<vmem>>, vector<1x1x8x2xf32>
      %108 = vector.shape_cast %107 : vector<1x1x8x2xf32> to vector<8x2xf32>
      %109 = vector.shape_cast %105 : vector<8x2xf32> to vector<1x1x8x2xf32>
      tpu.vector_store %arg8[%c0_146, %106, %c0_147, %c0_148], %109 {strides = array<i32>} : memref<1x2x8x2xf32, #tpu.memory_space<vmem>>, vector<1x1x8x2xf32>,
    }
    %c2_i32_126 = arith.constant 2 : i32
    return
  }
  func.func @transform_0(%arg0: i32) -> (i32, i32, i32, i32, i32) {
    %c0_i32 = arith.constant 0 : i32
    %c0_i32_0 = arith.constant 0 : i32
    %c0_i32_1 = arith.constant 0 : i32
    %c0_i32_2 = arith.constant 0 : i32
    %c0_i32_3 = arith.constant 0 : i32
    return %arg0, %c0_i32, %c0_i32_0, %c0_i32_1, %c0_i32_2 : i32, i32, i32, i32, i32
  }
  func.func @transform_1(%arg0: i32) -> (i32, i32, i32, i32) {
    %c0_i32 = arith.constant 0 : i32
    %c0_i32_0 = arith.constant 0 : i32
    %c0_i32_1 = arith.constant 0 : i32
    %c0_i32_2 = arith.constant 0 : i32
    %c0_i32_3 = arith.constant 0 : i32
    return %c0_i32, %c0_i32_0, %c0_i32_1, %c0_i32_2 : i32, i32, i32, i32
  }
  func.func @transform_2(%arg0: i32) -> (i32, i32) {
    %c0_i32 = arith.constant 0 : i32
    %c0_i32_0 = arith.constant 0 : i32
    %c0_i32_1 = arith.constant 0 : i32
    return %c0_i32, %c0_i32_0 : i32, i32
  }
  func.func @transform_3(%arg0: i32) -> (i32, i32, i32, i32) {
    %c0_i32 = arith.constant 0 : i32
    %c0_i32_0 = arith.constant 0 : i32
    %c0_i32_1 = arith.constant 0 : i32
    %c0_i32_2 = arith.constant 0 : i32
    %c0_i32_3 = arith.constant 0 : i32
    return %c0_i32, %c0_i32_0, %c0_i32_1, %c0_i32_2 : i32, i32, i32, i32
  }
  func.func @transform_4(%arg0: i32) -> (i32, i32) {
    %c0_i32 = arith.constant 0 : i32
    %c0_i32_0 = arith.constant 0 : i32
    %c0_i32_1 = arith.constant 0 : i32
    return %c0_i32, %c0_i32_0 : i32, i32
  }
  func.func @transform_5(%arg0: i32) -> (i32, i32, i32, i32) {
    %c0_i32 = arith.constant 0 : i32
    %c0_i32_0 = arith.constant 0 : i32
    %c0_i32_1 = arith.constant 0 : i32
    %c0_i32_2 = arith.constant 0 : i32
    %c0_i32_3 = arith.constant 0 : i32
    return %c0_i32, %c0_i32_0, %c0_i32_1, %c0_i32_2 : i32, i32, i32, i32
  }
  func.func @transform_6(%arg0: i32) -> (i32, i32) {
    %c0_i32 = arith.constant 0 : i32
    %c0_i32_0 = arith.constant 0 : i32
    %c0_i32_1 = arith.constant 0 : i32
    return %c0_i32, %c0_i32_0 : i32, i32
  }
  func.func @transform_7(%arg0: i32) -> (i32, i32, i32, i32) {
    %c0_i32 = arith.constant 0 : i32
    %c0_i32_0 = arith.constant 0 : i32
    %c0_i32_1 = arith.constant 0 : i32
    %c0_i32_2 = arith.constant 0 : i32
    return %arg0, %c0_i32, %c0_i32_0, %c0_i32_1 : i32, i32, i32, i32
  }
}

module attributes {stable_mosaic.version = 11 : i64} {
  func.func @_stage_kernel(%arg0: i32, %arg1: memref<1x2x4x8x2xf32, #tpu.memory_space<vmem>>, %arg2: memref<3x3x16x8xf32, #tpu.memory_space<vmem>>, %arg3: memref<16x1xf32, #tpu.memory_space<vmem>>, %arg4: memref<3x3x16x16xf32, #tpu.memory_space<vmem>>, %arg5: memref<16x1xf32, #tpu.memory_space<vmem>>, %arg6: memref<3x3x16x16xf32, #tpu.memory_space<vmem>>, %arg7: memref<16x1xf32, #tpu.memory_space<vmem>>, %arg8: memref<1x1x16x1xf32, #tpu.memory_space<vmem>>, %arg9: memref<3x16x3xf32, #tpu.memory_space<vmem>>, %arg10: memref<3x16x3xf32, #tpu.memory_space<vmem>>) attributes {dimension_semantics = [#tpu.dimension_semantics<parallel>], iteration_bounds = array<i64: 4>, scalar_prefetch = 0 : i64, scratch_operands = 2 : i64, tpu.core_type = #tpu.core_type<tc>, window_params = [{transform_indices = @transform_0, window_bounds = array<i64: 1, 2, 4, 8, 2>}, {pipeline_mode = #tpu.pipeline_mode<synchronous>, transform_indices = @transform_1, window_bounds = array<i64: 3, 3, 16, 8>}, {pipeline_mode = #tpu.pipeline_mode<synchronous>, transform_indices = @transform_2, window_bounds = array<i64: 16, 1>}, {pipeline_mode = #tpu.pipeline_mode<synchronous>, transform_indices = @transform_3, window_bounds = array<i64: 3, 3, 16, 16>}, {pipeline_mode = #tpu.pipeline_mode<synchronous>, transform_indices = @transform_4, window_bounds = array<i64: 16, 1>}, {pipeline_mode = #tpu.pipeline_mode<synchronous>, transform_indices = @transform_5, window_bounds = array<i64: 3, 3, 16, 16>}, {pipeline_mode = #tpu.pipeline_mode<synchronous>, transform_indices = @transform_6, window_bounds = array<i64: 16, 1>}, {transform_indices = @transform_7, window_bounds = array<i64: 1, 1, 16, 1>}]} {
    %cst = arith.constant 0.000000e+00 : f32
    %0 = vector.broadcast %cst : f32 to vector<3x16x3xf32>
    %c0 = arith.constant 0 : index
    %c0_0 = arith.constant 0 : index
    %c0_1 = arith.constant 0 : index
    %1 = vector.load %arg9[%c0, %c0_0, %c0_1] : memref<3x16x3xf32, #tpu.memory_space<vmem>>, vector<3x16x3xf32>
    tpu.vector_store %arg9[%c0, %c0_0, %c0_1], %0 {strides = array<i32>} : memref<3x16x3xf32, #tpu.memory_space<vmem>>, vector<3x16x3xf32>,
    %cst_2 = arith.constant 0.000000e+00 : f32
    %2 = vector.broadcast %cst_2 : f32 to vector<3x16x3xf32>
    %c0_3 = arith.constant 0 : index
    %c0_4 = arith.constant 0 : index
    %c0_5 = arith.constant 0 : index
    %3 = vector.load %arg10[%c0_3, %c0_4, %c0_5] : memref<3x16x3xf32, #tpu.memory_space<vmem>>, vector<3x16x3xf32>
    tpu.vector_store %arg10[%c0_3, %c0_4, %c0_5], %2 {strides = array<i32>} : memref<3x16x3xf32, #tpu.memory_space<vmem>>, vector<3x16x3xf32>,
    %c0_6 = arith.constant 0 : index
    %c0_7 = arith.constant 0 : index
    %c0_8 = arith.constant 0 : index
    %c0_9 = arith.constant 0 : index
    %4 = vector.load %arg2[%c0_6, %c0_7, %c0_8, %c0_9] : memref<3x3x16x8xf32, #tpu.memory_space<vmem>>, vector<1x1x16x8xf32>
    %5 = vector.shape_cast %4 : vector<1x1x16x8xf32> to vector<16x8xf32>
    %c0_10 = arith.constant 0 : index
    %c1 = arith.constant 1 : index
    %c0_11 = arith.constant 0 : index
    %c0_12 = arith.constant 0 : index
    %6 = vector.load %arg2[%c0_10, %c1, %c0_11, %c0_12] : memref<3x3x16x8xf32, #tpu.memory_space<vmem>>, vector<1x1x16x8xf32>
    %7 = vector.shape_cast %6 : vector<1x1x16x8xf32> to vector<16x8xf32>
    %c0_13 = arith.constant 0 : index
    %c2 = arith.constant 2 : index
    %c0_14 = arith.constant 0 : index
    %c0_15 = arith.constant 0 : index
    %8 = vector.load %arg2[%c0_13, %c2, %c0_14, %c0_15] : memref<3x3x16x8xf32, #tpu.memory_space<vmem>>, vector<1x1x16x8xf32>
    %9 = vector.shape_cast %8 : vector<1x1x16x8xf32> to vector<16x8xf32>
    %c1_16 = arith.constant 1 : index
    %c0_17 = arith.constant 0 : index
    %c0_18 = arith.constant 0 : index
    %c0_19 = arith.constant 0 : index
    %10 = vector.load %arg2[%c1_16, %c0_17, %c0_18, %c0_19] : memref<3x3x16x8xf32, #tpu.memory_space<vmem>>, vector<1x1x16x8xf32>
    %11 = vector.shape_cast %10 : vector<1x1x16x8xf32> to vector<16x8xf32>
    %c1_20 = arith.constant 1 : index
    %c1_21 = arith.constant 1 : index
    %c0_22 = arith.constant 0 : index
    %c0_23 = arith.constant 0 : index
    %12 = vector.load %arg2[%c1_20, %c1_21, %c0_22, %c0_23] : memref<3x3x16x8xf32, #tpu.memory_space<vmem>>, vector<1x1x16x8xf32>
    %13 = vector.shape_cast %12 : vector<1x1x16x8xf32> to vector<16x8xf32>
    %c1_24 = arith.constant 1 : index
    %c2_25 = arith.constant 2 : index
    %c0_26 = arith.constant 0 : index
    %c0_27 = arith.constant 0 : index
    %14 = vector.load %arg2[%c1_24, %c2_25, %c0_26, %c0_27] : memref<3x3x16x8xf32, #tpu.memory_space<vmem>>, vector<1x1x16x8xf32>
    %15 = vector.shape_cast %14 : vector<1x1x16x8xf32> to vector<16x8xf32>
    %c2_28 = arith.constant 2 : index
    %c0_29 = arith.constant 0 : index
    %c0_30 = arith.constant 0 : index
    %c0_31 = arith.constant 0 : index
    %16 = vector.load %arg2[%c2_28, %c0_29, %c0_30, %c0_31] : memref<3x3x16x8xf32, #tpu.memory_space<vmem>>, vector<1x1x16x8xf32>
    %17 = vector.shape_cast %16 : vector<1x1x16x8xf32> to vector<16x8xf32>
    %c2_32 = arith.constant 2 : index
    %c1_33 = arith.constant 1 : index
    %c0_34 = arith.constant 0 : index
    %c0_35 = arith.constant 0 : index
    %18 = vector.load %arg2[%c2_32, %c1_33, %c0_34, %c0_35] : memref<3x3x16x8xf32, #tpu.memory_space<vmem>>, vector<1x1x16x8xf32>
    %19 = vector.shape_cast %18 : vector<1x1x16x8xf32> to vector<16x8xf32>
    %c2_36 = arith.constant 2 : index
    %c2_37 = arith.constant 2 : index
    %c0_38 = arith.constant 0 : index
    %c0_39 = arith.constant 0 : index
    %20 = vector.load %arg2[%c2_36, %c2_37, %c0_38, %c0_39] : memref<3x3x16x8xf32, #tpu.memory_space<vmem>>, vector<1x1x16x8xf32>
    %21 = vector.shape_cast %20 : vector<1x1x16x8xf32> to vector<16x8xf32>
    %c0_40 = arith.constant 0 : index
    %c0_41 = arith.constant 0 : index
    %c0_42 = arith.constant 0 : index
    %c0_43 = arith.constant 0 : index
    %22 = vector.load %arg4[%c0_40, %c0_41, %c0_42, %c0_43] : memref<3x3x16x16xf32, #tpu.memory_space<vmem>>, vector<1x1x16x16xf32>
    %23 = vector.shape_cast %22 : vector<1x1x16x16xf32> to vector<16x16xf32>
    %c0_44 = arith.constant 0 : index
    %c1_45 = arith.constant 1 : index
    %c0_46 = arith.constant 0 : index
    %c0_47 = arith.constant 0 : index
    %24 = vector.load %arg4[%c0_44, %c1_45, %c0_46, %c0_47] : memref<3x3x16x16xf32, #tpu.memory_space<vmem>>, vector<1x1x16x16xf32>
    %25 = vector.shape_cast %24 : vector<1x1x16x16xf32> to vector<16x16xf32>
    %c0_48 = arith.constant 0 : index
    %c2_49 = arith.constant 2 : index
    %c0_50 = arith.constant 0 : index
    %c0_51 = arith.constant 0 : index
    %26 = vector.load %arg4[%c0_48, %c2_49, %c0_50, %c0_51] : memref<3x3x16x16xf32, #tpu.memory_space<vmem>>, vector<1x1x16x16xf32>
    %27 = vector.shape_cast %26 : vector<1x1x16x16xf32> to vector<16x16xf32>
    %c1_52 = arith.constant 1 : index
    %c0_53 = arith.constant 0 : index
    %c0_54 = arith.constant 0 : index
    %c0_55 = arith.constant 0 : index
    %28 = vector.load %arg4[%c1_52, %c0_53, %c0_54, %c0_55] : memref<3x3x16x16xf32, #tpu.memory_space<vmem>>, vector<1x1x16x16xf32>
    %29 = vector.shape_cast %28 : vector<1x1x16x16xf32> to vector<16x16xf32>
    %c1_56 = arith.constant 1 : index
    %c1_57 = arith.constant 1 : index
    %c0_58 = arith.constant 0 : index
    %c0_59 = arith.constant 0 : index
    %30 = vector.load %arg4[%c1_56, %c1_57, %c0_58, %c0_59] : memref<3x3x16x16xf32, #tpu.memory_space<vmem>>, vector<1x1x16x16xf32>
    %31 = vector.shape_cast %30 : vector<1x1x16x16xf32> to vector<16x16xf32>
    %c1_60 = arith.constant 1 : index
    %c2_61 = arith.constant 2 : index
    %c0_62 = arith.constant 0 : index
    %c0_63 = arith.constant 0 : index
    %32 = vector.load %arg4[%c1_60, %c2_61, %c0_62, %c0_63] : memref<3x3x16x16xf32, #tpu.memory_space<vmem>>, vector<1x1x16x16xf32>
    %33 = vector.shape_cast %32 : vector<1x1x16x16xf32> to vector<16x16xf32>
    %c2_64 = arith.constant 2 : index
    %c0_65 = arith.constant 0 : index
    %c0_66 = arith.constant 0 : index
    %c0_67 = arith.constant 0 : index
    %34 = vector.load %arg4[%c2_64, %c0_65, %c0_66, %c0_67] : memref<3x3x16x16xf32, #tpu.memory_space<vmem>>, vector<1x1x16x16xf32>
    %35 = vector.shape_cast %34 : vector<1x1x16x16xf32> to vector<16x16xf32>
    %c2_68 = arith.constant 2 : index
    %c1_69 = arith.constant 1 : index
    %c0_70 = arith.constant 0 : index
    %c0_71 = arith.constant 0 : index
    %36 = vector.load %arg4[%c2_68, %c1_69, %c0_70, %c0_71] : memref<3x3x16x16xf32, #tpu.memory_space<vmem>>, vector<1x1x16x16xf32>
    %37 = vector.shape_cast %36 : vector<1x1x16x16xf32> to vector<16x16xf32>
    %c2_72 = arith.constant 2 : index
    %c2_73 = arith.constant 2 : index
    %c0_74 = arith.constant 0 : index
    %c0_75 = arith.constant 0 : index
    %38 = vector.load %arg4[%c2_72, %c2_73, %c0_74, %c0_75] : memref<3x3x16x16xf32, #tpu.memory_space<vmem>>, vector<1x1x16x16xf32>
    %39 = vector.shape_cast %38 : vector<1x1x16x16xf32> to vector<16x16xf32>
    %c0_76 = arith.constant 0 : index
    %c0_77 = arith.constant 0 : index
    %c0_78 = arith.constant 0 : index
    %c0_79 = arith.constant 0 : index
    %40 = vector.load %arg6[%c0_76, %c0_77, %c0_78, %c0_79] : memref<3x3x16x16xf32, #tpu.memory_space<vmem>>, vector<1x1x16x16xf32>
    %41 = vector.shape_cast %40 : vector<1x1x16x16xf32> to vector<16x16xf32>
    %c0_80 = arith.constant 0 : index
    %c1_81 = arith.constant 1 : index
    %c0_82 = arith.constant 0 : index
    %c0_83 = arith.constant 0 : index
    %42 = vector.load %arg6[%c0_80, %c1_81, %c0_82, %c0_83] : memref<3x3x16x16xf32, #tpu.memory_space<vmem>>, vector<1x1x16x16xf32>
    %43 = vector.shape_cast %42 : vector<1x1x16x16xf32> to vector<16x16xf32>
    %c0_84 = arith.constant 0 : index
    %c2_85 = arith.constant 2 : index
    %c0_86 = arith.constant 0 : index
    %c0_87 = arith.constant 0 : index
    %44 = vector.load %arg6[%c0_84, %c2_85, %c0_86, %c0_87] : memref<3x3x16x16xf32, #tpu.memory_space<vmem>>, vector<1x1x16x16xf32>
    %45 = vector.shape_cast %44 : vector<1x1x16x16xf32> to vector<16x16xf32>
    %c1_88 = arith.constant 1 : index
    %c0_89 = arith.constant 0 : index
    %c0_90 = arith.constant 0 : index
    %c0_91 = arith.constant 0 : index
    %46 = vector.load %arg6[%c1_88, %c0_89, %c0_90, %c0_91] : memref<3x3x16x16xf32, #tpu.memory_space<vmem>>, vector<1x1x16x16xf32>
    %47 = vector.shape_cast %46 : vector<1x1x16x16xf32> to vector<16x16xf32>
    %c1_92 = arith.constant 1 : index
    %c1_93 = arith.constant 1 : index
    %c0_94 = arith.constant 0 : index
    %c0_95 = arith.constant 0 : index
    %48 = vector.load %arg6[%c1_92, %c1_93, %c0_94, %c0_95] : memref<3x3x16x16xf32, #tpu.memory_space<vmem>>, vector<1x1x16x16xf32>
    %49 = vector.shape_cast %48 : vector<1x1x16x16xf32> to vector<16x16xf32>
    %c1_96 = arith.constant 1 : index
    %c2_97 = arith.constant 2 : index
    %c0_98 = arith.constant 0 : index
    %c0_99 = arith.constant 0 : index
    %50 = vector.load %arg6[%c1_96, %c2_97, %c0_98, %c0_99] : memref<3x3x16x16xf32, #tpu.memory_space<vmem>>, vector<1x1x16x16xf32>
    %51 = vector.shape_cast %50 : vector<1x1x16x16xf32> to vector<16x16xf32>
    %c2_100 = arith.constant 2 : index
    %c0_101 = arith.constant 0 : index
    %c0_102 = arith.constant 0 : index
    %c0_103 = arith.constant 0 : index
    %52 = vector.load %arg6[%c2_100, %c0_101, %c0_102, %c0_103] : memref<3x3x16x16xf32, #tpu.memory_space<vmem>>, vector<1x1x16x16xf32>
    %53 = vector.shape_cast %52 : vector<1x1x16x16xf32> to vector<16x16xf32>
    %c2_104 = arith.constant 2 : index
    %c1_105 = arith.constant 1 : index
    %c0_106 = arith.constant 0 : index
    %c0_107 = arith.constant 0 : index
    %54 = vector.load %arg6[%c2_104, %c1_105, %c0_106, %c0_107] : memref<3x3x16x16xf32, #tpu.memory_space<vmem>>, vector<1x1x16x16xf32>
    %55 = vector.shape_cast %54 : vector<1x1x16x16xf32> to vector<16x16xf32>
    %c2_108 = arith.constant 2 : index
    %c2_109 = arith.constant 2 : index
    %c0_110 = arith.constant 0 : index
    %c0_111 = arith.constant 0 : index
    %56 = vector.load %arg6[%c2_108, %c2_109, %c0_110, %c0_111] : memref<3x3x16x16xf32, #tpu.memory_space<vmem>>, vector<1x1x16x16xf32>
    %57 = vector.shape_cast %56 : vector<1x1x16x16xf32> to vector<16x16xf32>
    %c0_112 = arith.constant 0 : index
    %c0_113 = arith.constant 0 : index
    %58 = vector.load %arg3[%c0_112, %c0_113] : memref<16x1xf32, #tpu.memory_space<vmem>>, vector<16x1xf32>
    %c0_114 = arith.constant 0 : index
    %c0_115 = arith.constant 0 : index
    %59 = vector.load %arg5[%c0_114, %c0_115] : memref<16x1xf32, #tpu.memory_space<vmem>>, vector<16x1xf32>
    %c0_116 = arith.constant 0 : index
    %c0_117 = arith.constant 0 : index
    %60 = vector.load %arg7[%c0_116, %c0_117] : memref<16x1xf32, #tpu.memory_space<vmem>>, vector<16x1xf32>
    %c0_i32 = arith.constant 0 : i32
    %cst_118 = arith.constant 0.000000e+00 : f32
    %61 = vector.broadcast %cst_118 : f32 to vector<16x1xf32>
    %c0_i32_119 = arith.constant 0 : i32
    %62 = arith.addi %c0_i32, %c0_i32_119 : i32
    %c0_120 = arith.constant 0 : index
    %63 = arith.index_cast %62 : i32 to index
    %c0_121 = arith.constant 0 : index
    %c0_122 = arith.constant 0 : index
    %c0_123 = arith.constant 0 : index
    %64 = vector.load %arg1[%c0_120, %63, %c0_121, %c0_122, %c0_123] : memref<1x2x4x8x2xf32, #tpu.memory_space<vmem>>, vector<1x1x1x8x2xf32>
    %65 = vector.shape_cast %64 : vector<1x1x1x8x2xf32> to vector<8x2xf32>
    %66 = vector.extract_strided_slice %65 {offsets = [0, 0], sizes = [8, 1], strides = [1, 1]} : vector<8x2xf32> to vector<8x1xf32>
    %cst_124 = arith.constant dense<0.000000e+00> : vector<16x1xf32>
    %67 = tpu.matmul %5, %66, %cst_124 {dimension_numbers = #tpu.dot_dimension_numbers<[1], [0], [0], [1], [0, 0, 1, 1], [], []>} : vector<16x8xf32>, vector<8x1xf32>, vector<16x1xf32> -> vector<16x1xf32>
    %68 = arith.addf %61, %67 : vector<16x1xf32>
    %c0_i32_125 = arith.constant 0 : i32
    %69 = arith.addi %c0_i32, %c0_i32_125 : i32
    %c0_126 = arith.constant 0 : index
    %70 = arith.index_cast %69 : i32 to index
    %c1_127 = arith.constant 1 : index
    %c0_128 = arith.constant 0 : index
    %c0_129 = arith.constant 0 : index
    %71 = vector.load %arg1[%c0_126, %70, %c1_127, %c0_128, %c0_129] : memref<1x2x4x8x2xf32, #tpu.memory_space<vmem>>, vector<1x1x1x8x2xf32>
    %72 = vector.shape_cast %71 : vector<1x1x1x8x2xf32> to vector<8x2xf32>
    %73 = vector.extract_strided_slice %72 {offsets = [0, 0], sizes = [8, 1], strides = [1, 1]} : vector<8x2xf32> to vector<8x1xf32>
    %cst_130 = arith.constant dense<0.000000e+00> : vector<16x1xf32>
    %74 = tpu.matmul %7, %73, %cst_130 {dimension_numbers = #tpu.dot_dimension_numbers<[1], [0], [0], [1], [0, 0, 1, 1], [], []>} : vector<16x8xf32>, vector<8x1xf32>, vector<16x1xf32> -> vector<16x1xf32>
    %75 = arith.addf %68, %74 : vector<16x1xf32>
    %c0_i32_131 = arith.constant 0 : i32
    %76 = arith.addi %c0_i32, %c0_i32_131 : i32
    %c0_132 = arith.constant 0 : index
    %77 = arith.index_cast %76 : i32 to index
    %c0_133 = arith.constant 0 : index
    %c0_134 = arith.constant 0 : index
    %c0_135 = arith.constant 0 : index
    %78 = vector.load %arg1[%c0_132, %77, %c0_133, %c0_134, %c0_135] : memref<1x2x4x8x2xf32, #tpu.memory_space<vmem>>, vector<1x1x1x8x2xf32>
    %79 = vector.shape_cast %78 : vector<1x1x1x8x2xf32> to vector<8x2xf32>
    %80 = vector.extract_strided_slice %79 {offsets = [0, 1], sizes = [8, 1], strides = [1, 1]} : vector<8x2xf32> to vector<8x1xf32>
    %cst_136 = arith.constant dense<0.000000e+00> : vector<16x1xf32>
    %81 = tpu.matmul %9, %80, %cst_136 {dimension_numbers = #tpu.dot_dimension_numbers<[1], [0], [0], [1], [0, 0, 1, 1], [], []>} : vector<16x8xf32>, vector<8x1xf32>, vector<16x1xf32> -> vector<16x1xf32>
    %82 = arith.addf %75, %81 : vector<16x1xf32>
    %c0_i32_137 = arith.constant 0 : i32
    %83 = arith.addi %c0_i32, %c0_i32_137 : i32
    %c0_138 = arith.constant 0 : index
    %84 = arith.index_cast %83 : i32 to index
    %c2_139 = arith.constant 2 : index
    %c0_140 = arith.constant 0 : index
    %c0_141 = arith.constant 0 : index
    %85 = vector.load %arg1[%c0_138, %84, %c2_139, %c0_140, %c0_141] : memref<1x2x4x8x2xf32, #tpu.memory_space<vmem>>, vector<1x1x1x8x2xf32>
    %86 = vector.shape_cast %85 : vector<1x1x1x8x2xf32> to vector<8x2xf32>
    %87 = vector.extract_strided_slice %86 {offsets = [0, 0], sizes = [8, 1], strides = [1, 1]} : vector<8x2xf32> to vector<8x1xf32>
    %cst_142 = arith.constant dense<0.000000e+00> : vector<16x1xf32>
    %88 = tpu.matmul %11, %87, %cst_142 {dimension_numbers = #tpu.dot_dimension_numbers<[1], [0], [0], [1], [0, 0, 1, 1], [], []>} : vector<16x8xf32>, vector<8x1xf32>, vector<16x1xf32> -> vector<16x1xf32>
    %89 = arith.addf %82, %88 : vector<16x1xf32>
    %c0_i32_143 = arith.constant 0 : i32
    %90 = arith.addi %c0_i32, %c0_i32_143 : i32
    %c0_144 = arith.constant 0 : index
    %91 = arith.index_cast %90 : i32 to index
    %c3 = arith.constant 3 : index
    %c0_145 = arith.constant 0 : index
    %c0_146 = arith.constant 0 : index
    %92 = vector.load %arg1[%c0_144, %91, %c3, %c0_145, %c0_146] : memref<1x2x4x8x2xf32, #tpu.memory_space<vmem>>, vector<1x1x1x8x2xf32>
    %93 = vector.shape_cast %92 : vector<1x1x1x8x2xf32> to vector<8x2xf32>
    %94 = vector.extract_strided_slice %93 {offsets = [0, 0], sizes = [8, 1], strides = [1, 1]} : vector<8x2xf32> to vector<8x1xf32>
    %cst_147 = arith.constant dense<0.000000e+00> : vector<16x1xf32>
    %95 = tpu.matmul %13, %94, %cst_147 {dimension_numbers = #tpu.dot_dimension_numbers<[1], [0], [0], [1], [0, 0, 1, 1], [], []>} : vector<16x8xf32>, vector<8x1xf32>, vector<16x1xf32> -> vector<16x1xf32>
    %96 = arith.addf %89, %95 : vector<16x1xf32>
    %c0_i32_148 = arith.constant 0 : i32
    %97 = arith.addi %c0_i32, %c0_i32_148 : i32
    %c0_149 = arith.constant 0 : index
    %98 = arith.index_cast %97 : i32 to index
    %c2_150 = arith.constant 2 : index
    %c0_151 = arith.constant 0 : index
    %c0_152 = arith.constant 0 : index
    %99 = vector.load %arg1[%c0_149, %98, %c2_150, %c0_151, %c0_152] : memref<1x2x4x8x2xf32, #tpu.memory_space<vmem>>, vector<1x1x1x8x2xf32>
    %100 = vector.shape_cast %99 : vector<1x1x1x8x2xf32> to vector<8x2xf32>
    %101 = vector.extract_strided_slice %100 {offsets = [0, 1], sizes = [8, 1], strides = [1, 1]} : vector<8x2xf32> to vector<8x1xf32>
    %cst_153 = arith.constant dense<0.000000e+00> : vector<16x1xf32>
    %102 = tpu.matmul %15, %101, %cst_153 {dimension_numbers = #tpu.dot_dimension_numbers<[1], [0], [0], [1], [0, 0, 1, 1], [], []>} : vector<16x8xf32>, vector<8x1xf32>, vector<16x1xf32> -> vector<16x1xf32>
    %103 = arith.addf %96, %102 : vector<16x1xf32>
    %c1_i32 = arith.constant 1 : i32
    %104 = arith.addi %c0_i32, %c1_i32 : i32
    %c0_154 = arith.constant 0 : index
    %105 = arith.index_cast %104 : i32 to index
    %c0_155 = arith.constant 0 : index
    %c0_156 = arith.constant 0 : index
    %c0_157 = arith.constant 0 : index
    %106 = vector.load %arg1[%c0_154, %105, %c0_155, %c0_156, %c0_157] : memref<1x2x4x8x2xf32, #tpu.memory_space<vmem>>, vector<1x1x1x8x2xf32>
    %107 = vector.shape_cast %106 : vector<1x1x1x8x2xf32> to vector<8x2xf32>
    %108 = vector.extract_strided_slice %107 {offsets = [0, 0], sizes = [8, 1], strides = [1, 1]} : vector<8x2xf32> to vector<8x1xf32>
    %cst_158 = arith.constant dense<0.000000e+00> : vector<16x1xf32>
    %109 = tpu.matmul %17, %108, %cst_158 {dimension_numbers = #tpu.dot_dimension_numbers<[1], [0], [0], [1], [0, 0, 1, 1], [], []>} : vector<16x8xf32>, vector<8x1xf32>, vector<16x1xf32> -> vector<16x1xf32>
    %110 = arith.addf %103, %109 : vector<16x1xf32>
    %c1_i32_159 = arith.constant 1 : i32
    %111 = arith.addi %c0_i32, %c1_i32_159 : i32
    %c0_160 = arith.constant 0 : index
    %112 = arith.index_cast %111 : i32 to index
    %c1_161 = arith.constant 1 : index
    %c0_162 = arith.constant 0 : index
    %c0_163 = arith.constant 0 : index
    %113 = vector.load %arg1[%c0_160, %112, %c1_161, %c0_162, %c0_163] : memref<1x2x4x8x2xf32, #tpu.memory_space<vmem>>, vector<1x1x1x8x2xf32>
    %114 = vector.shape_cast %113 : vector<1x1x1x8x2xf32> to vector<8x2xf32>
    %115 = vector.extract_strided_slice %114 {offsets = [0, 0], sizes = [8, 1], strides = [1, 1]} : vector<8x2xf32> to vector<8x1xf32>
    %cst_164 = arith.constant dense<0.000000e+00> : vector<16x1xf32>
    %116 = tpu.matmul %19, %115, %cst_164 {dimension_numbers = #tpu.dot_dimension_numbers<[1], [0], [0], [1], [0, 0, 1, 1], [], []>} : vector<16x8xf32>, vector<8x1xf32>, vector<16x1xf32> -> vector<16x1xf32>
    %117 = arith.addf %110, %116 : vector<16x1xf32>
    %c1_i32_165 = arith.constant 1 : i32
    %118 = arith.addi %c0_i32, %c1_i32_165 : i32
    %c0_166 = arith.constant 0 : index
    %119 = arith.index_cast %118 : i32 to index
    %c0_167 = arith.constant 0 : index
    %c0_168 = arith.constant 0 : index
    %c0_169 = arith.constant 0 : index
    %120 = vector.load %arg1[%c0_166, %119, %c0_167, %c0_168, %c0_169] : memref<1x2x4x8x2xf32, #tpu.memory_space<vmem>>, vector<1x1x1x8x2xf32>
    %121 = vector.shape_cast %120 : vector<1x1x1x8x2xf32> to vector<8x2xf32>
    %122 = vector.extract_strided_slice %121 {offsets = [0, 1], sizes = [8, 1], strides = [1, 1]} : vector<8x2xf32> to vector<8x1xf32>
    %cst_170 = arith.constant dense<0.000000e+00> : vector<16x1xf32>
    %123 = tpu.matmul %21, %122, %cst_170 {dimension_numbers = #tpu.dot_dimension_numbers<[1], [0], [0], [1], [0, 0, 1, 1], [], []>} : vector<16x8xf32>, vector<8x1xf32>, vector<16x1xf32> -> vector<16x1xf32>
    %124 = arith.addf %117, %123 : vector<16x1xf32>
    %125 = arith.addf %124, %58 : vector<16x1xf32>
    %c1_i32_171 = arith.constant 1 : i32
    %126 = arith.addi %c0_i32, %c1_i32_171 : i32
    %127 = arith.index_cast %126 : i32 to index
    %c0_172 = arith.constant 0 : index
    %c1_173 = arith.constant 1 : index
    %128 = vector.load %arg9[%127, %c0_172, %c1_173] : memref<3x16x3xf32, #tpu.memory_space<vmem>>, vector<1x16x1xf32>
    %129 = vector.shape_cast %128 : vector<1x16x1xf32> to vector<16x1xf32>
    %130 = vector.shape_cast %125 : vector<16x1xf32> to vector<1x16x1xf32>
    tpu.vector_store %arg9[%127, %c0_172, %c1_173], %130 {strides = array<i32>} : memref<3x16x3xf32, #tpu.memory_space<vmem>>, vector<1x16x1xf32>,
    %c1_i32_174 = arith.constant 1 : i32
    %c0_i32_175 = arith.constant 0 : i32
    %cst_176 = arith.constant 0.000000e+00 : f32
    %131 = vector.broadcast %cst_176 : f32 to vector<16x1xf32>
    %c0_i32_177 = arith.constant 0 : i32
    %132 = arith.addi %c0_i32_175, %c0_i32_177 : i32
    %133 = arith.index_cast %132 : i32 to index
    %c0_178 = arith.constant 0 : index
    %c0_179 = arith.constant 0 : index
    %134 = vector.load %arg9[%133, %c0_178, %c0_179] : memref<3x16x3xf32, #tpu.memory_space<vmem>>, vector<1x16x3xf32>
    %135 = vector.shape_cast %134 : vector<1x16x3xf32> to vector<16x3xf32>
    %136 = vector.extract_strided_slice %135 {offsets = [0, 0], sizes = [16, 1], strides = [1, 1]} : vector<16x3xf32> to vector<16x1xf32>
    %cst_180 = arith.constant dense<0.000000e+00> : vector<16x1xf32>
    %137 = tpu.matmul %23, %136, %cst_180 {dimension_numbers = #tpu.dot_dimension_numbers<[1], [0], [0], [1], [0, 0, 1, 1], [], []>} : vector<16x16xf32>, vector<16x1xf32>, vector<16x1xf32> -> vector<16x1xf32>
    %138 = arith.addf %131, %137 : vector<16x1xf32>
    %139 = vector.extract_strided_slice %135 {offsets = [0, 1], sizes = [16, 1], strides = [1, 1]} : vector<16x3xf32> to vector<16x1xf32>
    %cst_181 = arith.constant dense<0.000000e+00> : vector<16x1xf32>
    %140 = tpu.matmul %25, %139, %cst_181 {dimension_numbers = #tpu.dot_dimension_numbers<[1], [0], [0], [1], [0, 0, 1, 1], [], []>} : vector<16x16xf32>, vector<16x1xf32>, vector<16x1xf32> -> vector<16x1xf32>
    %141 = arith.addf %138, %140 : vector<16x1xf32>
    %142 = vector.extract_strided_slice %135 {offsets = [0, 2], sizes = [16, 1], strides = [1, 1]} : vector<16x3xf32> to vector<16x1xf32>
    %cst_182 = arith.constant dense<0.000000e+00> : vector<16x1xf32>
    %143 = tpu.matmul %27, %142, %cst_182 {dimension_numbers = #tpu.dot_dimension_numbers<[1], [0], [0], [1], [0, 0, 1, 1], [], []>} : vector<16x16xf32>, vector<16x1xf32>, vector<16x1xf32> -> vector<16x1xf32>
    %144 = arith.addf %141, %143 : vector<16x1xf32>
    %c1_i32_183 = arith.constant 1 : i32
    %145 = arith.addi %c0_i32_175, %c1_i32_183 : i32
    %146 = arith.index_cast %145 : i32 to index
    %c0_184 = arith.constant 0 : index
    %c0_185 = arith.constant 0 : index
    %147 = vector.load %arg9[%146, %c0_184, %c0_185] : memref<3x16x3xf32, #tpu.memory_space<vmem>>, vector<1x16x3xf32>
    %148 = vector.shape_cast %147 : vector<1x16x3xf32> to vector<16x3xf32>
    %149 = vector.extract_strided_slice %148 {offsets = [0, 0], sizes = [16, 1], strides = [1, 1]} : vector<16x3xf32> to vector<16x1xf32>
    %cst_186 = arith.constant dense<0.000000e+00> : vector<16x1xf32>
    %150 = tpu.matmul %29, %149, %cst_186 {dimension_numbers = #tpu.dot_dimension_numbers<[1], [0], [0], [1], [0, 0, 1, 1], [], []>} : vector<16x16xf32>, vector<16x1xf32>, vector<16x1xf32> -> vector<16x1xf32>
    %151 = arith.addf %144, %150 : vector<16x1xf32>
    %152 = vector.extract_strided_slice %148 {offsets = [0, 1], sizes = [16, 1], strides = [1, 1]} : vector<16x3xf32> to vector<16x1xf32>
    %cst_187 = arith.constant dense<0.000000e+00> : vector<16x1xf32>
    %153 = tpu.matmul %31, %152, %cst_187 {dimension_numbers = #tpu.dot_dimension_numbers<[1], [0], [0], [1], [0, 0, 1, 1], [], []>} : vector<16x16xf32>, vector<16x1xf32>, vector<16x1xf32> -> vector<16x1xf32>
    %154 = arith.addf %151, %153 : vector<16x1xf32>
    %155 = vector.extract_strided_slice %148 {offsets = [0, 2], sizes = [16, 1], strides = [1, 1]} : vector<16x3xf32> to vector<16x1xf32>
    %cst_188 = arith.constant dense<0.000000e+00> : vector<16x1xf32>
    %156 = tpu.matmul %33, %155, %cst_188 {dimension_numbers = #tpu.dot_dimension_numbers<[1], [0], [0], [1], [0, 0, 1, 1], [], []>} : vector<16x16xf32>, vector<16x1xf32>, vector<16x1xf32> -> vector<16x1xf32>
    %157 = arith.addf %154, %156 : vector<16x1xf32>
    %c2_i32 = arith.constant 2 : i32
    %158 = arith.addi %c0_i32_175, %c2_i32 : i32
    %159 = arith.index_cast %158 : i32 to index
    %c0_189 = arith.constant 0 : index
    %c0_190 = arith.constant 0 : index
    %160 = vector.load %arg9[%159, %c0_189, %c0_190] : memref<3x16x3xf32, #tpu.memory_space<vmem>>, vector<1x16x3xf32>
    %161 = vector.shape_cast %160 : vector<1x16x3xf32> to vector<16x3xf32>
    %162 = vector.extract_strided_slice %161 {offsets = [0, 0], sizes = [16, 1], strides = [1, 1]} : vector<16x3xf32> to vector<16x1xf32>
    %cst_191 = arith.constant dense<0.000000e+00> : vector<16x1xf32>
    %163 = tpu.matmul %35, %162, %cst_191 {dimension_numbers = #tpu.dot_dimension_numbers<[1], [0], [0], [1], [0, 0, 1, 1], [], []>} : vector<16x16xf32>, vector<16x1xf32>, vector<16x1xf32> -> vector<16x1xf32>
    %164 = arith.addf %157, %163 : vector<16x1xf32>
    %165 = vector.extract_strided_slice %161 {offsets = [0, 1], sizes = [16, 1], strides = [1, 1]} : vector<16x3xf32> to vector<16x1xf32>
    %cst_192 = arith.constant dense<0.000000e+00> : vector<16x1xf32>
    %166 = tpu.matmul %37, %165, %cst_192 {dimension_numbers = #tpu.dot_dimension_numbers<[1], [0], [0], [1], [0, 0, 1, 1], [], []>} : vector<16x16xf32>, vector<16x1xf32>, vector<16x1xf32> -> vector<16x1xf32>
    %167 = arith.addf %164, %166 : vector<16x1xf32>
    %168 = vector.extract_strided_slice %161 {offsets = [0, 2], sizes = [16, 1], strides = [1, 1]} : vector<16x3xf32> to vector<16x1xf32>
    %cst_193 = arith.constant dense<0.000000e+00> : vector<16x1xf32>
    %169 = tpu.matmul %39, %168, %cst_193 {dimension_numbers = #tpu.dot_dimension_numbers<[1], [0], [0], [1], [0, 0, 1, 1], [], []>} : vector<16x16xf32>, vector<16x1xf32>, vector<16x1xf32> -> vector<16x1xf32>
    %170 = arith.addf %167, %169 : vector<16x1xf32>
    %171 = arith.addf %170, %59 : vector<16x1xf32>
    %c1_i32_194 = arith.constant 1 : i32
    %172 = arith.addi %c0_i32_175, %c1_i32_194 : i32
    %173 = arith.index_cast %172 : i32 to index
    %c0_195 = arith.constant 0 : index
    %c1_196 = arith.constant 1 : index
    %174 = vector.load %arg10[%173, %c0_195, %c1_196] : memref<3x16x3xf32, #tpu.memory_space<vmem>>, vector<1x16x1xf32>
    %175 = vector.shape_cast %174 : vector<1x16x1xf32> to vector<16x1xf32>
    %176 = vector.shape_cast %171 : vector<16x1xf32> to vector<1x16x1xf32>
    tpu.vector_store %arg10[%173, %c0_195, %c1_196], %176 {strides = array<i32>} : memref<3x16x3xf32, #tpu.memory_space<vmem>>, vector<1x16x1xf32>,
    %c1_i32_197 = arith.constant 1 : i32
    %c0_i32_198 = arith.constant 0 : i32
    %cst_199 = arith.constant 0.000000e+00 : f32
    %177 = vector.broadcast %cst_199 : f32 to vector<16x1xf32>
    %c0_i32_200 = arith.constant 0 : i32
    %178 = arith.addi %c0_i32_198, %c0_i32_200 : i32
    %179 = arith.index_cast %178 : i32 to index
    %c0_201 = arith.constant 0 : index
    %c0_202 = arith.constant 0 : index
    %180 = vector.load %arg10[%179, %c0_201, %c0_202] : memref<3x16x3xf32, #tpu.memory_space<vmem>>, vector<1x16x3xf32>
    %181 = vector.shape_cast %180 : vector<1x16x3xf32> to vector<16x3xf32>
    %182 = vector.extract_strided_slice %181 {offsets = [0, 0], sizes = [16, 1], strides = [1, 1]} : vector<16x3xf32> to vector<16x1xf32>
    %cst_203 = arith.constant dense<0.000000e+00> : vector<16x1xf32>
    %183 = tpu.matmul %41, %182, %cst_203 {dimension_numbers = #tpu.dot_dimension_numbers<[1], [0], [0], [1], [0, 0, 1, 1], [], []>} : vector<16x16xf32>, vector<16x1xf32>, vector<16x1xf32> -> vector<16x1xf32>
    %184 = arith.addf %177, %183 : vector<16x1xf32>
    %185 = vector.extract_strided_slice %181 {offsets = [0, 1], sizes = [16, 1], strides = [1, 1]} : vector<16x3xf32> to vector<16x1xf32>
    %cst_204 = arith.constant dense<0.000000e+00> : vector<16x1xf32>
    %186 = tpu.matmul %43, %185, %cst_204 {dimension_numbers = #tpu.dot_dimension_numbers<[1], [0], [0], [1], [0, 0, 1, 1], [], []>} : vector<16x16xf32>, vector<16x1xf32>, vector<16x1xf32> -> vector<16x1xf32>
    %187 = arith.addf %184, %186 : vector<16x1xf32>
    %188 = vector.extract_strided_slice %181 {offsets = [0, 2], sizes = [16, 1], strides = [1, 1]} : vector<16x3xf32> to vector<16x1xf32>
    %cst_205 = arith.constant dense<0.000000e+00> : vector<16x1xf32>
    %189 = tpu.matmul %45, %188, %cst_205 {dimension_numbers = #tpu.dot_dimension_numbers<[1], [0], [0], [1], [0, 0, 1, 1], [], []>} : vector<16x16xf32>, vector<16x1xf32>, vector<16x1xf32> -> vector<16x1xf32>
    %190 = arith.addf %187, %189 : vector<16x1xf32>
    %c1_i32_206 = arith.constant 1 : i32
    %191 = arith.addi %c0_i32_198, %c1_i32_206 : i32
    %192 = arith.index_cast %191 : i32 to index
    %c0_207 = arith.constant 0 : index
    %c0_208 = arith.constant 0 : index
    %193 = vector.load %arg10[%192, %c0_207, %c0_208] : memref<3x16x3xf32, #tpu.memory_space<vmem>>, vector<1x16x3xf32>
    %194 = vector.shape_cast %193 : vector<1x16x3xf32> to vector<16x3xf32>
    %195 = vector.extract_strided_slice %194 {offsets = [0, 0], sizes = [16, 1], strides = [1, 1]} : vector<16x3xf32> to vector<16x1xf32>
    %cst_209 = arith.constant dense<0.000000e+00> : vector<16x1xf32>
    %196 = tpu.matmul %47, %195, %cst_209 {dimension_numbers = #tpu.dot_dimension_numbers<[1], [0], [0], [1], [0, 0, 1, 1], [], []>} : vector<16x16xf32>, vector<16x1xf32>, vector<16x1xf32> -> vector<16x1xf32>
    %197 = arith.addf %190, %196 : vector<16x1xf32>
    %198 = vector.extract_strided_slice %194 {offsets = [0, 1], sizes = [16, 1], strides = [1, 1]} : vector<16x3xf32> to vector<16x1xf32>
    %cst_210 = arith.constant dense<0.000000e+00> : vector<16x1xf32>
    %199 = tpu.matmul %49, %198, %cst_210 {dimension_numbers = #tpu.dot_dimension_numbers<[1], [0], [0], [1], [0, 0, 1, 1], [], []>} : vector<16x16xf32>, vector<16x1xf32>, vector<16x1xf32> -> vector<16x1xf32>
    %200 = arith.addf %197, %199 : vector<16x1xf32>
    %201 = vector.extract_strided_slice %194 {offsets = [0, 2], sizes = [16, 1], strides = [1, 1]} : vector<16x3xf32> to vector<16x1xf32>
    %cst_211 = arith.constant dense<0.000000e+00> : vector<16x1xf32>
    %202 = tpu.matmul %51, %201, %cst_211 {dimension_numbers = #tpu.dot_dimension_numbers<[1], [0], [0], [1], [0, 0, 1, 1], [], []>} : vector<16x16xf32>, vector<16x1xf32>, vector<16x1xf32> -> vector<16x1xf32>
    %203 = arith.addf %200, %202 : vector<16x1xf32>
    %c2_i32_212 = arith.constant 2 : i32
    %204 = arith.addi %c0_i32_198, %c2_i32_212 : i32
    %205 = arith.index_cast %204 : i32 to index
    %c0_213 = arith.constant 0 : index
    %c0_214 = arith.constant 0 : index
    %206 = vector.load %arg10[%205, %c0_213, %c0_214] : memref<3x16x3xf32, #tpu.memory_space<vmem>>, vector<1x16x3xf32>
    %207 = vector.shape_cast %206 : vector<1x16x3xf32> to vector<16x3xf32>
    %208 = vector.extract_strided_slice %207 {offsets = [0, 0], sizes = [16, 1], strides = [1, 1]} : vector<16x3xf32> to vector<16x1xf32>
    %cst_215 = arith.constant dense<0.000000e+00> : vector<16x1xf32>
    %209 = tpu.matmul %53, %208, %cst_215 {dimension_numbers = #tpu.dot_dimension_numbers<[1], [0], [0], [1], [0, 0, 1, 1], [], []>} : vector<16x16xf32>, vector<16x1xf32>, vector<16x1xf32> -> vector<16x1xf32>
    %210 = arith.addf %203, %209 : vector<16x1xf32>
    %211 = vector.extract_strided_slice %207 {offsets = [0, 1], sizes = [16, 1], strides = [1, 1]} : vector<16x3xf32> to vector<16x1xf32>
    %cst_216 = arith.constant dense<0.000000e+00> : vector<16x1xf32>
    %212 = tpu.matmul %55, %211, %cst_216 {dimension_numbers = #tpu.dot_dimension_numbers<[1], [0], [0], [1], [0, 0, 1, 1], [], []>} : vector<16x16xf32>, vector<16x1xf32>, vector<16x1xf32> -> vector<16x1xf32>
    %213 = arith.addf %210, %212 : vector<16x1xf32>
    %214 = vector.extract_strided_slice %207 {offsets = [0, 2], sizes = [16, 1], strides = [1, 1]} : vector<16x3xf32> to vector<16x1xf32>
    %cst_217 = arith.constant dense<0.000000e+00> : vector<16x1xf32>
    %215 = tpu.matmul %57, %214, %cst_217 {dimension_numbers = #tpu.dot_dimension_numbers<[1], [0], [0], [1], [0, 0, 1, 1], [], []>} : vector<16x16xf32>, vector<16x1xf32>, vector<16x1xf32> -> vector<16x1xf32>
    %216 = arith.addf %213, %215 : vector<16x1xf32>
    %217 = arith.addf %216, %60 : vector<16x1xf32>
    %c0_218 = arith.constant 0 : index
    %218 = arith.index_cast %c0_i32_198 : i32 to index
    %c0_219 = arith.constant 0 : index
    %c0_220 = arith.constant 0 : index
    %219 = vector.load %arg8[%c0_218, %218, %c0_219, %c0_220] : memref<1x1x16x1xf32, #tpu.memory_space<vmem>>, vector<1x1x16x1xf32>
    %220 = vector.shape_cast %219 : vector<1x1x16x1xf32> to vector<16x1xf32>
    %221 = vector.shape_cast %217 : vector<16x1xf32> to vector<1x1x16x1xf32>
    tpu.vector_store %arg8[%c0_218, %218, %c0_219, %c0_220], %221 {strides = array<i32>} : memref<1x1x16x1xf32, #tpu.memory_space<vmem>>, vector<1x1x16x1xf32>,
    %c1_i32_221 = arith.constant 1 : i32
    return
  }
  func.func @transform_0(%arg0: i32) -> (i32, i32, i32, i32, i32) {
    %c0_i32 = arith.constant 0 : i32
    %c0_i32_0 = arith.constant 0 : i32
    %c0_i32_1 = arith.constant 0 : i32
    %c0_i32_2 = arith.constant 0 : i32
    %c0_i32_3 = arith.constant 0 : i32
    return %arg0, %c0_i32, %c0_i32_0, %c0_i32_1, %c0_i32_2 : i32, i32, i32, i32, i32
  }
  func.func @transform_1(%arg0: i32) -> (i32, i32, i32, i32) {
    %c0_i32 = arith.constant 0 : i32
    %c0_i32_0 = arith.constant 0 : i32
    %c0_i32_1 = arith.constant 0 : i32
    %c0_i32_2 = arith.constant 0 : i32
    %c0_i32_3 = arith.constant 0 : i32
    return %c0_i32, %c0_i32_0, %c0_i32_1, %c0_i32_2 : i32, i32, i32, i32
  }
  func.func @transform_2(%arg0: i32) -> (i32, i32) {
    %c0_i32 = arith.constant 0 : i32
    %c0_i32_0 = arith.constant 0 : i32
    %c0_i32_1 = arith.constant 0 : i32
    return %c0_i32, %c0_i32_0 : i32, i32
  }
  func.func @transform_3(%arg0: i32) -> (i32, i32, i32, i32) {
    %c0_i32 = arith.constant 0 : i32
    %c0_i32_0 = arith.constant 0 : i32
    %c0_i32_1 = arith.constant 0 : i32
    %c0_i32_2 = arith.constant 0 : i32
    %c0_i32_3 = arith.constant 0 : i32
    return %c0_i32, %c0_i32_0, %c0_i32_1, %c0_i32_2 : i32, i32, i32, i32
  }
  func.func @transform_4(%arg0: i32) -> (i32, i32) {
    %c0_i32 = arith.constant 0 : i32
    %c0_i32_0 = arith.constant 0 : i32
    %c0_i32_1 = arith.constant 0 : i32
    return %c0_i32, %c0_i32_0 : i32, i32
  }
  func.func @transform_5(%arg0: i32) -> (i32, i32, i32, i32) {
    %c0_i32 = arith.constant 0 : i32
    %c0_i32_0 = arith.constant 0 : i32
    %c0_i32_1 = arith.constant 0 : i32
    %c0_i32_2 = arith.constant 0 : i32
    %c0_i32_3 = arith.constant 0 : i32
    return %c0_i32, %c0_i32_0, %c0_i32_1, %c0_i32_2 : i32, i32, i32, i32
  }
  func.func @transform_6(%arg0: i32) -> (i32, i32) {
    %c0_i32 = arith.constant 0 : i32
    %c0_i32_0 = arith.constant 0 : i32
    %c0_i32_1 = arith.constant 0 : i32
    return %c0_i32, %c0_i32_0 : i32, i32
  }
  func.func @transform_7(%arg0: i32) -> (i32, i32, i32, i32) {
    %c0_i32 = arith.constant 0 : i32
    %c0_i32_0 = arith.constant 0 : i32
    %c0_i32_1 = arith.constant 0 : i32
    %c0_i32_2 = arith.constant 0 : i32
    return %arg0, %c0_i32, %c0_i32_0, %c0_i32_1 : i32, i32, i32, i32
  }
}

module attributes {stable_mosaic.version = 11 : i64} {
  func.func @_stage_kernel(%arg0: i32, %arg1: memref<1x2x4x16x2xf32, #tpu.memory_space<vmem>>, %arg2: memref<3x3x16x16xf32, #tpu.memory_space<vmem>>, %arg3: memref<16x1xf32, #tpu.memory_space<vmem>>, %arg4: memref<3x3x16x16xf32, #tpu.memory_space<vmem>>, %arg5: memref<16x1xf32, #tpu.memory_space<vmem>>, %arg6: memref<3x3x16x16xf32, #tpu.memory_space<vmem>>, %arg7: memref<16x1xf32, #tpu.memory_space<vmem>>, %arg8: memref<1x1x16x1xf32, #tpu.memory_space<vmem>>, %arg9: memref<3x16x3xf32, #tpu.memory_space<vmem>>, %arg10: memref<3x16x3xf32, #tpu.memory_space<vmem>>) attributes {dimension_semantics = [#tpu.dimension_semantics<parallel>], iteration_bounds = array<i64: 4>, scalar_prefetch = 0 : i64, scratch_operands = 2 : i64, tpu.core_type = #tpu.core_type<tc>, window_params = [{transform_indices = @transform_0, window_bounds = array<i64: 1, 2, 4, 16, 2>}, {pipeline_mode = #tpu.pipeline_mode<synchronous>, transform_indices = @transform_1, window_bounds = array<i64: 3, 3, 16, 16>}, {pipeline_mode = #tpu.pipeline_mode<synchronous>, transform_indices = @transform_2, window_bounds = array<i64: 16, 1>}, {pipeline_mode = #tpu.pipeline_mode<synchronous>, transform_indices = @transform_3, window_bounds = array<i64: 3, 3, 16, 16>}, {pipeline_mode = #tpu.pipeline_mode<synchronous>, transform_indices = @transform_4, window_bounds = array<i64: 16, 1>}, {pipeline_mode = #tpu.pipeline_mode<synchronous>, transform_indices = @transform_5, window_bounds = array<i64: 3, 3, 16, 16>}, {pipeline_mode = #tpu.pipeline_mode<synchronous>, transform_indices = @transform_6, window_bounds = array<i64: 16, 1>}, {transform_indices = @transform_7, window_bounds = array<i64: 1, 1, 16, 1>}]} {
    %cst = arith.constant 0.000000e+00 : f32
    %0 = vector.broadcast %cst : f32 to vector<3x16x3xf32>
    %c0 = arith.constant 0 : index
    %c0_0 = arith.constant 0 : index
    %c0_1 = arith.constant 0 : index
    %1 = vector.load %arg9[%c0, %c0_0, %c0_1] : memref<3x16x3xf32, #tpu.memory_space<vmem>>, vector<3x16x3xf32>
    tpu.vector_store %arg9[%c0, %c0_0, %c0_1], %0 {strides = array<i32>} : memref<3x16x3xf32, #tpu.memory_space<vmem>>, vector<3x16x3xf32>,
    %cst_2 = arith.constant 0.000000e+00 : f32
    %2 = vector.broadcast %cst_2 : f32 to vector<3x16x3xf32>
    %c0_3 = arith.constant 0 : index
    %c0_4 = arith.constant 0 : index
    %c0_5 = arith.constant 0 : index
    %3 = vector.load %arg10[%c0_3, %c0_4, %c0_5] : memref<3x16x3xf32, #tpu.memory_space<vmem>>, vector<3x16x3xf32>
    tpu.vector_store %arg10[%c0_3, %c0_4, %c0_5], %2 {strides = array<i32>} : memref<3x16x3xf32, #tpu.memory_space<vmem>>, vector<3x16x3xf32>,
    %c0_6 = arith.constant 0 : index
    %c0_7 = arith.constant 0 : index
    %c0_8 = arith.constant 0 : index
    %c0_9 = arith.constant 0 : index
    %4 = vector.load %arg2[%c0_6, %c0_7, %c0_8, %c0_9] : memref<3x3x16x16xf32, #tpu.memory_space<vmem>>, vector<1x1x16x16xf32>
    %5 = vector.shape_cast %4 : vector<1x1x16x16xf32> to vector<16x16xf32>
    %c0_10 = arith.constant 0 : index
    %c1 = arith.constant 1 : index
    %c0_11 = arith.constant 0 : index
    %c0_12 = arith.constant 0 : index
    %6 = vector.load %arg2[%c0_10, %c1, %c0_11, %c0_12] : memref<3x3x16x16xf32, #tpu.memory_space<vmem>>, vector<1x1x16x16xf32>
    %7 = vector.shape_cast %6 : vector<1x1x16x16xf32> to vector<16x16xf32>
    %c0_13 = arith.constant 0 : index
    %c2 = arith.constant 2 : index
    %c0_14 = arith.constant 0 : index
    %c0_15 = arith.constant 0 : index
    %8 = vector.load %arg2[%c0_13, %c2, %c0_14, %c0_15] : memref<3x3x16x16xf32, #tpu.memory_space<vmem>>, vector<1x1x16x16xf32>
    %9 = vector.shape_cast %8 : vector<1x1x16x16xf32> to vector<16x16xf32>
    %c1_16 = arith.constant 1 : index
    %c0_17 = arith.constant 0 : index
    %c0_18 = arith.constant 0 : index
    %c0_19 = arith.constant 0 : index
    %10 = vector.load %arg2[%c1_16, %c0_17, %c0_18, %c0_19] : memref<3x3x16x16xf32, #tpu.memory_space<vmem>>, vector<1x1x16x16xf32>
    %11 = vector.shape_cast %10 : vector<1x1x16x16xf32> to vector<16x16xf32>
    %c1_20 = arith.constant 1 : index
    %c1_21 = arith.constant 1 : index
    %c0_22 = arith.constant 0 : index
    %c0_23 = arith.constant 0 : index
    %12 = vector.load %arg2[%c1_20, %c1_21, %c0_22, %c0_23] : memref<3x3x16x16xf32, #tpu.memory_space<vmem>>, vector<1x1x16x16xf32>
    %13 = vector.shape_cast %12 : vector<1x1x16x16xf32> to vector<16x16xf32>
    %c1_24 = arith.constant 1 : index
    %c2_25 = arith.constant 2 : index
    %c0_26 = arith.constant 0 : index
    %c0_27 = arith.constant 0 : index
    %14 = vector.load %arg2[%c1_24, %c2_25, %c0_26, %c0_27] : memref<3x3x16x16xf32, #tpu.memory_space<vmem>>, vector<1x1x16x16xf32>
    %15 = vector.shape_cast %14 : vector<1x1x16x16xf32> to vector<16x16xf32>
    %c2_28 = arith.constant 2 : index
    %c0_29 = arith.constant 0 : index
    %c0_30 = arith.constant 0 : index
    %c0_31 = arith.constant 0 : index
    %16 = vector.load %arg2[%c2_28, %c0_29, %c0_30, %c0_31] : memref<3x3x16x16xf32, #tpu.memory_space<vmem>>, vector<1x1x16x16xf32>
    %17 = vector.shape_cast %16 : vector<1x1x16x16xf32> to vector<16x16xf32>
    %c2_32 = arith.constant 2 : index
    %c1_33 = arith.constant 1 : index
    %c0_34 = arith.constant 0 : index
    %c0_35 = arith.constant 0 : index
    %18 = vector.load %arg2[%c2_32, %c1_33, %c0_34, %c0_35] : memref<3x3x16x16xf32, #tpu.memory_space<vmem>>, vector<1x1x16x16xf32>
    %19 = vector.shape_cast %18 : vector<1x1x16x16xf32> to vector<16x16xf32>
    %c2_36 = arith.constant 2 : index
    %c2_37 = arith.constant 2 : index
    %c0_38 = arith.constant 0 : index
    %c0_39 = arith.constant 0 : index
    %20 = vector.load %arg2[%c2_36, %c2_37, %c0_38, %c0_39] : memref<3x3x16x16xf32, #tpu.memory_space<vmem>>, vector<1x1x16x16xf32>
    %21 = vector.shape_cast %20 : vector<1x1x16x16xf32> to vector<16x16xf32>
    %c0_40 = arith.constant 0 : index
    %c0_41 = arith.constant 0 : index
    %c0_42 = arith.constant 0 : index
    %c0_43 = arith.constant 0 : index
    %22 = vector.load %arg4[%c0_40, %c0_41, %c0_42, %c0_43] : memref<3x3x16x16xf32, #tpu.memory_space<vmem>>, vector<1x1x16x16xf32>
    %23 = vector.shape_cast %22 : vector<1x1x16x16xf32> to vector<16x16xf32>
    %c0_44 = arith.constant 0 : index
    %c1_45 = arith.constant 1 : index
    %c0_46 = arith.constant 0 : index
    %c0_47 = arith.constant 0 : index
    %24 = vector.load %arg4[%c0_44, %c1_45, %c0_46, %c0_47] : memref<3x3x16x16xf32, #tpu.memory_space<vmem>>, vector<1x1x16x16xf32>
    %25 = vector.shape_cast %24 : vector<1x1x16x16xf32> to vector<16x16xf32>
    %c0_48 = arith.constant 0 : index
    %c2_49 = arith.constant 2 : index
    %c0_50 = arith.constant 0 : index
    %c0_51 = arith.constant 0 : index
    %26 = vector.load %arg4[%c0_48, %c2_49, %c0_50, %c0_51] : memref<3x3x16x16xf32, #tpu.memory_space<vmem>>, vector<1x1x16x16xf32>
    %27 = vector.shape_cast %26 : vector<1x1x16x16xf32> to vector<16x16xf32>
    %c1_52 = arith.constant 1 : index
    %c0_53 = arith.constant 0 : index
    %c0_54 = arith.constant 0 : index
    %c0_55 = arith.constant 0 : index
    %28 = vector.load %arg4[%c1_52, %c0_53, %c0_54, %c0_55] : memref<3x3x16x16xf32, #tpu.memory_space<vmem>>, vector<1x1x16x16xf32>
    %29 = vector.shape_cast %28 : vector<1x1x16x16xf32> to vector<16x16xf32>
    %c1_56 = arith.constant 1 : index
    %c1_57 = arith.constant 1 : index
    %c0_58 = arith.constant 0 : index
    %c0_59 = arith.constant 0 : index
    %30 = vector.load %arg4[%c1_56, %c1_57, %c0_58, %c0_59] : memref<3x3x16x16xf32, #tpu.memory_space<vmem>>, vector<1x1x16x16xf32>
    %31 = vector.shape_cast %30 : vector<1x1x16x16xf32> to vector<16x16xf32>
    %c1_60 = arith.constant 1 : index
    %c2_61 = arith.constant 2 : index
    %c0_62 = arith.constant 0 : index
    %c0_63 = arith.constant 0 : index
    %32 = vector.load %arg4[%c1_60, %c2_61, %c0_62, %c0_63] : memref<3x3x16x16xf32, #tpu.memory_space<vmem>>, vector<1x1x16x16xf32>
    %33 = vector.shape_cast %32 : vector<1x1x16x16xf32> to vector<16x16xf32>
    %c2_64 = arith.constant 2 : index
    %c0_65 = arith.constant 0 : index
    %c0_66 = arith.constant 0 : index
    %c0_67 = arith.constant 0 : index
    %34 = vector.load %arg4[%c2_64, %c0_65, %c0_66, %c0_67] : memref<3x3x16x16xf32, #tpu.memory_space<vmem>>, vector<1x1x16x16xf32>
    %35 = vector.shape_cast %34 : vector<1x1x16x16xf32> to vector<16x16xf32>
    %c2_68 = arith.constant 2 : index
    %c1_69 = arith.constant 1 : index
    %c0_70 = arith.constant 0 : index
    %c0_71 = arith.constant 0 : index
    %36 = vector.load %arg4[%c2_68, %c1_69, %c0_70, %c0_71] : memref<3x3x16x16xf32, #tpu.memory_space<vmem>>, vector<1x1x16x16xf32>
    %37 = vector.shape_cast %36 : vector<1x1x16x16xf32> to vector<16x16xf32>
    %c2_72 = arith.constant 2 : index
    %c2_73 = arith.constant 2 : index
    %c0_74 = arith.constant 0 : index
    %c0_75 = arith.constant 0 : index
    %38 = vector.load %arg4[%c2_72, %c2_73, %c0_74, %c0_75] : memref<3x3x16x16xf32, #tpu.memory_space<vmem>>, vector<1x1x16x16xf32>
    %39 = vector.shape_cast %38 : vector<1x1x16x16xf32> to vector<16x16xf32>
    %c0_76 = arith.constant 0 : index
    %c0_77 = arith.constant 0 : index
    %c0_78 = arith.constant 0 : index
    %c0_79 = arith.constant 0 : index
    %40 = vector.load %arg6[%c0_76, %c0_77, %c0_78, %c0_79] : memref<3x3x16x16xf32, #tpu.memory_space<vmem>>, vector<1x1x16x16xf32>
    %41 = vector.shape_cast %40 : vector<1x1x16x16xf32> to vector<16x16xf32>
    %c0_80 = arith.constant 0 : index
    %c1_81 = arith.constant 1 : index
    %c0_82 = arith.constant 0 : index
    %c0_83 = arith.constant 0 : index
    %42 = vector.load %arg6[%c0_80, %c1_81, %c0_82, %c0_83] : memref<3x3x16x16xf32, #tpu.memory_space<vmem>>, vector<1x1x16x16xf32>
    %43 = vector.shape_cast %42 : vector<1x1x16x16xf32> to vector<16x16xf32>
    %c0_84 = arith.constant 0 : index
    %c2_85 = arith.constant 2 : index
    %c0_86 = arith.constant 0 : index
    %c0_87 = arith.constant 0 : index
    %44 = vector.load %arg6[%c0_84, %c2_85, %c0_86, %c0_87] : memref<3x3x16x16xf32, #tpu.memory_space<vmem>>, vector<1x1x16x16xf32>
    %45 = vector.shape_cast %44 : vector<1x1x16x16xf32> to vector<16x16xf32>
    %c1_88 = arith.constant 1 : index
    %c0_89 = arith.constant 0 : index
    %c0_90 = arith.constant 0 : index
    %c0_91 = arith.constant 0 : index
    %46 = vector.load %arg6[%c1_88, %c0_89, %c0_90, %c0_91] : memref<3x3x16x16xf32, #tpu.memory_space<vmem>>, vector<1x1x16x16xf32>
    %47 = vector.shape_cast %46 : vector<1x1x16x16xf32> to vector<16x16xf32>
    %c1_92 = arith.constant 1 : index
    %c1_93 = arith.constant 1 : index
    %c0_94 = arith.constant 0 : index
    %c0_95 = arith.constant 0 : index
    %48 = vector.load %arg6[%c1_92, %c1_93, %c0_94, %c0_95] : memref<3x3x16x16xf32, #tpu.memory_space<vmem>>, vector<1x1x16x16xf32>
    %49 = vector.shape_cast %48 : vector<1x1x16x16xf32> to vector<16x16xf32>
    %c1_96 = arith.constant 1 : index
    %c2_97 = arith.constant 2 : index
    %c0_98 = arith.constant 0 : index
    %c0_99 = arith.constant 0 : index
    %50 = vector.load %arg6[%c1_96, %c2_97, %c0_98, %c0_99] : memref<3x3x16x16xf32, #tpu.memory_space<vmem>>, vector<1x1x16x16xf32>
    %51 = vector.shape_cast %50 : vector<1x1x16x16xf32> to vector<16x16xf32>
    %c2_100 = arith.constant 2 : index
    %c0_101 = arith.constant 0 : index
    %c0_102 = arith.constant 0 : index
    %c0_103 = arith.constant 0 : index
    %52 = vector.load %arg6[%c2_100, %c0_101, %c0_102, %c0_103] : memref<3x3x16x16xf32, #tpu.memory_space<vmem>>, vector<1x1x16x16xf32>
    %53 = vector.shape_cast %52 : vector<1x1x16x16xf32> to vector<16x16xf32>
    %c2_104 = arith.constant 2 : index
    %c1_105 = arith.constant 1 : index
    %c0_106 = arith.constant 0 : index
    %c0_107 = arith.constant 0 : index
    %54 = vector.load %arg6[%c2_104, %c1_105, %c0_106, %c0_107] : memref<3x3x16x16xf32, #tpu.memory_space<vmem>>, vector<1x1x16x16xf32>
    %55 = vector.shape_cast %54 : vector<1x1x16x16xf32> to vector<16x16xf32>
    %c2_108 = arith.constant 2 : index
    %c2_109 = arith.constant 2 : index
    %c0_110 = arith.constant 0 : index
    %c0_111 = arith.constant 0 : index
    %56 = vector.load %arg6[%c2_108, %c2_109, %c0_110, %c0_111] : memref<3x3x16x16xf32, #tpu.memory_space<vmem>>, vector<1x1x16x16xf32>
    %57 = vector.shape_cast %56 : vector<1x1x16x16xf32> to vector<16x16xf32>
    %c0_112 = arith.constant 0 : index
    %c0_113 = arith.constant 0 : index
    %58 = vector.load %arg3[%c0_112, %c0_113] : memref<16x1xf32, #tpu.memory_space<vmem>>, vector<16x1xf32>
    %c0_114 = arith.constant 0 : index
    %c0_115 = arith.constant 0 : index
    %59 = vector.load %arg5[%c0_114, %c0_115] : memref<16x1xf32, #tpu.memory_space<vmem>>, vector<16x1xf32>
    %c0_116 = arith.constant 0 : index
    %c0_117 = arith.constant 0 : index
    %60 = vector.load %arg7[%c0_116, %c0_117] : memref<16x1xf32, #tpu.memory_space<vmem>>, vector<16x1xf32>
    %c0_i32 = arith.constant 0 : i32
    %cst_118 = arith.constant 0.000000e+00 : f32
    %61 = vector.broadcast %cst_118 : f32 to vector<16x1xf32>
    %c0_i32_119 = arith.constant 0 : i32
    %62 = arith.addi %c0_i32, %c0_i32_119 : i32
    %c0_120 = arith.constant 0 : index
    %63 = arith.index_cast %62 : i32 to index
    %c0_121 = arith.constant 0 : index
    %c0_122 = arith.constant 0 : index
    %c0_123 = arith.constant 0 : index
    %64 = vector.load %arg1[%c0_120, %63, %c0_121, %c0_122, %c0_123] : memref<1x2x4x16x2xf32, #tpu.memory_space<vmem>>, vector<1x1x1x16x2xf32>
    %65 = vector.shape_cast %64 : vector<1x1x1x16x2xf32> to vector<16x2xf32>
    %66 = vector.extract_strided_slice %65 {offsets = [0, 0], sizes = [16, 1], strides = [1, 1]} : vector<16x2xf32> to vector<16x1xf32>
    %cst_124 = arith.constant dense<0.000000e+00> : vector<16x1xf32>
    %67 = tpu.matmul %5, %66, %cst_124 {dimension_numbers = #tpu.dot_dimension_numbers<[1], [0], [0], [1], [0, 0, 1, 1], [], []>} : vector<16x16xf32>, vector<16x1xf32>, vector<16x1xf32> -> vector<16x1xf32>
    %68 = arith.addf %61, %67 : vector<16x1xf32>
    %c0_i32_125 = arith.constant 0 : i32
    %69 = arith.addi %c0_i32, %c0_i32_125 : i32
    %c0_126 = arith.constant 0 : index
    %70 = arith.index_cast %69 : i32 to index
    %c1_127 = arith.constant 1 : index
    %c0_128 = arith.constant 0 : index
    %c0_129 = arith.constant 0 : index
    %71 = vector.load %arg1[%c0_126, %70, %c1_127, %c0_128, %c0_129] : memref<1x2x4x16x2xf32, #tpu.memory_space<vmem>>, vector<1x1x1x16x2xf32>
    %72 = vector.shape_cast %71 : vector<1x1x1x16x2xf32> to vector<16x2xf32>
    %73 = vector.extract_strided_slice %72 {offsets = [0, 0], sizes = [16, 1], strides = [1, 1]} : vector<16x2xf32> to vector<16x1xf32>
    %cst_130 = arith.constant dense<0.000000e+00> : vector<16x1xf32>
    %74 = tpu.matmul %7, %73, %cst_130 {dimension_numbers = #tpu.dot_dimension_numbers<[1], [0], [0], [1], [0, 0, 1, 1], [], []>} : vector<16x16xf32>, vector<16x1xf32>, vector<16x1xf32> -> vector<16x1xf32>
    %75 = arith.addf %68, %74 : vector<16x1xf32>
    %c0_i32_131 = arith.constant 0 : i32
    %76 = arith.addi %c0_i32, %c0_i32_131 : i32
    %c0_132 = arith.constant 0 : index
    %77 = arith.index_cast %76 : i32 to index
    %c0_133 = arith.constant 0 : index
    %c0_134 = arith.constant 0 : index
    %c0_135 = arith.constant 0 : index
    %78 = vector.load %arg1[%c0_132, %77, %c0_133, %c0_134, %c0_135] : memref<1x2x4x16x2xf32, #tpu.memory_space<vmem>>, vector<1x1x1x16x2xf32>
    %79 = vector.shape_cast %78 : vector<1x1x1x16x2xf32> to vector<16x2xf32>
    %80 = vector.extract_strided_slice %79 {offsets = [0, 1], sizes = [16, 1], strides = [1, 1]} : vector<16x2xf32> to vector<16x1xf32>
    %cst_136 = arith.constant dense<0.000000e+00> : vector<16x1xf32>
    %81 = tpu.matmul %9, %80, %cst_136 {dimension_numbers = #tpu.dot_dimension_numbers<[1], [0], [0], [1], [0, 0, 1, 1], [], []>} : vector<16x16xf32>, vector<16x1xf32>, vector<16x1xf32> -> vector<16x1xf32>
    %82 = arith.addf %75, %81 : vector<16x1xf32>
    %c0_i32_137 = arith.constant 0 : i32
    %83 = arith.addi %c0_i32, %c0_i32_137 : i32
    %c0_138 = arith.constant 0 : index
    %84 = arith.index_cast %83 : i32 to index
    %c2_139 = arith.constant 2 : index
    %c0_140 = arith.constant 0 : index
    %c0_141 = arith.constant 0 : index
    %85 = vector.load %arg1[%c0_138, %84, %c2_139, %c0_140, %c0_141] : memref<1x2x4x16x2xf32, #tpu.memory_space<vmem>>, vector<1x1x1x16x2xf32>
    %86 = vector.shape_cast %85 : vector<1x1x1x16x2xf32> to vector<16x2xf32>
    %87 = vector.extract_strided_slice %86 {offsets = [0, 0], sizes = [16, 1], strides = [1, 1]} : vector<16x2xf32> to vector<16x1xf32>
    %cst_142 = arith.constant dense<0.000000e+00> : vector<16x1xf32>
    %88 = tpu.matmul %11, %87, %cst_142 {dimension_numbers = #tpu.dot_dimension_numbers<[1], [0], [0], [1], [0, 0, 1, 1], [], []>} : vector<16x16xf32>, vector<16x1xf32>, vector<16x1xf32> -> vector<16x1xf32>
    %89 = arith.addf %82, %88 : vector<16x1xf32>
    %c0_i32_143 = arith.constant 0 : i32
    %90 = arith.addi %c0_i32, %c0_i32_143 : i32
    %c0_144 = arith.constant 0 : index
    %91 = arith.index_cast %90 : i32 to index
    %c3 = arith.constant 3 : index
    %c0_145 = arith.constant 0 : index
    %c0_146 = arith.constant 0 : index
    %92 = vector.load %arg1[%c0_144, %91, %c3, %c0_145, %c0_146] : memref<1x2x4x16x2xf32, #tpu.memory_space<vmem>>, vector<1x1x1x16x2xf32>
    %93 = vector.shape_cast %92 : vector<1x1x1x16x2xf32> to vector<16x2xf32>
    %94 = vector.extract_strided_slice %93 {offsets = [0, 0], sizes = [16, 1], strides = [1, 1]} : vector<16x2xf32> to vector<16x1xf32>
    %cst_147 = arith.constant dense<0.000000e+00> : vector<16x1xf32>
    %95 = tpu.matmul %13, %94, %cst_147 {dimension_numbers = #tpu.dot_dimension_numbers<[1], [0], [0], [1], [0, 0, 1, 1], [], []>} : vector<16x16xf32>, vector<16x1xf32>, vector<16x1xf32> -> vector<16x1xf32>
    %96 = arith.addf %89, %95 : vector<16x1xf32>
    %c0_i32_148 = arith.constant 0 : i32
    %97 = arith.addi %c0_i32, %c0_i32_148 : i32
    %c0_149 = arith.constant 0 : index
    %98 = arith.index_cast %97 : i32 to index
    %c2_150 = arith.constant 2 : index
    %c0_151 = arith.constant 0 : index
    %c0_152 = arith.constant 0 : index
    %99 = vector.load %arg1[%c0_149, %98, %c2_150, %c0_151, %c0_152] : memref<1x2x4x16x2xf32, #tpu.memory_space<vmem>>, vector<1x1x1x16x2xf32>
    %100 = vector.shape_cast %99 : vector<1x1x1x16x2xf32> to vector<16x2xf32>
    %101 = vector.extract_strided_slice %100 {offsets = [0, 1], sizes = [16, 1], strides = [1, 1]} : vector<16x2xf32> to vector<16x1xf32>
    %cst_153 = arith.constant dense<0.000000e+00> : vector<16x1xf32>
    %102 = tpu.matmul %15, %101, %cst_153 {dimension_numbers = #tpu.dot_dimension_numbers<[1], [0], [0], [1], [0, 0, 1, 1], [], []>} : vector<16x16xf32>, vector<16x1xf32>, vector<16x1xf32> -> vector<16x1xf32>
    %103 = arith.addf %96, %102 : vector<16x1xf32>
    %c1_i32 = arith.constant 1 : i32
    %104 = arith.addi %c0_i32, %c1_i32 : i32
    %c0_154 = arith.constant 0 : index
    %105 = arith.index_cast %104 : i32 to index
    %c0_155 = arith.constant 0 : index
    %c0_156 = arith.constant 0 : index
    %c0_157 = arith.constant 0 : index
    %106 = vector.load %arg1[%c0_154, %105, %c0_155, %c0_156, %c0_157] : memref<1x2x4x16x2xf32, #tpu.memory_space<vmem>>, vector<1x1x1x16x2xf32>
    %107 = vector.shape_cast %106 : vector<1x1x1x16x2xf32> to vector<16x2xf32>
    %108 = vector.extract_strided_slice %107 {offsets = [0, 0], sizes = [16, 1], strides = [1, 1]} : vector<16x2xf32> to vector<16x1xf32>
    %cst_158 = arith.constant dense<0.000000e+00> : vector<16x1xf32>
    %109 = tpu.matmul %17, %108, %cst_158 {dimension_numbers = #tpu.dot_dimension_numbers<[1], [0], [0], [1], [0, 0, 1, 1], [], []>} : vector<16x16xf32>, vector<16x1xf32>, vector<16x1xf32> -> vector<16x1xf32>
    %110 = arith.addf %103, %109 : vector<16x1xf32>
    %c1_i32_159 = arith.constant 1 : i32
    %111 = arith.addi %c0_i32, %c1_i32_159 : i32
    %c0_160 = arith.constant 0 : index
    %112 = arith.index_cast %111 : i32 to index
    %c1_161 = arith.constant 1 : index
    %c0_162 = arith.constant 0 : index
    %c0_163 = arith.constant 0 : index
    %113 = vector.load %arg1[%c0_160, %112, %c1_161, %c0_162, %c0_163] : memref<1x2x4x16x2xf32, #tpu.memory_space<vmem>>, vector<1x1x1x16x2xf32>
    %114 = vector.shape_cast %113 : vector<1x1x1x16x2xf32> to vector<16x2xf32>
    %115 = vector.extract_strided_slice %114 {offsets = [0, 0], sizes = [16, 1], strides = [1, 1]} : vector<16x2xf32> to vector<16x1xf32>
    %cst_164 = arith.constant dense<0.000000e+00> : vector<16x1xf32>
    %116 = tpu.matmul %19, %115, %cst_164 {dimension_numbers = #tpu.dot_dimension_numbers<[1], [0], [0], [1], [0, 0, 1, 1], [], []>} : vector<16x16xf32>, vector<16x1xf32>, vector<16x1xf32> -> vector<16x1xf32>
    %117 = arith.addf %110, %116 : vector<16x1xf32>
    %c1_i32_165 = arith.constant 1 : i32
    %118 = arith.addi %c0_i32, %c1_i32_165 : i32
    %c0_166 = arith.constant 0 : index
    %119 = arith.index_cast %118 : i32 to index
    %c0_167 = arith.constant 0 : index
    %c0_168 = arith.constant 0 : index
    %c0_169 = arith.constant 0 : index
    %120 = vector.load %arg1[%c0_166, %119, %c0_167, %c0_168, %c0_169] : memref<1x2x4x16x2xf32, #tpu.memory_space<vmem>>, vector<1x1x1x16x2xf32>
    %121 = vector.shape_cast %120 : vector<1x1x1x16x2xf32> to vector<16x2xf32>
    %122 = vector.extract_strided_slice %121 {offsets = [0, 1], sizes = [16, 1], strides = [1, 1]} : vector<16x2xf32> to vector<16x1xf32>
    %cst_170 = arith.constant dense<0.000000e+00> : vector<16x1xf32>
    %123 = tpu.matmul %21, %122, %cst_170 {dimension_numbers = #tpu.dot_dimension_numbers<[1], [0], [0], [1], [0, 0, 1, 1], [], []>} : vector<16x16xf32>, vector<16x1xf32>, vector<16x1xf32> -> vector<16x1xf32>
    %124 = arith.addf %117, %123 : vector<16x1xf32>
    %125 = arith.addf %124, %58 : vector<16x1xf32>
    %c1_i32_171 = arith.constant 1 : i32
    %126 = arith.addi %c0_i32, %c1_i32_171 : i32
    %127 = arith.index_cast %126 : i32 to index
    %c0_172 = arith.constant 0 : index
    %c1_173 = arith.constant 1 : index
    %128 = vector.load %arg9[%127, %c0_172, %c1_173] : memref<3x16x3xf32, #tpu.memory_space<vmem>>, vector<1x16x1xf32>
    %129 = vector.shape_cast %128 : vector<1x16x1xf32> to vector<16x1xf32>
    %130 = vector.shape_cast %125 : vector<16x1xf32> to vector<1x16x1xf32>
    tpu.vector_store %arg9[%127, %c0_172, %c1_173], %130 {strides = array<i32>} : memref<3x16x3xf32, #tpu.memory_space<vmem>>, vector<1x16x1xf32>,
    %c1_i32_174 = arith.constant 1 : i32
    %c0_i32_175 = arith.constant 0 : i32
    %cst_176 = arith.constant 0.000000e+00 : f32
    %131 = vector.broadcast %cst_176 : f32 to vector<16x1xf32>
    %c0_i32_177 = arith.constant 0 : i32
    %132 = arith.addi %c0_i32_175, %c0_i32_177 : i32
    %133 = arith.index_cast %132 : i32 to index
    %c0_178 = arith.constant 0 : index
    %c0_179 = arith.constant 0 : index
    %134 = vector.load %arg9[%133, %c0_178, %c0_179] : memref<3x16x3xf32, #tpu.memory_space<vmem>>, vector<1x16x3xf32>
    %135 = vector.shape_cast %134 : vector<1x16x3xf32> to vector<16x3xf32>
    %136 = vector.extract_strided_slice %135 {offsets = [0, 0], sizes = [16, 1], strides = [1, 1]} : vector<16x3xf32> to vector<16x1xf32>
    %cst_180 = arith.constant dense<0.000000e+00> : vector<16x1xf32>
    %137 = tpu.matmul %23, %136, %cst_180 {dimension_numbers = #tpu.dot_dimension_numbers<[1], [0], [0], [1], [0, 0, 1, 1], [], []>} : vector<16x16xf32>, vector<16x1xf32>, vector<16x1xf32> -> vector<16x1xf32>
    %138 = arith.addf %131, %137 : vector<16x1xf32>
    %139 = vector.extract_strided_slice %135 {offsets = [0, 1], sizes = [16, 1], strides = [1, 1]} : vector<16x3xf32> to vector<16x1xf32>
    %cst_181 = arith.constant dense<0.000000e+00> : vector<16x1xf32>
    %140 = tpu.matmul %25, %139, %cst_181 {dimension_numbers = #tpu.dot_dimension_numbers<[1], [0], [0], [1], [0, 0, 1, 1], [], []>} : vector<16x16xf32>, vector<16x1xf32>, vector<16x1xf32> -> vector<16x1xf32>
    %141 = arith.addf %138, %140 : vector<16x1xf32>
    %142 = vector.extract_strided_slice %135 {offsets = [0, 2], sizes = [16, 1], strides = [1, 1]} : vector<16x3xf32> to vector<16x1xf32>
    %cst_182 = arith.constant dense<0.000000e+00> : vector<16x1xf32>
    %143 = tpu.matmul %27, %142, %cst_182 {dimension_numbers = #tpu.dot_dimension_numbers<[1], [0], [0], [1], [0, 0, 1, 1], [], []>} : vector<16x16xf32>, vector<16x1xf32>, vector<16x1xf32> -> vector<16x1xf32>
    %144 = arith.addf %141, %143 : vector<16x1xf32>
    %c1_i32_183 = arith.constant 1 : i32
    %145 = arith.addi %c0_i32_175, %c1_i32_183 : i32
    %146 = arith.index_cast %145 : i32 to index
    %c0_184 = arith.constant 0 : index
    %c0_185 = arith.constant 0 : index
    %147 = vector.load %arg9[%146, %c0_184, %c0_185] : memref<3x16x3xf32, #tpu.memory_space<vmem>>, vector<1x16x3xf32>
    %148 = vector.shape_cast %147 : vector<1x16x3xf32> to vector<16x3xf32>
    %149 = vector.extract_strided_slice %148 {offsets = [0, 0], sizes = [16, 1], strides = [1, 1]} : vector<16x3xf32> to vector<16x1xf32>
    %cst_186 = arith.constant dense<0.000000e+00> : vector<16x1xf32>
    %150 = tpu.matmul %29, %149, %cst_186 {dimension_numbers = #tpu.dot_dimension_numbers<[1], [0], [0], [1], [0, 0, 1, 1], [], []>} : vector<16x16xf32>, vector<16x1xf32>, vector<16x1xf32> -> vector<16x1xf32>
    %151 = arith.addf %144, %150 : vector<16x1xf32>
    %152 = vector.extract_strided_slice %148 {offsets = [0, 1], sizes = [16, 1], strides = [1, 1]} : vector<16x3xf32> to vector<16x1xf32>
    %cst_187 = arith.constant dense<0.000000e+00> : vector<16x1xf32>
    %153 = tpu.matmul %31, %152, %cst_187 {dimension_numbers = #tpu.dot_dimension_numbers<[1], [0], [0], [1], [0, 0, 1, 1], [], []>} : vector<16x16xf32>, vector<16x1xf32>, vector<16x1xf32> -> vector<16x1xf32>
    %154 = arith.addf %151, %153 : vector<16x1xf32>
    %155 = vector.extract_strided_slice %148 {offsets = [0, 2], sizes = [16, 1], strides = [1, 1]} : vector<16x3xf32> to vector<16x1xf32>
    %cst_188 = arith.constant dense<0.000000e+00> : vector<16x1xf32>
    %156 = tpu.matmul %33, %155, %cst_188 {dimension_numbers = #tpu.dot_dimension_numbers<[1], [0], [0], [1], [0, 0, 1, 1], [], []>} : vector<16x16xf32>, vector<16x1xf32>, vector<16x1xf32> -> vector<16x1xf32>
    %157 = arith.addf %154, %156 : vector<16x1xf32>
    %c2_i32 = arith.constant 2 : i32
    %158 = arith.addi %c0_i32_175, %c2_i32 : i32
    %159 = arith.index_cast %158 : i32 to index
    %c0_189 = arith.constant 0 : index
    %c0_190 = arith.constant 0 : index
    %160 = vector.load %arg9[%159, %c0_189, %c0_190] : memref<3x16x3xf32, #tpu.memory_space<vmem>>, vector<1x16x3xf32>
    %161 = vector.shape_cast %160 : vector<1x16x3xf32> to vector<16x3xf32>
    %162 = vector.extract_strided_slice %161 {offsets = [0, 0], sizes = [16, 1], strides = [1, 1]} : vector<16x3xf32> to vector<16x1xf32>
    %cst_191 = arith.constant dense<0.000000e+00> : vector<16x1xf32>
    %163 = tpu.matmul %35, %162, %cst_191 {dimension_numbers = #tpu.dot_dimension_numbers<[1], [0], [0], [1], [0, 0, 1, 1], [], []>} : vector<16x16xf32>, vector<16x1xf32>, vector<16x1xf32> -> vector<16x1xf32>
    %164 = arith.addf %157, %163 : vector<16x1xf32>
    %165 = vector.extract_strided_slice %161 {offsets = [0, 1], sizes = [16, 1], strides = [1, 1]} : vector<16x3xf32> to vector<16x1xf32>
    %cst_192 = arith.constant dense<0.000000e+00> : vector<16x1xf32>
    %166 = tpu.matmul %37, %165, %cst_192 {dimension_numbers = #tpu.dot_dimension_numbers<[1], [0], [0], [1], [0, 0, 1, 1], [], []>} : vector<16x16xf32>, vector<16x1xf32>, vector<16x1xf32> -> vector<16x1xf32>
    %167 = arith.addf %164, %166 : vector<16x1xf32>
    %168 = vector.extract_strided_slice %161 {offsets = [0, 2], sizes = [16, 1], strides = [1, 1]} : vector<16x3xf32> to vector<16x1xf32>
    %cst_193 = arith.constant dense<0.000000e+00> : vector<16x1xf32>
    %169 = tpu.matmul %39, %168, %cst_193 {dimension_numbers = #tpu.dot_dimension_numbers<[1], [0], [0], [1], [0, 0, 1, 1], [], []>} : vector<16x16xf32>, vector<16x1xf32>, vector<16x1xf32> -> vector<16x1xf32>
    %170 = arith.addf %167, %169 : vector<16x1xf32>
    %171 = arith.addf %170, %59 : vector<16x1xf32>
    %c1_i32_194 = arith.constant 1 : i32
    %172 = arith.addi %c0_i32_175, %c1_i32_194 : i32
    %173 = arith.index_cast %172 : i32 to index
    %c0_195 = arith.constant 0 : index
    %c1_196 = arith.constant 1 : index
    %174 = vector.load %arg10[%173, %c0_195, %c1_196] : memref<3x16x3xf32, #tpu.memory_space<vmem>>, vector<1x16x1xf32>
    %175 = vector.shape_cast %174 : vector<1x16x1xf32> to vector<16x1xf32>
    %176 = vector.shape_cast %171 : vector<16x1xf32> to vector<1x16x1xf32>
    tpu.vector_store %arg10[%173, %c0_195, %c1_196], %176 {strides = array<i32>} : memref<3x16x3xf32, #tpu.memory_space<vmem>>, vector<1x16x1xf32>,
    %c1_i32_197 = arith.constant 1 : i32
    %c0_i32_198 = arith.constant 0 : i32
    %cst_199 = arith.constant 0.000000e+00 : f32
    %177 = vector.broadcast %cst_199 : f32 to vector<16x1xf32>
    %c0_i32_200 = arith.constant 0 : i32
    %178 = arith.addi %c0_i32_198, %c0_i32_200 : i32
    %179 = arith.index_cast %178 : i32 to index
    %c0_201 = arith.constant 0 : index
    %c0_202 = arith.constant 0 : index
    %180 = vector.load %arg10[%179, %c0_201, %c0_202] : memref<3x16x3xf32, #tpu.memory_space<vmem>>, vector<1x16x3xf32>
    %181 = vector.shape_cast %180 : vector<1x16x3xf32> to vector<16x3xf32>
    %182 = vector.extract_strided_slice %181 {offsets = [0, 0], sizes = [16, 1], strides = [1, 1]} : vector<16x3xf32> to vector<16x1xf32>
    %cst_203 = arith.constant dense<0.000000e+00> : vector<16x1xf32>
    %183 = tpu.matmul %41, %182, %cst_203 {dimension_numbers = #tpu.dot_dimension_numbers<[1], [0], [0], [1], [0, 0, 1, 1], [], []>} : vector<16x16xf32>, vector<16x1xf32>, vector<16x1xf32> -> vector<16x1xf32>
    %184 = arith.addf %177, %183 : vector<16x1xf32>
    %185 = vector.extract_strided_slice %181 {offsets = [0, 1], sizes = [16, 1], strides = [1, 1]} : vector<16x3xf32> to vector<16x1xf32>
    %cst_204 = arith.constant dense<0.000000e+00> : vector<16x1xf32>
    %186 = tpu.matmul %43, %185, %cst_204 {dimension_numbers = #tpu.dot_dimension_numbers<[1], [0], [0], [1], [0, 0, 1, 1], [], []>} : vector<16x16xf32>, vector<16x1xf32>, vector<16x1xf32> -> vector<16x1xf32>
    %187 = arith.addf %184, %186 : vector<16x1xf32>
    %188 = vector.extract_strided_slice %181 {offsets = [0, 2], sizes = [16, 1], strides = [1, 1]} : vector<16x3xf32> to vector<16x1xf32>
    %cst_205 = arith.constant dense<0.000000e+00> : vector<16x1xf32>
    %189 = tpu.matmul %45, %188, %cst_205 {dimension_numbers = #tpu.dot_dimension_numbers<[1], [0], [0], [1], [0, 0, 1, 1], [], []>} : vector<16x16xf32>, vector<16x1xf32>, vector<16x1xf32> -> vector<16x1xf32>
    %190 = arith.addf %187, %189 : vector<16x1xf32>
    %c1_i32_206 = arith.constant 1 : i32
    %191 = arith.addi %c0_i32_198, %c1_i32_206 : i32
    %192 = arith.index_cast %191 : i32 to index
    %c0_207 = arith.constant 0 : index
    %c0_208 = arith.constant 0 : index
    %193 = vector.load %arg10[%192, %c0_207, %c0_208] : memref<3x16x3xf32, #tpu.memory_space<vmem>>, vector<1x16x3xf32>
    %194 = vector.shape_cast %193 : vector<1x16x3xf32> to vector<16x3xf32>
    %195 = vector.extract_strided_slice %194 {offsets = [0, 0], sizes = [16, 1], strides = [1, 1]} : vector<16x3xf32> to vector<16x1xf32>
    %cst_209 = arith.constant dense<0.000000e+00> : vector<16x1xf32>
    %196 = tpu.matmul %47, %195, %cst_209 {dimension_numbers = #tpu.dot_dimension_numbers<[1], [0], [0], [1], [0, 0, 1, 1], [], []>} : vector<16x16xf32>, vector<16x1xf32>, vector<16x1xf32> -> vector<16x1xf32>
    %197 = arith.addf %190, %196 : vector<16x1xf32>
    %198 = vector.extract_strided_slice %194 {offsets = [0, 1], sizes = [16, 1], strides = [1, 1]} : vector<16x3xf32> to vector<16x1xf32>
    %cst_210 = arith.constant dense<0.000000e+00> : vector<16x1xf32>
    %199 = tpu.matmul %49, %198, %cst_210 {dimension_numbers = #tpu.dot_dimension_numbers<[1], [0], [0], [1], [0, 0, 1, 1], [], []>} : vector<16x16xf32>, vector<16x1xf32>, vector<16x1xf32> -> vector<16x1xf32>
    %200 = arith.addf %197, %199 : vector<16x1xf32>
    %201 = vector.extract_strided_slice %194 {offsets = [0, 2], sizes = [16, 1], strides = [1, 1]} : vector<16x3xf32> to vector<16x1xf32>
    %cst_211 = arith.constant dense<0.000000e+00> : vector<16x1xf32>
    %202 = tpu.matmul %51, %201, %cst_211 {dimension_numbers = #tpu.dot_dimension_numbers<[1], [0], [0], [1], [0, 0, 1, 1], [], []>} : vector<16x16xf32>, vector<16x1xf32>, vector<16x1xf32> -> vector<16x1xf32>
    %203 = arith.addf %200, %202 : vector<16x1xf32>
    %c2_i32_212 = arith.constant 2 : i32
    %204 = arith.addi %c0_i32_198, %c2_i32_212 : i32
    %205 = arith.index_cast %204 : i32 to index
    %c0_213 = arith.constant 0 : index
    %c0_214 = arith.constant 0 : index
    %206 = vector.load %arg10[%205, %c0_213, %c0_214] : memref<3x16x3xf32, #tpu.memory_space<vmem>>, vector<1x16x3xf32>
    %207 = vector.shape_cast %206 : vector<1x16x3xf32> to vector<16x3xf32>
    %208 = vector.extract_strided_slice %207 {offsets = [0, 0], sizes = [16, 1], strides = [1, 1]} : vector<16x3xf32> to vector<16x1xf32>
    %cst_215 = arith.constant dense<0.000000e+00> : vector<16x1xf32>
    %209 = tpu.matmul %53, %208, %cst_215 {dimension_numbers = #tpu.dot_dimension_numbers<[1], [0], [0], [1], [0, 0, 1, 1], [], []>} : vector<16x16xf32>, vector<16x1xf32>, vector<16x1xf32> -> vector<16x1xf32>
    %210 = arith.addf %203, %209 : vector<16x1xf32>
    %211 = vector.extract_strided_slice %207 {offsets = [0, 1], sizes = [16, 1], strides = [1, 1]} : vector<16x3xf32> to vector<16x1xf32>
    %cst_216 = arith.constant dense<0.000000e+00> : vector<16x1xf32>
    %212 = tpu.matmul %55, %211, %cst_216 {dimension_numbers = #tpu.dot_dimension_numbers<[1], [0], [0], [1], [0, 0, 1, 1], [], []>} : vector<16x16xf32>, vector<16x1xf32>, vector<16x1xf32> -> vector<16x1xf32>
    %213 = arith.addf %210, %212 : vector<16x1xf32>
    %214 = vector.extract_strided_slice %207 {offsets = [0, 2], sizes = [16, 1], strides = [1, 1]} : vector<16x3xf32> to vector<16x1xf32>
    %cst_217 = arith.constant dense<0.000000e+00> : vector<16x1xf32>
    %215 = tpu.matmul %57, %214, %cst_217 {dimension_numbers = #tpu.dot_dimension_numbers<[1], [0], [0], [1], [0, 0, 1, 1], [], []>} : vector<16x16xf32>, vector<16x1xf32>, vector<16x1xf32> -> vector<16x1xf32>
    %216 = arith.addf %213, %215 : vector<16x1xf32>
    %217 = arith.addf %216, %60 : vector<16x1xf32>
    %c0_218 = arith.constant 0 : index
    %218 = arith.index_cast %c0_i32_198 : i32 to index
    %c0_219 = arith.constant 0 : index
    %c0_220 = arith.constant 0 : index
    %219 = vector.load %arg8[%c0_218, %218, %c0_219, %c0_220] : memref<1x1x16x1xf32, #tpu.memory_space<vmem>>, vector<1x1x16x1xf32>
    %220 = vector.shape_cast %219 : vector<1x1x16x1xf32> to vector<16x1xf32>
    %221 = vector.shape_cast %217 : vector<16x1xf32> to vector<1x1x16x1xf32>
    tpu.vector_store %arg8[%c0_218, %218, %c0_219, %c0_220], %221 {strides = array<i32>} : memref<1x1x16x1xf32, #tpu.memory_space<vmem>>, vector<1x1x16x1xf32>,
    %c1_i32_221 = arith.constant 1 : i32
    return
  }
  func.func @transform_0(%arg0: i32) -> (i32, i32, i32, i32, i32) {
    %c0_i32 = arith.constant 0 : i32
    %c0_i32_0 = arith.constant 0 : i32
    %c0_i32_1 = arith.constant 0 : i32
    %c0_i32_2 = arith.constant 0 : i32
    %c0_i32_3 = arith.constant 0 : i32
    return %arg0, %c0_i32, %c0_i32_0, %c0_i32_1, %c0_i32_2 : i32, i32, i32, i32, i32
  }
  func.func @transform_1(%arg0: i32) -> (i32, i32, i32, i32) {
    %c0_i32 = arith.constant 0 : i32
    %c0_i32_0 = arith.constant 0 : i32
    %c0_i32_1 = arith.constant 0 : i32
    %c0_i32_2 = arith.constant 0 : i32
    %c0_i32_3 = arith.constant 0 : i32
    return %c0_i32, %c0_i32_0, %c0_i32_1, %c0_i32_2 : i32, i32, i32, i32
  }
  func.func @transform_2(%arg0: i32) -> (i32, i32) {
    %c0_i32 = arith.constant 0 : i32
    %c0_i32_0 = arith.constant 0 : i32
    %c0_i32_1 = arith.constant 0 : i32
    return %c0_i32, %c0_i32_0 : i32, i32
  }
  func.func @transform_3(%arg0: i32) -> (i32, i32, i32, i32) {
    %c0_i32 = arith.constant 0 : i32
    %c0_i32_0 = arith.constant 0 : i32
    %c0_i32_1 = arith.constant 0 : i32
    %c0_i32_2 = arith.constant 0 : i32
    %c0_i32_3 = arith.constant 0 : i32
    return %c0_i32, %c0_i32_0, %c0_i32_1, %c0_i32_2 : i32, i32, i32, i32
  }
  func.func @transform_4(%arg0: i32) -> (i32, i32) {
    %c0_i32 = arith.constant 0 : i32
    %c0_i32_0 = arith.constant 0 : i32
    %c0_i32_1 = arith.constant 0 : i32
    return %c0_i32, %c0_i32_0 : i32, i32
  }
  func.func @transform_5(%arg0: i32) -> (i32, i32, i32, i32) {
    %c0_i32 = arith.constant 0 : i32
    %c0_i32_0 = arith.constant 0 : i32
    %c0_i32_1 = arith.constant 0 : i32
    %c0_i32_2 = arith.constant 0 : i32
    %c0_i32_3 = arith.constant 0 : i32
    return %c0_i32, %c0_i32_0, %c0_i32_1, %c0_i32_2 : i32, i32, i32, i32
  }
  func.func @transform_6(%arg0: i32) -> (i32, i32) {
    %c0_i32 = arith.constant 0 : i32
    %c0_i32_0 = arith.constant 0 : i32
    %c0_i32_1 = arith.constant 0 : i32
    return %c0_i32, %c0_i32_0 : i32, i32
  }
  func.func @transform_7(%arg0: i32) -> (i32, i32, i32, i32) {
    %c0_i32 = arith.constant 0 : i32
    %c0_i32_0 = arith.constant 0 : i32
    %c0_i32_1 = arith.constant 0 : i32
    %c0_i32_2 = arith.constant 0 : i32
    return %arg0, %c0_i32, %c0_i32_0, %c0_i32_1 : i32, i32, i32, i32
  }
}

</mosaic_0001>

<llo_original>
// kernel: _lambda_.6
$region0: #{_lambda_.6}
  #allocation0 [shape = 'u32[]', space=smem, size = 0x4, offset = 0x4, fixed_abs, tag = 'smem constant byte address 0x4 - core index']
  #allocation1 [shape = 'u32[72,128]{1,0:T(1,128)}', space=vmem, size = 0x9000, scoped, tag = 'internal scratch']
  #allocation2 [shape = 'f32[10,4,10]{2,1,0:T(4,128)}', space=vmem, size = 0x5000, scoped, tag = 'scratch operand']
  #allocation3 [shape = 'f32[10,4,10]{2,1,0:T(4,128)}', space=vmem, size = 0x5000, scoped, tag = 'scratch operand']
  %s0 = inlined_call_operand.vmem [shape: f32[4,9,4,3,9], index: 0, kind: input, shape index: {}]
  %s1 = inlined_call_operand.vmem [shape: f32[3,3,4,3], index: 1, kind: input, shape index: {}]
  %s2 = inlined_call_operand.vmem [shape: f32[4,1], index: 2, kind: input, shape index: {}, may-alias: {2,4,6}]
  %s3 = inlined_call_operand.vmem [shape: f32[3,3,4,4], index: 3, kind: input, shape index: {}]
  %s4 = inlined_call_operand.vmem [shape: f32[4,1], index: 4, kind: input, shape index: {}, may-alias: {2,4,6}]
  %s5 = inlined_call_operand.vmem [shape: f32[3,3,4,4], index: 5, kind: input, shape index: {}]
  %s6 = inlined_call_operand.vmem [shape: f32[4,1], index: 6, kind: input, shape index: {}, may-alias: {2,4,6}]
  %s7 = inlined_call_operand.vmem [shape: f32[4,8,4,8], index: 7, kind: output, shape index: {}]
  %s8 = sld [smem:[#allocation0]]
  $region82: #{_lambda_.6} parent=0
    _
  %s10 = ssub.s32 1, %s8
  %s11 = scalar_select 0, %s10, %s8
  loop: start=0, step=1, limit=6
  $region2: #{_lambda_.6} parent=0 // loop_pre_header
    _
  $region3: #{_lambda_.6} parent=0 // loop_header
    %s13 = sphi 0, %s17
    %p14 = scmp.ge.s32.totalorder %s13, 6
    %s23 = sphi 0, %s25
    %s26 = sphi 0, %s23
    %s27 = sphi 0, %s26
    %s43 = sphi 0, %s27
    %s47 = sphi 0, %s47
    %s49 = sphi 0, %s47
    %s50 = sphi 0, %s49
    %s64 = sphi 0, %s50
    %s68 = sphi 0, %s68
    %s70 = sphi 0, %s68
    %s71 = sphi 0, %s70
    %s85 = sphi 0, %s71
    %s89 = sphi 0, %s89
    %s91 = sphi 0, %s89
    %s92 = sphi 0, %s91
    %s106 = sphi 0, %s92
    %s110 = sphi 0, %s110
    %s112 = sphi 0, %s110
    %s113 = sphi 0, %s112
    %s127 = sphi 0, %s113
    %s131 = sphi 0, %s131
    %s133 = sphi 0, %s131
    %s134 = sphi 0, %s133
    %s148 = sphi 0, %s134
    %s152 = sphi 0, %s152
    %s154 = sphi 0, %s152
    %s155 = sphi 0, %s154
    %s169 = sphi 0, %s155
    %s175 = sphi 0, %s177
    %s178 = sphi 0, %s175
    %s179 = sphi 0, %s178
    %s195 = sphi 0, %s179
  $region4: #{_lambda_.6} parent=0 // loop_header_branch
    %16 = sbr.rel (%p14) target = $region8
  $region5: #{_lambda_.6} parent=0 // loop_body
    %s18 = ssub.s32 %s13, 1
    %s19 = ssub.s32 %s13, 2
    %s20 = sadd.s32 %s13, 1
    %s21 = ssub.s32 %s13, %s20
    %p22 = scmp.eq.s32.totalorder %s21, 0
    %s24 = sadd.s32 %s23, 1
    %s25 = scalar_select %p22, %s23, %s24
    %p28 = pneg %p22
    %p29 = scmp.eq.s32.totalorder %s13, 3
    %p30 = por %p28, %p29
    %p31 = scmp.ne.s32.totalorder %s23, %s26
    %p32 = scmp.eq.s32.totalorder %s13, 0
    %p33 = por %p31, %p32
    %p34 = scmp.ne.s32.totalorder %s23, %s26
    %p35 = scmp.eq.s32.totalorder %s18, 3
    %p36 = por %p34, %p35
    %p37 = scmp.ne.s32.totalorder %s26, %s27
    %p38 = scmp.eq.s32.totalorder %s18, 0
    %p39 = por %p37, %p38
    %p40 = scmp.ne.s32.totalorder %s26, %s27
    %p41 = scmp.eq.s32.totalorder %s19, 3
    %p42 = por %p40, %p41
    %p44 = scmp.ne.s32.totalorder %s27, %s43
    %p45 = scmp.eq.s32.totalorder %s19, 0
    %p46 = por %p44, %p45
    %s48 = sadd.s32 %s47, 1
    %p51 = scmp.eq.s32.totalorder %s13, 3
    %p52 = scmp.ne.s32.totalorder %s47, %s49
    %p53 = scmp.eq.s32.totalorder %s13, 0
    %p54 = por %p52, %p53
    %p55 = scmp.ne.s32.totalorder %s47, %s49
    %p56 = scmp.eq.s32.totalorder %s18, 3
    %p57 = por %p55, %p56
    %p58 = scmp.ne.s32.totalorder %s49, %s50
    %p59 = scmp.eq.s32.totalorder %s18, 0
    %p60 = por %p58, %p59
    %p61 = scmp.ne.s32.totalorder %s49, %s50
    %p62 = scmp.eq.s32.totalorder %s19, 3
    %p63 = por %p61, %p62
    %p65 = scmp.ne.s32.totalorder %s50, %s64
    %p66 = scmp.eq.s32.totalorder %s19, 0
    %p67 = por %p65, %p66
    %s69 = sadd.s32 %s68, 1
    %p72 = scmp.eq.s32.totalorder %s13, 3
    %p73 = scmp.ne.s32.totalorder %s68, %s70
    %p74 = scmp.eq.s32.totalorder %s13, 0
    %p75 = por %p73, %p74
    %p76 = scmp.ne.s32.totalorder %s68, %s70
    %p77 = scmp.eq.s32.totalorder %s18, 3
    %p78 = por %p76, %p77
    %p79 = scmp.ne.s32.totalorder %s70, %s71
    %p80 = scmp.eq.s32.totalorder %s18, 0
    %p81 = por %p79, %p80
    %p82 = scmp.ne.s32.totalorder %s70, %s71
    %p83 = scmp.eq.s32.totalorder %s19, 3
    %p84 = por %p82, %p83
    %p86 = scmp.ne.s32.totalorder %s71, %s85
    %p87 = scmp.eq.s32.totalorder %s19, 0
    %p88 = por %p86, %p87
    %s90 = sadd.s32 %s89, 1
    %p93 = scmp.eq.s32.totalorder %s13, 3
    %p94 = scmp.ne.s32.totalorder %s89, %s91
    %p95 = scmp.eq.s32.totalorder %s13, 0
    %p96 = por %p94, %p95
    %p97 = scmp.ne.s32.totalorder %s89, %s91
    %p98 = scmp.eq.s32.totalorder %s18, 3
    %p99 = por %p97, %p98
    %p100 = scmp.ne.s32.totalorder %s91, %s92
    %p101 = scmp.eq.s32.totalorder %s18, 0
    %p102 = por %p100, %p101
    %p103 = scmp.ne.s32.totalorder %s91, %s92
    %p104 = scmp.eq.s32.totalorder %s19, 3
    %p105 = por %p103, %p104
    %p107 = scmp.ne.s32.totalorder %s92, %s106
    %p108 = scmp.eq.s32.totalorder %s19, 0
    %p109 = por %p107, %p108
    %s111 = sadd.s32 %s110, 1
    %p114 = scmp.eq.s32.totalorder %s13, 3
    %p115 = scmp.ne.s32.totalorder %s110, %s112
    %p116 = scmp.eq.s32.totalorder %s13, 0
    %p117 = por %p115, %p116
    %p118 = scmp.ne.s32.totalorder %s110, %s112
    %p119 = scmp.eq.s32.totalorder %s18, 3
    %p120 = por %p118, %p119
    %p121 = scmp.ne.s32.totalorder %s112, %s113
    %p122 = scmp.eq.s32.totalorder %s18, 0
    %p123 = por %p121, %p122
    %p124 = scmp.ne.s32.totalorder %s112, %s113
    %p125 = scmp.eq.s32.totalorder %s19, 3
    %p126 = por %p124, %p125
    %p128 = scmp.ne.s32.totalorder %s113, %s127
    %p129 = scmp.eq.s32.totalorder %s19, 0
    %p130 = por %p128, %p129
    %s132 = sadd.s32 %s131, 1
    %p135 = scmp.eq.s32.totalorder %s13, 3
    %p136 = scmp.ne.s32.totalorder %s131, %s133
    %p137 = scmp.eq.s32.totalorder %s13, 0
    %p138 = por %p136, %p137
    %p139 = scmp.ne.s32.totalorder %s131, %s133
    %p140 = scmp.eq.s32.totalorder %s18, 3
    %p141 = por %p139, %p140
    %p142 = scmp.ne.s32.totalorder %s133, %s134
    %p143 = scmp.eq.s32.totalorder %s18, 0
    %p144 = por %p142, %p143
    %p145 = scmp.ne.s32.totalorder %s133, %s134
    %p146 = scmp.eq.s32.totalorder %s19, 3
    %p147 = por %p145, %p146
    %p149 = scmp.ne.s32.totalorder %s134, %s148
    %p150 = scmp.eq.s32.totalorder %s19, 0
    %p151 = por %p149, %p150
    %s153 = sadd.s32 %s152, 1
    %p156 = scmp.eq.s32.totalorder %s13, 3
    %p157 = scmp.ne.s32.totalorder %s152, %s154
    %p158 = scmp.eq.s32.totalorder %s13, 0
    %p159 = por %p157, %p158
    %p160 = scmp.ne.s32.totalorder %s152, %s154
    %p161 = scmp.eq.s32.totalorder %s18, 3
    %p162 = por %p160, %p161
    %p163 = scmp.ne.s32.totalorder %s154, %s155
    %p164 = scmp.eq.s32.totalorder %s18, 0
    %p165 = por %p163, %p164
    %p166 = scmp.ne.s32.totalorder %s154, %s155
    %p167 = scmp.eq.s32.totalorder %s19, 3
    %p168 = por %p166, %p167
    %p170 = scmp.ne.s32.totalorder %s155, %s169
    %p171 = scmp.eq.s32.totalorder %s19, 0
    %p172 = por %p170, %p171
    %s173 = ssub.s32 %s13, %s20
    %p174 = scmp.eq.s32.totalorder %s173, 0
    %s176 = sadd.s32 %s175, 1
    %s177 = scalar_select %p174, %s175, %s176
    %p180 = pneg %p174
    %p181 = scmp.eq.s32.totalorder %s13, 3
    %p182 = por %p180, %p181
    %p183 = scmp.ne.s32.totalorder %s175, %s178
    %p184 = scmp.eq.s32.totalorder %s13, 0
    %p185 = por %p183, %p184
    %p186 = scmp.ne.s32.totalorder %s175, %s178
    %p187 = scmp.eq.s32.totalorder %s18, 3
    %p188 = por %p186, %p187
    %p189 = scmp.ne.s32.totalorder %s178, %s179
    %p190 = scmp.eq.s32.totalorder %s18, 0
    %p191 = por %p189, %p190
    %p192 = scmp.ne.s32.totalorder %s178, %s179
    %p193 = scmp.eq.s32.totalorder %s19, 3
    %p194 = por %p192, %p193
    %p196 = scmp.ne.s32.totalorder %s179, %s195
    %p197 = scmp.eq.s32.totalorder %s19, 0
    %p198 = por %p196, %p197
    %p199 = scmp.le.s32.totalorder 1, %s13
    %p200 = scmp.lt.s32.totalorder %s13, 5
    %p201 = pnand %p199, %p200
    %p202 = pneg %p201
    // Predicated region
    $region9: #{_lambda_.6} parent=5 // pred_check
      _
    $region10: #{_lambda_.6} parent=5 // pred_check_branch
      %204 = sbr.rel (%p201) target = $region12
    $region11: #{_lambda_.6} parent=5 // pred_region
      %s205 = ssub.s32 %s13, 1
      // Predicated region
      $region13: #{_lambda_.6} parent=11 // pred_check
        %p206 = pneg %p60
      $region14: #{_lambda_.6} parent=11 // pred_check_branch
        %208 = sbr.rel (%p206) target = $region16
      $region15: #{_lambda_.6} parent=11 // pred_region
        _
      $region16: #{_lambda_.6} parent=11 // pred_fallthru
        _
      // Predicated region
      $region17: #{_lambda_.6} parent=11 // pred_check
        %p209 = pneg %p81
      $region18: #{_lambda_.6} parent=11 // pred_check_branch
        %211 = sbr.rel (%p209) target = $region20
      $region19: #{_lambda_.6} parent=11 // pred_region
        _
      $region20: #{_lambda_.6} parent=11 // pred_fallthru
        _
      // Predicated region
      $region21: #{_lambda_.6} parent=11 // pred_check
        %p212 = pneg %p102
      $region22: #{_lambda_.6} parent=11 // pred_check_branch
        %214 = sbr.rel (%p212) target = $region24
      $region23: #{_lambda_.6} parent=11 // pred_region
        _
      $region24: #{_lambda_.6} parent=11 // pred_fallthru
        _
      // Predicated region
      $region25: #{_lambda_.6} parent=11 // pred_check
        %p215 = pneg %p123
      $region26: #{_lambda_.6} parent=11 // pred_check_branch
        %217 = sbr.rel (%p215) target = $region28
      $region27: #{_lambda_.6} parent=11 // pred_region
        _
      $region28: #{_lambda_.6} parent=11 // pred_fallthru
        _
      // Predicated region
      $region29: #{_lambda_.6} parent=11 // pred_check
        %p218 = pneg %p144
      $region30: #{_lambda_.6} parent=11 // pred_check_branch
        %220 = sbr.rel (%p218) target = $region32
      $region31: #{_lambda_.6} parent=11 // pred_region
        _
      $region32: #{_lambda_.6} parent=11 // pred_fallthru
        _
      // Predicated region
      $region33: #{_lambda_.6} parent=11 // pred_check
        %p221 = pneg %p165
      $region34: #{_lambda_.6} parent=11 // pred_check_branch
        %223 = sbr.rel (%p221) target = $region36
      $region35: #{_lambda_.6} parent=11 // pred_region
        _
      $region36: #{_lambda_.6} parent=11 // pred_fallthru
        _
    $region12: #{_lambda_.6} parent=5 // pred_fallthru
      _
    %p224 = scmp.lt.s32.totalorder %s13, 4
    // Predicated region
    $region37: #{_lambda_.6} parent=5 // pred_check
      %p225 = pneg %p224
    $region38: #{_lambda_.6} parent=5 // pred_check_branch
      %227 = sbr.rel (%p225) target = $region40
    $region39: #{_lambda_.6} parent=5 // pred_region
      // Predicated region
      $region41: #{_lambda_.6} parent=39 // pred_check
        %p228 = pneg %p33
      $region42: #{_lambda_.6} parent=39 // pred_check_branch
        %230 = sbr.rel (%p228) target = $region44
      $region43: #{_lambda_.6} parent=39 // pred_region
        %p231 = scmp.lt.s32.totalorder %s13, 3
        %s232 = scalar_select %p231, %s13, 3
        %s233 = smul.addr %s232, 36
        %s234 = smul.addr %s233, 4
        %s235 = scalar_lea.vmem %s0, %s234
      $region44: #{_lambda_.6} parent=39 // pred_fallthru
        _
    $region40: #{_lambda_.6} parent=5 // pred_fallthru
      _
    %p236 = scmp.le.s32.totalorder 1, %s13
    %p237 = scmp.lt.s32.totalorder %s13, 5
    %p238 = pnand %p236, %p237
    %p239 = pneg %p238
    // Predicated region
    $region45: #{_lambda_.6} parent=5 // pred_check
      _
    $region46: #{_lambda_.6} parent=5 // pred_check_branch
      %241 = sbr.rel (%p238) target = $region48
    $region47: #{_lambda_.6} parent=5 // pred_region
      %s242 = ssub.s32 %s13, 1
      %p243 = scmp.lt.s32.totalorder %s18, 3
      %s244 = scalar_select %p243, %s18, 3
      %s245 = smul.addr %s244, 36
      %s246 = smul.addr %s245, 4
      %s247 = scalar_lea.vmem %s0, %s246
      %p248 = pneg %p39
      %p249 = pneg %p36
      %p250 = pneg %p60
      %p251 = pneg %p57
      %p252 = pneg %p81
      %p253 = pneg %p78
      %p254 = pneg %p102
      %p255 = pneg %p99
      %p256 = pneg %p123
      %p257 = pneg %p120
      %p258 = pneg %p144
      %p259 = pneg %p141
      %p260 = pneg %p165
      %p261 = pneg %p162
      %p262 = pneg %p191
      %p263 = pneg %p188
      %p264 = scmp.lt.s32.totalorder %s18, 3
      %s265 = scalar_select %p264, %s18, 3
      %s266 = smul.addr %s265, 8
      %s267 = smul.addr %s266, 4
      %s268 = scalar_lea.vmem %s7, %s267
      %p269 = scmp.lt.s32.totalorder %s18, 3
      %s270 = scalar_select %p269, %s18, 3
      %s271 = smul.addr %s270, 36
      %s272 = smul.addr %s271, 4
      %s273 = scalar_lea.vmem %s0, %s272
      %p274 = scmp.lt.s32.totalorder %s18, 3
      %s275 = scalar_select %p274, %s18, 3
      %s276 = smul.addr %s275, 8
      %s277 = smul.addr %s276, 4
      %s278 = scalar_lea.vmem %s7, %s277
      %vm279 = vcmask 76800
      %280 = vst.msk [vmem:[#allocation2] sm:$0xf] %vm279, 0.0
      %281 = vst.msk [vmem:[#allocation2 + $0x4] sm:$0xf] %vm279, 0.0
      %282 = vst.msk [vmem:[#allocation2 + $0x8] sm:$0xf] %vm279, 0.0
      %283 = vst.msk [vmem:[#allocation2 + $0xc] sm:$0xf] %vm279, 0.0
      %284 = vst.msk [vmem:[#allocation2 + $0x10] sm:$0xf] %vm279, 0.0
      %285 = vst.msk [vmem:[#allocation2 + $0x14] sm:$0xf] %vm279, 0.0
      %286 = vst.msk [vmem:[#allocation2 + $0x18] sm:$0xf] %vm279, 0.0
      %287 = vst.msk [vmem:[#allocation2 + $0x1c] sm:$0xf] %vm279, 0.0
      %288 = vst.msk [vmem:[#allocation2 + $0x20] sm:$0xf] %vm279, 0.0
      %289 = vst.msk [vmem:[#allocation2 + $0x24] sm:$0xf] %vm279, 0.0
      %290 = vst.msk [vmem:[#allocation3] sm:$0xf] %vm279, 0.0
      %291 = vst.msk [vmem:[#allocation3 + $0x4] sm:$0xf] %vm279, 0.0
      %292 = vst.msk [vmem:[#allocation3 + $0x8] sm:$0xf] %vm279, 0.0
      %293 = vst.msk [vmem:[#allocation3 + $0xc] sm:$0xf] %vm279, 0.0
      %294 = vst.msk [vmem:[#allocation3 + $0x10] sm:$0xf] %vm279, 0.0
      %295 = vst.msk [vmem:[#allocation3 + $0x14] sm:$0xf] %vm279, 0.0
      %296 = vst.msk [vmem:[#allocation3 + $0x18] sm:$0xf] %vm279, 0.0
      %297 = vst.msk [vmem:[#allocation3 + $0x1c] sm:$0xf] %vm279, 0.0
      %298 = vst.msk [vmem:[#allocation3 + $0x20] sm:$0xf] %vm279, 0.0
      %299 = vst.msk [vmem:[#allocation3 + $0x24] sm:$0xf] %vm279, 0.0
      %v300 = vld [vmem:[%s1] sm:$0xf]
      %s301 = scalar_lea.vmem %s1, 4
      %v302 = vld [vmem:[%s301] sm:$0xf]
      %s303 = scalar_lea.vmem %s1, 8
      %v304 = vld [vmem:[%s303] sm:$0xf]
      %s305 = scalar_lea.vmem %s1, 12
      %v306 = vld [vmem:[%s305] sm:$0xf]
      %s307 = scalar_lea.vmem %s1, 16
      %v308 = vld [vmem:[%s307] sm:$0xf]
      %s309 = scalar_lea.vmem %s1, 20
      %v310 = vld [vmem:[%s309] sm:$0xf]
      %s311 = scalar_lea.vmem %s1, 24
      %v312 = vld [vmem:[%s311] sm:$0xf]
      %s313 = scalar_lea.vmem %s1, 28
      %v314 = vld [vmem:[%s313] sm:$0xf]
      %s315 = scalar_lea.vmem %s1, 32
      %v316 = vld [vmem:[%s315] sm:$0xf]
      %v317 = vld [vmem:[%s3] sm:$0xf]
      %s318 = scalar_lea.vmem %s3, 4
      %v319 = vld [vmem:[%s318] sm:$0xf]
      %s320 = scalar_lea.vmem %s3, 8
      %v321 = vld [vmem:[%s320] sm:$0xf]
      %s322 = scalar_lea.vmem %s3, 12
      %v323 = vld [vmem:[%s322] sm:$0xf]
      %s324 = scalar_lea.vmem %s3, 16
      %v325 = vld [vmem:[%s324] sm:$0xf]
      %s326 = scalar_lea.vmem %s3, 20
      %v327 = vld [vmem:[%s326] sm:$0xf]
      %s328 = scalar_lea.vmem %s3, 24
      %v329 = vld [vmem:[%s328] sm:$0xf]
      %s330 = scalar_lea.vmem %s3, 28
      %v331 = vld [vmem:[%s330] sm:$0xf]
      %s332 = scalar_lea.vmem %s3, 32
      %v333 = vld [vmem:[%s332] sm:$0xf]
      %v334 = vld [vmem:[%s5] sm:$0xf]
      %s335 = scalar_lea.vmem %s5, 4
      %v336 = vld [vmem:[%s335] sm:$0xf]
      %s337 = scalar_lea.vmem %s5, 8
      %v338 = vld [vmem:[%s337] sm:$0xf]
      %s339 = scalar_lea.vmem %s5, 12
      %v340 = vld [vmem:[%s339] sm:$0xf]
      %s341 = scalar_lea.vmem %s5, 16
      %v342 = vld [vmem:[%s341] sm:$0xf]
      %s343 = scalar_lea.vmem %s5, 20
      %v344 = vld [vmem:[%s343] sm:$0xf]
      %s345 = scalar_lea.vmem %s5, 24
      %v346 = vld [vmem:[%s345] sm:$0xf]
      %s347 = scalar_lea.vmem %s5, 28
      %v348 = vld [vmem:[%s347] sm:$0xf]
      %s349 = scalar_lea.vmem %s5, 32
      %v350 = vld [vmem:[%s349] sm:$0xf]
      %v351 = vld [vmem:[%s2] sm:$0xf]
      %v352 = vld [vmem:[%s4] sm:$0xf]
      %v353 = vld [vmem:[%s6] sm:$0xf]
      loop: start=0, step=1, limit=8
      $region49: #{_lambda_.6} parent=47 // loop_pre_header
        _
      $region50: #{_lambda_.6} parent=47 // loop_header
        %s355 = sphi 0, %s359
        %p356 = scmp.ge.s32.totalorder %s355, 8
      $region51: #{_lambda_.6} parent=47 // loop_header_branch
        %358 = sbr.rel (%p356) target = $region55
      $region52: #{_lambda_.6} parent=47 // loop_body
        %s360 = smul.u32 %s355, 16
        %s361 = scalar_lea.vmem %s273, %s360
        %v362 = vld [vmem:[%s361] sm:$0x7]
        %s363 = sadd.s32 4, %s360
        %s364 = scalar_lea.vmem %s273, %s363
        %v365 = vld [vmem:[%s364] sm:$0x7]
        %vm366 = vcmask 23552
        %v368 = vsel %vm366, %v302, 0
        %vm370 = vcmask 1042432
        %v372 = vsel %vm370, %v365, 0
        %374 = vmatpush.msra.mxu0 0.0
        %375 = vmatpush.msra.mxu0 0.0
        %376 = vmatpush.msra.mxu0 0.0
        %377 = vmatpush.msra.mxu0 0.0
        %378 = vmatpush.msra.mxu0 0.0
        %379 = vmatpush.msra.mxu0 0.0
        %380 = vmatpush.msra.mxu0 0.0
        %381 = vmatpush.msra.mxu0 0.0
        %382 = vmatpush.msra.mxu0 0.0
        %383 = vmatpush.msra.mxu0 0.0
        %384 = vmatpush.msra.mxu0 0.0
        %385 = vmatpush.msra.mxu0 0.0
        %386 = vmatpush.msra.mxu0 0.0
        %387 = vmatpush.msra.mxu0 0.0
        %388 = vmatpush.msra.mxu0 0.0
        %389 = vmatpush.msra.mxu0 %v372
        %390 = vmatmul.f32.gmra.mxu0 %v368
        %v391 = vpop.f32.mrf.mxu0
        %v392 = vadd.f32 0.0, %v391
        %393 = vdwg.mxu0
        %v395 = vsel %vm366, %v300, 0
        %v398 = vsel %vm370, %v362, 0
        %400 = vmatpush.msra.mxu0 0.0
        %401 = vmatpush.msra.mxu0 0.0
        %402 = vmatpush.msra.mxu0 0.0
        %403 = vmatpush.msra.mxu0 0.0
        %404 = vmatpush.msra.mxu0 0.0
        %405 = vmatpush.msra.mxu0 0.0
        %406 = vmatpush.msra.mxu0 0.0
        %407 = vmatpush.msra.mxu0 0.0
        %408 = vmatpush.msra.mxu0 0.0
        %409 = vmatpush.msra.mxu0 0.0
        %410 = vmatpush.msra.mxu0 0.0
        %411 = vmatpush.msra.mxu0 0.0
        %412 = vmatpush.msra.mxu0 0.0
        %413 = vmatpush.msra.mxu0 0.0
        %414 = vmatpush.msra.mxu0 0.0
        %415 = vmatpush.msra.mxu0 %v398
        %416 = vmatmul.f32.gmra.mxu0 %v395
        %v417 = vpop.f32.mrf.mxu0
        %v418 = vadd.f32 %v392, %v417
        %419 = vdwg.mxu0
        %420 = vrot.lane.b32.xlu0 %v362, 127
        %v421 = vpop.permute.xlu0 %420
        %v423 = vsel %vm366, %v304, 0
        %v425 = vsel %vm370, %v421, 0
        %427 = vmatpush.msra.mxu0 0.0
        %428 = vmatpush.msra.mxu0 0.0
        %429 = vmatpush.msra.mxu0 0.0
        %430 = vmatpush.msra.mxu0 0.0
        %431 = vmatpush.msra.mxu0 0.0
        %432 = vmatpush.msra.mxu0 0.0
        %433 = vmatpush.msra.mxu0 0.0
        %434 = vmatpush.msra.mxu0 0.0
        %435 = vmatpush.msra.mxu0 0.0
        %436 = vmatpush.msra.mxu0 0.0
        %437 = vmatpush.msra.mxu0 0.0
        %438 = vmatpush.msra.mxu0 0.0
        %439 = vmatpush.msra.mxu0 0.0
        %440 = vmatpush.msra.mxu0 0.0
        %441 = vmatpush.msra.mxu0 0.0
        %442 = vmatpush.msra.mxu0 %v425
        %443 = vmatmul.f32.gmra.mxu0 %v423
        %v444 = vpop.f32.mrf.mxu0
        %v445 = vadd.f32 0.0, %v444
        %446 = vdwg.mxu0
        %v447 = vadd.f32 %v418, %v445
        %s448 = sadd.s32 8, %s360
        %s449 = scalar_lea.vmem %s273, %s448
        %v450 = vld [vmem:[%s449] sm:$0x7]
        %v452 = vsel %vm366, %v306, 0
        %v455 = vsel %vm370, %v450, 0
        %457 = vmatpush.msra.mxu0 0.0
        %458 = vmatpush.msra.mxu0 0.0
        %459 = vmatpush.msra.mxu0 0.0
        %460 = vmatpush.msra.mxu0 0.0
        %461 = vmatpush.msra.mxu0 0.0
        %462 = vmatpush.msra.mxu0 0.0
        %463 = vmatpush.msra.mxu0 0.0
        %464 = vmatpush.msra.mxu0 0.0
        %465 = vmatpush.msra.mxu0 0.0
        %466 = vmatpush.msra.mxu0 0.0
        %467 = vmatpush.msra.mxu0 0.0
        %468 = vmatpush.msra.mxu0 0.0
        %469 = vmatpush.msra.mxu0 0.0
        %470 = vmatpush.msra.mxu0 0.0
        %471 = vmatpush.msra.mxu0 0.0
        %472 = vmatpush.msra.mxu0 %v455
        %473 = vmatmul.f32.gmra.mxu0 %v452
        %v474 = vpop.f32.mrf.mxu0
        %v475 = vadd.f32 0.0, %v474
        %476 = vdwg.mxu0
        %v477 = vadd.f32 %v447, %v475
        %s478 = sadd.s32 12, %s360
        %s479 = scalar_lea.vmem %s273, %s478
        %v480 = vld [vmem:[%s479] sm:$0x7]
        %v482 = vsel %vm366, %v308, 0
        %v485 = vsel %vm370, %v480, 0
        %487 = vmatpush.msra.mxu0 0.0
        %488 = vmatpush.msra.mxu0 0.0
        %489 = vmatpush.msra.mxu0 0.0
        %490 = vmatpush.msra.mxu0 0.0
        %491 = vmatpush.msra.mxu0 0.0
        %492 = vmatpush.msra.mxu0 0.0
        %493 = vmatpush.msra.mxu0 0.0
        %494 = vmatpush.msra.mxu0 0.0
        %495 = vmatpush.msra.mxu0 0.0
        %496 = vmatpush.msra.mxu0 0.0
        %497 = vmatpush.msra.mxu0 0.0
        %498 = vmatpush.msra.mxu0 0.0
        %499 = vmatpush.msra.mxu0 0.0
        %500 = vmatpush.msra.mxu0 0.0
        %501 = vmatpush.msra.mxu0 0.0
        %502 = vmatpush.msra.mxu0 %v485
        %503 = vmatmul.f32.gmra.mxu0 %v482
        %v504 = vpop.f32.mrf.mxu0
        %v505 = vadd.f32 0.0, %v504
        %506 = vdwg.mxu0
        %v507 = vadd.f32 %v477, %v505
        %508 = vrot.lane.b32.xlu0 %v450, 127
        %v509 = vpop.permute.xlu0 %508
        %v511 = vsel %vm366, %v310, 0
        %v513 = vsel %vm370, %v509, 0
        %515 = vmatpush.msra.mxu0 0.0
        %516 = vmatpush.msra.mxu0 0.0
        %517 = vmatpush.msra.mxu0 0.0
        %518 = vmatpush.msra.mxu0 0.0
        %519 = vmatpush.msra.mxu0 0.0
        %520 = vmatpush.msra.mxu0 0.0
        %521 = vmatpush.msra.mxu0 0.0
        %522 = vmatpush.msra.mxu0 0.0
        %523 = vmatpush.msra.mxu0 0.0
        %524 = vmatpush.msra.mxu0 0.0
        %525 = vmatpush.msra.mxu0 0.0
        %526 = vmatpush.msra.mxu0 0.0
        %527 = vmatpush.msra.mxu0 0.0
        %528 = vmatpush.msra.mxu0 0.0
        %529 = vmatpush.msra.mxu0 0.0
        %530 = vmatpush.msra.mxu0 %v513
        %531 = vmatmul.f32.gmra.mxu0 %v511
        %v532 = vpop.f32.mrf.mxu0
        %v533 = vadd.f32 0.0, %v532
        %534 = vdwg.mxu0
        %v535 = vadd.f32 %v507, %v533
        %s536 = sadd.s32 %s355, 1
        %s537 = smul.u32 %s536, 16
        %s538 = scalar_lea.vmem %s273, %s537
        %v539 = vld [vmem:[%s538] sm:$0x7]
        %v541 = vsel %vm366, %v312, 0
        %v544 = vsel %vm370, %v539, 0
        %546 = vmatpush.msra.mxu0 0.0
        %547 = vmatpush.msra.mxu0 0.0
        %548 = vmatpush.msra.mxu0 0.0
        %549 = vmatpush.msra.mxu0 0.0
        %550 = vmatpush.msra.mxu0 0.0
        %551 = vmatpush.msra.mxu0 0.0
        %552 = vmatpush.msra.mxu0 0.0
        %553 = vmatpush.msra.mxu0 0.0
        %554 = vmatpush.msra.mxu0 0.0
        %555 = vmatpush.msra.mxu0 0.0
        %556 = vmatpush.msra.mxu0 0.0
        %557 = vmatpush.msra.mxu0 0.0
        %558 = vmatpush.msra.mxu0 0.0
        %559 = vmatpush.msra.mxu0 0.0
        %560 = vmatpush.msra.mxu0 0.0
        %561 = vmatpush.msra.mxu0 %v544
        %562 = vmatmul.f32.gmra.mxu0 %v541
        %v563 = vpop.f32.mrf.mxu0
        %v564 = vadd.f32 0.0, %v563
        %565 = vdwg.mxu0
        %v566 = vadd.f32 %v535, %v564
        %s567 = sadd.s32 4, %s537
        %s568 = scalar_lea.vmem %s273, %s567
        %v569 = vld [vmem:[%s568] sm:$0x7]
        %v571 = vsel %vm366, %v314, 0
        %v574 = vsel %vm370, %v569, 0
        %576 = vmatpush.msra.mxu0 0.0
        %577 = vmatpush.msra.mxu0 0.0
        %578 = vmatpush.msra.mxu0 0.0
        %579 = vmatpush.msra.mxu0 0.0
        %580 = vmatpush.msra.mxu0 0.0
        %581 = vmatpush.msra.mxu0 0.0
        %582 = vmatpush.msra.mxu0 0.0
        %583 = vmatpush.msra.mxu0 0.0
        %584 = vmatpush.msra.mxu0 0.0
        %585 = vmatpush.msra.mxu0 0.0
        %586 = vmatpush.msra.mxu0 0.0
        %587 = vmatpush.msra.mxu0 0.0
        %588 = vmatpush.msra.mxu0 0.0
        %589 = vmatpush.msra.mxu0 0.0
        %590 = vmatpush.msra.mxu0 0.0
        %591 = vmatpush.msra.mxu0 %v574
        %592 = vmatmul.f32.gmra.mxu0 %v571
        %v593 = vpop.f32.mrf.mxu0
        %v594 = vadd.f32 0.0, %v593
        %595 = vdwg.mxu0
        %v596 = vadd.f32 %v566, %v594
        %597 = vrot.lane.b32.xlu0 %v539, 127
        %v598 = vpop.permute.xlu0 %597
        %v600 = vsel %vm366, %v316, 0
        %v602 = vsel %vm370, %v598, 0
        %604 = vmatpush.msra.mxu0 0.0
        %605 = vmatpush.msra.mxu0 0.0
        %606 = vmatpush.msra.mxu0 0.0
        %607 = vmatpush.msra.mxu0 0.0
        %608 = vmatpush.msra.mxu0 0.0
        %609 = vmatpush.msra.mxu0 0.0
        %610 = vmatpush.msra.mxu0 0.0
        %611 = vmatpush.msra.mxu0 0.0
        %612 = vmatpush.msra.mxu0 0.0
        %613 = vmatpush.msra.mxu0 0.0
        %614 = vmatpush.msra.mxu0 0.0
        %615 = vmatpush.msra.mxu0 0.0
        %616 = vmatpush.msra.mxu0 0.0
        %617 = vmatpush.msra.mxu0 0.0
        %618 = vmatpush.msra.mxu0 0.0
        %619 = vmatpush.msra.mxu0 %v602
        %620 = vmatmul.f32.gmra.mxu0 %v600
        %v621 = vpop.f32.mrf.mxu0
        %v622 = vadd.f32 0.0, %v621
        %623 = vdwg.mxu0
        %v624 = vadd.f32 %v596, %v622
        %626 = vset.pattern.permute.xlu0 0
        %627 = vperm.xlu0 %626, %v351
        %v628 = vpop.permute.xlu0 %627
        %v630 = vadd.f32 %v624, %v628
        %632 = vrot.lane.b32.xlu0 %v630, 1
        %v633 = vpop.permute.xlu0 %632
        %s635 = smul.u32 %s536, 4
        %s636 = scalar_lea.vmem [#allocation2], %s635
        %vm637 = vcmask 68616
        %638 = vst.msk [vmem:[%s636] sm:$0xf] %vm637, %v633
      $region53: #{_lambda_.6} parent=47 // loop_footer
        %s359 = sadd.s32 1, %s355
      $region54: #{_lambda_.6} parent=47 // loop_footer_branch
        %354 = sbr.rel target = $region50
      $region55: #{_lambda_.6} parent=47 // loop_exit
        _
      loop: start=0, step=1, limit=8
      $region56: #{_lambda_.6} parent=47 // loop_pre_header
        _
      $region57: #{_lambda_.6} parent=47 // loop_header
        %s640 = sphi 0, %s644
        %p641 = scmp.ge.s32.totalorder %s640, 8
      $region58: #{_lambda_.6} parent=47 // loop_header_branch
        %643 = sbr.rel (%p641) target = $region62
      $region59: #{_lambda_.6} parent=47 // loop_body
        %s645 = smul.u32 %s640, 4
        %s646 = scalar_lea.vmem [#allocation2], %s645
        %v647 = vld [vmem:[%s646] sm:$0xf]
        %649 = vrot.lane.b32.xlu0 %v647, 127
        %v650 = vpop.permute.xlu0 %649
        %vm651 = vcmask 31744
        %v653 = vsel %vm651, %v319, 0
        %vm655 = vcmask 1043456
        %v656 = vsel %vm655, %v650, 0
        %658 = vmatpush.msra.mxu0 0.0
        %659 = vmatpush.msra.mxu0 0.0
        %660 = vmatpush.msra.mxu0 0.0
        %661 = vmatpush.msra.mxu0 0.0
        %662 = vmatpush.msra.mxu0 0.0
        %663 = vmatpush.msra.mxu0 0.0
        %664 = vmatpush.msra.mxu0 0.0
        %665 = vmatpush.msra.mxu0 0.0
        %666 = vmatpush.msra.mxu0 0.0
        %667 = vmatpush.msra.mxu0 0.0
        %668 = vmatpush.msra.mxu0 0.0
        %669 = vmatpush.msra.mxu0 0.0
        %670 = vmatpush.msra.mxu0 0.0
        %671 = vmatpush.msra.mxu0 0.0
        %672 = vmatpush.msra.mxu0 0.0
        %673 = vmatpush.msra.mxu0 %v656
        %674 = vmatmul.f32.gmra.mxu0 %v653
        %v675 = vpop.f32.mrf.mxu0
        %v676 = vadd.f32 0.0, %v675
        %677 = vdwg.mxu0
        %v679 = vsel %vm651, %v317, 0
        %v681 = vsel %vm655, %v647, 0
        %683 = vmatpush.msra.mxu0 0.0
        %684 = vmatpush.msra.mxu0 0.0
        %685 = vmatpush.msra.mxu0 0.0
        %686 = vmatpush.msra.mxu0 0.0
        %687 = vmatpush.msra.mxu0 0.0
        %688 = vmatpush.msra.mxu0 0.0
        %689 = vmatpush.msra.mxu0 0.0
        %690 = vmatpush.msra.mxu0 0.0
        %691 = vmatpush.msra.mxu0 0.0
        %692 = vmatpush.msra.mxu0 0.0
        %693 = vmatpush.msra.mxu0 0.0
        %694 = vmatpush.msra.mxu0 0.0
        %695 = vmatpush.msra.mxu0 0.0
        %696 = vmatpush.msra.mxu0 0.0
        %697 = vmatpush.msra.mxu0 0.0
        %698 = vmatpush.msra.mxu0 %v681
        %699 = vmatmul.f32.gmra.mxu0 %v679
        %v700 = vpop.f32.mrf.mxu0
        %v701 = vadd.f32 %v676, %v700
        %702 = vdwg.mxu0
        %703 = vrot.lane.b32.xlu0 %v647, 126
        %v704 = vpop.permute.xlu0 %703
        %v706 = vsel %vm651, %v321, 0
        %v708 = vsel %vm655, %v704, 0
        %710 = vmatpush.msra.mxu0 0.0
        %711 = vmatpush.msra.mxu0 0.0
        %712 = vmatpush.msra.mxu0 0.0
        %713 = vmatpush.msra.mxu0 0.0
        %714 = vmatpush.msra.mxu0 0.0
        %715 = vmatpush.msra.mxu0 0.0
        %716 = vmatpush.msra.mxu0 0.0
        %717 = vmatpush.msra.mxu0 0.0
        %718 = vmatpush.msra.mxu0 0.0
        %719 = vmatpush.msra.mxu0 0.0
        %720 = vmatpush.msra.mxu0 0.0
        %721 = vmatpush.msra.mxu0 0.0
        %722 = vmatpush.msra.mxu0 0.0
        %723 = vmatpush.msra.mxu0 0.0
        %724 = vmatpush.msra.mxu0 0.0
        %725 = vmatpush.msra.mxu0 %v708
        %726 = vmatmul.f32.gmra.mxu0 %v706
        %v727 = vpop.f32.mrf.mxu0
        %v728 = vadd.f32 0.0, %v727
        %729 = vdwg.mxu0
        %v730 = vadd.f32 %v701, %v728
        %s731 = sadd.s32 %s640, 1
        %s732 = smul.u32 %s731, 4
        %s733 = scalar_lea.vmem [#allocation2], %s732
        %v734 = vld [vmem:[%s733] sm:$0xf]
        %v736 = vsel %vm651, %v323, 0
        %v739 = vsel %vm655, %v734, 0
        %741 = vmatpush.msra.mxu0 0.0
        %742 = vmatpush.msra.mxu0 0.0
        %743 = vmatpush.msra.mxu0 0.0
        %744 = vmatpush.msra.mxu0 0.0
        %745 = vmatpush.msra.mxu0 0.0
        %746 = vmatpush.msra.mxu0 0.0
        %747 = vmatpush.msra.mxu0 0.0
        %748 = vmatpush.msra.mxu0 0.0
        %749 = vmatpush.msra.mxu0 0.0
        %750 = vmatpush.msra.mxu0 0.0
        %751 = vmatpush.msra.mxu0 0.0
        %752 = vmatpush.msra.mxu0 0.0
        %753 = vmatpush.msra.mxu0 0.0
        %754 = vmatpush.msra.mxu0 0.0
        %755 = vmatpush.msra.mxu0 0.0
        %756 = vmatpush.msra.mxu0 %v739
        %757 = vmatmul.f32.gmra.mxu0 %v736
        %v758 = vpop.f32.mrf.mxu0
        %v759 = vadd.f32 0.0, %v758
        %760 = vdwg.mxu0
        %v761 = vadd.f32 %v730, %v759
        %762 = vrot.lane.b32.xlu0 %v734, 127
        %v763 = vpop.permute.xlu0 %762
        %v765 = vsel %vm651, %v325, 0
        %v767 = vsel %vm655, %v763, 0
        %769 = vmatpush.msra.mxu0 0.0
        %770 = vmatpush.msra.mxu0 0.0
        %771 = vmatpush.msra.mxu0 0.0
        %772 = vmatpush.msra.mxu0 0.0
        %773 = vmatpush.msra.mxu0 0.0
        %774 = vmatpush.msra.mxu0 0.0
        %775 = vmatpush.msra.mxu0 0.0
        %776 = vmatpush.msra.mxu0 0.0
        %777 = vmatpush.msra.mxu0 0.0
        %778 = vmatpush.msra.mxu0 0.0
        %779 = vmatpush.msra.mxu0 0.0
        %780 = vmatpush.msra.mxu0 0.0
        %781 = vmatpush.msra.mxu0 0.0
        %782 = vmatpush.msra.mxu0 0.0
        %783 = vmatpush.msra.mxu0 0.0
        %784 = vmatpush.msra.mxu0 %v767
        %785 = vmatmul.f32.gmra.mxu0 %v765
        %v786 = vpop.f32.mrf.mxu0
        %v787 = vadd.f32 0.0, %v786
        %788 = vdwg.mxu0
        %v789 = vadd.f32 %v761, %v787
        %790 = vrot.lane.b32.xlu0 %v734, 126
        %v791 = vpop.permute.xlu0 %790
        %v793 = vsel %vm651, %v327, 0
        %v795 = vsel %vm655, %v791, 0
        %797 = vmatpush.msra.mxu0 0.0
        %798 = vmatpush.msra.mxu0 0.0
        %799 = vmatpush.msra.mxu0 0.0
        %800 = vmatpush.msra.mxu0 0.0
        %801 = vmatpush.msra.mxu0 0.0
        %802 = vmatpush.msra.mxu0 0.0
        %803 = vmatpush.msra.mxu0 0.0
        %804 = vmatpush.msra.mxu0 0.0
        %805 = vmatpush.msra.mxu0 0.0
        %806 = vmatpush.msra.mxu0 0.0
        %807 = vmatpush.msra.mxu0 0.0
        %808 = vmatpush.msra.mxu0 0.0
        %809 = vmatpush.msra.mxu0 0.0
        %810 = vmatpush.msra.mxu0 0.0
        %811 = vmatpush.msra.mxu0 0.0
        %812 = vmatpush.msra.mxu0 %v795
        %813 = vmatmul.f32.gmra.mxu0 %v793
        %v814 = vpop.f32.mrf.mxu0
        %v815 = vadd.f32 0.0, %v814
        %816 = vdwg.mxu0
        %v817 = vadd.f32 %v789, %v815
        %s818 = sadd.s32 %s640, 2
        %s819 = smul.u32 %s818, 4
        %s820 = scalar_lea.vmem [#allocation2], %s819
        %v821 = vld [vmem:[%s820] sm:$0xf]
        %v823 = vsel %vm651, %v329, 0
        %v826 = vsel %vm655, %v821, 0
        %828 = vmatpush.msra.mxu0 0.0
        %829 = vmatpush.msra.mxu0 0.0
        %830 = vmatpush.msra.mxu0 0.0
        %831 = vmatpush.msra.mxu0 0.0
        %832 = vmatpush.msra.mxu0 0.0
        %833 = vmatpush.msra.mxu0 0.0
        %834 = vmatpush.msra.mxu0 0.0
        %835 = vmatpush.msra.mxu0 0.0
        %836 = vmatpush.msra.mxu0 0.0
        %837 = vmatpush.msra.mxu0 0.0
        %838 = vmatpush.msra.mxu0 0.0
        %839 = vmatpush.msra.mxu0 0.0
        %840 = vmatpush.msra.mxu0 0.0
        %841 = vmatpush.msra.mxu0 0.0
        %842 = vmatpush.msra.mxu0 0.0
        %843 = vmatpush.msra.mxu0 %v826
        %844 = vmatmul.f32.gmra.mxu0 %v823
        %v845 = vpop.f32.mrf.mxu0
        %v846 = vadd.f32 0.0, %v845
        %847 = vdwg.mxu0
        %v848 = vadd.f32 %v817, %v846
        %849 = vrot.lane.b32.xlu0 %v821, 127
        %v850 = vpop.permute.xlu0 %849
        %v852 = vsel %vm651, %v331, 0
        %v854 = vsel %vm655, %v850, 0
        %856 = vmatpush.msra.mxu0 0.0
        %857 = vmatpush.msra.mxu0 0.0
        %858 = vmatpush.msra.mxu0 0.0
        %859 = vmatpush.msra.mxu0 0.0
        %860 = vmatpush.msra.mxu0 0.0
        %861 = vmatpush.msra.mxu0 0.0
        %862 = vmatpush.msra.mxu0 0.0
        %863 = vmatpush.msra.mxu0 0.0
        %864 = vmatpush.msra.mxu0 0.0
        %865 = vmatpush.msra.mxu0 0.0
        %866 = vmatpush.msra.mxu0 0.0
        %867 = vmatpush.msra.mxu0 0.0
        %868 = vmatpush.msra.mxu0 0.0
        %869 = vmatpush.msra.mxu0 0.0
        %870 = vmatpush.msra.mxu0 0.0
        %871 = vmatpush.msra.mxu0 %v854
        %872 = vmatmul.f32.gmra.mxu0 %v852
        %v873 = vpop.f32.mrf.mxu0
        %v874 = vadd.f32 0.0, %v873
        %875 = vdwg.mxu0
        %v876 = vadd.f32 %v848, %v874
        %877 = vrot.lane.b32.xlu0 %v821, 126
        %v878 = vpop.permute.xlu0 %877
        %v880 = vsel %vm651, %v333, 0
        %v882 = vsel %vm655, %v878, 0
        %884 = vmatpush.msra.mxu0 0.0
        %885 = vmatpush.msra.mxu0 0.0
        %886 = vmatpush.msra.mxu0 0.0
        %887 = vmatpush.msra.mxu0 0.0
        %888 = vmatpush.msra.mxu0 0.0
        %889 = vmatpush.msra.mxu0 0.0
        %890 = vmatpush.msra.mxu0 0.0
        %891 = vmatpush.msra.mxu0 0.0
        %892 = vmatpush.msra.mxu0 0.0
        %893 = vmatpush.msra.mxu0 0.0
        %894 = vmatpush.msra.mxu0 0.0
        %895 = vmatpush.msra.mxu0 0.0
        %896 = vmatpush.msra.mxu0 0.0
        %897 = vmatpush.msra.mxu0 0.0
        %898 = vmatpush.msra.mxu0 0.0
        %899 = vmatpush.msra.mxu0 %v882
        %900 = vmatmul.f32.gmra.mxu0 %v880
        %v901 = vpop.f32.mrf.mxu0
        %v902 = vadd.f32 0.0, %v901
        %903 = vdwg.mxu0
        %v904 = vadd.f32 %v876, %v902
        %906 = vset.pattern.permute.xlu0 0
        %907 = vperm.xlu0 %906, %v352
        %v908 = vpop.permute.xlu0 %907
        %v910 = vadd.f32 %v904, %v908
        %912 = vrot.lane.b32.xlu0 %v910, 1
        %v913 = vpop.permute.xlu0 %912
        %s915 = scalar_lea.vmem [#allocation3], %s732
        %vm916 = vcmask 68616
        %917 = vst.msk [vmem:[%s915] sm:$0xf] %vm916, %v913
      $region60: #{_lambda_.6} parent=47 // loop_footer
        %s644 = sadd.s32 1, %s640
      $region61: #{_lambda_.6} parent=47 // loop_footer_branch
        %639 = sbr.rel target = $region57
      $region62: #{_lambda_.6} parent=47 // loop_exit
        _
      loop: start=0, step=1, limit=8
      $region63: #{_lambda_.6} parent=47 // loop_pre_header
        _
      $region64: #{_lambda_.6} parent=47 // loop_header
        %s919 = sphi 0, %s923
        %p920 = scmp.ge.s32.totalorder %s919, 8
      $region65: #{_lambda_.6} parent=47 // loop_header_branch
        %922 = sbr.rel (%p920) target = $region69
      $region66: #{_lambda_.6} parent=47 // loop_body
        %s924 = smul.u32 %s919, 4
        %s925 = scalar_lea.vmem [#allocation3], %s924
        %v926 = vld [vmem:[%s925] sm:$0xf]
        %928 = vrot.lane.b32.xlu0 %v926, 127
        %v929 = vpop.permute.xlu0 %928
        %vm930 = vcmask 31744
        %v932 = vsel %vm930, %v336, 0
        %vm934 = vcmask 1043456
        %v935 = vsel %vm934, %v929, 0
        %937 = vmatpush.msra.mxu0 0.0
        %938 = vmatpush.msra.mxu0 0.0
        %939 = vmatpush.msra.mxu0 0.0
        %940 = vmatpush.msra.mxu0 0.0
        %941 = vmatpush.msra.mxu0 0.0
        %942 = vmatpush.msra.mxu0 0.0
        %943 = vmatpush.msra.mxu0 0.0
        %944 = vmatpush.msra.mxu0 0.0
        %945 = vmatpush.msra.mxu0 0.0
        %946 = vmatpush.msra.mxu0 0.0
        %947 = vmatpush.msra.mxu0 0.0
        %948 = vmatpush.msra.mxu0 0.0
        %949 = vmatpush.msra.mxu0 0.0
        %950 = vmatpush.msra.mxu0 0.0
        %951 = vmatpush.msra.mxu0 0.0
        %952 = vmatpush.msra.mxu0 %v935
        %953 = vmatmul.f32.gmra.mxu0 %v932
        %v954 = vpop.f32.mrf.mxu0
        %v955 = vadd.f32 0.0, %v954
        %956 = vdwg.mxu0
        %v958 = vsel %vm930, %v334, 0
        %v960 = vsel %vm934, %v926, 0
        %962 = vmatpush.msra.mxu0 0.0
        %963 = vmatpush.msra.mxu0 0.0
        %964 = vmatpush.msra.mxu0 0.0
        %965 = vmatpush.msra.mxu0 0.0
        %966 = vmatpush.msra.mxu0 0.0
        %967 = vmatpush.msra.mxu0 0.0
        %968 = vmatpush.msra.mxu0 0.0
        %969 = vmatpush.msra.mxu0 0.0
        %970 = vmatpush.msra.mxu0 0.0
        %971 = vmatpush.msra.mxu0 0.0
        %972 = vmatpush.msra.mxu0 0.0
        %973 = vmatpush.msra.mxu0 0.0
        %974 = vmatpush.msra.mxu0 0.0
        %975 = vmatpush.msra.mxu0 0.0
        %976 = vmatpush.msra.mxu0 0.0
        %977 = vmatpush.msra.mxu0 %v960
        %978 = vmatmul.f32.gmra.mxu0 %v958
        %v979 = vpop.f32.mrf.mxu0
        %v980 = vadd.f32 %v955, %v979
        %981 = vdwg.mxu0
        %982 = vrot.lane.b32.xlu0 %v926, 126
        %v983 = vpop.permute.xlu0 %982
        %v985 = vsel %vm930, %v338, 0
        %v987 = vsel %vm934, %v983, 0
        %989 = vmatpush.msra.mxu0 0.0
        %990 = vmatpush.msra.mxu0 0.0
        %991 = vmatpush.msra.mxu0 0.0
        %992 = vmatpush.msra.mxu0 0.0
        %993 = vmatpush.msra.mxu0 0.0
        %994 = vmatpush.msra.mxu0 0.0
        %995 = vmatpush.msra.mxu0 0.0
        %996 = vmatpush.msra.mxu0 0.0
        %997 = vmatpush.msra.mxu0 0.0
        %998 = vmatpush.msra.mxu0 0.0
        %999 = vmatpush.msra.mxu0 0.0
        %1000 = vmatpush.msra.mxu0 0.0
        %1001 = vmatpush.msra.mxu0 0.0
        %1002 = vmatpush.msra.mxu0 0.0
        %1003 = vmatpush.msra.mxu0 0.0
        %1004 = vmatpush.msra.mxu0 %v987
        %1005 = vmatmul.f32.gmra.mxu0 %v985
        %v1006 = vpop.f32.mrf.mxu0
        %v1007 = vadd.f32 0.0, %v1006
        %1008 = vdwg.mxu0
        %v1009 = vadd.f32 %v980, %v1007
        %s1010 = sadd.s32 %s919, 1
        %s1011 = smul.u32 %s1010, 4
        %s1012 = scalar_lea.vmem [#allocation3], %s1011
        %v1013 = vld [vmem:[%s1012] sm:$0xf]
        %v1015 = vsel %vm930, %v340, 0
        %v1018 = vsel %vm934, %v1013, 0
        %1020 = vmatpush.msra.mxu0 0.0
        %1021 = vmatpush.msra.mxu0 0.0
        %1022 = vmatpush.msra.mxu0 0.0
        %1023 = vmatpush.msra.mxu0 0.0
        %1024 = vmatpush.msra.mxu0 0.0
        %1025 = vmatpush.msra.mxu0 0.0
        %1026 = vmatpush.msra.mxu0 0.0
        %1027 = vmatpush.msra.mxu0 0.0
        %1028 = vmatpush.msra.mxu0 0.0
        %1029 = vmatpush.msra.mxu0 0.0
        %1030 = vmatpush.msra.mxu0 0.0
        %1031 = vmatpush.msra.mxu0 0.0
        %1032 = vmatpush.msra.mxu0 0.0
        %1033 = vmatpush.msra.mxu0 0.0
        %1034 = vmatpush.msra.mxu0 0.0
        %1035 = vmatpush.msra.mxu0 %v1018
        %1036 = vmatmul.f32.gmra.mxu0 %v1015
        %v1037 = vpop.f32.mrf.mxu0
        %v1038 = vadd.f32 0.0, %v1037
        %1039 = vdwg.mxu0
        %v1040 = vadd.f32 %v1009, %v1038
        %1041 = vrot.lane.b32.xlu0 %v1013, 127
        %v1042 = vpop.permute.xlu0 %1041
        %v1044 = vsel %vm930, %v342, 0
        %v1046 = vsel %vm934, %v1042, 0
        %1048 = vmatpush.msra.mxu0 0.0
        %1049 = vmatpush.msra.mxu0 0.0
        %1050 = vmatpush.msra.mxu0 0.0
        %1051 = vmatpush.msra.mxu0 0.0
        %1052 = vmatpush.msra.mxu0 0.0
        %1053 = vmatpush.msra.mxu0 0.0
        %1054 = vmatpush.msra.mxu0 0.0
        %1055 = vmatpush.msra.mxu0 0.0
        %1056 = vmatpush.msra.mxu0 0.0
        %1057 = vmatpush.msra.mxu0 0.0
        %1058 = vmatpush.msra.mxu0 0.0
        %1059 = vmatpush.msra.mxu0 0.0
        %1060 = vmatpush.msra.mxu0 0.0
        %1061 = vmatpush.msra.mxu0 0.0
        %1062 = vmatpush.msra.mxu0 0.0
        %1063 = vmatpush.msra.mxu0 %v1046
        %1064 = vmatmul.f32.gmra.mxu0 %v1044
        %v1065 = vpop.f32.mrf.mxu0
        %v1066 = vadd.f32 0.0, %v1065
        %1067 = vdwg.mxu0
        %v1068 = vadd.f32 %v1040, %v1066
        %1069 = vrot.lane.b32.xlu0 %v1013, 126
        %v1070 = vpop.permute.xlu0 %1069
        %v1072 = vsel %vm930, %v344, 0
        %v1074 = vsel %vm934, %v1070, 0
        %1076 = vmatpush.msra.mxu0 0.0
        %1077 = vmatpush.msra.mxu0 0.0
        %1078 = vmatpush.msra.mxu0 0.0
        %1079 = vmatpush.msra.mxu0 0.0
        %1080 = vmatpush.msra.mxu0 0.0
        %1081 = vmatpush.msra.mxu0 0.0
        %1082 = vmatpush.msra.mxu0 0.0
        %1083 = vmatpush.msra.mxu0 0.0
        %1084 = vmatpush.msra.mxu0 0.0
        %1085 = vmatpush.msra.mxu0 0.0
        %1086 = vmatpush.msra.mxu0 0.0
        %1087 = vmatpush.msra.mxu0 0.0
        %1088 = vmatpush.msra.mxu0 0.0
        %1089 = vmatpush.msra.mxu0 0.0
        %1090 = vmatpush.msra.mxu0 0.0
        %1091 = vmatpush.msra.mxu0 %v1074
        %1092 = vmatmul.f32.gmra.mxu0 %v1072
        %v1093 = vpop.f32.mrf.mxu0
        %v1094 = vadd.f32 0.0, %v1093
        %1095 = vdwg.mxu0
        %v1096 = vadd.f32 %v1068, %v1094
        %s1097 = sadd.s32 %s919, 2
        %s1098 = smul.u32 %s1097, 4
        %s1099 = scalar_lea.vmem [#allocation3], %s1098
        %v1100 = vld [vmem:[%s1099] sm:$0xf]
        %v1102 = vsel %vm930, %v346, 0
        %v1105 = vsel %vm934, %v1100, 0
        %1107 = vmatpush.msra.mxu0 0.0
        %1108 = vmatpush.msra.mxu0 0.0
        %1109 = vmatpush.msra.mxu0 0.0
        %1110 = vmatpush.msra.mxu0 0.0
        %1111 = vmatpush.msra.mxu0 0.0
        %1112 = vmatpush.msra.mxu0 0.0
        %1113 = vmatpush.msra.mxu0 0.0
        %1114 = vmatpush.msra.mxu0 0.0
        %1115 = vmatpush.msra.mxu0 0.0
        %1116 = vmatpush.msra.mxu0 0.0
        %1117 = vmatpush.msra.mxu0 0.0
        %1118 = vmatpush.msra.mxu0 0.0
        %1119 = vmatpush.msra.mxu0 0.0
        %1120 = vmatpush.msra.mxu0 0.0
        %1121 = vmatpush.msra.mxu0 0.0
        %1122 = vmatpush.msra.mxu0 %v1105
        %1123 = vmatmul.f32.gmra.mxu0 %v1102
        %v1124 = vpop.f32.mrf.mxu0
        %v1125 = vadd.f32 0.0, %v1124
        %1126 = vdwg.mxu0
        %v1127 = vadd.f32 %v1096, %v1125
        %1128 = vrot.lane.b32.xlu0 %v1100, 127
        %v1129 = vpop.permute.xlu0 %1128
        %v1131 = vsel %vm930, %v348, 0
        %v1133 = vsel %vm934, %v1129, 0
        %1135 = vmatpush.msra.mxu0 0.0
        %1136 = vmatpush.msra.mxu0 0.0
        %1137 = vmatpush.msra.mxu0 0.0
        %1138 = vmatpush.msra.mxu0 0.0
        %1139 = vmatpush.msra.mxu0 0.0
        %1140 = vmatpush.msra.mxu0 0.0
        %1141 = vmatpush.msra.mxu0 0.0
        %1142 = vmatpush.msra.mxu0 0.0
        %1143 = vmatpush.msra.mxu0 0.0
        %1144 = vmatpush.msra.mxu0 0.0
        %1145 = vmatpush.msra.mxu0 0.0
        %1146 = vmatpush.msra.mxu0 0.0
        %1147 = vmatpush.msra.mxu0 0.0
        %1148 = vmatpush.msra.mxu0 0.0
        %1149 = vmatpush.msra.mxu0 0.0
        %1150 = vmatpush.msra.mxu0 %v1133
        %1151 = vmatmul.f32.gmra.mxu0 %v1131
        %v1152 = vpop.f32.mrf.mxu0
        %v1153 = vadd.f32 0.0, %v1152
        %1154 = vdwg.mxu0
        %v1155 = vadd.f32 %v1127, %v1153
        %1156 = vrot.lane.b32.xlu0 %v1100, 126
        %v1157 = vpop.permute.xlu0 %1156
        %v1159 = vsel %vm930, %v350, 0
        %v1161 = vsel %vm934, %v1157, 0
        %1163 = vmatpush.msra.mxu0 0.0
        %1164 = vmatpush.msra.mxu0 0.0
        %1165 = vmatpush.msra.mxu0 0.0
        %1166 = vmatpush.msra.mxu0 0.0
        %1167 = vmatpush.msra.mxu0 0.0
        %1168 = vmatpush.msra.mxu0 0.0
        %1169 = vmatpush.msra.mxu0 0.0
        %1170 = vmatpush.msra.mxu0 0.0
        %1171 = vmatpush.msra.mxu0 0.0
        %1172 = vmatpush.msra.mxu0 0.0
        %1173 = vmatpush.msra.mxu0 0.0
        %1174 = vmatpush.msra.mxu0 0.0
        %1175 = vmatpush.msra.mxu0 0.0
        %1176 = vmatpush.msra.mxu0 0.0
        %1177 = vmatpush.msra.mxu0 0.0
        %1178 = vmatpush.msra.mxu0 %v1161
        %1179 = vmatmul.f32.gmra.mxu0 %v1159
        %v1180 = vpop.f32.mrf.mxu0
        %v1181 = vadd.f32 0.0, %v1180
        %1182 = vdwg.mxu0
        %v1183 = vadd.f32 %v1155, %v1181
        %1185 = vset.pattern.permute.xlu0 0
        %1186 = vperm.xlu0 %1185, %v353
        %v1187 = vpop.permute.xlu0 %1186
        %v1189 = vadd.f32 %v1183, %v1187
        %s1190 = scalar_lea.vmem %s278, %s924
        %vm1191 = vcmask 60416
        %1192 = vst.msk [vmem:[%s1190] sm:$0xf] %vm1191, %v1189
      $region67: #{_lambda_.6} parent=47 // loop_footer
        %s923 = sadd.s32 1, %s919
      $region68: #{_lambda_.6} parent=47 // loop_footer_branch
        %918 = sbr.rel target = $region64
      $region69: #{_lambda_.6} parent=47 // loop_exit
        _
      %p1193 = scmp.lt.s32.totalorder %s18, 3
      %s1194 = scalar_select %p1193, %s18, 3
      %s1195 = smul.addr %s1194, 8
      %s1196 = smul.addr %s1195, 4
      %s1197 = scalar_lea.vmem %s7, %s1196
      // Predicated region
      $region70: #{_lambda_.6} parent=47 // pred_check
        %p1198 = pneg %p188
      $region71: #{_lambda_.6} parent=47 // pred_check_branch
        %1200 = sbr.rel (%p1198) target = $region73
      $region72: #{_lambda_.6} parent=47 // pred_region
        _
      $region73: #{_lambda_.6} parent=47 // pred_fallthru
        _
    $region48: #{_lambda_.6} parent=5 // pred_fallthru
      _
    %p1201 = scmp.le.s32.totalorder 2, %s13
    // Predicated region
    $region74: #{_lambda_.6} parent=5 // pred_check
      %p1202 = pneg %p1201
    $region75: #{_lambda_.6} parent=5 // pred_check_branch
      %1204 = sbr.rel (%p1202) target = $region77
    $region76: #{_lambda_.6} parent=5 // pred_region
      %s1205 = ssub.s32 %s13, 2
      // Predicated region
      $region78: #{_lambda_.6} parent=76 // pred_check
        %p1206 = pneg %p194
      $region79: #{_lambda_.6} parent=76 // pred_check_branch
        %1208 = sbr.rel (%p1206) target = $region81
      $region80: #{_lambda_.6} parent=76 // pred_region
        %p1209 = scmp.lt.s32.totalorder %s19, 3
        %s1210 = scalar_select %p1209, %s19, 3
        %s1211 = smul.addr %s1210, 8
        %s1212 = smul.addr %s1211, 4
        %s1213 = scalar_lea.vmem %s7, %s1212
      $region81: #{_lambda_.6} parent=76 // pred_fallthru
        _
    $region77: #{_lambda_.6} parent=5 // pred_fallthru
      _
  $region6: #{_lambda_.6} parent=0 // loop_footer
    %s17 = sadd.s32 1, %s13
  $region7: #{_lambda_.6} parent=0 // loop_footer_branch
    %12 = sbr.rel target = $region3
  $region8: #{_lambda_.6} parent=0 // loop_exit
    _

// kernel: _lambda_.7
$region0: #{_lambda_.7}
  #allocation0 [shape = 'u32[]', space=smem, size = 0x4, offset = 0x4, fixed_abs, tag = 'smem constant byte address 0x4 - core index']
  #allocation1 [shape = 'u32[72,128]{1,0:T(1,128)}', space=vmem, size = 0x9000, scoped, tag = 'internal scratch']
  #allocation2 [shape = 'f32[6,8,6]{2,1,0:T(8,128)}', space=vmem, size = 0x6000, scoped, tag = 'scratch operand']
  #allocation3 [shape = 'f32[6,8,6]{2,1,0:T(8,128)}', space=vmem, size = 0x6000, scoped, tag = 'scratch operand']
  %s0 = inlined_call_operand.vmem [shape: f32[4,5,4,4,5], index: 0, kind: input, shape index: {}]
  %s1 = inlined_call_operand.vmem [shape: f32[3,3,8,4], index: 1, kind: input, shape index: {}]
  %s2 = inlined_call_operand.vmem [shape: f32[8,1], index: 2, kind: input, shape index: {}, may-alias: {2,4,6}]
  %s3 = inlined_call_operand.vmem [shape: f32[3,3,8,8], index: 3, kind: input, shape index: {}]
  %s4 = inlined_call_operand.vmem [shape: f32[8,1], index: 4, kind: input, shape index: {}, may-alias: {2,4,6}]
  %s5 = inlined_call_operand.vmem [shape: f32[3,3,8,8], index: 5, kind: input, shape index: {}]
  %s6 = inlined_call_operand.vmem [shape: f32[8,1], index: 6, kind: input, shape index: {}, may-alias: {2,4,6}]
  %s7 = inlined_call_operand.vmem [shape: f32[4,4,8,4], index: 7, kind: output, shape index: {}]
  %s8 = sld [smem:[#allocation0]]
  $region82: #{_lambda_.7} parent=0
    _
  %s10 = ssub.s32 1, %s8
  %s11 = scalar_select 0, %s10, %s8
  loop: start=0, step=1, limit=6
  $region2: #{_lambda_.7} parent=0 // loop_pre_header
    _
  $region3: #{_lambda_.7} parent=0 // loop_header
    %s13 = sphi 0, %s17
    %p14 = scmp.ge.s32.totalorder %s13, 6
    %s23 = sphi 0, %s25
    %s26 = sphi 0, %s23
    %s27 = sphi 0, %s26
    %s43 = sphi 0, %s27
    %s47 = sphi 0, %s47
    %s49 = sphi 0, %s47
    %s50 = sphi 0, %s49
    %s64 = sphi 0, %s50
    %s68 = sphi 0, %s68
    %s70 = sphi 0, %s68
    %s71 = sphi 0, %s70
    %s85 = sphi 0, %s71
    %s89 = sphi 0, %s89
    %s91 = sphi 0, %s89
    %s92 = sphi 0, %s91
    %s106 = sphi 0, %s92
    %s110 = sphi 0, %s110
    %s112 = sphi 0, %s110
    %s113 = sphi 0, %s112
    %s127 = sphi 0, %s113
    %s131 = sphi 0, %s131
    %s133 = sphi 0, %s131
    %s134 = sphi 0, %s133
    %s148 = sphi 0, %s134
    %s152 = sphi 0, %s152
    %s154 = sphi 0, %s152
    %s155 = sphi 0, %s154
    %s169 = sphi 0, %s155
    %s175 = sphi 0, %s177
    %s178 = sphi 0, %s175
    %s179 = sphi 0, %s178
    %s195 = sphi 0, %s179
  $region4: #{_lambda_.7} parent=0 // loop_header_branch
    %16 = sbr.rel (%p14) target = $region8
  $region5: #{_lambda_.7} parent=0 // loop_body
    %s18 = ssub.s32 %s13, 1
    %s19 = ssub.s32 %s13, 2
    %s20 = sadd.s32 %s13, 1
    %s21 = ssub.s32 %s13, %s20
    %p22 = scmp.eq.s32.totalorder %s21, 0
    %s24 = sadd.s32 %s23, 1
    %s25 = scalar_select %p22, %s23, %s24
    %p28 = pneg %p22
    %p29 = scmp.eq.s32.totalorder %s13, 3
    %p30 = por %p28, %p29
    %p31 = scmp.ne.s32.totalorder %s23, %s26
    %p32 = scmp.eq.s32.totalorder %s13, 0
    %p33 = por %p31, %p32
    %p34 = scmp.ne.s32.totalorder %s23, %s26
    %p35 = scmp.eq.s32.totalorder %s18, 3
    %p36 = por %p34, %p35
    %p37 = scmp.ne.s32.totalorder %s26, %s27
    %p38 = scmp.eq.s32.totalorder %s18, 0
    %p39 = por %p37, %p38
    %p40 = scmp.ne.s32.totalorder %s26, %s27
    %p41 = scmp.eq.s32.totalorder %s19, 3
    %p42 = por %p40, %p41
    %p44 = scmp.ne.s32.totalorder %s27, %s43
    %p45 = scmp.eq.s32.totalorder %s19, 0
    %p46 = por %p44, %p45
    %s48 = sadd.s32 %s47, 1
    %p51 = scmp.eq.s32.totalorder %s13, 3
    %p52 = scmp.ne.s32.totalorder %s47, %s49
    %p53 = scmp.eq.s32.totalorder %s13, 0
    %p54 = por %p52, %p53
    %p55 = scmp.ne.s32.totalorder %s47, %s49
    %p56 = scmp.eq.s32.totalorder %s18, 3
    %p57 = por %p55, %p56
    %p58 = scmp.ne.s32.totalorder %s49, %s50
    %p59 = scmp.eq.s32.totalorder %s18, 0
    %p60 = por %p58, %p59
    %p61 = scmp.ne.s32.totalorder %s49, %s50
    %p62 = scmp.eq.s32.totalorder %s19, 3
    %p63 = por %p61, %p62
    %p65 = scmp.ne.s32.totalorder %s50, %s64
    %p66 = scmp.eq.s32.totalorder %s19, 0
    %p67 = por %p65, %p66
    %s69 = sadd.s32 %s68, 1
    %p72 = scmp.eq.s32.totalorder %s13, 3
    %p73 = scmp.ne.s32.totalorder %s68, %s70
    %p74 = scmp.eq.s32.totalorder %s13, 0
    %p75 = por %p73, %p74
    %p76 = scmp.ne.s32.totalorder %s68, %s70
    %p77 = scmp.eq.s32.totalorder %s18, 3
    %p78 = por %p76, %p77
    %p79 = scmp.ne.s32.totalorder %s70, %s71
    %p80 = scmp.eq.s32.totalorder %s18, 0
    %p81 = por %p79, %p80
    %p82 = scmp.ne.s32.totalorder %s70, %s71
    %p83 = scmp.eq.s32.totalorder %s19, 3
    %p84 = por %p82, %p83
    %p86 = scmp.ne.s32.totalorder %s71, %s85
    %p87 = scmp.eq.s32.totalorder %s19, 0
    %p88 = por %p86, %p87
    %s90 = sadd.s32 %s89, 1
    %p93 = scmp.eq.s32.totalorder %s13, 3
    %p94 = scmp.ne.s32.totalorder %s89, %s91
    %p95 = scmp.eq.s32.totalorder %s13, 0
    %p96 = por %p94, %p95
    %p97 = scmp.ne.s32.totalorder %s89, %s91
    %p98 = scmp.eq.s32.totalorder %s18, 3
    %p99 = por %p97, %p98
    %p100 = scmp.ne.s32.totalorder %s91, %s92
    %p101 = scmp.eq.s32.totalorder %s18, 0
    %p102 = por %p100, %p101
    %p103 = scmp.ne.s32.totalorder %s91, %s92
    %p104 = scmp.eq.s32.totalorder %s19, 3
    %p105 = por %p103, %p104
    %p107 = scmp.ne.s32.totalorder %s92, %s106
    %p108 = scmp.eq.s32.totalorder %s19, 0
    %p109 = por %p107, %p108
    %s111 = sadd.s32 %s110, 1
    %p114 = scmp.eq.s32.totalorder %s13, 3
    %p115 = scmp.ne.s32.totalorder %s110, %s112
    %p116 = scmp.eq.s32.totalorder %s13, 0
    %p117 = por %p115, %p116
    %p118 = scmp.ne.s32.totalorder %s110, %s112
    %p119 = scmp.eq.s32.totalorder %s18, 3
    %p120 = por %p118, %p119
    %p121 = scmp.ne.s32.totalorder %s112, %s113
    %p122 = scmp.eq.s32.totalorder %s18, 0
    %p123 = por %p121, %p122
    %p124 = scmp.ne.s32.totalorder %s112, %s113
    %p125 = scmp.eq.s32.totalorder %s19, 3
    %p126 = por %p124, %p125
    %p128 = scmp.ne.s32.totalorder %s113, %s127
    %p129 = scmp.eq.s32.totalorder %s19, 0
    %p130 = por %p128, %p129
    %s132 = sadd.s32 %s131, 1
    %p135 = scmp.eq.s32.totalorder %s13, 3
    %p136 = scmp.ne.s32.totalorder %s131, %s133
    %p137 = scmp.eq.s32.totalorder %s13, 0
    %p138 = por %p136, %p137
    %p139 = scmp.ne.s32.totalorder %s131, %s133
    %p140 = scmp.eq.s32.totalorder %s18, 3
    %p141 = por %p139, %p140
    %p142 = scmp.ne.s32.totalorder %s133, %s134
    %p143 = scmp.eq.s32.totalorder %s18, 0
    %p144 = por %p142, %p143
    %p145 = scmp.ne.s32.totalorder %s133, %s134
    %p146 = scmp.eq.s32.totalorder %s19, 3
    %p147 = por %p145, %p146
    %p149 = scmp.ne.s32.totalorder %s134, %s148
    %p150 = scmp.eq.s32.totalorder %s19, 0
    %p151 = por %p149, %p150
    %s153 = sadd.s32 %s152, 1
    %p156 = scmp.eq.s32.totalorder %s13, 3
    %p157 = scmp.ne.s32.totalorder %s152, %s154
    %p158 = scmp.eq.s32.totalorder %s13, 0
    %p159 = por %p157, %p158
    %p160 = scmp.ne.s32.totalorder %s152, %s154
    %p161 = scmp.eq.s32.totalorder %s18, 3
    %p162 = por %p160, %p161
    %p163 = scmp.ne.s32.totalorder %s154, %s155
    %p164 = scmp.eq.s32.totalorder %s18, 0
    %p165 = por %p163, %p164
    %p166 = scmp.ne.s32.totalorder %s154, %s155
    %p167 = scmp.eq.s32.totalorder %s19, 3
    %p168 = por %p166, %p167
    %p170 = scmp.ne.s32.totalorder %s155, %s169
    %p171 = scmp.eq.s32.totalorder %s19, 0
    %p172 = por %p170, %p171
    %s173 = ssub.s32 %s13, %s20
    %p174 = scmp.eq.s32.totalorder %s173, 0
    %s176 = sadd.s32 %s175, 1
    %s177 = scalar_select %p174, %s175, %s176
    %p180 = pneg %p174
    %p181 = scmp.eq.s32.totalorder %s13, 3
    %p182 = por %p180, %p181
    %p183 = scmp.ne.s32.totalorder %s175, %s178
    %p184 = scmp.eq.s32.totalorder %s13, 0
    %p185 = por %p183, %p184
    %p186 = scmp.ne.s32.totalorder %s175, %s178
    %p187 = scmp.eq.s32.totalorder %s18, 3
    %p188 = por %p186, %p187
    %p189 = scmp.ne.s32.totalorder %s178, %s179
    %p190 = scmp.eq.s32.totalorder %s18, 0
    %p191 = por %p189, %p190
    %p192 = scmp.ne.s32.totalorder %s178, %s179
    %p193 = scmp.eq.s32.totalorder %s19, 3
    %p194 = por %p192, %p193
    %p196 = scmp.ne.s32.totalorder %s179, %s195
    %p197 = scmp.eq.s32.totalorder %s19, 0
    %p198 = por %p196, %p197
    %p199 = scmp.le.s32.totalorder 1, %s13
    %p200 = scmp.lt.s32.totalorder %s13, 5
    %p201 = pnand %p199, %p200
    %p202 = pneg %p201
    // Predicated region
    $region9: #{_lambda_.7} parent=5 // pred_check
      _
    $region10: #{_lambda_.7} parent=5 // pred_check_branch
      %204 = sbr.rel (%p201) target = $region12
    $region11: #{_lambda_.7} parent=5 // pred_region
      %s205 = ssub.s32 %s13, 1
      // Predicated region
      $region13: #{_lambda_.7} parent=11 // pred_check
        %p206 = pneg %p60
      $region14: #{_lambda_.7} parent=11 // pred_check_branch
        %208 = sbr.rel (%p206) target = $region16
      $region15: #{_lambda_.7} parent=11 // pred_region
        _
      $region16: #{_lambda_.7} parent=11 // pred_fallthru
        _
      // Predicated region
      $region17: #{_lambda_.7} parent=11 // pred_check
        %p209 = pneg %p81
      $region18: #{_lambda_.7} parent=11 // pred_check_branch
        %211 = sbr.rel (%p209) target = $region20
      $region19: #{_lambda_.7} parent=11 // pred_region
        _
      $region20: #{_lambda_.7} parent=11 // pred_fallthru
        _
      // Predicated region
      $region21: #{_lambda_.7} parent=11 // pred_check
        %p212 = pneg %p102
      $region22: #{_lambda_.7} parent=11 // pred_check_branch
        %214 = sbr.rel (%p212) target = $region24
      $region23: #{_lambda_.7} parent=11 // pred_region
        _
      $region24: #{_lambda_.7} parent=11 // pred_fallthru
        _
      // Predicated region
      $region25: #{_lambda_.7} parent=11 // pred_check
        %p215 = pneg %p123
      $region26: #{_lambda_.7} parent=11 // pred_check_branch
        %217 = sbr.rel (%p215) target = $region28
      $region27: #{_lambda_.7} parent=11 // pred_region
        _
      $region28: #{_lambda_.7} parent=11 // pred_fallthru
        _
      // Predicated region
      $region29: #{_lambda_.7} parent=11 // pred_check
        %p218 = pneg %p144
      $region30: #{_lambda_.7} parent=11 // pred_check_branch
        %220 = sbr.rel (%p218) target = $region32
      $region31: #{_lambda_.7} parent=11 // pred_region
        _
      $region32: #{_lambda_.7} parent=11 // pred_fallthru
        _
      // Predicated region
      $region33: #{_lambda_.7} parent=11 // pred_check
        %p221 = pneg %p165
      $region34: #{_lambda_.7} parent=11 // pred_check_branch
        %223 = sbr.rel (%p221) target = $region36
      $region35: #{_lambda_.7} parent=11 // pred_region
        _
      $region36: #{_lambda_.7} parent=11 // pred_fallthru
        _
    $region12: #{_lambda_.7} parent=5 // pred_fallthru
      _
    %p224 = scmp.lt.s32.totalorder %s13, 4
    // Predicated region
    $region37: #{_lambda_.7} parent=5 // pred_check
      %p225 = pneg %p224
    $region38: #{_lambda_.7} parent=5 // pred_check_branch
      %227 = sbr.rel (%p225) target = $region40
    $region39: #{_lambda_.7} parent=5 // pred_region
      // Predicated region
      $region41: #{_lambda_.7} parent=39 // pred_check
        %p228 = pneg %p33
      $region42: #{_lambda_.7} parent=39 // pred_check_branch
        %230 = sbr.rel (%p228) target = $region44
      $region43: #{_lambda_.7} parent=39 // pred_region
        %p231 = scmp.lt.s32.totalorder %s13, 3
        %s232 = scalar_select %p231, %s13, 3
        %s233 = smul.addr %s232, 20
        %s234 = smul.addr %s233, 4
        %s235 = scalar_lea.vmem %s0, %s234
      $region44: #{_lambda_.7} parent=39 // pred_fallthru
        _
    $region40: #{_lambda_.7} parent=5 // pred_fallthru
      _
    %p236 = scmp.le.s32.totalorder 1, %s13
    %p237 = scmp.lt.s32.totalorder %s13, 5
    %p238 = pnand %p236, %p237
    %p239 = pneg %p238
    // Predicated region
    $region45: #{_lambda_.7} parent=5 // pred_check
      _
    $region46: #{_lambda_.7} parent=5 // pred_check_branch
      %241 = sbr.rel (%p238) target = $region48
    $region47: #{_lambda_.7} parent=5 // pred_region
      %s242 = ssub.s32 %s13, 1
      %p243 = scmp.lt.s32.totalorder %s18, 3
      %s244 = scalar_select %p243, %s18, 3
      %s245 = smul.addr %s244, 20
      %s246 = smul.addr %s245, 4
      %s247 = scalar_lea.vmem %s0, %s246
      %p248 = pneg %p39
      %p249 = pneg %p36
      %p250 = pneg %p60
      %p251 = pneg %p57
      %p252 = pneg %p81
      %p253 = pneg %p78
      %p254 = pneg %p102
      %p255 = pneg %p99
      %p256 = pneg %p123
      %p257 = pneg %p120
      %p258 = pneg %p144
      %p259 = pneg %p141
      %p260 = pneg %p165
      %p261 = pneg %p162
      %p262 = pneg %p191
      %p263 = pneg %p188
      %p264 = scmp.lt.s32.totalorder %s18, 3
      %s265 = scalar_select %p264, %s18, 3
      %s266 = smul.addr %s265, 4
      %s267 = smul.addr %s266, 8
      %s268 = scalar_lea.vmem %s7, %s267
      %p269 = scmp.lt.s32.totalorder %s18, 3
      %s270 = scalar_select %p269, %s18, 3
      %s271 = smul.addr %s270, 20
      %s272 = smul.addr %s271, 4
      %s273 = scalar_lea.vmem %s0, %s272
      %p274 = scmp.lt.s32.totalorder %s18, 3
      %s275 = scalar_select %p274, %s18, 3
      %s276 = smul.addr %s275, 4
      %s277 = smul.addr %s276, 8
      %s278 = scalar_lea.vmem %s7, %s277
      %vm279 = vcmask 48128
      %280 = vst.msk [vmem:[#allocation2] sm:$0xff] %vm279, 0.0
      %281 = vst.msk [vmem:[#allocation2 + $0x8] sm:$0xff] %vm279, 0.0
      %282 = vst.msk [vmem:[#allocation2 + $0x10] sm:$0xff] %vm279, 0.0
      %283 = vst.msk [vmem:[#allocation2 + $0x18] sm:$0xff] %vm279, 0.0
      %284 = vst.msk [vmem:[#allocation2 + $0x20] sm:$0xff] %vm279, 0.0
      %285 = vst.msk [vmem:[#allocation2 + $0x28] sm:$0xff] %vm279, 0.0
      %286 = vst.msk [vmem:[#allocation3] sm:$0xff] %vm279, 0.0
      %287 = vst.msk [vmem:[#allocation3 + $0x8] sm:$0xff] %vm279, 0.0
      %288 = vst.msk [vmem:[#allocation3 + $0x10] sm:$0xff] %vm279, 0.0
      %289 = vst.msk [vmem:[#allocation3 + $0x18] sm:$0xff] %vm279, 0.0
      %290 = vst.msk [vmem:[#allocation3 + $0x20] sm:$0xff] %vm279, 0.0
      %291 = vst.msk [vmem:[#allocation3 + $0x28] sm:$0xff] %vm279, 0.0
      %v292 = vld [vmem:[%s1] sm:$0xff]
      %s293 = scalar_lea.vmem %s1, 8
      %v294 = vld [vmem:[%s293] sm:$0xff]
      %s295 = scalar_lea.vmem %s1, 16
      %v296 = vld [vmem:[%s295] sm:$0xff]
      %s297 = scalar_lea.vmem %s1, 24
      %v298 = vld [vmem:[%s297] sm:$0xff]
      %s299 = scalar_lea.vmem %s1, 32
      %v300 = vld [vmem:[%s299] sm:$0xff]
      %s301 = scalar_lea.vmem %s1, 40
      %v302 = vld [vmem:[%s301] sm:$0xff]
      %s303 = scalar_lea.vmem %s1, 48
      %v304 = vld [vmem:[%s303] sm:$0xff]
      %s305 = scalar_lea.vmem %s1, 56
      %v306 = vld [vmem:[%s305] sm:$0xff]
      %s307 = scalar_lea.vmem %s1, 64
      %v308 = vld [vmem:[%s307] sm:$0xff]
      %v309 = vld [vmem:[%s3] sm:$0xff]
      %s310 = scalar_lea.vmem %s3, 8
      %v311 = vld [vmem:[%s310] sm:$0xff]
      %s312 = scalar_lea.vmem %s3, 16
      %v313 = vld [vmem:[%s312] sm:$0xff]
      %s314 = scalar_lea.vmem %s3, 24
      %v315 = vld [vmem:[%s314] sm:$0xff]
      %s316 = scalar_lea.vmem %s3, 32
      %v317 = vld [vmem:[%s316] sm:$0xff]
      %s318 = scalar_lea.vmem %s3, 40
      %v319 = vld [vmem:[%s318] sm:$0xff]
      %s320 = scalar_lea.vmem %s3, 48
      %v321 = vld [vmem:[%s320] sm:$0xff]
      %s322 = scalar_lea.vmem %s3, 56
      %v323 = vld [vmem:[%s322] sm:$0xff]
      %s324 = scalar_lea.vmem %s3, 64
      %v325 = vld [vmem:[%s324] sm:$0xff]
      %v326 = vld [vmem:[%s5] sm:$0xff]
      %s327 = scalar_lea.vmem %s5, 8
      %v328 = vld [vmem:[%s327] sm:$0xff]
      %s329 = scalar_lea.vmem %s5, 16
      %v330 = vld [vmem:[%s329] sm:$0xff]
      %s331 = scalar_lea.vmem %s5, 24
      %v332 = vld [vmem:[%s331] sm:$0xff]
      %s333 = scalar_lea.vmem %s5, 32
      %v334 = vld [vmem:[%s333] sm:$0xff]
      %s335 = scalar_lea.vmem %s5, 40
      %v336 = vld [vmem:[%s335] sm:$0xff]
      %s337 = scalar_lea.vmem %s5, 48
      %v338 = vld [vmem:[%s337] sm:$0xff]
      %s339 = scalar_lea.vmem %s5, 56
      %v340 = vld [vmem:[%s339] sm:$0xff]
      %s341 = scalar_lea.vmem %s5, 64
      %v342 = vld [vmem:[%s341] sm:$0xff]
      %v343 = vld [vmem:[%s2] sm:$0xff]
      %v344 = vld [vmem:[%s4] sm:$0xff]
      %v345 = vld [vmem:[%s6] sm:$0xff]
      loop: start=0, step=1, limit=4
      $region49: #{_lambda_.7} parent=47 // loop_pre_header
        _
      $region50: #{_lambda_.7} parent=47 // loop_header
        %s347 = sphi 0, %s351
        %p348 = scmp.ge.s32.totalorder %s347, 4
      $region51: #{_lambda_.7} parent=47 // loop_header_branch
        %350 = sbr.rel (%p348) target = $region55
      $region52: #{_lambda_.7} parent=47 // loop_body
        %s352 = smul.u32 %s347, 16
        %s353 = scalar_lea.vmem %s273, %s352
        %v354 = vld [vmem:[%s353] sm:$0xf]
        %s355 = sadd.s32 4, %s352
        %s356 = scalar_lea.vmem %s273, %s355
        %v357 = vld [vmem:[%s356] sm:$0xf]
        %vm358 = vcmask 31744
        %v360 = vsel %vm358, %v294, 0
        %vm362 = vcmask 1043456
        %v364 = vsel %vm362, %v357, 0
        %366 = vmatpush.msra.mxu0 0.0
        %367 = vmatpush.msra.mxu0 0.0
        %368 = vmatpush.msra.mxu0 0.0
        %369 = vmatpush.msra.mxu0 0.0
        %370 = vmatpush.msra.mxu0 0.0
        %371 = vmatpush.msra.mxu0 0.0
        %372 = vmatpush.msra.mxu0 0.0
        %373 = vmatpush.msra.mxu0 0.0
        %374 = vmatpush.msra.mxu0 0.0
        %375 = vmatpush.msra.mxu0 0.0
        %376 = vmatpush.msra.mxu0 0.0
        %377 = vmatpush.msra.mxu0 0.0
        %378 = vmatpush.msra.mxu0 0.0
        %379 = vmatpush.msra.mxu0 0.0
        %380 = vmatpush.msra.mxu0 0.0
        %381 = vmatpush.msra.mxu0 %v364
        %382 = vmatmul.f32.gmra.mxu0 %v360
        %v383 = vpop.f32.mrf.mxu0
        %v384 = vadd.f32 0.0, %v383
        %385 = vdwg.mxu0
        %v387 = vsel %vm358, %v292, 0
        %v390 = vsel %vm362, %v354, 0
        %392 = vmatpush.msra.mxu0 0.0
        %393 = vmatpush.msra.mxu0 0.0
        %394 = vmatpush.msra.mxu0 0.0
        %395 = vmatpush.msra.mxu0 0.0
        %396 = vmatpush.msra.mxu0 0.0
        %397 = vmatpush.msra.mxu0 0.0
        %398 = vmatpush.msra.mxu0 0.0
        %399 = vmatpush.msra.mxu0 0.0
        %400 = vmatpush.msra.mxu0 0.0
        %401 = vmatpush.msra.mxu0 0.0
        %402 = vmatpush.msra.mxu0 0.0
        %403 = vmatpush.msra.mxu0 0.0
        %404 = vmatpush.msra.mxu0 0.0
        %405 = vmatpush.msra.mxu0 0.0
        %406 = vmatpush.msra.mxu0 0.0
        %407 = vmatpush.msra.mxu0 %v390
        %408 = vmatmul.f32.gmra.mxu0 %v387
        %v409 = vpop.f32.mrf.mxu0
        %v410 = vadd.f32 %v384, %v409
        %411 = vdwg.mxu0
        %412 = vrot.lane.b32.xlu0 %v354, 127
        %v413 = vpop.permute.xlu0 %412
        %v415 = vsel %vm358, %v296, 0
        %v417 = vsel %vm362, %v413, 0
        %419 = vmatpush.msra.mxu0 0.0
        %420 = vmatpush.msra.mxu0 0.0
        %421 = vmatpush.msra.mxu0 0.0
        %422 = vmatpush.msra.mxu0 0.0
        %423 = vmatpush.msra.mxu0 0.0
        %424 = vmatpush.msra.mxu0 0.0
        %425 = vmatpush.msra.mxu0 0.0
        %426 = vmatpush.msra.mxu0 0.0
        %427 = vmatpush.msra.mxu0 0.0
        %428 = vmatpush.msra.mxu0 0.0
        %429 = vmatpush.msra.mxu0 0.0
        %430 = vmatpush.msra.mxu0 0.0
        %431 = vmatpush.msra.mxu0 0.0
        %432 = vmatpush.msra.mxu0 0.0
        %433 = vmatpush.msra.mxu0 0.0
        %434 = vmatpush.msra.mxu0 %v417
        %435 = vmatmul.f32.gmra.mxu0 %v415
        %v436 = vpop.f32.mrf.mxu0
        %v437 = vadd.f32 0.0, %v436
        %438 = vdwg.mxu0
        %v439 = vadd.f32 %v410, %v437
        %s440 = sadd.s32 8, %s352
        %s441 = scalar_lea.vmem %s273, %s440
        %v442 = vld [vmem:[%s441] sm:$0xf]
        %v444 = vsel %vm358, %v298, 0
        %v447 = vsel %vm362, %v442, 0
        %449 = vmatpush.msra.mxu0 0.0
        %450 = vmatpush.msra.mxu0 0.0
        %451 = vmatpush.msra.mxu0 0.0
        %452 = vmatpush.msra.mxu0 0.0
        %453 = vmatpush.msra.mxu0 0.0
        %454 = vmatpush.msra.mxu0 0.0
        %455 = vmatpush.msra.mxu0 0.0
        %456 = vmatpush.msra.mxu0 0.0
        %457 = vmatpush.msra.mxu0 0.0
        %458 = vmatpush.msra.mxu0 0.0
        %459 = vmatpush.msra.mxu0 0.0
        %460 = vmatpush.msra.mxu0 0.0
        %461 = vmatpush.msra.mxu0 0.0
        %462 = vmatpush.msra.mxu0 0.0
        %463 = vmatpush.msra.mxu0 0.0
        %464 = vmatpush.msra.mxu0 %v447
        %465 = vmatmul.f32.gmra.mxu0 %v444
        %v466 = vpop.f32.mrf.mxu0
        %v467 = vadd.f32 0.0, %v466
        %468 = vdwg.mxu0
        %v469 = vadd.f32 %v439, %v467
        %s470 = sadd.s32 12, %s352
        %s471 = scalar_lea.vmem %s273, %s470
        %v472 = vld [vmem:[%s471] sm:$0xf]
        %v474 = vsel %vm358, %v300, 0
        %v477 = vsel %vm362, %v472, 0
        %479 = vmatpush.msra.mxu0 0.0
        %480 = vmatpush.msra.mxu0 0.0
        %481 = vmatpush.msra.mxu0 0.0
        %482 = vmatpush.msra.mxu0 0.0
        %483 = vmatpush.msra.mxu0 0.0
        %484 = vmatpush.msra.mxu0 0.0
        %485 = vmatpush.msra.mxu0 0.0
        %486 = vmatpush.msra.mxu0 0.0
        %487 = vmatpush.msra.mxu0 0.0
        %488 = vmatpush.msra.mxu0 0.0
        %489 = vmatpush.msra.mxu0 0.0
        %490 = vmatpush.msra.mxu0 0.0
        %491 = vmatpush.msra.mxu0 0.0
        %492 = vmatpush.msra.mxu0 0.0
        %493 = vmatpush.msra.mxu0 0.0
        %494 = vmatpush.msra.mxu0 %v477
        %495 = vmatmul.f32.gmra.mxu0 %v474
        %v496 = vpop.f32.mrf.mxu0
        %v497 = vadd.f32 0.0, %v496
        %498 = vdwg.mxu0
        %v499 = vadd.f32 %v469, %v497
        %500 = vrot.lane.b32.xlu0 %v442, 127
        %v501 = vpop.permute.xlu0 %500
        %v503 = vsel %vm358, %v302, 0
        %v505 = vsel %vm362, %v501, 0
        %507 = vmatpush.msra.mxu0 0.0
        %508 = vmatpush.msra.mxu0 0.0
        %509 = vmatpush.msra.mxu0 0.0
        %510 = vmatpush.msra.mxu0 0.0
        %511 = vmatpush.msra.mxu0 0.0
        %512 = vmatpush.msra.mxu0 0.0
        %513 = vmatpush.msra.mxu0 0.0
        %514 = vmatpush.msra.mxu0 0.0
        %515 = vmatpush.msra.mxu0 0.0
        %516 = vmatpush.msra.mxu0 0.0
        %517 = vmatpush.msra.mxu0 0.0
        %518 = vmatpush.msra.mxu0 0.0
        %519 = vmatpush.msra.mxu0 0.0
        %520 = vmatpush.msra.mxu0 0.0
        %521 = vmatpush.msra.mxu0 0.0
        %522 = vmatpush.msra.mxu0 %v505
        %523 = vmatmul.f32.gmra.mxu0 %v503
        %v524 = vpop.f32.mrf.mxu0
        %v525 = vadd.f32 0.0, %v524
        %526 = vdwg.mxu0
        %v527 = vadd.f32 %v499, %v525
        %s528 = sadd.s32 %s347, 1
        %s529 = smul.u32 %s528, 16
        %s530 = scalar_lea.vmem %s273, %s529
        %v531 = vld [vmem:[%s530] sm:$0xf]
        %v533 = vsel %vm358, %v304, 0
        %v536 = vsel %vm362, %v531, 0
        %538 = vmatpush.msra.mxu0 0.0
        %539 = vmatpush.msra.mxu0 0.0
        %540 = vmatpush.msra.mxu0 0.0
        %541 = vmatpush.msra.mxu0 0.0
        %542 = vmatpush.msra.mxu0 0.0
        %543 = vmatpush.msra.mxu0 0.0
        %544 = vmatpush.msra.mxu0 0.0
        %545 = vmatpush.msra.mxu0 0.0
        %546 = vmatpush.msra.mxu0 0.0
        %547 = vmatpush.msra.mxu0 0.0
        %548 = vmatpush.msra.mxu0 0.0
        %549 = vmatpush.msra.mxu0 0.0
        %550 = vmatpush.msra.mxu0 0.0
        %551 = vmatpush.msra.mxu0 0.0
        %552 = vmatpush.msra.mxu0 0.0
        %553 = vmatpush.msra.mxu0 %v536
        %554 = vmatmul.f32.gmra.mxu0 %v533
        %v555 = vpop.f32.mrf.mxu0
        %v556 = vadd.f32 0.0, %v555
        %557 = vdwg.mxu0
        %v558 = vadd.f32 %v527, %v556
        %s559 = sadd.s32 4, %s529
        %s560 = scalar_lea.vmem %s273, %s559
        %v561 = vld [vmem:[%s560] sm:$0xf]
        %v563 = vsel %vm358, %v306, 0
        %v566 = vsel %vm362, %v561, 0
        %568 = vmatpush.msra.mxu0 0.0
        %569 = vmatpush.msra.mxu0 0.0
        %570 = vmatpush.msra.mxu0 0.0
        %571 = vmatpush.msra.mxu0 0.0
        %572 = vmatpush.msra.mxu0 0.0
        %573 = vmatpush.msra.mxu0 0.0
        %574 = vmatpush.msra.mxu0 0.0
        %575 = vmatpush.msra.mxu0 0.0
        %576 = vmatpush.msra.mxu0 0.0
        %577 = vmatpush.msra.mxu0 0.0
        %578 = vmatpush.msra.mxu0 0.0
        %579 = vmatpush.msra.mxu0 0.0
        %580 = vmatpush.msra.mxu0 0.0
        %581 = vmatpush.msra.mxu0 0.0
        %582 = vmatpush.msra.mxu0 0.0
        %583 = vmatpush.msra.mxu0 %v566
        %584 = vmatmul.f32.gmra.mxu0 %v563
        %v585 = vpop.f32.mrf.mxu0
        %v586 = vadd.f32 0.0, %v585
        %587 = vdwg.mxu0
        %v588 = vadd.f32 %v558, %v586
        %589 = vrot.lane.b32.xlu0 %v531, 127
        %v590 = vpop.permute.xlu0 %589
        %v592 = vsel %vm358, %v308, 0
        %v594 = vsel %vm362, %v590, 0
        %596 = vmatpush.msra.mxu0 0.0
        %597 = vmatpush.msra.mxu0 0.0
        %598 = vmatpush.msra.mxu0 0.0
        %599 = vmatpush.msra.mxu0 0.0
        %600 = vmatpush.msra.mxu0 0.0
        %601 = vmatpush.msra.mxu0 0.0
        %602 = vmatpush.msra.mxu0 0.0
        %603 = vmatpush.msra.mxu0 0.0
        %604 = vmatpush.msra.mxu0 0.0
        %605 = vmatpush.msra.mxu0 0.0
        %606 = vmatpush.msra.mxu0 0.0
        %607 = vmatpush.msra.mxu0 0.0
        %608 = vmatpush.msra.mxu0 0.0
        %609 = vmatpush.msra.mxu0 0.0
        %610 = vmatpush.msra.mxu0 0.0
        %611 = vmatpush.msra.mxu0 %v594
        %612 = vmatmul.f32.gmra.mxu0 %v592
        %v613 = vpop.f32.mrf.mxu0
        %v614 = vadd.f32 0.0, %v613
        %615 = vdwg.mxu0
        %v616 = vadd.f32 %v588, %v614
        %618 = vset.pattern.permute.xlu0 0
        %619 = vperm.xlu0 %618, %v343
        %v620 = vpop.permute.xlu0 %619
        %v622 = vadd.f32 %v616, %v620
        %624 = vrot.lane.b32.xlu0 %v622, 1
        %v625 = vpop.permute.xlu0 %624
        %s627 = smul.u32 %s528, 8
        %s628 = scalar_lea.vmem [#allocation2], %s627
        %vm629 = vcmask 39944
        %630 = vst.msk [vmem:[%s628] sm:$0xff] %vm629, %v625
      $region53: #{_lambda_.7} parent=47 // loop_footer
        %s351 = sadd.s32 1, %s347
      $region54: #{_lambda_.7} parent=47 // loop_footer_branch
        %346 = sbr.rel target = $region50
      $region55: #{_lambda_.7} parent=47 // loop_exit
        _
      loop: start=0, step=1, limit=4
      $region56: #{_lambda_.7} parent=47 // loop_pre_header
        _
      $region57: #{_lambda_.7} parent=47 // loop_header
        %s632 = sphi 0, %s636
        %p633 = scmp.ge.s32.totalorder %s632, 4
      $region58: #{_lambda_.7} parent=47 // loop_header_branch
        %635 = sbr.rel (%p633) target = $region62
      $region59: #{_lambda_.7} parent=47 // loop_body
        %s637 = smul.u32 %s632, 8
        %s638 = scalar_lea.vmem [#allocation2], %s637
        %v639 = vld [vmem:[%s638] sm:$0xff]
        %641 = vrot.lane.b32.xlu0 %v639, 127
        %v642 = vpop.permute.xlu0 %641
        %vm644 = vcmask 64512
        %v646 = vsel %vm644, %v311, 0
        %648 = vmatpush.msra.mxu0 0.0
        %649 = vmatpush.msra.mxu0 0.0
        %650 = vmatpush.msra.mxu0 0.0
        %651 = vmatpush.msra.mxu0 0.0
        %652 = vmatpush.msra.mxu0 0.0
        %653 = vmatpush.msra.mxu0 0.0
        %654 = vmatpush.msra.mxu0 0.0
        %655 = vmatpush.msra.mxu0 0.0
        %656 = vmatpush.msra.mxu0 0.0
        %657 = vmatpush.msra.mxu0 0.0
        %658 = vmatpush.msra.mxu0 0.0
        %659 = vmatpush.msra.mxu0 0.0
        %660 = vmatpush.msra.mxu0 0.0
        %661 = vmatpush.msra.mxu0 0.0
        %662 = vmatpush.msra.mxu0 0.0
        %663 = vmatpush.msra.mxu0 %v642
        %664 = vmatmul.f32.gmra.mxu0 %v646
        %v665 = vpop.f32.mrf.mxu0
        %v666 = vadd.f32 0.0, %v665
        %667 = vdwg.mxu0
        %v669 = vsel %vm644, %v309, 0
        %671 = vmatpush.msra.mxu0 0.0
        %672 = vmatpush.msra.mxu0 0.0
        %673 = vmatpush.msra.mxu0 0.0
        %674 = vmatpush.msra.mxu0 0.0
        %675 = vmatpush.msra.mxu0 0.0
        %676 = vmatpush.msra.mxu0 0.0
        %677 = vmatpush.msra.mxu0 0.0
        %678 = vmatpush.msra.mxu0 0.0
        %679 = vmatpush.msra.mxu0 0.0
        %680 = vmatpush.msra.mxu0 0.0
        %681 = vmatpush.msra.mxu0 0.0
        %682 = vmatpush.msra.mxu0 0.0
        %683 = vmatpush.msra.mxu0 0.0
        %684 = vmatpush.msra.mxu0 0.0
        %685 = vmatpush.msra.mxu0 0.0
        %686 = vmatpush.msra.mxu0 %v639
        %687 = vmatmul.f32.gmra.mxu0 %v669
        %v688 = vpop.f32.mrf.mxu0
        %v689 = vadd.f32 %v666, %v688
        %690 = vdwg.mxu0
        %691 = vrot.lane.b32.xlu0 %v639, 126
        %v692 = vpop.permute.xlu0 %691
        %v695 = vsel %vm644, %v313, 0
        %697 = vmatpush.msra.mxu0 0.0
        %698 = vmatpush.msra.mxu0 0.0
        %699 = vmatpush.msra.mxu0 0.0
        %700 = vmatpush.msra.mxu0 0.0
        %701 = vmatpush.msra.mxu0 0.0
        %702 = vmatpush.msra.mxu0 0.0
        %703 = vmatpush.msra.mxu0 0.0
        %704 = vmatpush.msra.mxu0 0.0
        %705 = vmatpush.msra.mxu0 0.0
        %706 = vmatpush.msra.mxu0 0.0
        %707 = vmatpush.msra.mxu0 0.0
        %708 = vmatpush.msra.mxu0 0.0
        %709 = vmatpush.msra.mxu0 0.0
        %710 = vmatpush.msra.mxu0 0.0
        %711 = vmatpush.msra.mxu0 0.0
        %712 = vmatpush.msra.mxu0 %v692
        %713 = vmatmul.f32.gmra.mxu0 %v695
        %v714 = vpop.f32.mrf.mxu0
        %v715 = vadd.f32 0.0, %v714
        %716 = vdwg.mxu0
        %v717 = vadd.f32 %v689, %v715
        %s718 = sadd.s32 %s632, 1
        %s719 = smul.u32 %s718, 8
        %s720 = scalar_lea.vmem [#allocation2], %s719
        %v721 = vld [vmem:[%s720] sm:$0xff]
        %v723 = vsel %vm644, %v315, 0
        %725 = vmatpush.msra.mxu0 0.0
        %726 = vmatpush.msra.mxu0 0.0
        %727 = vmatpush.msra.mxu0 0.0
        %728 = vmatpush.msra.mxu0 0.0
        %729 = vmatpush.msra.mxu0 0.0
        %730 = vmatpush.msra.mxu0 0.0
        %731 = vmatpush.msra.mxu0 0.0
        %732 = vmatpush.msra.mxu0 0.0
        %733 = vmatpush.msra.mxu0 0.0
        %734 = vmatpush.msra.mxu0 0.0
        %735 = vmatpush.msra.mxu0 0.0
        %736 = vmatpush.msra.mxu0 0.0
        %737 = vmatpush.msra.mxu0 0.0
        %738 = vmatpush.msra.mxu0 0.0
        %739 = vmatpush.msra.mxu0 0.0
        %740 = vmatpush.msra.mxu0 %v721
        %741 = vmatmul.f32.gmra.mxu0 %v723
        %v742 = vpop.f32.mrf.mxu0
        %v743 = vadd.f32 0.0, %v742
        %744 = vdwg.mxu0
        %v745 = vadd.f32 %v717, %v743
        %747 = vrot.lane.b32.xlu0 %v721, 127
        %v748 = vpop.permute.xlu0 %747
        %v751 = vsel %vm644, %v317, 0
        %753 = vmatpush.msra.mxu0 0.0
        %754 = vmatpush.msra.mxu0 0.0
        %755 = vmatpush.msra.mxu0 0.0
        %756 = vmatpush.msra.mxu0 0.0
        %757 = vmatpush.msra.mxu0 0.0
        %758 = vmatpush.msra.mxu0 0.0
        %759 = vmatpush.msra.mxu0 0.0
        %760 = vmatpush.msra.mxu0 0.0
        %761 = vmatpush.msra.mxu0 0.0
        %762 = vmatpush.msra.mxu0 0.0
        %763 = vmatpush.msra.mxu0 0.0
        %764 = vmatpush.msra.mxu0 0.0
        %765 = vmatpush.msra.mxu0 0.0
        %766 = vmatpush.msra.mxu0 0.0
        %767 = vmatpush.msra.mxu0 0.0
        %768 = vmatpush.msra.mxu0 %v748
        %769 = vmatmul.f32.gmra.mxu0 %v751
        %v770 = vpop.f32.mrf.mxu0
        %v771 = vadd.f32 0.0, %v770
        %772 = vdwg.mxu0
        %v773 = vadd.f32 %v745, %v771
        %774 = vrot.lane.b32.xlu0 %v721, 126
        %v775 = vpop.permute.xlu0 %774
        %v778 = vsel %vm644, %v319, 0
        %780 = vmatpush.msra.mxu0 0.0
        %781 = vmatpush.msra.mxu0 0.0
        %782 = vmatpush.msra.mxu0 0.0
        %783 = vmatpush.msra.mxu0 0.0
        %784 = vmatpush.msra.mxu0 0.0
        %785 = vmatpush.msra.mxu0 0.0
        %786 = vmatpush.msra.mxu0 0.0
        %787 = vmatpush.msra.mxu0 0.0
        %788 = vmatpush.msra.mxu0 0.0
        %789 = vmatpush.msra.mxu0 0.0
        %790 = vmatpush.msra.mxu0 0.0
        %791 = vmatpush.msra.mxu0 0.0
        %792 = vmatpush.msra.mxu0 0.0
        %793 = vmatpush.msra.mxu0 0.0
        %794 = vmatpush.msra.mxu0 0.0
        %795 = vmatpush.msra.mxu0 %v775
        %796 = vmatmul.f32.gmra.mxu0 %v778
        %v797 = vpop.f32.mrf.mxu0
        %v798 = vadd.f32 0.0, %v797
        %799 = vdwg.mxu0
        %v800 = vadd.f32 %v773, %v798
        %s801 = sadd.s32 %s632, 2
        %s802 = smul.u32 %s801, 8
        %s803 = scalar_lea.vmem [#allocation2], %s802
        %v804 = vld [vmem:[%s803] sm:$0xff]
        %v806 = vsel %vm644, %v321, 0
        %808 = vmatpush.msra.mxu0 0.0
        %809 = vmatpush.msra.mxu0 0.0
        %810 = vmatpush.msra.mxu0 0.0
        %811 = vmatpush.msra.mxu0 0.0
        %812 = vmatpush.msra.mxu0 0.0
        %813 = vmatpush.msra.mxu0 0.0
        %814 = vmatpush.msra.mxu0 0.0
        %815 = vmatpush.msra.mxu0 0.0
        %816 = vmatpush.msra.mxu0 0.0
        %817 = vmatpush.msra.mxu0 0.0
        %818 = vmatpush.msra.mxu0 0.0
        %819 = vmatpush.msra.mxu0 0.0
        %820 = vmatpush.msra.mxu0 0.0
        %821 = vmatpush.msra.mxu0 0.0
        %822 = vmatpush.msra.mxu0 0.0
        %823 = vmatpush.msra.mxu0 %v804
        %824 = vmatmul.f32.gmra.mxu0 %v806
        %v825 = vpop.f32.mrf.mxu0
        %v826 = vadd.f32 0.0, %v825
        %827 = vdwg.mxu0
        %v828 = vadd.f32 %v800, %v826
        %830 = vrot.lane.b32.xlu0 %v804, 127
        %v831 = vpop.permute.xlu0 %830
        %v834 = vsel %vm644, %v323, 0
        %836 = vmatpush.msra.mxu0 0.0
        %837 = vmatpush.msra.mxu0 0.0
        %838 = vmatpush.msra.mxu0 0.0
        %839 = vmatpush.msra.mxu0 0.0
        %840 = vmatpush.msra.mxu0 0.0
        %841 = vmatpush.msra.mxu0 0.0
        %842 = vmatpush.msra.mxu0 0.0
        %843 = vmatpush.msra.mxu0 0.0
        %844 = vmatpush.msra.mxu0 0.0
        %845 = vmatpush.msra.mxu0 0.0
        %846 = vmatpush.msra.mxu0 0.0
        %847 = vmatpush.msra.mxu0 0.0
        %848 = vmatpush.msra.mxu0 0.0
        %849 = vmatpush.msra.mxu0 0.0
        %850 = vmatpush.msra.mxu0 0.0
        %851 = vmatpush.msra.mxu0 %v831
        %852 = vmatmul.f32.gmra.mxu0 %v834
        %v853 = vpop.f32.mrf.mxu0
        %v854 = vadd.f32 0.0, %v853
        %855 = vdwg.mxu0
        %v856 = vadd.f32 %v828, %v854
        %857 = vrot.lane.b32.xlu0 %v804, 126
        %v858 = vpop.permute.xlu0 %857
        %v861 = vsel %vm644, %v325, 0
        %863 = vmatpush.msra.mxu0 0.0
        %864 = vmatpush.msra.mxu0 0.0
        %865 = vmatpush.msra.mxu0 0.0
        %866 = vmatpush.msra.mxu0 0.0
        %867 = vmatpush.msra.mxu0 0.0
        %868 = vmatpush.msra.mxu0 0.0
        %869 = vmatpush.msra.mxu0 0.0
        %870 = vmatpush.msra.mxu0 0.0
        %871 = vmatpush.msra.mxu0 0.0
        %872 = vmatpush.msra.mxu0 0.0
        %873 = vmatpush.msra.mxu0 0.0
        %874 = vmatpush.msra.mxu0 0.0
        %875 = vmatpush.msra.mxu0 0.0
        %876 = vmatpush.msra.mxu0 0.0
        %877 = vmatpush.msra.mxu0 0.0
        %878 = vmatpush.msra.mxu0 %v858
        %879 = vmatmul.f32.gmra.mxu0 %v861
        %v880 = vpop.f32.mrf.mxu0
        %v881 = vadd.f32 0.0, %v880
        %882 = vdwg.mxu0
        %v883 = vadd.f32 %v856, %v881
        %885 = vset.pattern.permute.xlu0 0
        %886 = vperm.xlu0 %885, %v344
        %v887 = vpop.permute.xlu0 %886
        %v889 = vadd.f32 %v883, %v887
        %891 = vrot.lane.b32.xlu0 %v889, 1
        %v892 = vpop.permute.xlu0 %891
        %s894 = scalar_lea.vmem [#allocation3], %s719
        %vm895 = vcmask 39944
        %896 = vst.msk [vmem:[%s894] sm:$0xff] %vm895, %v892
      $region60: #{_lambda_.7} parent=47 // loop_footer
        %s636 = sadd.s32 1, %s632
      $region61: #{_lambda_.7} parent=47 // loop_footer_branch
        %631 = sbr.rel target = $region57
      $region62: #{_lambda_.7} parent=47 // loop_exit
        _
      loop: start=0, step=1, limit=4
      $region63: #{_lambda_.7} parent=47 // loop_pre_header
        _
      $region64: #{_lambda_.7} parent=47 // loop_header
        %s898 = sphi 0, %s902
        %p899 = scmp.ge.s32.totalorder %s898, 4
      $region65: #{_lambda_.7} parent=47 // loop_header_branch
        %901 = sbr.rel (%p899) target = $region69
      $region66: #{_lambda_.7} parent=47 // loop_body
        %s903 = smul.u32 %s898, 8
        %s904 = scalar_lea.vmem [#allocation3], %s903
        %v905 = vld [vmem:[%s904] sm:$0xff]
        %907 = vrot.lane.b32.xlu0 %v905, 127
        %v908 = vpop.permute.xlu0 %907
        %vm910 = vcmask 64512
        %v912 = vsel %vm910, %v328, 0
        %914 = vmatpush.msra.mxu0 0.0
        %915 = vmatpush.msra.mxu0 0.0
        %916 = vmatpush.msra.mxu0 0.0
        %917 = vmatpush.msra.mxu0 0.0
        %918 = vmatpush.msra.mxu0 0.0
        %919 = vmatpush.msra.mxu0 0.0
        %920 = vmatpush.msra.mxu0 0.0
        %921 = vmatpush.msra.mxu0 0.0
        %922 = vmatpush.msra.mxu0 0.0
        %923 = vmatpush.msra.mxu0 0.0
        %924 = vmatpush.msra.mxu0 0.0
        %925 = vmatpush.msra.mxu0 0.0
        %926 = vmatpush.msra.mxu0 0.0
        %927 = vmatpush.msra.mxu0 0.0
        %928 = vmatpush.msra.mxu0 0.0
        %929 = vmatpush.msra.mxu0 %v908
        %930 = vmatmul.f32.gmra.mxu0 %v912
        %v931 = vpop.f32.mrf.mxu0
        %v932 = vadd.f32 0.0, %v931
        %933 = vdwg.mxu0
        %v935 = vsel %vm910, %v326, 0
        %937 = vmatpush.msra.mxu0 0.0
        %938 = vmatpush.msra.mxu0 0.0
        %939 = vmatpush.msra.mxu0 0.0
        %940 = vmatpush.msra.mxu0 0.0
        %941 = vmatpush.msra.mxu0 0.0
        %942 = vmatpush.msra.mxu0 0.0
        %943 = vmatpush.msra.mxu0 0.0
        %944 = vmatpush.msra.mxu0 0.0
        %945 = vmatpush.msra.mxu0 0.0
        %946 = vmatpush.msra.mxu0 0.0
        %947 = vmatpush.msra.mxu0 0.0
        %948 = vmatpush.msra.mxu0 0.0
        %949 = vmatpush.msra.mxu0 0.0
        %950 = vmatpush.msra.mxu0 0.0
        %951 = vmatpush.msra.mxu0 0.0
        %952 = vmatpush.msra.mxu0 %v905
        %953 = vmatmul.f32.gmra.mxu0 %v935
        %v954 = vpop.f32.mrf.mxu0
        %v955 = vadd.f32 %v932, %v954
        %956 = vdwg.mxu0
        %957 = vrot.lane.b32.xlu0 %v905, 126
        %v958 = vpop.permute.xlu0 %957
        %v961 = vsel %vm910, %v330, 0
        %963 = vmatpush.msra.mxu0 0.0
        %964 = vmatpush.msra.mxu0 0.0
        %965 = vmatpush.msra.mxu0 0.0
        %966 = vmatpush.msra.mxu0 0.0
        %967 = vmatpush.msra.mxu0 0.0
        %968 = vmatpush.msra.mxu0 0.0
        %969 = vmatpush.msra.mxu0 0.0
        %970 = vmatpush.msra.mxu0 0.0
        %971 = vmatpush.msra.mxu0 0.0
        %972 = vmatpush.msra.mxu0 0.0
        %973 = vmatpush.msra.mxu0 0.0
        %974 = vmatpush.msra.mxu0 0.0
        %975 = vmatpush.msra.mxu0 0.0
        %976 = vmatpush.msra.mxu0 0.0
        %977 = vmatpush.msra.mxu0 0.0
        %978 = vmatpush.msra.mxu0 %v958
        %979 = vmatmul.f32.gmra.mxu0 %v961
        %v980 = vpop.f32.mrf.mxu0
        %v981 = vadd.f32 0.0, %v980
        %982 = vdwg.mxu0
        %v983 = vadd.f32 %v955, %v981
        %s984 = sadd.s32 %s898, 1
        %s985 = smul.u32 %s984, 8
        %s986 = scalar_lea.vmem [#allocation3], %s985
        %v987 = vld [vmem:[%s986] sm:$0xff]
        %v989 = vsel %vm910, %v332, 0
        %991 = vmatpush.msra.mxu0 0.0
        %992 = vmatpush.msra.mxu0 0.0
        %993 = vmatpush.msra.mxu0 0.0
        %994 = vmatpush.msra.mxu0 0.0
        %995 = vmatpush.msra.mxu0 0.0
        %996 = vmatpush.msra.mxu0 0.0
        %997 = vmatpush.msra.mxu0 0.0
        %998 = vmatpush.msra.mxu0 0.0
        %999 = vmatpush.msra.mxu0 0.0
        %1000 = vmatpush.msra.mxu0 0.0
        %1001 = vmatpush.msra.mxu0 0.0
        %1002 = vmatpush.msra.mxu0 0.0
        %1003 = vmatpush.msra.mxu0 0.0
        %1004 = vmatpush.msra.mxu0 0.0
        %1005 = vmatpush.msra.mxu0 0.0
        %1006 = vmatpush.msra.mxu0 %v987
        %1007 = vmatmul.f32.gmra.mxu0 %v989
        %v1008 = vpop.f32.mrf.mxu0
        %v1009 = vadd.f32 0.0, %v1008
        %1010 = vdwg.mxu0
        %v1011 = vadd.f32 %v983, %v1009
        %1013 = vrot.lane.b32.xlu0 %v987, 127
        %v1014 = vpop.permute.xlu0 %1013
        %v1017 = vsel %vm910, %v334, 0
        %1019 = vmatpush.msra.mxu0 0.0
        %1020 = vmatpush.msra.mxu0 0.0
        %1021 = vmatpush.msra.mxu0 0.0
        %1022 = vmatpush.msra.mxu0 0.0
        %1023 = vmatpush.msra.mxu0 0.0
        %1024 = vmatpush.msra.mxu0 0.0
        %1025 = vmatpush.msra.mxu0 0.0
        %1026 = vmatpush.msra.mxu0 0.0
        %1027 = vmatpush.msra.mxu0 0.0
        %1028 = vmatpush.msra.mxu0 0.0
        %1029 = vmatpush.msra.mxu0 0.0
        %1030 = vmatpush.msra.mxu0 0.0
        %1031 = vmatpush.msra.mxu0 0.0
        %1032 = vmatpush.msra.mxu0 0.0
        %1033 = vmatpush.msra.mxu0 0.0
        %1034 = vmatpush.msra.mxu0 %v1014
        %1035 = vmatmul.f32.gmra.mxu0 %v1017
        %v1036 = vpop.f32.mrf.mxu0
        %v1037 = vadd.f32 0.0, %v1036
        %1038 = vdwg.mxu0
        %v1039 = vadd.f32 %v1011, %v1037
        %1040 = vrot.lane.b32.xlu0 %v987, 126
        %v1041 = vpop.permute.xlu0 %1040
        %v1044 = vsel %vm910, %v336, 0
        %1046 = vmatpush.msra.mxu0 0.0
        %1047 = vmatpush.msra.mxu0 0.0
        %1048 = vmatpush.msra.mxu0 0.0
        %1049 = vmatpush.msra.mxu0 0.0
        %1050 = vmatpush.msra.mxu0 0.0
        %1051 = vmatpush.msra.mxu0 0.0
        %1052 = vmatpush.msra.mxu0 0.0
        %1053 = vmatpush.msra.mxu0 0.0
        %1054 = vmatpush.msra.mxu0 0.0
        %1055 = vmatpush.msra.mxu0 0.0
        %1056 = vmatpush.msra.mxu0 0.0
        %1057 = vmatpush.msra.mxu0 0.0
        %1058 = vmatpush.msra.mxu0 0.0
        %1059 = vmatpush.msra.mxu0 0.0
        %1060 = vmatpush.msra.mxu0 0.0
        %1061 = vmatpush.msra.mxu0 %v1041
        %1062 = vmatmul.f32.gmra.mxu0 %v1044
        %v1063 = vpop.f32.mrf.mxu0
        %v1064 = vadd.f32 0.0, %v1063
        %1065 = vdwg.mxu0
        %v1066 = vadd.f32 %v1039, %v1064
        %s1067 = sadd.s32 %s898, 2
        %s1068 = smul.u32 %s1067, 8
        %s1069 = scalar_lea.vmem [#allocation3], %s1068
        %v1070 = vld [vmem:[%s1069] sm:$0xff]
        %v1072 = vsel %vm910, %v338, 0
        %1074 = vmatpush.msra.mxu0 0.0
        %1075 = vmatpush.msra.mxu0 0.0
        %1076 = vmatpush.msra.mxu0 0.0
        %1077 = vmatpush.msra.mxu0 0.0
        %1078 = vmatpush.msra.mxu0 0.0
        %1079 = vmatpush.msra.mxu0 0.0
        %1080 = vmatpush.msra.mxu0 0.0
        %1081 = vmatpush.msra.mxu0 0.0
        %1082 = vmatpush.msra.mxu0 0.0
        %1083 = vmatpush.msra.mxu0 0.0
        %1084 = vmatpush.msra.mxu0 0.0
        %1085 = vmatpush.msra.mxu0 0.0
        %1086 = vmatpush.msra.mxu0 0.0
        %1087 = vmatpush.msra.mxu0 0.0
        %1088 = vmatpush.msra.mxu0 0.0
        %1089 = vmatpush.msra.mxu0 %v1070
        %1090 = vmatmul.f32.gmra.mxu0 %v1072
        %v1091 = vpop.f32.mrf.mxu0
        %v1092 = vadd.f32 0.0, %v1091
        %1093 = vdwg.mxu0
        %v1094 = vadd.f32 %v1066, %v1092
        %1096 = vrot.lane.b32.xlu0 %v1070, 127
        %v1097 = vpop.permute.xlu0 %1096
        %v1100 = vsel %vm910, %v340, 0
        %1102 = vmatpush.msra.mxu0 0.0
        %1103 = vmatpush.msra.mxu0 0.0
        %1104 = vmatpush.msra.mxu0 0.0
        %1105 = vmatpush.msra.mxu0 0.0
        %1106 = vmatpush.msra.mxu0 0.0
        %1107 = vmatpush.msra.mxu0 0.0
        %1108 = vmatpush.msra.mxu0 0.0
        %1109 = vmatpush.msra.mxu0 0.0
        %1110 = vmatpush.msra.mxu0 0.0
        %1111 = vmatpush.msra.mxu0 0.0
        %1112 = vmatpush.msra.mxu0 0.0
        %1113 = vmatpush.msra.mxu0 0.0
        %1114 = vmatpush.msra.mxu0 0.0
        %1115 = vmatpush.msra.mxu0 0.0
        %1116 = vmatpush.msra.mxu0 0.0
        %1117 = vmatpush.msra.mxu0 %v1097
        %1118 = vmatmul.f32.gmra.mxu0 %v1100
        %v1119 = vpop.f32.mrf.mxu0
        %v1120 = vadd.f32 0.0, %v1119
        %1121 = vdwg.mxu0
        %v1122 = vadd.f32 %v1094, %v1120
        %1123 = vrot.lane.b32.xlu0 %v1070, 126
        %v1124 = vpop.permute.xlu0 %1123
        %v1127 = vsel %vm910, %v342, 0
        %1129 = vmatpush.msra.mxu0 0.0
        %1130 = vmatpush.msra.mxu0 0.0
        %1131 = vmatpush.msra.mxu0 0.0
        %1132 = vmatpush.msra.mxu0 0.0
        %1133 = vmatpush.msra.mxu0 0.0
        %1134 = vmatpush.msra.mxu0 0.0
        %1135 = vmatpush.msra.mxu0 0.0
        %1136 = vmatpush.msra.mxu0 0.0
        %1137 = vmatpush.msra.mxu0 0.0
        %1138 = vmatpush.msra.mxu0 0.0
        %1139 = vmatpush.msra.mxu0 0.0
        %1140 = vmatpush.msra.mxu0 0.0
        %1141 = vmatpush.msra.mxu0 0.0
        %1142 = vmatpush.msra.mxu0 0.0
        %1143 = vmatpush.msra.mxu0 0.0
        %1144 = vmatpush.msra.mxu0 %v1124
        %1145 = vmatmul.f32.gmra.mxu0 %v1127
        %v1146 = vpop.f32.mrf.mxu0
        %v1147 = vadd.f32 0.0, %v1146
        %1148 = vdwg.mxu0
        %v1149 = vadd.f32 %v1122, %v1147
        %1151 = vset.pattern.permute.xlu0 0
        %1152 = vperm.xlu0 %1151, %v345
        %v1153 = vpop.permute.xlu0 %1152
        %v1155 = vadd.f32 %v1149, %v1153
        %s1156 = scalar_lea.vmem %s278, %s903
        %vm1157 = vcmask 31744
        %1158 = vst.msk [vmem:[%s1156] sm:$0xff] %vm1157, %v1155
      $region67: #{_lambda_.7} parent=47 // loop_footer
        %s902 = sadd.s32 1, %s898
      $region68: #{_lambda_.7} parent=47 // loop_footer_branch
        %897 = sbr.rel target = $region64
      $region69: #{_lambda_.7} parent=47 // loop_exit
        _
      %p1159 = scmp.lt.s32.totalorder %s18, 3
      %s1160 = scalar_select %p1159, %s18, 3
      %s1161 = smul.addr %s1160, 4
      %s1162 = smul.addr %s1161, 8
      %s1163 = scalar_lea.vmem %s7, %s1162
      // Predicated region
      $region70: #{_lambda_.7} parent=47 // pred_check
        %p1164 = pneg %p188
      $region71: #{_lambda_.7} parent=47 // pred_check_branch
        %1166 = sbr.rel (%p1164) target = $region73
      $region72: #{_lambda_.7} parent=47 // pred_region
        _
      $region73: #{_lambda_.7} parent=47 // pred_fallthru
        _
    $region48: #{_lambda_.7} parent=5 // pred_fallthru
      _
    %p1167 = scmp.le.s32.totalorder 2, %s13
    // Predicated region
    $region74: #{_lambda_.7} parent=5 // pred_check
      %p1168 = pneg %p1167
    $region75: #{_lambda_.7} parent=5 // pred_check_branch
      %1170 = sbr.rel (%p1168) target = $region77
    $region76: #{_lambda_.7} parent=5 // pred_region
      %s1171 = ssub.s32 %s13, 2
      // Predicated region
      $region78: #{_lambda_.7} parent=76 // pred_check
        %p1172 = pneg %p194
      $region79: #{_lambda_.7} parent=76 // pred_check_branch
        %1174 = sbr.rel (%p1172) target = $region81
      $region80: #{_lambda_.7} parent=76 // pred_region
        %p1175 = scmp.lt.s32.totalorder %s19, 3
        %s1176 = scalar_select %p1175, %s19, 3
        %s1177 = smul.addr %s1176, 4
        %s1178 = smul.addr %s1177, 8
        %s1179 = scalar_lea.vmem %s7, %s1178
      $region81: #{_lambda_.7} parent=76 // pred_fallthru
        _
    $region77: #{_lambda_.7} parent=5 // pred_fallthru
      _
  $region6: #{_lambda_.7} parent=0 // loop_footer
    %s17 = sadd.s32 1, %s13
  $region7: #{_lambda_.7} parent=0 // loop_footer_branch
    %12 = sbr.rel target = $region3
  $region8: #{_lambda_.7} parent=0 // loop_exit
    _

// kernel: _lambda_.8
$region0: #{_lambda_.8}
  #allocation0 [shape = 'u32[]', space=smem, size = 0x4, offset = 0x4, fixed_abs, tag = 'smem constant byte address 0x4 - core index']
  #allocation1 [shape = 'u32[72,128]{1,0:T(1,128)}', space=vmem, size = 0x9000, scoped, tag = 'internal scratch']
  #allocation2 [shape = 'f32[4,8,4]{2,1,0:T(8,128)}', space=vmem, size = 0x4000, scoped, tag = 'scratch operand']
  #allocation3 [shape = 'f32[4,8,4]{2,1,0:T(8,128)}', space=vmem, size = 0x4000, scoped, tag = 'scratch operand']
  %s0 = inlined_call_operand.vmem [shape: f32[4,3,4,8,3], index: 0, kind: input, shape index: {}]
  %s1 = inlined_call_operand.vmem [shape: f32[3,3,8,8], index: 1, kind: input, shape index: {}]
  %s2 = inlined_call_operand.vmem [shape: f32[8,1], index: 2, kind: input, shape index: {}, may-alias: {2,4,6}]
  %s3 = inlined_call_operand.vmem [shape: f32[3,3,8,8], index: 3, kind: input, shape index: {}]
  %s4 = inlined_call_operand.vmem [shape: f32[8,1], index: 4, kind: input, shape index: {}, may-alias: {2,4,6}]
  %s5 = inlined_call_operand.vmem [shape: f32[3,3,8,8], index: 5, kind: input, shape index: {}]
  %s6 = inlined_call_operand.vmem [shape: f32[8,1], index: 6, kind: input, shape index: {}, may-alias: {2,4,6}]
  %s7 = inlined_call_operand.vmem [shape: f32[4,2,8,2], index: 7, kind: output, shape index: {}]
  %s8 = sld [smem:[#allocation0]]
  $region82: #{_lambda_.8} parent=0
    _
  %s10 = ssub.s32 1, %s8
  %s11 = scalar_select 0, %s10, %s8
  loop: start=0, step=1, limit=6
  $region2: #{_lambda_.8} parent=0 // loop_pre_header
    _
  $region3: #{_lambda_.8} parent=0 // loop_header
    %s13 = sphi 0, %s17
    %p14 = scmp.ge.s32.totalorder %s13, 6
    %s23 = sphi 0, %s25
    %s26 = sphi 0, %s23
    %s27 = sphi 0, %s26
    %s43 = sphi 0, %s27
    %s47 = sphi 0, %s47
    %s49 = sphi 0, %s47
    %s50 = sphi 0, %s49
    %s64 = sphi 0, %s50
    %s68 = sphi 0, %s68
    %s70 = sphi 0, %s68
    %s71 = sphi 0, %s70
    %s85 = sphi 0, %s71
    %s89 = sphi 0, %s89
    %s91 = sphi 0, %s89
    %s92 = sphi 0, %s91
    %s106 = sphi 0, %s92
    %s110 = sphi 0, %s110
    %s112 = sphi 0, %s110
    %s113 = sphi 0, %s112
    %s127 = sphi 0, %s113
    %s131 = sphi 0, %s131
    %s133 = sphi 0, %s131
    %s134 = sphi 0, %s133
    %s148 = sphi 0, %s134
    %s152 = sphi 0, %s152
    %s154 = sphi 0, %s152
    %s155 = sphi 0, %s154
    %s169 = sphi 0, %s155
    %s175 = sphi 0, %s177
    %s178 = sphi 0, %s175
    %s179 = sphi 0, %s178
    %s195 = sphi 0, %s179
  $region4: #{_lambda_.8} parent=0 // loop_header_branch
    %16 = sbr.rel (%p14) target = $region8
  $region5: #{_lambda_.8} parent=0 // loop_body
    %s18 = ssub.s32 %s13, 1
    %s19 = ssub.s32 %s13, 2
    %s20 = sadd.s32 %s13, 1
    %s21 = ssub.s32 %s13, %s20
    %p22 = scmp.eq.s32.totalorder %s21, 0
    %s24 = sadd.s32 %s23, 1
    %s25 = scalar_select %p22, %s23, %s24
    %p28 = pneg %p22
    %p29 = scmp.eq.s32.totalorder %s13, 3
    %p30 = por %p28, %p29
    %p31 = scmp.ne.s32.totalorder %s23, %s26
    %p32 = scmp.eq.s32.totalorder %s13, 0
    %p33 = por %p31, %p32
    %p34 = scmp.ne.s32.totalorder %s23, %s26
    %p35 = scmp.eq.s32.totalorder %s18, 3
    %p36 = por %p34, %p35
    %p37 = scmp.ne.s32.totalorder %s26, %s27
    %p38 = scmp.eq.s32.totalorder %s18, 0
    %p39 = por %p37, %p38
    %p40 = scmp.ne.s32.totalorder %s26, %s27
    %p41 = scmp.eq.s32.totalorder %s19, 3
    %p42 = por %p40, %p41
    %p44 = scmp.ne.s32.totalorder %s27, %s43
    %p45 = scmp.eq.s32.totalorder %s19, 0
    %p46 = por %p44, %p45
    %s48 = sadd.s32 %s47, 1
    %p51 = scmp.eq.s32.totalorder %s13, 3
    %p52 = scmp.ne.s32.totalorder %s47, %s49
    %p53 = scmp.eq.s32.totalorder %s13, 0
    %p54 = por %p52, %p53
    %p55 = scmp.ne.s32.totalorder %s47, %s49
    %p56 = scmp.eq.s32.totalorder %s18, 3
    %p57 = por %p55, %p56
    %p58 = scmp.ne.s32.totalorder %s49, %s50
    %p59 = scmp.eq.s32.totalorder %s18, 0
    %p60 = por %p58, %p59
    %p61 = scmp.ne.s32.totalorder %s49, %s50
    %p62 = scmp.eq.s32.totalorder %s19, 3
    %p63 = por %p61, %p62
    %p65 = scmp.ne.s32.totalorder %s50, %s64
    %p66 = scmp.eq.s32.totalorder %s19, 0
    %p67 = por %p65, %p66
    %s69 = sadd.s32 %s68, 1
    %p72 = scmp.eq.s32.totalorder %s13, 3
    %p73 = scmp.ne.s32.totalorder %s68, %s70
    %p74 = scmp.eq.s32.totalorder %s13, 0
    %p75 = por %p73, %p74
    %p76 = scmp.ne.s32.totalorder %s68, %s70
    %p77 = scmp.eq.s32.totalorder %s18, 3
    %p78 = por %p76, %p77
    %p79 = scmp.ne.s32.totalorder %s70, %s71
    %p80 = scmp.eq.s32.totalorder %s18, 0
    %p81 = por %p79, %p80
    %p82 = scmp.ne.s32.totalorder %s70, %s71
    %p83 = scmp.eq.s32.totalorder %s19, 3
    %p84 = por %p82, %p83
    %p86 = scmp.ne.s32.totalorder %s71, %s85
    %p87 = scmp.eq.s32.totalorder %s19, 0
    %p88 = por %p86, %p87
    %s90 = sadd.s32 %s89, 1
    %p93 = scmp.eq.s32.totalorder %s13, 3
    %p94 = scmp.ne.s32.totalorder %s89, %s91
    %p95 = scmp.eq.s32.totalorder %s13, 0
    %p96 = por %p94, %p95
    %p97 = scmp.ne.s32.totalorder %s89, %s91
    %p98 = scmp.eq.s32.totalorder %s18, 3
    %p99 = por %p97, %p98
    %p100 = scmp.ne.s32.totalorder %s91, %s92
    %p101 = scmp.eq.s32.totalorder %s18, 0
    %p102 = por %p100, %p101
    %p103 = scmp.ne.s32.totalorder %s91, %s92
    %p104 = scmp.eq.s32.totalorder %s19, 3
    %p105 = por %p103, %p104
    %p107 = scmp.ne.s32.totalorder %s92, %s106
    %p108 = scmp.eq.s32.totalorder %s19, 0
    %p109 = por %p107, %p108
    %s111 = sadd.s32 %s110, 1
    %p114 = scmp.eq.s32.totalorder %s13, 3
    %p115 = scmp.ne.s32.totalorder %s110, %s112
    %p116 = scmp.eq.s32.totalorder %s13, 0
    %p117 = por %p115, %p116
    %p118 = scmp.ne.s32.totalorder %s110, %s112
    %p119 = scmp.eq.s32.totalorder %s18, 3
    %p120 = por %p118, %p119
    %p121 = scmp.ne.s32.totalorder %s112, %s113
    %p122 = scmp.eq.s32.totalorder %s18, 0
    %p123 = por %p121, %p122
    %p124 = scmp.ne.s32.totalorder %s112, %s113
    %p125 = scmp.eq.s32.totalorder %s19, 3
    %p126 = por %p124, %p125
    %p128 = scmp.ne.s32.totalorder %s113, %s127
    %p129 = scmp.eq.s32.totalorder %s19, 0
    %p130 = por %p128, %p129
    %s132 = sadd.s32 %s131, 1
    %p135 = scmp.eq.s32.totalorder %s13, 3
    %p136 = scmp.ne.s32.totalorder %s131, %s133
    %p137 = scmp.eq.s32.totalorder %s13, 0
    %p138 = por %p136, %p137
    %p139 = scmp.ne.s32.totalorder %s131, %s133
    %p140 = scmp.eq.s32.totalorder %s18, 3
    %p141 = por %p139, %p140
    %p142 = scmp.ne.s32.totalorder %s133, %s134
    %p143 = scmp.eq.s32.totalorder %s18, 0
    %p144 = por %p142, %p143
    %p145 = scmp.ne.s32.totalorder %s133, %s134
    %p146 = scmp.eq.s32.totalorder %s19, 3
    %p147 = por %p145, %p146
    %p149 = scmp.ne.s32.totalorder %s134, %s148
    %p150 = scmp.eq.s32.totalorder %s19, 0
    %p151 = por %p149, %p150
    %s153 = sadd.s32 %s152, 1
    %p156 = scmp.eq.s32.totalorder %s13, 3
    %p157 = scmp.ne.s32.totalorder %s152, %s154
    %p158 = scmp.eq.s32.totalorder %s13, 0
    %p159 = por %p157, %p158
    %p160 = scmp.ne.s32.totalorder %s152, %s154
    %p161 = scmp.eq.s32.totalorder %s18, 3
    %p162 = por %p160, %p161
    %p163 = scmp.ne.s32.totalorder %s154, %s155
    %p164 = scmp.eq.s32.totalorder %s18, 0
    %p165 = por %p163, %p164
    %p166 = scmp.ne.s32.totalorder %s154, %s155
    %p167 = scmp.eq.s32.totalorder %s19, 3
    %p168 = por %p166, %p167
    %p170 = scmp.ne.s32.totalorder %s155, %s169
    %p171 = scmp.eq.s32.totalorder %s19, 0
    %p172 = por %p170, %p171
    %s173 = ssub.s32 %s13, %s20
    %p174 = scmp.eq.s32.totalorder %s173, 0
    %s176 = sadd.s32 %s175, 1
    %s177 = scalar_select %p174, %s175, %s176
    %p180 = pneg %p174
    %p181 = scmp.eq.s32.totalorder %s13, 3
    %p182 = por %p180, %p181
    %p183 = scmp.ne.s32.totalorder %s175, %s178
    %p184 = scmp.eq.s32.totalorder %s13, 0
    %p185 = por %p183, %p184
    %p186 = scmp.ne.s32.totalorder %s175, %s178
    %p187 = scmp.eq.s32.totalorder %s18, 3
    %p188 = por %p186, %p187
    %p189 = scmp.ne.s32.totalorder %s178, %s179
    %p190 = scmp.eq.s32.totalorder %s18, 0
    %p191 = por %p189, %p190
    %p192 = scmp.ne.s32.totalorder %s178, %s179
    %p193 = scmp.eq.s32.totalorder %s19, 3
    %p194 = por %p192, %p193
    %p196 = scmp.ne.s32.totalorder %s179, %s195
    %p197 = scmp.eq.s32.totalorder %s19, 0
    %p198 = por %p196, %p197
    %p199 = scmp.le.s32.totalorder 1, %s13
    %p200 = scmp.lt.s32.totalorder %s13, 5
    %p201 = pnand %p199, %p200
    %p202 = pneg %p201
    // Predicated region
    $region9: #{_lambda_.8} parent=5 // pred_check
      _
    $region10: #{_lambda_.8} parent=5 // pred_check_branch
      %204 = sbr.rel (%p201) target = $region12
    $region11: #{_lambda_.8} parent=5 // pred_region
      %s205 = ssub.s32 %s13, 1
      // Predicated region
      $region13: #{_lambda_.8} parent=11 // pred_check
        %p206 = pneg %p60
      $region14: #{_lambda_.8} parent=11 // pred_check_branch
        %208 = sbr.rel (%p206) target = $region16
      $region15: #{_lambda_.8} parent=11 // pred_region
        _
      $region16: #{_lambda_.8} parent=11 // pred_fallthru
        _
      // Predicated region
      $region17: #{_lambda_.8} parent=11 // pred_check
        %p209 = pneg %p81
      $region18: #{_lambda_.8} parent=11 // pred_check_branch
        %211 = sbr.rel (%p209) target = $region20
      $region19: #{_lambda_.8} parent=11 // pred_region
        _
      $region20: #{_lambda_.8} parent=11 // pred_fallthru
        _
      // Predicated region
      $region21: #{_lambda_.8} parent=11 // pred_check
        %p212 = pneg %p102
      $region22: #{_lambda_.8} parent=11 // pred_check_branch
        %214 = sbr.rel (%p212) target = $region24
      $region23: #{_lambda_.8} parent=11 // pred_region
        _
      $region24: #{_lambda_.8} parent=11 // pred_fallthru
        _
      // Predicated region
      $region25: #{_lambda_.8} parent=11 // pred_check
        %p215 = pneg %p123
      $region26: #{_lambda_.8} parent=11 // pred_check_branch
        %217 = sbr.rel (%p215) target = $region28
      $region27: #{_lambda_.8} parent=11 // pred_region
        _
      $region28: #{_lambda_.8} parent=11 // pred_fallthru
        _
      // Predicated region
      $region29: #{_lambda_.8} parent=11 // pred_check
        %p218 = pneg %p144
      $region30: #{_lambda_.8} parent=11 // pred_check_branch
        %220 = sbr.rel (%p218) target = $region32
      $region31: #{_lambda_.8} parent=11 // pred_region
        _
      $region32: #{_lambda_.8} parent=11 // pred_fallthru
        _
      // Predicated region
      $region33: #{_lambda_.8} parent=11 // pred_check
        %p221 = pneg %p165
      $region34: #{_lambda_.8} parent=11 // pred_check_branch
        %223 = sbr.rel (%p221) target = $region36
      $region35: #{_lambda_.8} parent=11 // pred_region
        _
      $region36: #{_lambda_.8} parent=11 // pred_fallthru
        _
    $region12: #{_lambda_.8} parent=5 // pred_fallthru
      _
    %p224 = scmp.lt.s32.totalorder %s13, 4
    // Predicated region
    $region37: #{_lambda_.8} parent=5 // pred_check
      %p225 = pneg %p224
    $region38: #{_lambda_.8} parent=5 // pred_check_branch
      %227 = sbr.rel (%p225) target = $region40
    $region39: #{_lambda_.8} parent=5 // pred_region
      // Predicated region
      $region41: #{_lambda_.8} parent=39 // pred_check
        %p228 = pneg %p33
      $region42: #{_lambda_.8} parent=39 // pred_check_branch
        %230 = sbr.rel (%p228) target = $region44
      $region43: #{_lambda_.8} parent=39 // pred_region
        %p231 = scmp.lt.s32.totalorder %s13, 3
        %s232 = scalar_select %p231, %s13, 3
        %s233 = smul.addr %s232, 12
        %s234 = smul.addr %s233, 8
        %s235 = scalar_lea.vmem %s0, %s234
      $region44: #{_lambda_.8} parent=39 // pred_fallthru
        _
    $region40: #{_lambda_.8} parent=5 // pred_fallthru
      _
    %p236 = scmp.le.s32.totalorder 1, %s13
    %p237 = scmp.lt.s32.totalorder %s13, 5
    %p238 = pnand %p236, %p237
    %p239 = pneg %p238
    // Predicated region
    $region45: #{_lambda_.8} parent=5 // pred_check
      _
    $region46: #{_lambda_.8} parent=5 // pred_check_branch
      %241 = sbr.rel (%p238) target = $region48
    $region47: #{_lambda_.8} parent=5 // pred_region
      %s242 = ssub.s32 %s13, 1
      %p243 = scmp.lt.s32.totalorder %s18, 3
      %s244 = scalar_select %p243, %s18, 3
      %s245 = smul.addr %s244, 12
      %s246 = smul.addr %s245, 8
      %s247 = scalar_lea.vmem %s0, %s246
      %p248 = pneg %p39
      %p249 = pneg %p36
      %p250 = pneg %p60
      %p251 = pneg %p57
      %p252 = pneg %p81
      %p253 = pneg %p78
      %p254 = pneg %p102
      %p255 = pneg %p99
      %p256 = pneg %p123
      %p257 = pneg %p120
      %p258 = pneg %p144
      %p259 = pneg %p141
      %p260 = pneg %p165
      %p261 = pneg %p162
      %p262 = pneg %p191
      %p263 = pneg %p188
      %p264 = scmp.lt.s32.totalorder %s18, 3
      %s265 = scalar_select %p264, %s18, 3
      %s266 = smul.addr %s265, 2
      %s267 = smul.addr %s266, 8
      %s268 = scalar_lea.vmem %s7, %s267
      %p269 = scmp.lt.s32.totalorder %s18, 3
      %s270 = scalar_select %p269, %s18, 3
      %s271 = smul.addr %s270, 12
      %s272 = smul.addr %s271, 8
      %s273 = scalar_lea.vmem %s0, %s272
      %p274 = scmp.lt.s32.totalorder %s18, 3
      %s275 = scalar_select %p274, %s18, 3
      %s276 = smul.addr %s275, 2
      %s277 = smul.addr %s276, 8
      %s278 = scalar_lea.vmem %s7, %s277
      %vm279 = vcmask 31744
      %280 = vst.msk [vmem:[#allocation2] sm:$0xff] %vm279, 0.0
      %281 = vst.msk [vmem:[#allocation2 + $0x8] sm:$0xff] %vm279, 0.0
      %282 = vst.msk [vmem:[#allocation2 + $0x10] sm:$0xff] %vm279, 0.0
      %283 = vst.msk [vmem:[#allocation2 + $0x18] sm:$0xff] %vm279, 0.0
      %284 = vst.msk [vmem:[#allocation3] sm:$0xff] %vm279, 0.0
      %285 = vst.msk [vmem:[#allocation3 + $0x8] sm:$0xff] %vm279, 0.0
      %286 = vst.msk [vmem:[#allocation3 + $0x10] sm:$0xff] %vm279, 0.0
      %287 = vst.msk [vmem:[#allocation3 + $0x18] sm:$0xff] %vm279, 0.0
      %v288 = vld [vmem:[%s1] sm:$0xff]
      %s289 = scalar_lea.vmem %s1, 8
      %v290 = vld [vmem:[%s289] sm:$0xff]
      %s291 = scalar_lea.vmem %s1, 16
      %v292 = vld [vmem:[%s291] sm:$0xff]
      %s293 = scalar_lea.vmem %s1, 24
      %v294 = vld [vmem:[%s293] sm:$0xff]
      %s295 = scalar_lea.vmem %s1, 32
      %v296 = vld [vmem:[%s295] sm:$0xff]
      %s297 = scalar_lea.vmem %s1, 40
      %v298 = vld [vmem:[%s297] sm:$0xff]
      %s299 = scalar_lea.vmem %s1, 48
      %v300 = vld [vmem:[%s299] sm:$0xff]
      %s301 = scalar_lea.vmem %s1, 56
      %v302 = vld [vmem:[%s301] sm:$0xff]
      %s303 = scalar_lea.vmem %s1, 64
      %v304 = vld [vmem:[%s303] sm:$0xff]
      %v305 = vld [vmem:[%s3] sm:$0xff]
      %s306 = scalar_lea.vmem %s3, 8
      %v307 = vld [vmem:[%s306] sm:$0xff]
      %s308 = scalar_lea.vmem %s3, 16
      %v309 = vld [vmem:[%s308] sm:$0xff]
      %s310 = scalar_lea.vmem %s3, 24
      %v311 = vld [vmem:[%s310] sm:$0xff]
      %s312 = scalar_lea.vmem %s3, 32
      %v313 = vld [vmem:[%s312] sm:$0xff]
      %s314 = scalar_lea.vmem %s3, 40
      %v315 = vld [vmem:[%s314] sm:$0xff]
      %s316 = scalar_lea.vmem %s3, 48
      %v317 = vld [vmem:[%s316] sm:$0xff]
      %s318 = scalar_lea.vmem %s3, 56
      %v319 = vld [vmem:[%s318] sm:$0xff]
      %s320 = scalar_lea.vmem %s3, 64
      %v321 = vld [vmem:[%s320] sm:$0xff]
      %v322 = vld [vmem:[%s5] sm:$0xff]
      %s323 = scalar_lea.vmem %s5, 8
      %v324 = vld [vmem:[%s323] sm:$0xff]
      %s325 = scalar_lea.vmem %s5, 16
      %v326 = vld [vmem:[%s325] sm:$0xff]
      %s327 = scalar_lea.vmem %s5, 24
      %v328 = vld [vmem:[%s327] sm:$0xff]
      %s329 = scalar_lea.vmem %s5, 32
      %v330 = vld [vmem:[%s329] sm:$0xff]
      %s331 = scalar_lea.vmem %s5, 40
      %v332 = vld [vmem:[%s331] sm:$0xff]
      %s333 = scalar_lea.vmem %s5, 48
      %v334 = vld [vmem:[%s333] sm:$0xff]
      %s335 = scalar_lea.vmem %s5, 56
      %v336 = vld [vmem:[%s335] sm:$0xff]
      %s337 = scalar_lea.vmem %s5, 64
      %v338 = vld [vmem:[%s337] sm:$0xff]
      %v339 = vld [vmem:[%s2] sm:$0xff]
      %v340 = vld [vmem:[%s4] sm:$0xff]
      %v341 = vld [vmem:[%s6] sm:$0xff]
      loop: start=0, step=1, limit=2
      $region49: #{_lambda_.8} parent=47 // loop_pre_header
        _
      $region50: #{_lambda_.8} parent=47 // loop_header
        %s343 = sphi 0, %s347
        %p344 = scmp.ge.s32.totalorder %s343, 2
      $region51: #{_lambda_.8} parent=47 // loop_header_branch
        %346 = sbr.rel (%p344) target = $region55
      $region52: #{_lambda_.8} parent=47 // loop_body
        %s348 = smul.u32 %s343, 32
        %s349 = scalar_lea.vmem %s273, %s348
        %v350 = vld [vmem:[%s349] sm:$0xff]
        %s351 = sadd.s32 8, %s348
        %s352 = scalar_lea.vmem %s273, %s351
        %v353 = vld [vmem:[%s352] sm:$0xff]
        %vm354 = vcmask 64512
        %v356 = vsel %vm354, %v290, 0
        %358 = vmatpush.msra.mxu0 0.0
        %359 = vmatpush.msra.mxu0 0.0
        %360 = vmatpush.msra.mxu0 0.0
        %361 = vmatpush.msra.mxu0 0.0
        %362 = vmatpush.msra.mxu0 0.0
        %363 = vmatpush.msra.mxu0 0.0
        %364 = vmatpush.msra.mxu0 0.0
        %365 = vmatpush.msra.mxu0 0.0
        %366 = vmatpush.msra.mxu0 0.0
        %367 = vmatpush.msra.mxu0 0.0
        %368 = vmatpush.msra.mxu0 0.0
        %369 = vmatpush.msra.mxu0 0.0
        %370 = vmatpush.msra.mxu0 0.0
        %371 = vmatpush.msra.mxu0 0.0
        %372 = vmatpush.msra.mxu0 0.0
        %373 = vmatpush.msra.mxu0 %v353
        %374 = vmatmul.f32.gmra.mxu0 %v356
        %v375 = vpop.f32.mrf.mxu0
        %v376 = vadd.f32 0.0, %v375
        %377 = vdwg.mxu0
        %v379 = vsel %vm354, %v288, 0
        %381 = vmatpush.msra.mxu0 0.0
        %382 = vmatpush.msra.mxu0 0.0
        %383 = vmatpush.msra.mxu0 0.0
        %384 = vmatpush.msra.mxu0 0.0
        %385 = vmatpush.msra.mxu0 0.0
        %386 = vmatpush.msra.mxu0 0.0
        %387 = vmatpush.msra.mxu0 0.0
        %388 = vmatpush.msra.mxu0 0.0
        %389 = vmatpush.msra.mxu0 0.0
        %390 = vmatpush.msra.mxu0 0.0
        %391 = vmatpush.msra.mxu0 0.0
        %392 = vmatpush.msra.mxu0 0.0
        %393 = vmatpush.msra.mxu0 0.0
        %394 = vmatpush.msra.mxu0 0.0
        %395 = vmatpush.msra.mxu0 0.0
        %396 = vmatpush.msra.mxu0 %v350
        %397 = vmatmul.f32.gmra.mxu0 %v379
        %v398 = vpop.f32.mrf.mxu0
        %v399 = vadd.f32 %v376, %v398
        %400 = vdwg.mxu0
        %402 = vrot.lane.b32.xlu0 %v350, 127
        %v403 = vpop.permute.xlu0 %402
        %v406 = vsel %vm354, %v292, 0
        %408 = vmatpush.msra.mxu0 0.0
        %409 = vmatpush.msra.mxu0 0.0
        %410 = vmatpush.msra.mxu0 0.0
        %411 = vmatpush.msra.mxu0 0.0
        %412 = vmatpush.msra.mxu0 0.0
        %413 = vmatpush.msra.mxu0 0.0
        %414 = vmatpush.msra.mxu0 0.0
        %415 = vmatpush.msra.mxu0 0.0
        %416 = vmatpush.msra.mxu0 0.0
        %417 = vmatpush.msra.mxu0 0.0
        %418 = vmatpush.msra.mxu0 0.0
        %419 = vmatpush.msra.mxu0 0.0
        %420 = vmatpush.msra.mxu0 0.0
        %421 = vmatpush.msra.mxu0 0.0
        %422 = vmatpush.msra.mxu0 0.0
        %423 = vmatpush.msra.mxu0 %v403
        %424 = vmatmul.f32.gmra.mxu0 %v406
        %v425 = vpop.f32.mrf.mxu0
        %v426 = vadd.f32 0.0, %v425
        %427 = vdwg.mxu0
        %v428 = vadd.f32 %v399, %v426
        %s429 = sadd.s32 16, %s348
        %s430 = scalar_lea.vmem %s273, %s429
        %v431 = vld [vmem:[%s430] sm:$0xff]
        %v433 = vsel %vm354, %v294, 0
        %435 = vmatpush.msra.mxu0 0.0
        %436 = vmatpush.msra.mxu0 0.0
        %437 = vmatpush.msra.mxu0 0.0
        %438 = vmatpush.msra.mxu0 0.0
        %439 = vmatpush.msra.mxu0 0.0
        %440 = vmatpush.msra.mxu0 0.0
        %441 = vmatpush.msra.mxu0 0.0
        %442 = vmatpush.msra.mxu0 0.0
        %443 = vmatpush.msra.mxu0 0.0
        %444 = vmatpush.msra.mxu0 0.0
        %445 = vmatpush.msra.mxu0 0.0
        %446 = vmatpush.msra.mxu0 0.0
        %447 = vmatpush.msra.mxu0 0.0
        %448 = vmatpush.msra.mxu0 0.0
        %449 = vmatpush.msra.mxu0 0.0
        %450 = vmatpush.msra.mxu0 %v431
        %451 = vmatmul.f32.gmra.mxu0 %v433
        %v452 = vpop.f32.mrf.mxu0
        %v453 = vadd.f32 0.0, %v452
        %454 = vdwg.mxu0
        %v455 = vadd.f32 %v428, %v453
        %s456 = sadd.s32 24, %s348
        %s457 = scalar_lea.vmem %s273, %s456
        %v458 = vld [vmem:[%s457] sm:$0xff]
        %v460 = vsel %vm354, %v296, 0
        %462 = vmatpush.msra.mxu0 0.0
        %463 = vmatpush.msra.mxu0 0.0
        %464 = vmatpush.msra.mxu0 0.0
        %465 = vmatpush.msra.mxu0 0.0
        %466 = vmatpush.msra.mxu0 0.0
        %467 = vmatpush.msra.mxu0 0.0
        %468 = vmatpush.msra.mxu0 0.0
        %469 = vmatpush.msra.mxu0 0.0
        %470 = vmatpush.msra.mxu0 0.0
        %471 = vmatpush.msra.mxu0 0.0
        %472 = vmatpush.msra.mxu0 0.0
        %473 = vmatpush.msra.mxu0 0.0
        %474 = vmatpush.msra.mxu0 0.0
        %475 = vmatpush.msra.mxu0 0.0
        %476 = vmatpush.msra.mxu0 0.0
        %477 = vmatpush.msra.mxu0 %v458
        %478 = vmatmul.f32.gmra.mxu0 %v460
        %v479 = vpop.f32.mrf.mxu0
        %v480 = vadd.f32 0.0, %v479
        %481 = vdwg.mxu0
        %v482 = vadd.f32 %v455, %v480
        %484 = vrot.lane.b32.xlu0 %v431, 127
        %v485 = vpop.permute.xlu0 %484
        %v488 = vsel %vm354, %v298, 0
        %490 = vmatpush.msra.mxu0 0.0
        %491 = vmatpush.msra.mxu0 0.0
        %492 = vmatpush.msra.mxu0 0.0
        %493 = vmatpush.msra.mxu0 0.0
        %494 = vmatpush.msra.mxu0 0.0
        %495 = vmatpush.msra.mxu0 0.0
        %496 = vmatpush.msra.mxu0 0.0
        %497 = vmatpush.msra.mxu0 0.0
        %498 = vmatpush.msra.mxu0 0.0
        %499 = vmatpush.msra.mxu0 0.0
        %500 = vmatpush.msra.mxu0 0.0
        %501 = vmatpush.msra.mxu0 0.0
        %502 = vmatpush.msra.mxu0 0.0
        %503 = vmatpush.msra.mxu0 0.0
        %504 = vmatpush.msra.mxu0 0.0
        %505 = vmatpush.msra.mxu0 %v485
        %506 = vmatmul.f32.gmra.mxu0 %v488
        %v507 = vpop.f32.mrf.mxu0
        %v508 = vadd.f32 0.0, %v507
        %509 = vdwg.mxu0
        %v510 = vadd.f32 %v482, %v508
        %s511 = sadd.s32 %s343, 1
        %s512 = smul.u32 %s511, 32
        %s513 = scalar_lea.vmem %s273, %s512
        %v514 = vld [vmem:[%s513] sm:$0xff]
        %v516 = vsel %vm354, %v300, 0
        %518 = vmatpush.msra.mxu0 0.0
        %519 = vmatpush.msra.mxu0 0.0
        %520 = vmatpush.msra.mxu0 0.0
        %521 = vmatpush.msra.mxu0 0.0
        %522 = vmatpush.msra.mxu0 0.0
        %523 = vmatpush.msra.mxu0 0.0
        %524 = vmatpush.msra.mxu0 0.0
        %525 = vmatpush.msra.mxu0 0.0
        %526 = vmatpush.msra.mxu0 0.0
        %527 = vmatpush.msra.mxu0 0.0
        %528 = vmatpush.msra.mxu0 0.0
        %529 = vmatpush.msra.mxu0 0.0
        %530 = vmatpush.msra.mxu0 0.0
        %531 = vmatpush.msra.mxu0 0.0
        %532 = vmatpush.msra.mxu0 0.0
        %533 = vmatpush.msra.mxu0 %v514
        %534 = vmatmul.f32.gmra.mxu0 %v516
        %v535 = vpop.f32.mrf.mxu0
        %v536 = vadd.f32 0.0, %v535
        %537 = vdwg.mxu0
        %v538 = vadd.f32 %v510, %v536
        %s539 = sadd.s32 8, %s512
        %s540 = scalar_lea.vmem %s273, %s539
        %v541 = vld [vmem:[%s540] sm:$0xff]
        %v543 = vsel %vm354, %v302, 0
        %545 = vmatpush.msra.mxu0 0.0
        %546 = vmatpush.msra.mxu0 0.0
        %547 = vmatpush.msra.mxu0 0.0
        %548 = vmatpush.msra.mxu0 0.0
        %549 = vmatpush.msra.mxu0 0.0
        %550 = vmatpush.msra.mxu0 0.0
        %551 = vmatpush.msra.mxu0 0.0
        %552 = vmatpush.msra.mxu0 0.0
        %553 = vmatpush.msra.mxu0 0.0
        %554 = vmatpush.msra.mxu0 0.0
        %555 = vmatpush.msra.mxu0 0.0
        %556 = vmatpush.msra.mxu0 0.0
        %557 = vmatpush.msra.mxu0 0.0
        %558 = vmatpush.msra.mxu0 0.0
        %559 = vmatpush.msra.mxu0 0.0
        %560 = vmatpush.msra.mxu0 %v541
        %561 = vmatmul.f32.gmra.mxu0 %v543
        %v562 = vpop.f32.mrf.mxu0
        %v563 = vadd.f32 0.0, %v562
        %564 = vdwg.mxu0
        %v565 = vadd.f32 %v538, %v563
        %567 = vrot.lane.b32.xlu0 %v514, 127
        %v568 = vpop.permute.xlu0 %567
        %v571 = vsel %vm354, %v304, 0
        %573 = vmatpush.msra.mxu0 0.0
        %574 = vmatpush.msra.mxu0 0.0
        %575 = vmatpush.msra.mxu0 0.0
        %576 = vmatpush.msra.mxu0 0.0
        %577 = vmatpush.msra.mxu0 0.0
        %578 = vmatpush.msra.mxu0 0.0
        %579 = vmatpush.msra.mxu0 0.0
        %580 = vmatpush.msra.mxu0 0.0
        %581 = vmatpush.msra.mxu0 0.0
        %582 = vmatpush.msra.mxu0 0.0
        %583 = vmatpush.msra.mxu0 0.0
        %584 = vmatpush.msra.mxu0 0.0
        %585 = vmatpush.msra.mxu0 0.0
        %586 = vmatpush.msra.mxu0 0.0
        %587 = vmatpush.msra.mxu0 0.0
        %588 = vmatpush.msra.mxu0 %v568
        %589 = vmatmul.f32.gmra.mxu0 %v571
        %v590 = vpop.f32.mrf.mxu0
        %v591 = vadd.f32 0.0, %v590
        %592 = vdwg.mxu0
        %v593 = vadd.f32 %v565, %v591
        %595 = vset.pattern.permute.xlu0 0
        %596 = vperm.xlu0 %595, %v339
        %v597 = vpop.permute.xlu0 %596
        %v599 = vadd.f32 %v593, %v597
        %601 = vrot.lane.b32.xlu0 %v599, 1
        %v602 = vpop.permute.xlu0 %601
        %s604 = smul.u32 %s511, 8
        %s605 = scalar_lea.vmem [#allocation2], %s604
        %vm606 = vcmask 23560
        %607 = vst.msk [vmem:[%s605] sm:$0xff] %vm606, %v602
      $region53: #{_lambda_.8} parent=47 // loop_footer
        %s347 = sadd.s32 1, %s343
      $region54: #{_lambda_.8} parent=47 // loop_footer_branch
        %342 = sbr.rel target = $region50
      $region55: #{_lambda_.8} parent=47 // loop_exit
        _
      loop: start=0, step=1, limit=2
      $region56: #{_lambda_.8} parent=47 // loop_pre_header
        _
      $region57: #{_lambda_.8} parent=47 // loop_header
        %s609 = sphi 0, %s613
        %p610 = scmp.ge.s32.totalorder %s609, 2
      $region58: #{_lambda_.8} parent=47 // loop_header_branch
        %612 = sbr.rel (%p610) target = $region62
      $region59: #{_lambda_.8} parent=47 // loop_body
        %s614 = smul.u32 %s609, 8
        %s615 = scalar_lea.vmem [#allocation2], %s614
        %v616 = vld [vmem:[%s615] sm:$0xff]
        %618 = vrot.lane.b32.xlu0 %v616, 127
        %v619 = vpop.permute.xlu0 %618
        %vm621 = vcmask 64512
        %v623 = vsel %vm621, %v307, 0
        %625 = vmatpush.msra.mxu0 0.0
        %626 = vmatpush.msra.mxu0 0.0
        %627 = vmatpush.msra.mxu0 0.0
        %628 = vmatpush.msra.mxu0 0.0
        %629 = vmatpush.msra.mxu0 0.0
        %630 = vmatpush.msra.mxu0 0.0
        %631 = vmatpush.msra.mxu0 0.0
        %632 = vmatpush.msra.mxu0 0.0
        %633 = vmatpush.msra.mxu0 0.0
        %634 = vmatpush.msra.mxu0 0.0
        %635 = vmatpush.msra.mxu0 0.0
        %636 = vmatpush.msra.mxu0 0.0
        %637 = vmatpush.msra.mxu0 0.0
        %638 = vmatpush.msra.mxu0 0.0
        %639 = vmatpush.msra.mxu0 0.0
        %640 = vmatpush.msra.mxu0 %v619
        %641 = vmatmul.f32.gmra.mxu0 %v623
        %v642 = vpop.f32.mrf.mxu0
        %v643 = vadd.f32 0.0, %v642
        %644 = vdwg.mxu0
        %v646 = vsel %vm621, %v305, 0
        %648 = vmatpush.msra.mxu0 0.0
        %649 = vmatpush.msra.mxu0 0.0
        %650 = vmatpush.msra.mxu0 0.0
        %651 = vmatpush.msra.mxu0 0.0
        %652 = vmatpush.msra.mxu0 0.0
        %653 = vmatpush.msra.mxu0 0.0
        %654 = vmatpush.msra.mxu0 0.0
        %655 = vmatpush.msra.mxu0 0.0
        %656 = vmatpush.msra.mxu0 0.0
        %657 = vmatpush.msra.mxu0 0.0
        %658 = vmatpush.msra.mxu0 0.0
        %659 = vmatpush.msra.mxu0 0.0
        %660 = vmatpush.msra.mxu0 0.0
        %661 = vmatpush.msra.mxu0 0.0
        %662 = vmatpush.msra.mxu0 0.0
        %663 = vmatpush.msra.mxu0 %v616
        %664 = vmatmul.f32.gmra.mxu0 %v646
        %v665 = vpop.f32.mrf.mxu0
        %v666 = vadd.f32 %v643, %v665
        %667 = vdwg.mxu0
        %668 = vrot.lane.b32.xlu0 %v616, 126
        %v669 = vpop.permute.xlu0 %668
        %v672 = vsel %vm621, %v309, 0
        %674 = vmatpush.msra.mxu0 0.0
        %675 = vmatpush.msra.mxu0 0.0
        %676 = vmatpush.msra.mxu0 0.0
        %677 = vmatpush.msra.mxu0 0.0
        %678 = vmatpush.msra.mxu0 0.0
        %679 = vmatpush.msra.mxu0 0.0
        %680 = vmatpush.msra.mxu0 0.0
        %681 = vmatpush.msra.mxu0 0.0
        %682 = vmatpush.msra.mxu0 0.0
        %683 = vmatpush.msra.mxu0 0.0
        %684 = vmatpush.msra.mxu0 0.0
        %685 = vmatpush.msra.mxu0 0.0
        %686 = vmatpush.msra.mxu0 0.0
        %687 = vmatpush.msra.mxu0 0.0
        %688 = vmatpush.msra.mxu0 0.0
        %689 = vmatpush.msra.mxu0 %v669
        %690 = vmatmul.f32.gmra.mxu0 %v672
        %v691 = vpop.f32.mrf.mxu0
        %v692 = vadd.f32 0.0, %v691
        %693 = vdwg.mxu0
        %v694 = vadd.f32 %v666, %v692
        %s695 = sadd.s32 %s609, 1
        %s696 = smul.u32 %s695, 8
        %s697 = scalar_lea.vmem [#allocation2], %s696
        %v698 = vld [vmem:[%s697] sm:$0xff]
        %v700 = vsel %vm621, %v311, 0
        %702 = vmatpush.msra.mxu0 0.0
        %703 = vmatpush.msra.mxu0 0.0
        %704 = vmatpush.msra.mxu0 0.0
        %705 = vmatpush.msra.mxu0 0.0
        %706 = vmatpush.msra.mxu0 0.0
        %707 = vmatpush.msra.mxu0 0.0
        %708 = vmatpush.msra.mxu0 0.0
        %709 = vmatpush.msra.mxu0 0.0
        %710 = vmatpush.msra.mxu0 0.0
        %711 = vmatpush.msra.mxu0 0.0
        %712 = vmatpush.msra.mxu0 0.0
        %713 = vmatpush.msra.mxu0 0.0
        %714 = vmatpush.msra.mxu0 0.0
        %715 = vmatpush.msra.mxu0 0.0
        %716 = vmatpush.msra.mxu0 0.0
        %717 = vmatpush.msra.mxu0 %v698
        %718 = vmatmul.f32.gmra.mxu0 %v700
        %v719 = vpop.f32.mrf.mxu0
        %v720 = vadd.f32 0.0, %v719
        %721 = vdwg.mxu0
        %v722 = vadd.f32 %v694, %v720
        %724 = vrot.lane.b32.xlu0 %v698, 127
        %v725 = vpop.permute.xlu0 %724
        %v728 = vsel %vm621, %v313, 0
        %730 = vmatpush.msra.mxu0 0.0
        %731 = vmatpush.msra.mxu0 0.0
        %732 = vmatpush.msra.mxu0 0.0
        %733 = vmatpush.msra.mxu0 0.0
        %734 = vmatpush.msra.mxu0 0.0
        %735 = vmatpush.msra.mxu0 0.0
        %736 = vmatpush.msra.mxu0 0.0
        %737 = vmatpush.msra.mxu0 0.0
        %738 = vmatpush.msra.mxu0 0.0
        %739 = vmatpush.msra.mxu0 0.0
        %740 = vmatpush.msra.mxu0 0.0
        %741 = vmatpush.msra.mxu0 0.0
        %742 = vmatpush.msra.mxu0 0.0
        %743 = vmatpush.msra.mxu0 0.0
        %744 = vmatpush.msra.mxu0 0.0
        %745 = vmatpush.msra.mxu0 %v725
        %746 = vmatmul.f32.gmra.mxu0 %v728
        %v747 = vpop.f32.mrf.mxu0
        %v748 = vadd.f32 0.0, %v747
        %749 = vdwg.mxu0
        %v750 = vadd.f32 %v722, %v748
        %751 = vrot.lane.b32.xlu0 %v698, 126
        %v752 = vpop.permute.xlu0 %751
        %v755 = vsel %vm621, %v315, 0
        %757 = vmatpush.msra.mxu0 0.0
        %758 = vmatpush.msra.mxu0 0.0
        %759 = vmatpush.msra.mxu0 0.0
        %760 = vmatpush.msra.mxu0 0.0
        %761 = vmatpush.msra.mxu0 0.0
        %762 = vmatpush.msra.mxu0 0.0
        %763 = vmatpush.msra.mxu0 0.0
        %764 = vmatpush.msra.mxu0 0.0
        %765 = vmatpush.msra.mxu0 0.0
        %766 = vmatpush.msra.mxu0 0.0
        %767 = vmatpush.msra.mxu0 0.0
        %768 = vmatpush.msra.mxu0 0.0
        %769 = vmatpush.msra.mxu0 0.0
        %770 = vmatpush.msra.mxu0 0.0
        %771 = vmatpush.msra.mxu0 0.0
        %772 = vmatpush.msra.mxu0 %v752
        %773 = vmatmul.f32.gmra.mxu0 %v755
        %v774 = vpop.f32.mrf.mxu0
        %v775 = vadd.f32 0.0, %v774
        %776 = vdwg.mxu0
        %v777 = vadd.f32 %v750, %v775
        %s778 = sadd.s32 %s609, 2
        %s779 = smul.u32 %s778, 8
        %s780 = scalar_lea.vmem [#allocation2], %s779
        %v781 = vld [vmem:[%s780] sm:$0xff]
        %v783 = vsel %vm621, %v317, 0
        %785 = vmatpush.msra.mxu0 0.0
        %786 = vmatpush.msra.mxu0 0.0
        %787 = vmatpush.msra.mxu0 0.0
        %788 = vmatpush.msra.mxu0 0.0
        %789 = vmatpush.msra.mxu0 0.0
        %790 = vmatpush.msra.mxu0 0.0
        %791 = vmatpush.msra.mxu0 0.0
        %792 = vmatpush.msra.mxu0 0.0
        %793 = vmatpush.msra.mxu0 0.0
        %794 = vmatpush.msra.mxu0 0.0
        %795 = vmatpush.msra.mxu0 0.0
        %796 = vmatpush.msra.mxu0 0.0
        %797 = vmatpush.msra.mxu0 0.0
        %798 = vmatpush.msra.mxu0 0.0
        %799 = vmatpush.msra.mxu0 0.0
        %800 = vmatpush.msra.mxu0 %v781
        %801 = vmatmul.f32.gmra.mxu0 %v783
        %v802 = vpop.f32.mrf.mxu0
        %v803 = vadd.f32 0.0, %v802
        %804 = vdwg.mxu0
        %v805 = vadd.f32 %v777, %v803
        %807 = vrot.lane.b32.xlu0 %v781, 127
        %v808 = vpop.permute.xlu0 %807
        %v811 = vsel %vm621, %v319, 0
        %813 = vmatpush.msra.mxu0 0.0
        %814 = vmatpush.msra.mxu0 0.0
        %815 = vmatpush.msra.mxu0 0.0
        %816 = vmatpush.msra.mxu0 0.0
        %817 = vmatpush.msra.mxu0 0.0
        %818 = vmatpush.msra.mxu0 0.0
        %819 = vmatpush.msra.mxu0 0.0
        %820 = vmatpush.msra.mxu0 0.0
        %821 = vmatpush.msra.mxu0 0.0
        %822 = vmatpush.msra.mxu0 0.0
        %823 = vmatpush.msra.mxu0 0.0
        %824 = vmatpush.msra.mxu0 0.0
        %825 = vmatpush.msra.mxu0 0.0
        %826 = vmatpush.msra.mxu0 0.0
        %827 = vmatpush.msra.mxu0 0.0
        %828 = vmatpush.msra.mxu0 %v808
        %829 = vmatmul.f32.gmra.mxu0 %v811
        %v830 = vpop.f32.mrf.mxu0
        %v831 = vadd.f32 0.0, %v830
        %832 = vdwg.mxu0
        %v833 = vadd.f32 %v805, %v831
        %834 = vrot.lane.b32.xlu0 %v781, 126
        %v835 = vpop.permute.xlu0 %834
        %v838 = vsel %vm621, %v321, 0
        %840 = vmatpush.msra.mxu0 0.0
        %841 = vmatpush.msra.mxu0 0.0
        %842 = vmatpush.msra.mxu0 0.0
        %843 = vmatpush.msra.mxu0 0.0
        %844 = vmatpush.msra.mxu0 0.0
        %845 = vmatpush.msra.mxu0 0.0
        %846 = vmatpush.msra.mxu0 0.0
        %847 = vmatpush.msra.mxu0 0.0
        %848 = vmatpush.msra.mxu0 0.0
        %849 = vmatpush.msra.mxu0 0.0
        %850 = vmatpush.msra.mxu0 0.0
        %851 = vmatpush.msra.mxu0 0.0
        %852 = vmatpush.msra.mxu0 0.0
        %853 = vmatpush.msra.mxu0 0.0
        %854 = vmatpush.msra.mxu0 0.0
        %855 = vmatpush.msra.mxu0 %v835
        %856 = vmatmul.f32.gmra.mxu0 %v838
        %v857 = vpop.f32.mrf.mxu0
        %v858 = vadd.f32 0.0, %v857
        %859 = vdwg.mxu0
        %v860 = vadd.f32 %v833, %v858
        %862 = vset.pattern.permute.xlu0 0
        %863 = vperm.xlu0 %862, %v340
        %v864 = vpop.permute.xlu0 %863
        %v866 = vadd.f32 %v860, %v864
        %868 = vrot.lane.b32.xlu0 %v866, 1
        %v869 = vpop.permute.xlu0 %868
        %s871 = scalar_lea.vmem [#allocation3], %s696
        %vm872 = vcmask 23560
        %873 = vst.msk [vmem:[%s871] sm:$0xff] %vm872, %v869
      $region60: #{_lambda_.8} parent=47 // loop_footer
        %s613 = sadd.s32 1, %s609
      $region61: #{_lambda_.8} parent=47 // loop_footer_branch
        %608 = sbr.rel target = $region57
      $region62: #{_lambda_.8} parent=47 // loop_exit
        _
      loop: start=0, step=1, limit=2
      $region63: #{_lambda_.8} parent=47 // loop_pre_header
        _
      $region64: #{_lambda_.8} parent=47 // loop_header
        %s875 = sphi 0, %s879
        %p876 = scmp.ge.s32.totalorder %s875, 2
      $region65: #{_lambda_.8} parent=47 // loop_header_branch
        %878 = sbr.rel (%p876) target = $region69
      $region66: #{_lambda_.8} parent=47 // loop_body
        %s880 = smul.u32 %s875, 8
        %s881 = scalar_lea.vmem [#allocation3], %s880
        %v882 = vld [vmem:[%s881] sm:$0xff]
        %884 = vrot.lane.b32.xlu0 %v882, 127
        %v885 = vpop.permute.xlu0 %884
        %vm887 = vcmask 64512
        %v889 = vsel %vm887, %v324, 0
        %891 = vmatpush.msra.mxu0 0.0
        %892 = vmatpush.msra.mxu0 0.0
        %893 = vmatpush.msra.mxu0 0.0
        %894 = vmatpush.msra.mxu0 0.0
        %895 = vmatpush.msra.mxu0 0.0
        %896 = vmatpush.msra.mxu0 0.0
        %897 = vmatpush.msra.mxu0 0.0
        %898 = vmatpush.msra.mxu0 0.0
        %899 = vmatpush.msra.mxu0 0.0
        %900 = vmatpush.msra.mxu0 0.0
        %901 = vmatpush.msra.mxu0 0.0
        %902 = vmatpush.msra.mxu0 0.0
        %903 = vmatpush.msra.mxu0 0.0
        %904 = vmatpush.msra.mxu0 0.0
        %905 = vmatpush.msra.mxu0 0.0
        %906 = vmatpush.msra.mxu0 %v885
        %907 = vmatmul.f32.gmra.mxu0 %v889
        %v908 = vpop.f32.mrf.mxu0
        %v909 = vadd.f32 0.0, %v908
        %910 = vdwg.mxu0
        %v912 = vsel %vm887, %v322, 0
        %914 = vmatpush.msra.mxu0 0.0
        %915 = vmatpush.msra.mxu0 0.0
        %916 = vmatpush.msra.mxu0 0.0
        %917 = vmatpush.msra.mxu0 0.0
        %918 = vmatpush.msra.mxu0 0.0
        %919 = vmatpush.msra.mxu0 0.0
        %920 = vmatpush.msra.mxu0 0.0
        %921 = vmatpush.msra.mxu0 0.0
        %922 = vmatpush.msra.mxu0 0.0
        %923 = vmatpush.msra.mxu0 0.0
        %924 = vmatpush.msra.mxu0 0.0
        %925 = vmatpush.msra.mxu0 0.0
        %926 = vmatpush.msra.mxu0 0.0
        %927 = vmatpush.msra.mxu0 0.0
        %928 = vmatpush.msra.mxu0 0.0
        %929 = vmatpush.msra.mxu0 %v882
        %930 = vmatmul.f32.gmra.mxu0 %v912
        %v931 = vpop.f32.mrf.mxu0
        %v932 = vadd.f32 %v909, %v931
        %933 = vdwg.mxu0
        %934 = vrot.lane.b32.xlu0 %v882, 126
        %v935 = vpop.permute.xlu0 %934
        %v938 = vsel %vm887, %v326, 0
        %940 = vmatpush.msra.mxu0 0.0
        %941 = vmatpush.msra.mxu0 0.0
        %942 = vmatpush.msra.mxu0 0.0
        %943 = vmatpush.msra.mxu0 0.0
        %944 = vmatpush.msra.mxu0 0.0
        %945 = vmatpush.msra.mxu0 0.0
        %946 = vmatpush.msra.mxu0 0.0
        %947 = vmatpush.msra.mxu0 0.0
        %948 = vmatpush.msra.mxu0 0.0
        %949 = vmatpush.msra.mxu0 0.0
        %950 = vmatpush.msra.mxu0 0.0
        %951 = vmatpush.msra.mxu0 0.0
        %952 = vmatpush.msra.mxu0 0.0
        %953 = vmatpush.msra.mxu0 0.0
        %954 = vmatpush.msra.mxu0 0.0
        %955 = vmatpush.msra.mxu0 %v935
        %956 = vmatmul.f32.gmra.mxu0 %v938
        %v957 = vpop.f32.mrf.mxu0
        %v958 = vadd.f32 0.0, %v957
        %959 = vdwg.mxu0
        %v960 = vadd.f32 %v932, %v958
        %s961 = sadd.s32 %s875, 1
        %s962 = smul.u32 %s961, 8
        %s963 = scalar_lea.vmem [#allocation3], %s962
        %v964 = vld [vmem:[%s963] sm:$0xff]
        %v966 = vsel %vm887, %v328, 0
        %968 = vmatpush.msra.mxu0 0.0
        %969 = vmatpush.msra.mxu0 0.0
        %970 = vmatpush.msra.mxu0 0.0
        %971 = vmatpush.msra.mxu0 0.0
        %972 = vmatpush.msra.mxu0 0.0
        %973 = vmatpush.msra.mxu0 0.0
        %974 = vmatpush.msra.mxu0 0.0
        %975 = vmatpush.msra.mxu0 0.0
        %976 = vmatpush.msra.mxu0 0.0
        %977 = vmatpush.msra.mxu0 0.0
        %978 = vmatpush.msra.mxu0 0.0
        %979 = vmatpush.msra.mxu0 0.0
        %980 = vmatpush.msra.mxu0 0.0
        %981 = vmatpush.msra.mxu0 0.0
        %982 = vmatpush.msra.mxu0 0.0
        %983 = vmatpush.msra.mxu0 %v964
        %984 = vmatmul.f32.gmra.mxu0 %v966
        %v985 = vpop.f32.mrf.mxu0
        %v986 = vadd.f32 0.0, %v985
        %987 = vdwg.mxu0
        %v988 = vadd.f32 %v960, %v986
        %990 = vrot.lane.b32.xlu0 %v964, 127
        %v991 = vpop.permute.xlu0 %990
        %v994 = vsel %vm887, %v330, 0
        %996 = vmatpush.msra.mxu0 0.0
        %997 = vmatpush.msra.mxu0 0.0
        %998 = vmatpush.msra.mxu0 0.0
        %999 = vmatpush.msra.mxu0 0.0
        %1000 = vmatpush.msra.mxu0 0.0
        %1001 = vmatpush.msra.mxu0 0.0
        %1002 = vmatpush.msra.mxu0 0.0
        %1003 = vmatpush.msra.mxu0 0.0
        %1004 = vmatpush.msra.mxu0 0.0
        %1005 = vmatpush.msra.mxu0 0.0
        %1006 = vmatpush.msra.mxu0 0.0
        %1007 = vmatpush.msra.mxu0 0.0
        %1008 = vmatpush.msra.mxu0 0.0
        %1009 = vmatpush.msra.mxu0 0.0
        %1010 = vmatpush.msra.mxu0 0.0
        %1011 = vmatpush.msra.mxu0 %v991
        %1012 = vmatmul.f32.gmra.mxu0 %v994
        %v1013 = vpop.f32.mrf.mxu0
        %v1014 = vadd.f32 0.0, %v1013
        %1015 = vdwg.mxu0
        %v1016 = vadd.f32 %v988, %v1014
        %1017 = vrot.lane.b32.xlu0 %v964, 126
        %v1018 = vpop.permute.xlu0 %1017
        %v1021 = vsel %vm887, %v332, 0
        %1023 = vmatpush.msra.mxu0 0.0
        %1024 = vmatpush.msra.mxu0 0.0
        %1025 = vmatpush.msra.mxu0 0.0
        %1026 = vmatpush.msra.mxu0 0.0
        %1027 = vmatpush.msra.mxu0 0.0
        %1028 = vmatpush.msra.mxu0 0.0
        %1029 = vmatpush.msra.mxu0 0.0
        %1030 = vmatpush.msra.mxu0 0.0
        %1031 = vmatpush.msra.mxu0 0.0
        %1032 = vmatpush.msra.mxu0 0.0
        %1033 = vmatpush.msra.mxu0 0.0
        %1034 = vmatpush.msra.mxu0 0.0
        %1035 = vmatpush.msra.mxu0 0.0
        %1036 = vmatpush.msra.mxu0 0.0
        %1037 = vmatpush.msra.mxu0 0.0
        %1038 = vmatpush.msra.mxu0 %v1018
        %1039 = vmatmul.f32.gmra.mxu0 %v1021
        %v1040 = vpop.f32.mrf.mxu0
        %v1041 = vadd.f32 0.0, %v1040
        %1042 = vdwg.mxu0
        %v1043 = vadd.f32 %v1016, %v1041
        %s1044 = sadd.s32 %s875, 2
        %s1045 = smul.u32 %s1044, 8
        %s1046 = scalar_lea.vmem [#allocation3], %s1045
        %v1047 = vld [vmem:[%s1046] sm:$0xff]
        %v1049 = vsel %vm887, %v334, 0
        %1051 = vmatpush.msra.mxu0 0.0
        %1052 = vmatpush.msra.mxu0 0.0
        %1053 = vmatpush.msra.mxu0 0.0
        %1054 = vmatpush.msra.mxu0 0.0
        %1055 = vmatpush.msra.mxu0 0.0
        %1056 = vmatpush.msra.mxu0 0.0
        %1057 = vmatpush.msra.mxu0 0.0
        %1058 = vmatpush.msra.mxu0 0.0
        %1059 = vmatpush.msra.mxu0 0.0
        %1060 = vmatpush.msra.mxu0 0.0
        %1061 = vmatpush.msra.mxu0 0.0
        %1062 = vmatpush.msra.mxu0 0.0
        %1063 = vmatpush.msra.mxu0 0.0
        %1064 = vmatpush.msra.mxu0 0.0
        %1065 = vmatpush.msra.mxu0 0.0
        %1066 = vmatpush.msra.mxu0 %v1047
        %1067 = vmatmul.f32.gmra.mxu0 %v1049
        %v1068 = vpop.f32.mrf.mxu0
        %v1069 = vadd.f32 0.0, %v1068
        %1070 = vdwg.mxu0
        %v1071 = vadd.f32 %v1043, %v1069
        %1073 = vrot.lane.b32.xlu0 %v1047, 127
        %v1074 = vpop.permute.xlu0 %1073
        %v1077 = vsel %vm887, %v336, 0
        %1079 = vmatpush.msra.mxu0 0.0
        %1080 = vmatpush.msra.mxu0 0.0
        %1081 = vmatpush.msra.mxu0 0.0
        %1082 = vmatpush.msra.mxu0 0.0
        %1083 = vmatpush.msra.mxu0 0.0
        %1084 = vmatpush.msra.mxu0 0.0
        %1085 = vmatpush.msra.mxu0 0.0
        %1086 = vmatpush.msra.mxu0 0.0
        %1087 = vmatpush.msra.mxu0 0.0
        %1088 = vmatpush.msra.mxu0 0.0
        %1089 = vmatpush.msra.mxu0 0.0
        %1090 = vmatpush.msra.mxu0 0.0
        %1091 = vmatpush.msra.mxu0 0.0
        %1092 = vmatpush.msra.mxu0 0.0
        %1093 = vmatpush.msra.mxu0 0.0
        %1094 = vmatpush.msra.mxu0 %v1074
        %1095 = vmatmul.f32.gmra.mxu0 %v1077
        %v1096 = vpop.f32.mrf.mxu0
        %v1097 = vadd.f32 0.0, %v1096
        %1098 = vdwg.mxu0
        %v1099 = vadd.f32 %v1071, %v1097
        %1100 = vrot.lane.b32.xlu0 %v1047, 126
        %v1101 = vpop.permute.xlu0 %1100
        %v1104 = vsel %vm887, %v338, 0
        %1106 = vmatpush.msra.mxu0 0.0
        %1107 = vmatpush.msra.mxu0 0.0
        %1108 = vmatpush.msra.mxu0 0.0
        %1109 = vmatpush.msra.mxu0 0.0
        %1110 = vmatpush.msra.mxu0 0.0
        %1111 = vmatpush.msra.mxu0 0.0
        %1112 = vmatpush.msra.mxu0 0.0
        %1113 = vmatpush.msra.mxu0 0.0
        %1114 = vmatpush.msra.mxu0 0.0
        %1115 = vmatpush.msra.mxu0 0.0
        %1116 = vmatpush.msra.mxu0 0.0
        %1117 = vmatpush.msra.mxu0 0.0
        %1118 = vmatpush.msra.mxu0 0.0
        %1119 = vmatpush.msra.mxu0 0.0
        %1120 = vmatpush.msra.mxu0 0.0
        %1121 = vmatpush.msra.mxu0 %v1101
        %1122 = vmatmul.f32.gmra.mxu0 %v1104
        %v1123 = vpop.f32.mrf.mxu0
        %v1124 = vadd.f32 0.0, %v1123
        %1125 = vdwg.mxu0
        %v1126 = vadd.f32 %v1099, %v1124
        %1128 = vset.pattern.permute.xlu0 0
        %1129 = vperm.xlu0 %1128, %v341
        %v1130 = vpop.permute.xlu0 %1129
        %v1132 = vadd.f32 %v1126, %v1130
        %s1133 = scalar_lea.vmem %s278, %s880
        %vm1134 = vcmask 15360
        %1135 = vst.msk [vmem:[%s1133] sm:$0xff] %vm1134, %v1132
      $region67: #{_lambda_.8} parent=47 // loop_footer
        %s879 = sadd.s32 1, %s875
      $region68: #{_lambda_.8} parent=47 // loop_footer_branch
        %874 = sbr.rel target = $region64
      $region69: #{_lambda_.8} parent=47 // loop_exit
        _
      %p1136 = scmp.lt.s32.totalorder %s18, 3
      %s1137 = scalar_select %p1136, %s18, 3
      %s1138 = smul.addr %s1137, 2
      %s1139 = smul.addr %s1138, 8
      %s1140 = scalar_lea.vmem %s7, %s1139
      // Predicated region
      $region70: #{_lambda_.8} parent=47 // pred_check
        %p1141 = pneg %p188
      $region71: #{_lambda_.8} parent=47 // pred_check_branch
        %1143 = sbr.rel (%p1141) target = $region73
      $region72: #{_lambda_.8} parent=47 // pred_region
        _
      $region73: #{_lambda_.8} parent=47 // pred_fallthru
        _
    $region48: #{_lambda_.8} parent=5 // pred_fallthru
      _
    %p1144 = scmp.le.s32.totalorder 2, %s13
    // Predicated region
    $region74: #{_lambda_.8} parent=5 // pred_check
      %p1145 = pneg %p1144
    $region75: #{_lambda_.8} parent=5 // pred_check_branch
      %1147 = sbr.rel (%p1145) target = $region77
    $region76: #{_lambda_.8} parent=5 // pred_region
      %s1148 = ssub.s32 %s13, 2
      // Predicated region
      $region78: #{_lambda_.8} parent=76 // pred_check
        %p1149 = pneg %p194
      $region79: #{_lambda_.8} parent=76 // pred_check_branch
        %1151 = sbr.rel (%p1149) target = $region81
      $region80: #{_lambda_.8} parent=76 // pred_region
        %p1152 = scmp.lt.s32.totalorder %s19, 3
        %s1153 = scalar_select %p1152, %s19, 3
        %s1154 = smul.addr %s1153, 2
        %s1155 = smul.addr %s1154, 8
        %s1156 = scalar_lea.vmem %s7, %s1155
      $region81: #{_lambda_.8} parent=76 // pred_fallthru
        _
    $region77: #{_lambda_.8} parent=5 // pred_fallthru
      _
  $region6: #{_lambda_.8} parent=0 // loop_footer
    %s17 = sadd.s32 1, %s13
  $region7: #{_lambda_.8} parent=0 // loop_footer_branch
    %12 = sbr.rel target = $region3
  $region8: #{_lambda_.8} parent=0 // loop_exit
    _

// kernel: _lambda_.9
$region0: #{_lambda_.9}
  #allocation0 [shape = 'u32[]', space=smem, size = 0x4, offset = 0x4, fixed_abs, tag = 'smem constant byte address 0x4 - core index']
  #allocation1 [shape = 'u32[72,128]{1,0:T(1,128)}', space=vmem, size = 0x9000, scoped, tag = 'internal scratch']
  #allocation2 [shape = 'f32[3,16,3]{2,1,0:T(8,128)}', space=vmem, size = 0x6000, scoped, tag = 'scratch operand']
  #allocation3 [shape = 'f32[3,16,3]{2,1,0:T(8,128)}', space=vmem, size = 0x6000, scoped, tag = 'scratch operand']
  %s0 = inlined_call_operand.vmem [shape: f32[4,2,4,8,2], index: 0, kind: input, shape index: {}]
  %s1 = inlined_call_operand.vmem [shape: f32[3,3,16,8], index: 1, kind: input, shape index: {}]
  %s2 = inlined_call_operand.vmem [shape: f32[16,1], index: 2, kind: input, shape index: {}, may-alias: {2,4,6}]
  %s3 = inlined_call_operand.vmem [shape: f32[3,3,16,16], index: 3, kind: input, shape index: {}]
  %s4 = inlined_call_operand.vmem [shape: f32[16,1], index: 4, kind: input, shape index: {}, may-alias: {2,4,6}]
  %s5 = inlined_call_operand.vmem [shape: f32[3,3,16,16], index: 5, kind: input, shape index: {}]
  %s6 = inlined_call_operand.vmem [shape: f32[16,1], index: 6, kind: input, shape index: {}, may-alias: {2,4,6}]
  %s7 = inlined_call_operand.vmem [shape: f32[4,1,16,1], index: 7, kind: output, shape index: {}]
  %s8 = sld [smem:[#allocation0]]
  $region61: #{_lambda_.9} parent=0
    _
  %s10 = ssub.s32 1, %s8
  %s11 = scalar_select 0, %s10, %s8
  loop: start=0, step=1, limit=6
  $region2: #{_lambda_.9} parent=0 // loop_pre_header
    _
  $region3: #{_lambda_.9} parent=0 // loop_header
    %s13 = sphi 0, %s17
    %p14 = scmp.ge.s32.totalorder %s13, 6
    %s23 = sphi 0, %s25
    %s26 = sphi 0, %s23
    %s27 = sphi 0, %s26
    %s43 = sphi 0, %s27
    %s47 = sphi 0, %s47
    %s49 = sphi 0, %s47
    %s50 = sphi 0, %s49
    %s64 = sphi 0, %s50
    %s68 = sphi 0, %s68
    %s70 = sphi 0, %s68
    %s71 = sphi 0, %s70
    %s85 = sphi 0, %s71
    %s89 = sphi 0, %s89
    %s91 = sphi 0, %s89
    %s92 = sphi 0, %s91
    %s106 = sphi 0, %s92
    %s110 = sphi 0, %s110
    %s112 = sphi 0, %s110
    %s113 = sphi 0, %s112
    %s127 = sphi 0, %s113
    %s131 = sphi 0, %s131
    %s133 = sphi 0, %s131
    %s134 = sphi 0, %s133
    %s148 = sphi 0, %s134
    %s152 = sphi 0, %s152
    %s154 = sphi 0, %s152
    %s155 = sphi 0, %s154
    %s169 = sphi 0, %s155
    %s175 = sphi 0, %s177
    %s178 = sphi 0, %s175
    %s179 = sphi 0, %s178
    %s195 = sphi 0, %s179
  $region4: #{_lambda_.9} parent=0 // loop_header_branch
    %16 = sbr.rel (%p14) target = $region8
  $region5: #{_lambda_.9} parent=0 // loop_body
    %s18 = ssub.s32 %s13, 1
    %s19 = ssub.s32 %s13, 2
    %s20 = sadd.s32 %s13, 1
    %s21 = ssub.s32 %s13, %s20
    %p22 = scmp.eq.s32.totalorder %s21, 0
    %s24 = sadd.s32 %s23, 1
    %s25 = scalar_select %p22, %s23, %s24
    %p28 = pneg %p22
    %p29 = scmp.eq.s32.totalorder %s13, 3
    %p30 = por %p28, %p29
    %p31 = scmp.ne.s32.totalorder %s23, %s26
    %p32 = scmp.eq.s32.totalorder %s13, 0
    %p33 = por %p31, %p32
    %p34 = scmp.ne.s32.totalorder %s23, %s26
    %p35 = scmp.eq.s32.totalorder %s18, 3
    %p36 = por %p34, %p35
    %p37 = scmp.ne.s32.totalorder %s26, %s27
    %p38 = scmp.eq.s32.totalorder %s18, 0
    %p39 = por %p37, %p38
    %p40 = scmp.ne.s32.totalorder %s26, %s27
    %p41 = scmp.eq.s32.totalorder %s19, 3
    %p42 = por %p40, %p41
    %p44 = scmp.ne.s32.totalorder %s27, %s43
    %p45 = scmp.eq.s32.totalorder %s19, 0
    %p46 = por %p44, %p45
    %s48 = sadd.s32 %s47, 1
    %p51 = scmp.eq.s32.totalorder %s13, 3
    %p52 = scmp.ne.s32.totalorder %s47, %s49
    %p53 = scmp.eq.s32.totalorder %s13, 0
    %p54 = por %p52, %p53
    %p55 = scmp.ne.s32.totalorder %s47, %s49
    %p56 = scmp.eq.s32.totalorder %s18, 3
    %p57 = por %p55, %p56
    %p58 = scmp.ne.s32.totalorder %s49, %s50
    %p59 = scmp.eq.s32.totalorder %s18, 0
    %p60 = por %p58, %p59
    %p61 = scmp.ne.s32.totalorder %s49, %s50
    %p62 = scmp.eq.s32.totalorder %s19, 3
    %p63 = por %p61, %p62
    %p65 = scmp.ne.s32.totalorder %s50, %s64
    %p66 = scmp.eq.s32.totalorder %s19, 0
    %p67 = por %p65, %p66
    %s69 = sadd.s32 %s68, 1
    %p72 = scmp.eq.s32.totalorder %s13, 3
    %p73 = scmp.ne.s32.totalorder %s68, %s70
    %p74 = scmp.eq.s32.totalorder %s13, 0
    %p75 = por %p73, %p74
    %p76 = scmp.ne.s32.totalorder %s68, %s70
    %p77 = scmp.eq.s32.totalorder %s18, 3
    %p78 = por %p76, %p77
    %p79 = scmp.ne.s32.totalorder %s70, %s71
    %p80 = scmp.eq.s32.totalorder %s18, 0
    %p81 = por %p79, %p80
    %p82 = scmp.ne.s32.totalorder %s70, %s71
    %p83 = scmp.eq.s32.totalorder %s19, 3
    %p84 = por %p82, %p83
    %p86 = scmp.ne.s32.totalorder %s71, %s85
    %p87 = scmp.eq.s32.totalorder %s19, 0
    %p88 = por %p86, %p87
    %s90 = sadd.s32 %s89, 1
    %p93 = scmp.eq.s32.totalorder %s13, 3
    %p94 = scmp.ne.s32.totalorder %s89, %s91
    %p95 = scmp.eq.s32.totalorder %s13, 0
    %p96 = por %p94, %p95
    %p97 = scmp.ne.s32.totalorder %s89, %s91
    %p98 = scmp.eq.s32.totalorder %s18, 3
    %p99 = por %p97, %p98
    %p100 = scmp.ne.s32.totalorder %s91, %s92
    %p101 = scmp.eq.s32.totalorder %s18, 0
    %p102 = por %p100, %p101
    %p103 = scmp.ne.s32.totalorder %s91, %s92
    %p104 = scmp.eq.s32.totalorder %s19, 3
    %p105 = por %p103, %p104
    %p107 = scmp.ne.s32.totalorder %s92, %s106
    %p108 = scmp.eq.s32.totalorder %s19, 0
    %p109 = por %p107, %p108
    %s111 = sadd.s32 %s110, 1
    %p114 = scmp.eq.s32.totalorder %s13, 3
    %p115 = scmp.ne.s32.totalorder %s110, %s112
    %p116 = scmp.eq.s32.totalorder %s13, 0
    %p117 = por %p115, %p116
    %p118 = scmp.ne.s32.totalorder %s110, %s112
    %p119 = scmp.eq.s32.totalorder %s18, 3
    %p120 = por %p118, %p119
    %p121 = scmp.ne.s32.totalorder %s112, %s113
    %p122 = scmp.eq.s32.totalorder %s18, 0
    %p123 = por %p121, %p122
    %p124 = scmp.ne.s32.totalorder %s112, %s113
    %p125 = scmp.eq.s32.totalorder %s19, 3
    %p126 = por %p124, %p125
    %p128 = scmp.ne.s32.totalorder %s113, %s127
    %p129 = scmp.eq.s32.totalorder %s19, 0
    %p130 = por %p128, %p129
    %s132 = sadd.s32 %s131, 1
    %p135 = scmp.eq.s32.totalorder %s13, 3
    %p136 = scmp.ne.s32.totalorder %s131, %s133
    %p137 = scmp.eq.s32.totalorder %s13, 0
    %p138 = por %p136, %p137
    %p139 = scmp.ne.s32.totalorder %s131, %s133
    %p140 = scmp.eq.s32.totalorder %s18, 3
    %p141 = por %p139, %p140
    %p142 = scmp.ne.s32.totalorder %s133, %s134
    %p143 = scmp.eq.s32.totalorder %s18, 0
    %p144 = por %p142, %p143
    %p145 = scmp.ne.s32.totalorder %s133, %s134
    %p146 = scmp.eq.s32.totalorder %s19, 3
    %p147 = por %p145, %p146
    %p149 = scmp.ne.s32.totalorder %s134, %s148
    %p150 = scmp.eq.s32.totalorder %s19, 0
    %p151 = por %p149, %p150
    %s153 = sadd.s32 %s152, 1
    %p156 = scmp.eq.s32.totalorder %s13, 3
    %p157 = scmp.ne.s32.totalorder %s152, %s154
    %p158 = scmp.eq.s32.totalorder %s13, 0
    %p159 = por %p157, %p158
    %p160 = scmp.ne.s32.totalorder %s152, %s154
    %p161 = scmp.eq.s32.totalorder %s18, 3
    %p162 = por %p160, %p161
    %p163 = scmp.ne.s32.totalorder %s154, %s155
    %p164 = scmp.eq.s32.totalorder %s18, 0
    %p165 = por %p163, %p164
    %p166 = scmp.ne.s32.totalorder %s154, %s155
    %p167 = scmp.eq.s32.totalorder %s19, 3
    %p168 = por %p166, %p167
    %p170 = scmp.ne.s32.totalorder %s155, %s169
    %p171 = scmp.eq.s32.totalorder %s19, 0
    %p172 = por %p170, %p171
    %s173 = ssub.s32 %s13, %s20
    %p174 = scmp.eq.s32.totalorder %s173, 0
    %s176 = sadd.s32 %s175, 1
    %s177 = scalar_select %p174, %s175, %s176
    %p180 = pneg %p174
    %p181 = scmp.eq.s32.totalorder %s13, 3
    %p182 = por %p180, %p181
    %p183 = scmp.ne.s32.totalorder %s175, %s178
    %p184 = scmp.eq.s32.totalorder %s13, 0
    %p185 = por %p183, %p184
    %p186 = scmp.ne.s32.totalorder %s175, %s178
    %p187 = scmp.eq.s32.totalorder %s18, 3
    %p188 = por %p186, %p187
    %p189 = scmp.ne.s32.totalorder %s178, %s179
    %p190 = scmp.eq.s32.totalorder %s18, 0
    %p191 = por %p189, %p190
    %p192 = scmp.ne.s32.totalorder %s178, %s179
    %p193 = scmp.eq.s32.totalorder %s19, 3
    %p194 = por %p192, %p193
    %p196 = scmp.ne.s32.totalorder %s179, %s195
    %p197 = scmp.eq.s32.totalorder %s19, 0
    %p198 = por %p196, %p197
    %p199 = scmp.le.s32.totalorder 1, %s13
    %p200 = scmp.lt.s32.totalorder %s13, 5
    %p201 = pnand %p199, %p200
    %p202 = pneg %p201
    // Predicated region
    $region9: #{_lambda_.9} parent=5 // pred_check
      _
    $region10: #{_lambda_.9} parent=5 // pred_check_branch
      %204 = sbr.rel (%p201) target = $region12
    $region11: #{_lambda_.9} parent=5 // pred_region
      %s205 = ssub.s32 %s13, 1
      // Predicated region
      $region13: #{_lambda_.9} parent=11 // pred_check
        %p206 = pneg %p60
      $region14: #{_lambda_.9} parent=11 // pred_check_branch
        %208 = sbr.rel (%p206) target = $region16
      $region15: #{_lambda_.9} parent=11 // pred_region
        _
      $region16: #{_lambda_.9} parent=11 // pred_fallthru
        _
      // Predicated region
      $region17: #{_lambda_.9} parent=11 // pred_check
        %p209 = pneg %p81
      $region18: #{_lambda_.9} parent=11 // pred_check_branch
        %211 = sbr.rel (%p209) target = $region20
      $region19: #{_lambda_.9} parent=11 // pred_region
        _
      $region20: #{_lambda_.9} parent=11 // pred_fallthru
        _
      // Predicated region
      $region21: #{_lambda_.9} parent=11 // pred_check
        %p212 = pneg %p102
      $region22: #{_lambda_.9} parent=11 // pred_check_branch
        %214 = sbr.rel (%p212) target = $region24
      $region23: #{_lambda_.9} parent=11 // pred_region
        _
      $region24: #{_lambda_.9} parent=11 // pred_fallthru
        _
      // Predicated region
      $region25: #{_lambda_.9} parent=11 // pred_check
        %p215 = pneg %p123
      $region26: #{_lambda_.9} parent=11 // pred_check_branch
        %217 = sbr.rel (%p215) target = $region28
      $region27: #{_lambda_.9} parent=11 // pred_region
        _
      $region28: #{_lambda_.9} parent=11 // pred_fallthru
        _
      // Predicated region
      $region29: #{_lambda_.9} parent=11 // pred_check
        %p218 = pneg %p144
      $region30: #{_lambda_.9} parent=11 // pred_check_branch
        %220 = sbr.rel (%p218) target = $region32
      $region31: #{_lambda_.9} parent=11 // pred_region
        _
      $region32: #{_lambda_.9} parent=11 // pred_fallthru
        _
      // Predicated region
      $region33: #{_lambda_.9} parent=11 // pred_check
        %p221 = pneg %p165
      $region34: #{_lambda_.9} parent=11 // pred_check_branch
        %223 = sbr.rel (%p221) target = $region36
      $region35: #{_lambda_.9} parent=11 // pred_region
        _
      $region36: #{_lambda_.9} parent=11 // pred_fallthru
        _
    $region12: #{_lambda_.9} parent=5 // pred_fallthru
      _
    %p224 = scmp.lt.s32.totalorder %s13, 4
    // Predicated region
    $region37: #{_lambda_.9} parent=5 // pred_check
      %p225 = pneg %p224
    $region38: #{_lambda_.9} parent=5 // pred_check_branch
      %227 = sbr.rel (%p225) target = $region40
    $region39: #{_lambda_.9} parent=5 // pred_region
      // Predicated region
      $region41: #{_lambda_.9} parent=39 // pred_check
        %p228 = pneg %p33
      $region42: #{_lambda_.9} parent=39 // pred_check_branch
        %230 = sbr.rel (%p228) target = $region44
      $region43: #{_lambda_.9} parent=39 // pred_region
        %p231 = scmp.lt.s32.totalorder %s13, 3
        %s232 = scalar_select %p231, %s13, 3
        %s233 = smul.addr %s232, 8
        %s234 = smul.addr %s233, 8
        %s235 = scalar_lea.vmem %s0, %s234
      $region44: #{_lambda_.9} parent=39 // pred_fallthru
        _
    $region40: #{_lambda_.9} parent=5 // pred_fallthru
      _
    %p236 = scmp.le.s32.totalorder 1, %s13
    %p237 = scmp.lt.s32.totalorder %s13, 5
    %p238 = pnand %p236, %p237
    %p239 = pneg %p238
    // Predicated region
    $region45: #{_lambda_.9} parent=5 // pred_check
      _
    $region46: #{_lambda_.9} parent=5 // pred_check_branch
      %241 = sbr.rel (%p238) target = $region48
    $region47: #{_lambda_.9} parent=5 // pred_region
      %s242 = ssub.s32 %s13, 1
      %p243 = scmp.lt.s32.totalorder %s18, 3
      %s244 = scalar_select %p243, %s18, 3
      %s245 = smul.addr %s244, 8
      %s246 = smul.addr %s245, 8
      %s247 = scalar_lea.vmem %s0, %s246
      %p248 = pneg %p39
      %p249 = pneg %p36
      %p250 = pneg %p60
      %p251 = pneg %p57
      %p252 = pneg %p81
      %p253 = pneg %p78
      %p254 = pneg %p102
      %p255 = pneg %p99
      %p256 = pneg %p123
      %p257 = pneg %p120
      %p258 = pneg %p144
      %p259 = pneg %p141
      %p260 = pneg %p165
      %p261 = pneg %p162
      %p262 = pneg %p191
      %p263 = pneg %p188
      %p264 = scmp.lt.s32.totalorder %s18, 3
      %s265 = scalar_select %p264, %s18, 3
      %s266 = smul.addr %s265, 2
      %s267 = smul.addr %s266, 8
      %s268 = scalar_lea.vmem %s7, %s267
      %p269 = scmp.lt.s32.totalorder %s18, 3
      %s270 = scalar_select %p269, %s18, 3
      %s271 = smul.addr %s270, 8
      %s272 = smul.addr %s271, 8
      %s273 = scalar_lea.vmem %s0, %s272
      %p274 = scmp.lt.s32.totalorder %s18, 3
      %s275 = scalar_select %p274, %s18, 3
      %s276 = smul.addr %s275, 2
      %s277 = smul.addr %s276, 8
      %s278 = scalar_lea.vmem %s7, %s277
      %vm279 = vcmask 23552
      %280 = vst.msk [vmem:[#allocation2] sm:$0xff] %vm279, 0.0
      %281 = vst.msk [vmem:[#allocation2 + $0x8] sm:$0xff] %vm279, 0.0
      %282 = vst.msk [vmem:[#allocation2 + $0x10] sm:$0xff] %vm279, 0.0
      %283 = vst.msk [vmem:[#allocation2 + $0x18] sm:$0xff] %vm279, 0.0
      %284 = vst.msk [vmem:[#allocation2 + $0x20] sm:$0xff] %vm279, 0.0
      %285 = vst.msk [vmem:[#allocation2 + $0x28] sm:$0xff] %vm279, 0.0
      %286 = vst.msk [vmem:[#allocation3] sm:$0xff] %vm279, 0.0
      %287 = vst.msk [vmem:[#allocation3 + $0x8] sm:$0xff] %vm279, 0.0
      %288 = vst.msk [vmem:[#allocation3 + $0x10] sm:$0xff] %vm279, 0.0
      %289 = vst.msk [vmem:[#allocation3 + $0x18] sm:$0xff] %vm279, 0.0
      %290 = vst.msk [vmem:[#allocation3 + $0x20] sm:$0xff] %vm279, 0.0
      %291 = vst.msk [vmem:[#allocation3 + $0x28] sm:$0xff] %vm279, 0.0
      %v292 = vld [vmem:[%s1] sm:$0xff]
      %v293 = vld [vmem:[%s1 + $0x8] sm:$0xff]
      %s294 = scalar_lea.vmem %s1, 16
      %v295 = vld [vmem:[%s294] sm:$0xff]
      %v296 = vld [vmem:[%s294 + $0x8] sm:$0xff]
      %s297 = scalar_lea.vmem %s1, 32
      %v298 = vld [vmem:[%s297] sm:$0xff]
      %v299 = vld [vmem:[%s297 + $0x8] sm:$0xff]
      %s300 = scalar_lea.vmem %s1, 48
      %v301 = vld [vmem:[%s300] sm:$0xff]
      %v302 = vld [vmem:[%s300 + $0x8] sm:$0xff]
      %s303 = scalar_lea.vmem %s1, 64
      %v304 = vld [vmem:[%s303] sm:$0xff]
      %v305 = vld [vmem:[%s303 + $0x8] sm:$0xff]
      %s306 = scalar_lea.vmem %s1, 80
      %v307 = vld [vmem:[%s306] sm:$0xff]
      %v308 = vld [vmem:[%s306 + $0x8] sm:$0xff]
      %s309 = scalar_lea.vmem %s1, 96
      %v310 = vld [vmem:[%s309] sm:$0xff]
      %v311 = vld [vmem:[%s309 + $0x8] sm:$0xff]
      %s312 = scalar_lea.vmem %s1, 112
      %v313 = vld [vmem:[%s312] sm:$0xff]
      %v314 = vld [vmem:[%s312 + $0x8] sm:$0xff]
      %s315 = scalar_lea.vmem %s1, 128
      %v316 = vld [vmem:[%s315] sm:$0xff]
      %v317 = vld [vmem:[%s315 + $0x8] sm:$0xff]
      %v318 = vld [vmem:[%s3] sm:$0xff]
      %v319 = vld [vmem:[%s3 + $0x8] sm:$0xff]
      %s320 = scalar_lea.vmem %s3, 16
      %v321 = vld [vmem:[%s320] sm:$0xff]
      %v322 = vld [vmem:[%s320 + $0x8] sm:$0xff]
      %s323 = scalar_lea.vmem %s3, 32
      %v324 = vld [vmem:[%s323] sm:$0xff]
      %v325 = vld [vmem:[%s323 + $0x8] sm:$0xff]
      %s326 = scalar_lea.vmem %s3, 48
      %v327 = vld [vmem:[%s326] sm:$0xff]
      %v328 = vld [vmem:[%s326 + $0x8] sm:$0xff]
      %s329 = scalar_lea.vmem %s3, 64
      %v330 = vld [vmem:[%s329] sm:$0xff]
      %v331 = vld [vmem:[%s329 + $0x8] sm:$0xff]
      %s332 = scalar_lea.vmem %s3, 80
      %v333 = vld [vmem:[%s332] sm:$0xff]
      %v334 = vld [vmem:[%s332 + $0x8] sm:$0xff]
      %s335 = scalar_lea.vmem %s3, 96
      %v336 = vld [vmem:[%s335] sm:$0xff]
      %v337 = vld [vmem:[%s335 + $0x8] sm:$0xff]
      %s338 = scalar_lea.vmem %s3, 112
      %v339 = vld [vmem:[%s338] sm:$0xff]
      %v340 = vld [vmem:[%s338 + $0x8] sm:$0xff]
      %s341 = scalar_lea.vmem %s3, 128
      %v342 = vld [vmem:[%s341] sm:$0xff]
      %v343 = vld [vmem:[%s341 + $0x8] sm:$0xff]
      %v344 = vld [vmem:[%s5] sm:$0xff]
      %v345 = vld [vmem:[%s5 + $0x8] sm:$0xff]
      %s346 = scalar_lea.vmem %s5, 16
      %v347 = vld [vmem:[%s346] sm:$0xff]
      %v348 = vld [vmem:[%s346 + $0x8] sm:$0xff]
      %s349 = scalar_lea.vmem %s5, 32
      %v350 = vld [vmem:[%s349] sm:$0xff]
      %v351 = vld [vmem:[%s349 + $0x8] sm:$0xff]
      %s352 = scalar_lea.vmem %s5, 48
      %v353 = vld [vmem:[%s352] sm:$0xff]
      %v354 = vld [vmem:[%s352 + $0x8] sm:$0xff]
      %s355 = scalar_lea.vmem %s5, 64
      %v356 = vld [vmem:[%s355] sm:$0xff]
      %v357 = vld [vmem:[%s355 + $0x8] sm:$0xff]
      %s358 = scalar_lea.vmem %s5, 80
      %v359 = vld [vmem:[%s358] sm:$0xff]
      %v360 = vld [vmem:[%s358 + $0x8] sm:$0xff]
      %s361 = scalar_lea.vmem %s5, 96
      %v362 = vld [vmem:[%s361] sm:$0xff]
      %v363 = vld [vmem:[%s361 + $0x8] sm:$0xff]
      %s364 = scalar_lea.vmem %s5, 112
      %v365 = vld [vmem:[%s364] sm:$0xff]
      %v366 = vld [vmem:[%s364 + $0x8] sm:$0xff]
      %s367 = scalar_lea.vmem %s5, 128
      %v368 = vld [vmem:[%s367] sm:$0xff]
      %v369 = vld [vmem:[%s367 + $0x8] sm:$0xff]
      %v370 = vld [vmem:[%s2] sm:$0xff]
      %v371 = vld [vmem:[%s2 + $0x8] sm:$0xff]
      %v372 = vld [vmem:[%s4] sm:$0xff]
      %v373 = vld [vmem:[%s4 + $0x8] sm:$0xff]
      %v374 = vld [vmem:[%s6] sm:$0xff]
      %v375 = vld [vmem:[%s6 + $0x8] sm:$0xff]
      %v376 = vld [vmem:[%s273] sm:$0xff]
      %s377 = scalar_lea.vmem %s273, 8
      %v378 = vld [vmem:[%s377] sm:$0xff]
      %vm379 = vcmask 64512
      %v381 = vsel %vm379, %v295, 0
      %v384 = vsel %vm379, %v296, 0
      %386 = vmatpush.msra.mxu0 0.0
      %387 = vmatpush.msra.mxu0 0.0
      %388 = vmatpush.msra.mxu0 0.0
      %389 = vmatpush.msra.mxu0 0.0
      %390 = vmatpush.msra.mxu0 0.0
      %391 = vmatpush.msra.mxu0 0.0
      %392 = vmatpush.msra.mxu0 0.0
      %393 = vmatpush.msra.mxu0 0.0
      %394 = vmatpush.msra.mxu0 0.0
      %395 = vmatpush.msra.mxu0 0.0
      %396 = vmatpush.msra.mxu0 0.0
      %397 = vmatpush.msra.mxu0 0.0
      %398 = vmatpush.msra.mxu0 0.0
      %399 = vmatpush.msra.mxu0 0.0
      %400 = vmatpush.msra.mxu0 0.0
      %401 = vmatpush.msra.mxu0 %v378
      %402 = vmatmul.f32.gmra.mxu0 %v381
      %v403 = vpop.f32.mrf.mxu0
      %v404 = vadd.f32 0.0, %v403
      %405 = vmatmul.f32.gmra.mxu0 %v384
      %v406 = vpop.f32.mrf.mxu0
      %v407 = vadd.f32 0.0, %v406
      %408 = vdwg.mxu0
      %v410 = vsel %vm379, %v292, 0
      %v413 = vsel %vm379, %v293, 0
      %415 = vmatpush.msra.mxu0 0.0
      %416 = vmatpush.msra.mxu0 0.0
      %417 = vmatpush.msra.mxu0 0.0
      %418 = vmatpush.msra.mxu0 0.0
      %419 = vmatpush.msra.mxu0 0.0
      %420 = vmatpush.msra.mxu0 0.0
      %421 = vmatpush.msra.mxu0 0.0
      %422 = vmatpush.msra.mxu0 0.0
      %423 = vmatpush.msra.mxu0 0.0
      %424 = vmatpush.msra.mxu0 0.0
      %425 = vmatpush.msra.mxu0 0.0
      %426 = vmatpush.msra.mxu0 0.0
      %427 = vmatpush.msra.mxu0 0.0
      %428 = vmatpush.msra.mxu0 0.0
      %429 = vmatpush.msra.mxu0 0.0
      %430 = vmatpush.msra.mxu0 %v376
      %431 = vmatmul.f32.gmra.mxu0 %v410
      %v432 = vpop.f32.mrf.mxu0
      %v433 = vadd.f32 %v404, %v432
      %434 = vmatmul.f32.gmra.mxu0 %v413
      %v435 = vpop.f32.mrf.mxu0
      %v436 = vadd.f32 %v407, %v435
      %437 = vdwg.mxu0
      %439 = vrot.lane.b32.xlu0 %v376, 127
      %v440 = vpop.permute.xlu0 %439
      %v443 = vsel %vm379, %v298, 0
      %v446 = vsel %vm379, %v299, 0
      %448 = vmatpush.msra.mxu0 0.0
      %449 = vmatpush.msra.mxu0 0.0
      %450 = vmatpush.msra.mxu0 0.0
      %451 = vmatpush.msra.mxu0 0.0
      %452 = vmatpush.msra.mxu0 0.0
      %453 = vmatpush.msra.mxu0 0.0
      %454 = vmatpush.msra.mxu0 0.0
      %455 = vmatpush.msra.mxu0 0.0
      %456 = vmatpush.msra.mxu0 0.0
      %457 = vmatpush.msra.mxu0 0.0
      %458 = vmatpush.msra.mxu0 0.0
      %459 = vmatpush.msra.mxu0 0.0
      %460 = vmatpush.msra.mxu0 0.0
      %461 = vmatpush.msra.mxu0 0.0
      %462 = vmatpush.msra.mxu0 0.0
      %463 = vmatpush.msra.mxu0 %v440
      %464 = vmatmul.f32.gmra.mxu0 %v443
      %v465 = vpop.f32.mrf.mxu0
      %v466 = vadd.f32 0.0, %v465
      %467 = vmatmul.f32.gmra.mxu0 %v446
      %v468 = vpop.f32.mrf.mxu0
      %v469 = vadd.f32 0.0, %v468
      %470 = vdwg.mxu0
      %v471 = vadd.f32 %v433, %v466
      %v472 = vadd.f32 %v436, %v469
      %s473 = scalar_lea.vmem %s273, 16
      %v474 = vld [vmem:[%s473] sm:$0xff]
      %v476 = vsel %vm379, %v301, 0
      %v479 = vsel %vm379, %v302, 0
      %481 = vmatpush.msra.mxu0 0.0
      %482 = vmatpush.msra.mxu0 0.0
      %483 = vmatpush.msra.mxu0 0.0
      %484 = vmatpush.msra.mxu0 0.0
      %485 = vmatpush.msra.mxu0 0.0
      %486 = vmatpush.msra.mxu0 0.0
      %487 = vmatpush.msra.mxu0 0.0
      %488 = vmatpush.msra.mxu0 0.0
      %489 = vmatpush.msra.mxu0 0.0
      %490 = vmatpush.msra.mxu0 0.0
      %491 = vmatpush.msra.mxu0 0.0
      %492 = vmatpush.msra.mxu0 0.0
      %493 = vmatpush.msra.mxu0 0.0
      %494 = vmatpush.msra.mxu0 0.0
      %495 = vmatpush.msra.mxu0 0.0
      %496 = vmatpush.msra.mxu0 %v474
      %497 = vmatmul.f32.gmra.mxu0 %v476
      %v498 = vpop.f32.mrf.mxu0
      %v499 = vadd.f32 0.0, %v498
      %500 = vmatmul.f32.gmra.mxu0 %v479
      %v501 = vpop.f32.mrf.mxu0
      %v502 = vadd.f32 0.0, %v501
      %503 = vdwg.mxu0
      %v504 = vadd.f32 %v471, %v499
      %v505 = vadd.f32 %v472, %v502
      %s506 = scalar_lea.vmem %s273, 24
      %v507 = vld [vmem:[%s506] sm:$0xff]
      %v509 = vsel %vm379, %v304, 0
      %v512 = vsel %vm379, %v305, 0
      %514 = vmatpush.msra.mxu0 0.0
      %515 = vmatpush.msra.mxu0 0.0
      %516 = vmatpush.msra.mxu0 0.0
      %517 = vmatpush.msra.mxu0 0.0
      %518 = vmatpush.msra.mxu0 0.0
      %519 = vmatpush.msra.mxu0 0.0
      %520 = vmatpush.msra.mxu0 0.0
      %521 = vmatpush.msra.mxu0 0.0
      %522 = vmatpush.msra.mxu0 0.0
      %523 = vmatpush.msra.mxu0 0.0
      %524 = vmatpush.msra.mxu0 0.0
      %525 = vmatpush.msra.mxu0 0.0
      %526 = vmatpush.msra.mxu0 0.0
      %527 = vmatpush.msra.mxu0 0.0
      %528 = vmatpush.msra.mxu0 0.0
      %529 = vmatpush.msra.mxu0 %v507
      %530 = vmatmul.f32.gmra.mxu0 %v509
      %v531 = vpop.f32.mrf.mxu0
      %v532 = vadd.f32 0.0, %v531
      %533 = vmatmul.f32.gmra.mxu0 %v512
      %v534 = vpop.f32.mrf.mxu0
      %v535 = vadd.f32 0.0, %v534
      %536 = vdwg.mxu0
      %v537 = vadd.f32 %v504, %v532
      %v538 = vadd.f32 %v505, %v535
      %540 = vrot.lane.b32.xlu0 %v474, 127
      %v541 = vpop.permute.xlu0 %540
      %v544 = vsel %vm379, %v307, 0
      %v547 = vsel %vm379, %v308, 0
      %549 = vmatpush.msra.mxu0 0.0
      %550 = vmatpush.msra.mxu0 0.0
      %551 = vmatpush.msra.mxu0 0.0
      %552 = vmatpush.msra.mxu0 0.0
      %553 = vmatpush.msra.mxu0 0.0
      %554 = vmatpush.msra.mxu0 0.0
      %555 = vmatpush.msra.mxu0 0.0
      %556 = vmatpush.msra.mxu0 0.0
      %557 = vmatpush.msra.mxu0 0.0
      %558 = vmatpush.msra.mxu0 0.0
      %559 = vmatpush.msra.mxu0 0.0
      %560 = vmatpush.msra.mxu0 0.0
      %561 = vmatpush.msra.mxu0 0.0
      %562 = vmatpush.msra.mxu0 0.0
      %563 = vmatpush.msra.mxu0 0.0
      %564 = vmatpush.msra.mxu0 %v541
      %565 = vmatmul.f32.gmra.mxu0 %v544
      %v566 = vpop.f32.mrf.mxu0
      %v567 = vadd.f32 0.0, %v566
      %568 = vmatmul.f32.gmra.mxu0 %v547
      %v569 = vpop.f32.mrf.mxu0
      %v570 = vadd.f32 0.0, %v569
      %571 = vdwg.mxu0
      %v572 = vadd.f32 %v537, %v567
      %v573 = vadd.f32 %v538, %v570
      %s574 = scalar_lea.vmem %s273, 32
      %v575 = vld [vmem:[%s574] sm:$0xff]
      %v577 = vsel %vm379, %v310, 0
      %v580 = vsel %vm379, %v311, 0
      %582 = vmatpush.msra.mxu0 0.0
      %583 = vmatpush.msra.mxu0 0.0
      %584 = vmatpush.msra.mxu0 0.0
      %585 = vmatpush.msra.mxu0 0.0
      %586 = vmatpush.msra.mxu0 0.0
      %587 = vmatpush.msra.mxu0 0.0
      %588 = vmatpush.msra.mxu0 0.0
      %589 = vmatpush.msra.mxu0 0.0
      %590 = vmatpush.msra.mxu0 0.0
      %591 = vmatpush.msra.mxu0 0.0
      %592 = vmatpush.msra.mxu0 0.0
      %593 = vmatpush.msra.mxu0 0.0
      %594 = vmatpush.msra.mxu0 0.0
      %595 = vmatpush.msra.mxu0 0.0
      %596 = vmatpush.msra.mxu0 0.0
      %597 = vmatpush.msra.mxu0 %v575
      %598 = vmatmul.f32.gmra.mxu0 %v577
      %v599 = vpop.f32.mrf.mxu0
      %v600 = vadd.f32 0.0, %v599
      %601 = vmatmul.f32.gmra.mxu0 %v580
      %v602 = vpop.f32.mrf.mxu0
      %v603 = vadd.f32 0.0, %v602
      %604 = vdwg.mxu0
      %v605 = vadd.f32 %v572, %v600
      %v606 = vadd.f32 %v573, %v603
      %s607 = scalar_lea.vmem %s273, 40
      %v608 = vld [vmem:[%s607] sm:$0xff]
      %v610 = vsel %vm379, %v313, 0
      %v613 = vsel %vm379, %v314, 0
      %615 = vmatpush.msra.mxu0 0.0
      %616 = vmatpush.msra.mxu0 0.0
      %617 = vmatpush.msra.mxu0 0.0
      %618 = vmatpush.msra.mxu0 0.0
      %619 = vmatpush.msra.mxu0 0.0
      %620 = vmatpush.msra.mxu0 0.0
      %621 = vmatpush.msra.mxu0 0.0
      %622 = vmatpush.msra.mxu0 0.0
      %623 = vmatpush.msra.mxu0 0.0
      %624 = vmatpush.msra.mxu0 0.0
      %625 = vmatpush.msra.mxu0 0.0
      %626 = vmatpush.msra.mxu0 0.0
      %627 = vmatpush.msra.mxu0 0.0
      %628 = vmatpush.msra.mxu0 0.0
      %629 = vmatpush.msra.mxu0 0.0
      %630 = vmatpush.msra.mxu0 %v608
      %631 = vmatmul.f32.gmra.mxu0 %v610
      %v632 = vpop.f32.mrf.mxu0
      %v633 = vadd.f32 0.0, %v632
      %634 = vmatmul.f32.gmra.mxu0 %v613
      %v635 = vpop.f32.mrf.mxu0
      %v636 = vadd.f32 0.0, %v635
      %637 = vdwg.mxu0
      %v638 = vadd.f32 %v605, %v633
      %v639 = vadd.f32 %v606, %v636
      %641 = vrot.lane.b32.xlu0 %v575, 127
      %v642 = vpop.permute.xlu0 %641
      %v645 = vsel %vm379, %v316, 0
      %v648 = vsel %vm379, %v317, 0
      %650 = vmatpush.msra.mxu0 0.0
      %651 = vmatpush.msra.mxu0 0.0
      %652 = vmatpush.msra.mxu0 0.0
      %653 = vmatpush.msra.mxu0 0.0
      %654 = vmatpush.msra.mxu0 0.0
      %655 = vmatpush.msra.mxu0 0.0
      %656 = vmatpush.msra.mxu0 0.0
      %657 = vmatpush.msra.mxu0 0.0
      %658 = vmatpush.msra.mxu0 0.0
      %659 = vmatpush.msra.mxu0 0.0
      %660 = vmatpush.msra.mxu0 0.0
      %661 = vmatpush.msra.mxu0 0.0
      %662 = vmatpush.msra.mxu0 0.0
      %663 = vmatpush.msra.mxu0 0.0
      %664 = vmatpush.msra.mxu0 0.0
      %665 = vmatpush.msra.mxu0 %v642
      %666 = vmatmul.f32.gmra.mxu0 %v645
      %v667 = vpop.f32.mrf.mxu0
      %v668 = vadd.f32 0.0, %v667
      %669 = vmatmul.f32.gmra.mxu0 %v648
      %v670 = vpop.f32.mrf.mxu0
      %v671 = vadd.f32 0.0, %v670
      %672 = vdwg.mxu0
      %v673 = vadd.f32 %v638, %v668
      %v674 = vadd.f32 %v639, %v671
      %v675 = vadd.f32 %v673, %v370
      %v676 = vadd.f32 %v674, %v371
      %679 = vrot.lane.b32.xlu0 %v675, 1
      %v680 = vpop.permute.xlu0 %679
      %681 = vrot.lane.b32.xlu0 %v676, 1
      %v682 = vpop.permute.xlu0 %681
      %s685 = scalar_lea.vmem [#allocation2], 16
      %vm686 = vcmask 15368
      %687 = vst.msk [vmem:[%s685] sm:$0xff] %vm686, %v680
      %688 = vst.msk [vmem:[%s685 + $0x8] sm:$0xff] %vm686, %v682
      %v689 = vld [vmem:[#allocation2] sm:$0xff]
      %v690 = vld [vmem:[#allocation2 + $0x8] sm:$0xff]
      %693 = vrot.lane.b32.xlu0 %v689, 127
      %v694 = vpop.permute.xlu0 %693
      %695 = vrot.lane.b32.xlu0 %v690, 127
      %v696 = vpop.permute.xlu0 %695
      %vm699 = vcmask 130048
      %v701 = vsel %vm699, %v321, 0
      %v704 = vsel %vm699, %v322, 0
      %706 = vmatpush.msra.mxu0 0.0
      %707 = vmatpush.msra.mxu0 0.0
      %708 = vmatpush.msra.mxu0 0.0
      %709 = vmatpush.msra.mxu0 0.0
      %710 = vmatpush.msra.mxu0 0.0
      %711 = vmatpush.msra.mxu0 0.0
      %712 = vmatpush.msra.mxu0 0.0
      %713 = vmatpush.msra.mxu0 0.0
      %714 = vmatpush.msra.mxu0 0.0
      %715 = vmatpush.msra.mxu0 0.0
      %716 = vmatpush.msra.mxu0 0.0
      %717 = vmatpush.msra.mxu0 0.0
      %718 = vmatpush.msra.mxu0 0.0
      %719 = vmatpush.msra.mxu0 0.0
      %720 = vmatpush.msra.mxu0 %v696
      %721 = vmatpush.msra.mxu0 %v694
      %722 = vmatmul.f32.gmra.mxu0 %v701
      %v723 = vpop.f32.mrf.mxu0
      %v724 = vadd.f32 0.0, %v723
      %725 = vmatmul.f32.gmra.mxu0 %v704
      %v726 = vpop.f32.mrf.mxu0
      %v727 = vadd.f32 0.0, %v726
      %728 = vdwg.mxu0
      %v730 = vsel %vm699, %v318, 0
      %v733 = vsel %vm699, %v319, 0
      %735 = vmatpush.msra.mxu0 0.0
      %736 = vmatpush.msra.mxu0 0.0
      %737 = vmatpush.msra.mxu0 0.0
      %738 = vmatpush.msra.mxu0 0.0
      %739 = vmatpush.msra.mxu0 0.0
      %740 = vmatpush.msra.mxu0 0.0
      %741 = vmatpush.msra.mxu0 0.0
      %742 = vmatpush.msra.mxu0 0.0
      %743 = vmatpush.msra.mxu0 0.0
      %744 = vmatpush.msra.mxu0 0.0
      %745 = vmatpush.msra.mxu0 0.0
      %746 = vmatpush.msra.mxu0 0.0
      %747 = vmatpush.msra.mxu0 0.0
      %748 = vmatpush.msra.mxu0 0.0
      %749 = vmatpush.msra.mxu0 %v690
      %750 = vmatpush.msra.mxu0 %v689
      %751 = vmatmul.f32.gmra.mxu0 %v730
      %v752 = vpop.f32.mrf.mxu0
      %v753 = vadd.f32 %v724, %v752
      %754 = vmatmul.f32.gmra.mxu0 %v733
      %v755 = vpop.f32.mrf.mxu0
      %v756 = vadd.f32 %v727, %v755
      %757 = vdwg.mxu0
      %758 = vrot.lane.b32.xlu0 %v689, 126
      %v759 = vpop.permute.xlu0 %758
      %760 = vrot.lane.b32.xlu0 %v690, 126
      %v761 = vpop.permute.xlu0 %760
      %v765 = vsel %vm699, %v324, 0
      %v768 = vsel %vm699, %v325, 0
      %770 = vmatpush.msra.mxu0 0.0
      %771 = vmatpush.msra.mxu0 0.0
      %772 = vmatpush.msra.mxu0 0.0
      %773 = vmatpush.msra.mxu0 0.0
      %774 = vmatpush.msra.mxu0 0.0
      %775 = vmatpush.msra.mxu0 0.0
      %776 = vmatpush.msra.mxu0 0.0
      %777 = vmatpush.msra.mxu0 0.0
      %778 = vmatpush.msra.mxu0 0.0
      %779 = vmatpush.msra.mxu0 0.0
      %780 = vmatpush.msra.mxu0 0.0
      %781 = vmatpush.msra.mxu0 0.0
      %782 = vmatpush.msra.mxu0 0.0
      %783 = vmatpush.msra.mxu0 0.0
      %784 = vmatpush.msra.mxu0 %v761
      %785 = vmatpush.msra.mxu0 %v759
      %786 = vmatmul.f32.gmra.mxu0 %v765
      %v787 = vpop.f32.mrf.mxu0
      %v788 = vadd.f32 0.0, %v787
      %789 = vmatmul.f32.gmra.mxu0 %v768
      %v790 = vpop.f32.mrf.mxu0
      %v791 = vadd.f32 0.0, %v790
      %792 = vdwg.mxu0
      %v793 = vadd.f32 %v753, %v788
      %v794 = vadd.f32 %v756, %v791
      %v795 = vld [vmem:[%s685] sm:$0xff]
      %v796 = vld [vmem:[%s685 + $0x8] sm:$0xff]
      %v798 = vsel %vm699, %v327, 0
      %v801 = vsel %vm699, %v328, 0
      %803 = vmatpush.msra.mxu0 0.0
      %804 = vmatpush.msra.mxu0 0.0
      %805 = vmatpush.msra.mxu0 0.0
      %806 = vmatpush.msra.mxu0 0.0
      %807 = vmatpush.msra.mxu0 0.0
      %808 = vmatpush.msra.mxu0 0.0
      %809 = vmatpush.msra.mxu0 0.0
      %810 = vmatpush.msra.mxu0 0.0
      %811 = vmatpush.msra.mxu0 0.0
      %812 = vmatpush.msra.mxu0 0.0
      %813 = vmatpush.msra.mxu0 0.0
      %814 = vmatpush.msra.mxu0 0.0
      %815 = vmatpush.msra.mxu0 0.0
      %816 = vmatpush.msra.mxu0 0.0
      %817 = vmatpush.msra.mxu0 %v796
      %818 = vmatpush.msra.mxu0 %v795
      %819 = vmatmul.f32.gmra.mxu0 %v798
      %v820 = vpop.f32.mrf.mxu0
      %v821 = vadd.f32 0.0, %v820
      %822 = vmatmul.f32.gmra.mxu0 %v801
      %v823 = vpop.f32.mrf.mxu0
      %v824 = vadd.f32 0.0, %v823
      %825 = vdwg.mxu0
      %v826 = vadd.f32 %v793, %v821
      %v827 = vadd.f32 %v794, %v824
      %830 = vrot.lane.b32.xlu0 %v795, 127
      %v831 = vpop.permute.xlu0 %830
      %832 = vrot.lane.b32.xlu0 %v796, 127
      %v833 = vpop.permute.xlu0 %832
      %v837 = vsel %vm699, %v330, 0
      %v840 = vsel %vm699, %v331, 0
      %842 = vmatpush.msra.mxu0 0.0
      %843 = vmatpush.msra.mxu0 0.0
      %844 = vmatpush.msra.mxu0 0.0
      %845 = vmatpush.msra.mxu0 0.0
      %846 = vmatpush.msra.mxu0 0.0
      %847 = vmatpush.msra.mxu0 0.0
      %848 = vmatpush.msra.mxu0 0.0
      %849 = vmatpush.msra.mxu0 0.0
      %850 = vmatpush.msra.mxu0 0.0
      %851 = vmatpush.msra.mxu0 0.0
      %852 = vmatpush.msra.mxu0 0.0
      %853 = vmatpush.msra.mxu0 0.0
      %854 = vmatpush.msra.mxu0 0.0
      %855 = vmatpush.msra.mxu0 0.0
      %856 = vmatpush.msra.mxu0 %v833
      %857 = vmatpush.msra.mxu0 %v831
      %858 = vmatmul.f32.gmra.mxu0 %v837
      %v859 = vpop.f32.mrf.mxu0
      %v860 = vadd.f32 0.0, %v859
      %861 = vmatmul.f32.gmra.mxu0 %v840
      %v862 = vpop.f32.mrf.mxu0
      %v863 = vadd.f32 0.0, %v862
      %864 = vdwg.mxu0
      %v865 = vadd.f32 %v826, %v860
      %v866 = vadd.f32 %v827, %v863
      %867 = vrot.lane.b32.xlu0 %v795, 126
      %v868 = vpop.permute.xlu0 %867
      %869 = vrot.lane.b32.xlu0 %v796, 126
      %v870 = vpop.permute.xlu0 %869
      %v874 = vsel %vm699, %v333, 0
      %v877 = vsel %vm699, %v334, 0
      %879 = vmatpush.msra.mxu0 0.0
      %880 = vmatpush.msra.mxu0 0.0
      %881 = vmatpush.msra.mxu0 0.0
      %882 = vmatpush.msra.mxu0 0.0
      %883 = vmatpush.msra.mxu0 0.0
      %884 = vmatpush.msra.mxu0 0.0
      %885 = vmatpush.msra.mxu0 0.0
      %886 = vmatpush.msra.mxu0 0.0
      %887 = vmatpush.msra.mxu0 0.0
      %888 = vmatpush.msra.mxu0 0.0
      %889 = vmatpush.msra.mxu0 0.0
      %890 = vmatpush.msra.mxu0 0.0
      %891 = vmatpush.msra.mxu0 0.0
      %892 = vmatpush.msra.mxu0 0.0
      %893 = vmatpush.msra.mxu0 %v870
      %894 = vmatpush.msra.mxu0 %v868
      %895 = vmatmul.f32.gmra.mxu0 %v874
      %v896 = vpop.f32.mrf.mxu0
      %v897 = vadd.f32 0.0, %v896
      %898 = vmatmul.f32.gmra.mxu0 %v877
      %v899 = vpop.f32.mrf.mxu0
      %v900 = vadd.f32 0.0, %v899
      %901 = vdwg.mxu0
      %v902 = vadd.f32 %v865, %v897
      %v903 = vadd.f32 %v866, %v900
      %s904 = scalar_lea.vmem [#allocation2], 32
      %v905 = vld [vmem:[%s904] sm:$0xff]
      %v906 = vld [vmem:[%s904 + $0x8] sm:$0xff]
      %v908 = vsel %vm699, %v336, 0
      %v911 = vsel %vm699, %v337, 0
      %913 = vmatpush.msra.mxu0 0.0
      %914 = vmatpush.msra.mxu0 0.0
      %915 = vmatpush.msra.mxu0 0.0
      %916 = vmatpush.msra.mxu0 0.0
      %917 = vmatpush.msra.mxu0 0.0
      %918 = vmatpush.msra.mxu0 0.0
      %919 = vmatpush.msra.mxu0 0.0
      %920 = vmatpush.msra.mxu0 0.0
      %921 = vmatpush.msra.mxu0 0.0
      %922 = vmatpush.msra.mxu0 0.0
      %923 = vmatpush.msra.mxu0 0.0
      %924 = vmatpush.msra.mxu0 0.0
      %925 = vmatpush.msra.mxu0 0.0
      %926 = vmatpush.msra.mxu0 0.0
      %927 = vmatpush.msra.mxu0 %v906
      %928 = vmatpush.msra.mxu0 %v905
      %929 = vmatmul.f32.gmra.mxu0 %v908
      %v930 = vpop.f32.mrf.mxu0
      %v931 = vadd.f32 0.0, %v930
      %932 = vmatmul.f32.gmra.mxu0 %v911
      %v933 = vpop.f32.mrf.mxu0
      %v934 = vadd.f32 0.0, %v933
      %935 = vdwg.mxu0
      %v936 = vadd.f32 %v902, %v931
      %v937 = vadd.f32 %v903, %v934
      %940 = vrot.lane.b32.xlu0 %v905, 127
      %v941 = vpop.permute.xlu0 %940
      %942 = vrot.lane.b32.xlu0 %v906, 127
      %v943 = vpop.permute.xlu0 %942
      %v947 = vsel %vm699, %v339, 0
      %v950 = vsel %vm699, %v340, 0
      %952 = vmatpush.msra.mxu0 0.0
      %953 = vmatpush.msra.mxu0 0.0
      %954 = vmatpush.msra.mxu0 0.0
      %955 = vmatpush.msra.mxu0 0.0
      %956 = vmatpush.msra.mxu0 0.0
      %957 = vmatpush.msra.mxu0 0.0
      %958 = vmatpush.msra.mxu0 0.0
      %959 = vmatpush.msra.mxu0 0.0
      %960 = vmatpush.msra.mxu0 0.0
      %961 = vmatpush.msra.mxu0 0.0
      %962 = vmatpush.msra.mxu0 0.0
      %963 = vmatpush.msra.mxu0 0.0
      %964 = vmatpush.msra.mxu0 0.0
      %965 = vmatpush.msra.mxu0 0.0
      %966 = vmatpush.msra.mxu0 %v943
      %967 = vmatpush.msra.mxu0 %v941
      %968 = vmatmul.f32.gmra.mxu0 %v947
      %v969 = vpop.f32.mrf.mxu0
      %v970 = vadd.f32 0.0, %v969
      %971 = vmatmul.f32.gmra.mxu0 %v950
      %v972 = vpop.f32.mrf.mxu0
      %v973 = vadd.f32 0.0, %v972
      %974 = vdwg.mxu0
      %v975 = vadd.f32 %v936, %v970
      %v976 = vadd.f32 %v937, %v973
      %977 = vrot.lane.b32.xlu0 %v905, 126
      %v978 = vpop.permute.xlu0 %977
      %979 = vrot.lane.b32.xlu0 %v906, 126
      %v980 = vpop.permute.xlu0 %979
      %v984 = vsel %vm699, %v342, 0
      %v987 = vsel %vm699, %v343, 0
      %989 = vmatpush.msra.mxu0 0.0
      %990 = vmatpush.msra.mxu0 0.0
      %991 = vmatpush.msra.mxu0 0.0
      %992 = vmatpush.msra.mxu0 0.0
      %993 = vmatpush.msra.mxu0 0.0
      %994 = vmatpush.msra.mxu0 0.0
      %995 = vmatpush.msra.mxu0 0.0
      %996 = vmatpush.msra.mxu0 0.0
      %997 = vmatpush.msra.mxu0 0.0
      %998 = vmatpush.msra.mxu0 0.0
      %999 = vmatpush.msra.mxu0 0.0
      %1000 = vmatpush.msra.mxu0 0.0
      %1001 = vmatpush.msra.mxu0 0.0
      %1002 = vmatpush.msra.mxu0 0.0
      %1003 = vmatpush.msra.mxu0 %v980
      %1004 = vmatpush.msra.mxu0 %v978
      %1005 = vmatmul.f32.gmra.mxu0 %v984
      %v1006 = vpop.f32.mrf.mxu0
      %v1007 = vadd.f32 0.0, %v1006
      %1008 = vmatmul.f32.gmra.mxu0 %v987
      %v1009 = vpop.f32.mrf.mxu0
      %v1010 = vadd.f32 0.0, %v1009
      %1011 = vdwg.mxu0
      %v1012 = vadd.f32 %v975, %v1007
      %v1013 = vadd.f32 %v976, %v1010
      %v1014 = vadd.f32 %v1012, %v372
      %v1015 = vadd.f32 %v1013, %v373
      %1018 = vrot.lane.b32.xlu0 %v1014, 1
      %v1019 = vpop.permute.xlu0 %1018
      %1020 = vrot.lane.b32.xlu0 %v1015, 1
      %v1021 = vpop.permute.xlu0 %1020
      %s1024 = scalar_lea.vmem [#allocation3], 16
      %1025 = vst.msk [vmem:[%s1024] sm:$0xff] %vm686, %v1019
      %1026 = vst.msk [vmem:[%s1024 + $0x8] sm:$0xff] %vm686, %v1021
      %v1027 = vld [vmem:[#allocation3] sm:$0xff]
      %v1028 = vld [vmem:[#allocation3 + $0x8] sm:$0xff]
      %1031 = vrot.lane.b32.xlu0 %v1027, 127
      %v1032 = vpop.permute.xlu0 %1031
      %1033 = vrot.lane.b32.xlu0 %v1028, 127
      %v1034 = vpop.permute.xlu0 %1033
      %v1038 = vsel %vm699, %v347, 0
      %v1041 = vsel %vm699, %v348, 0
      %1043 = vmatpush.msra.mxu0 0.0
      %1044 = vmatpush.msra.mxu0 0.0
      %1045 = vmatpush.msra.mxu0 0.0
      %1046 = vmatpush.msra.mxu0 0.0
      %1047 = vmatpush.msra.mxu0 0.0
      %1048 = vmatpush.msra.mxu0 0.0
      %1049 = vmatpush.msra.mxu0 0.0
      %1050 = vmatpush.msra.mxu0 0.0
      %1051 = vmatpush.msra.mxu0 0.0
      %1052 = vmatpush.msra.mxu0 0.0
      %1053 = vmatpush.msra.mxu0 0.0
      %1054 = vmatpush.msra.mxu0 0.0
      %1055 = vmatpush.msra.mxu0 0.0
      %1056 = vmatpush.msra.mxu0 0.0
      %1057 = vmatpush.msra.mxu0 %v1034
      %1058 = vmatpush.msra.mxu0 %v1032
      %1059 = vmatmul.f32.gmra.mxu0 %v1038
      %v1060 = vpop.f32.mrf.mxu0
      %v1061 = vadd.f32 0.0, %v1060
      %1062 = vmatmul.f32.gmra.mxu0 %v1041
      %v1063 = vpop.f32.mrf.mxu0
      %v1064 = vadd.f32 0.0, %v1063
      %1065 = vdwg.mxu0
      %v1067 = vsel %vm699, %v344, 0
      %v1070 = vsel %vm699, %v345, 0
      %1072 = vmatpush.msra.mxu0 0.0
      %1073 = vmatpush.msra.mxu0 0.0
      %1074 = vmatpush.msra.mxu0 0.0
      %1075 = vmatpush.msra.mxu0 0.0
      %1076 = vmatpush.msra.mxu0 0.0
      %1077 = vmatpush.msra.mxu0 0.0
      %1078 = vmatpush.msra.mxu0 0.0
      %1079 = vmatpush.msra.mxu0 0.0
      %1080 = vmatpush.msra.mxu0 0.0
      %1081 = vmatpush.msra.mxu0 0.0
      %1082 = vmatpush.msra.mxu0 0.0
      %1083 = vmatpush.msra.mxu0 0.0
      %1084 = vmatpush.msra.mxu0 0.0
      %1085 = vmatpush.msra.mxu0 0.0
      %1086 = vmatpush.msra.mxu0 %v1028
      %1087 = vmatpush.msra.mxu0 %v1027
      %1088 = vmatmul.f32.gmra.mxu0 %v1067
      %v1089 = vpop.f32.mrf.mxu0
      %v1090 = vadd.f32 %v1061, %v1089
      %1091 = vmatmul.f32.gmra.mxu0 %v1070
      %v1092 = vpop.f32.mrf.mxu0
      %v1093 = vadd.f32 %v1064, %v1092
      %1094 = vdwg.mxu0
      %1095 = vrot.lane.b32.xlu0 %v1027, 126
      %v1096 = vpop.permute.xlu0 %1095
      %1097 = vrot.lane.b32.xlu0 %v1028, 126
      %v1098 = vpop.permute.xlu0 %1097
      %v1102 = vsel %vm699, %v350, 0
      %v1105 = vsel %vm699, %v351, 0
      %1107 = vmatpush.msra.mxu0 0.0
      %1108 = vmatpush.msra.mxu0 0.0
      %1109 = vmatpush.msra.mxu0 0.0
      %1110 = vmatpush.msra.mxu0 0.0
      %1111 = vmatpush.msra.mxu0 0.0
      %1112 = vmatpush.msra.mxu0 0.0
      %1113 = vmatpush.msra.mxu0 0.0
      %1114 = vmatpush.msra.mxu0 0.0
      %1115 = vmatpush.msra.mxu0 0.0
      %1116 = vmatpush.msra.mxu0 0.0
      %1117 = vmatpush.msra.mxu0 0.0
      %1118 = vmatpush.msra.mxu0 0.0
      %1119 = vmatpush.msra.mxu0 0.0
      %1120 = vmatpush.msra.mxu0 0.0
      %1121 = vmatpush.msra.mxu0 %v1098
      %1122 = vmatpush.msra.mxu0 %v1096
      %1123 = vmatmul.f32.gmra.mxu0 %v1102
      %v1124 = vpop.f32.mrf.mxu0
      %v1125 = vadd.f32 0.0, %v1124
      %1126 = vmatmul.f32.gmra.mxu0 %v1105
      %v1127 = vpop.f32.mrf.mxu0
      %v1128 = vadd.f32 0.0, %v1127
      %1129 = vdwg.mxu0
      %v1130 = vadd.f32 %v1090, %v1125
      %v1131 = vadd.f32 %v1093, %v1128
      %v1132 = vld [vmem:[%s1024] sm:$0xff]
      %v1133 = vld [vmem:[%s1024 + $0x8] sm:$0xff]
      %v1135 = vsel %vm699, %v353, 0
      %v1138 = vsel %vm699, %v354, 0
      %1140 = vmatpush.msra.mxu0 0.0
      %1141 = vmatpush.msra.mxu0 0.0
      %1142 = vmatpush.msra.mxu0 0.0
      %1143 = vmatpush.msra.mxu0 0.0
      %1144 = vmatpush.msra.mxu0 0.0
      %1145 = vmatpush.msra.mxu0 0.0
      %1146 = vmatpush.msra.mxu0 0.0
      %1147 = vmatpush.msra.mxu0 0.0
      %1148 = vmatpush.msra.mxu0 0.0
      %1149 = vmatpush.msra.mxu0 0.0
      %1150 = vmatpush.msra.mxu0 0.0
      %1151 = vmatpush.msra.mxu0 0.0
      %1152 = vmatpush.msra.mxu0 0.0
      %1153 = vmatpush.msra.mxu0 0.0
      %1154 = vmatpush.msra.mxu0 %v1133
      %1155 = vmatpush.msra.mxu0 %v1132
      %1156 = vmatmul.f32.gmra.mxu0 %v1135
      %v1157 = vpop.f32.mrf.mxu0
      %v1158 = vadd.f32 0.0, %v1157
      %1159 = vmatmul.f32.gmra.mxu0 %v1138
      %v1160 = vpop.f32.mrf.mxu0
      %v1161 = vadd.f32 0.0, %v1160
      %1162 = vdwg.mxu0
      %v1163 = vadd.f32 %v1130, %v1158
      %v1164 = vadd.f32 %v1131, %v1161
      %1167 = vrot.lane.b32.xlu0 %v1132, 127
      %v1168 = vpop.permute.xlu0 %1167
      %1169 = vrot.lane.b32.xlu0 %v1133, 127
      %v1170 = vpop.permute.xlu0 %1169
      %v1174 = vsel %vm699, %v356, 0
      %v1177 = vsel %vm699, %v357, 0
      %1179 = vmatpush.msra.mxu0 0.0
      %1180 = vmatpush.msra.mxu0 0.0
      %1181 = vmatpush.msra.mxu0 0.0
      %1182 = vmatpush.msra.mxu0 0.0
      %1183 = vmatpush.msra.mxu0 0.0
      %1184 = vmatpush.msra.mxu0 0.0
      %1185 = vmatpush.msra.mxu0 0.0
      %1186 = vmatpush.msra.mxu0 0.0
      %1187 = vmatpush.msra.mxu0 0.0
      %1188 = vmatpush.msra.mxu0 0.0
      %1189 = vmatpush.msra.mxu0 0.0
      %1190 = vmatpush.msra.mxu0 0.0
      %1191 = vmatpush.msra.mxu0 0.0
      %1192 = vmatpush.msra.mxu0 0.0
      %1193 = vmatpush.msra.mxu0 %v1170
      %1194 = vmatpush.msra.mxu0 %v1168
      %1195 = vmatmul.f32.gmra.mxu0 %v1174
      %v1196 = vpop.f32.mrf.mxu0
      %v1197 = vadd.f32 0.0, %v1196
      %1198 = vmatmul.f32.gmra.mxu0 %v1177
      %v1199 = vpop.f32.mrf.mxu0
      %v1200 = vadd.f32 0.0, %v1199
      %1201 = vdwg.mxu0
      %v1202 = vadd.f32 %v1163, %v1197
      %v1203 = vadd.f32 %v1164, %v1200
      %1204 = vrot.lane.b32.xlu0 %v1132, 126
      %v1205 = vpop.permute.xlu0 %1204
      %1206 = vrot.lane.b32.xlu0 %v1133, 126
      %v1207 = vpop.permute.xlu0 %1206
      %v1211 = vsel %vm699, %v359, 0
      %v1214 = vsel %vm699, %v360, 0
      %1216 = vmatpush.msra.mxu0 0.0
      %1217 = vmatpush.msra.mxu0 0.0
      %1218 = vmatpush.msra.mxu0 0.0
      %1219 = vmatpush.msra.mxu0 0.0
      %1220 = vmatpush.msra.mxu0 0.0
      %1221 = vmatpush.msra.mxu0 0.0
      %1222 = vmatpush.msra.mxu0 0.0
      %1223 = vmatpush.msra.mxu0 0.0
      %1224 = vmatpush.msra.mxu0 0.0
      %1225 = vmatpush.msra.mxu0 0.0
      %1226 = vmatpush.msra.mxu0 0.0
      %1227 = vmatpush.msra.mxu0 0.0
      %1228 = vmatpush.msra.mxu0 0.0
      %1229 = vmatpush.msra.mxu0 0.0
      %1230 = vmatpush.msra.mxu0 %v1207
      %1231 = vmatpush.msra.mxu0 %v1205
      %1232 = vmatmul.f32.gmra.mxu0 %v1211
      %v1233 = vpop.f32.mrf.mxu0
      %v1234 = vadd.f32 0.0, %v1233
      %1235 = vmatmul.f32.gmra.mxu0 %v1214
      %v1236 = vpop.f32.mrf.mxu0
      %v1237 = vadd.f32 0.0, %v1236
      %1238 = vdwg.mxu0
      %v1239 = vadd.f32 %v1202, %v1234
      %v1240 = vadd.f32 %v1203, %v1237
      %s1241 = scalar_lea.vmem [#allocation3], 32
      %v1242 = vld [vmem:[%s1241] sm:$0xff]
      %v1243 = vld [vmem:[%s1241 + $0x8] sm:$0xff]
      %v1245 = vsel %vm699, %v362, 0
      %v1248 = vsel %vm699, %v363, 0
      %1250 = vmatpush.msra.mxu0 0.0
      %1251 = vmatpush.msra.mxu0 0.0
      %1252 = vmatpush.msra.mxu0 0.0
      %1253 = vmatpush.msra.mxu0 0.0
      %1254 = vmatpush.msra.mxu0 0.0
      %1255 = vmatpush.msra.mxu0 0.0
      %1256 = vmatpush.msra.mxu0 0.0
      %1257 = vmatpush.msra.mxu0 0.0
      %1258 = vmatpush.msra.mxu0 0.0
      %1259 = vmatpush.msra.mxu0 0.0
      %1260 = vmatpush.msra.mxu0 0.0
      %1261 = vmatpush.msra.mxu0 0.0
      %1262 = vmatpush.msra.mxu0 0.0
      %1263 = vmatpush.msra.mxu0 0.0
      %1264 = vmatpush.msra.mxu0 %v1243
      %1265 = vmatpush.msra.mxu0 %v1242
      %1266 = vmatmul.f32.gmra.mxu0 %v1245
      %v1267 = vpop.f32.mrf.mxu0
      %v1268 = vadd.f32 0.0, %v1267
      %1269 = vmatmul.f32.gmra.mxu0 %v1248
      %v1270 = vpop.f32.mrf.mxu0
      %v1271 = vadd.f32 0.0, %v1270
      %1272 = vdwg.mxu0
      %v1273 = vadd.f32 %v1239, %v1268
      %v1274 = vadd.f32 %v1240, %v1271
      %1277 = vrot.lane.b32.xlu0 %v1242, 127
      %v1278 = vpop.permute.xlu0 %1277
      %1279 = vrot.lane.b32.xlu0 %v1243, 127
      %v1280 = vpop.permute.xlu0 %1279
      %v1284 = vsel %vm699, %v365, 0
      %v1287 = vsel %vm699, %v366, 0
      %1289 = vmatpush.msra.mxu0 0.0
      %1290 = vmatpush.msra.mxu0 0.0
      %1291 = vmatpush.msra.mxu0 0.0
      %1292 = vmatpush.msra.mxu0 0.0
      %1293 = vmatpush.msra.mxu0 0.0
      %1294 = vmatpush.msra.mxu0 0.0
      %1295 = vmatpush.msra.mxu0 0.0
      %1296 = vmatpush.msra.mxu0 0.0
      %1297 = vmatpush.msra.mxu0 0.0
      %1298 = vmatpush.msra.mxu0 0.0
      %1299 = vmatpush.msra.mxu0 0.0
      %1300 = vmatpush.msra.mxu0 0.0
      %1301 = vmatpush.msra.mxu0 0.0
      %1302 = vmatpush.msra.mxu0 0.0
      %1303 = vmatpush.msra.mxu0 %v1280
      %1304 = vmatpush.msra.mxu0 %v1278
      %1305 = vmatmul.f32.gmra.mxu0 %v1284
      %v1306 = vpop.f32.mrf.mxu0
      %v1307 = vadd.f32 0.0, %v1306
      %1308 = vmatmul.f32.gmra.mxu0 %v1287
      %v1309 = vpop.f32.mrf.mxu0
      %v1310 = vadd.f32 0.0, %v1309
      %1311 = vdwg.mxu0
      %v1312 = vadd.f32 %v1273, %v1307
      %v1313 = vadd.f32 %v1274, %v1310
      %1314 = vrot.lane.b32.xlu0 %v1242, 126
      %v1315 = vpop.permute.xlu0 %1314
      %1316 = vrot.lane.b32.xlu0 %v1243, 126
      %v1317 = vpop.permute.xlu0 %1316
      %v1321 = vsel %vm699, %v368, 0
      %v1324 = vsel %vm699, %v369, 0
      %1326 = vmatpush.msra.mxu0 0.0
      %1327 = vmatpush.msra.mxu0 0.0
      %1328 = vmatpush.msra.mxu0 0.0
      %1329 = vmatpush.msra.mxu0 0.0
      %1330 = vmatpush.msra.mxu0 0.0
      %1331 = vmatpush.msra.mxu0 0.0
      %1332 = vmatpush.msra.mxu0 0.0
      %1333 = vmatpush.msra.mxu0 0.0
      %1334 = vmatpush.msra.mxu0 0.0
      %1335 = vmatpush.msra.mxu0 0.0
      %1336 = vmatpush.msra.mxu0 0.0
      %1337 = vmatpush.msra.mxu0 0.0
      %1338 = vmatpush.msra.mxu0 0.0
      %1339 = vmatpush.msra.mxu0 0.0
      %1340 = vmatpush.msra.mxu0 %v1317
      %1341 = vmatpush.msra.mxu0 %v1315
      %1342 = vmatmul.f32.gmra.mxu0 %v1321
      %v1343 = vpop.f32.mrf.mxu0
      %v1344 = vadd.f32 0.0, %v1343
      %1345 = vmatmul.f32.gmra.mxu0 %v1324
      %v1346 = vpop.f32.mrf.mxu0
      %v1347 = vadd.f32 0.0, %v1346
      %1348 = vdwg.mxu0
      %v1349 = vadd.f32 %v1312, %v1344
      %v1350 = vadd.f32 %v1313, %v1347
      %v1351 = vadd.f32 %v1349, %v374
      %v1352 = vadd.f32 %v1350, %v375
      %vm1353 = vcmask 7168
      %1354 = vst.msk [vmem:[%s278] sm:$0xff] %vm1353, %v1351
      %1355 = vst.msk [vmem:[%s278 + $0x8] sm:$0xff] %vm1353, %v1352
      %p1356 = scmp.lt.s32.totalorder %s18, 3
      %s1357 = scalar_select %p1356, %s18, 3
      %s1358 = smul.addr %s1357, 2
      %s1359 = smul.addr %s1358, 8
      %s1360 = scalar_lea.vmem %s7, %s1359
      // Predicated region
      $region49: #{_lambda_.9} parent=47 // pred_check
        %p1361 = pneg %p188
      $region50: #{_lambda_.9} parent=47 // pred_check_branch
        %1363 = sbr.rel (%p1361) target = $region52
      $region51: #{_lambda_.9} parent=47 // pred_region
        _
      $region52: #{_lambda_.9} parent=47 // pred_fallthru
        _
    $region48: #{_lambda_.9} parent=5 // pred_fallthru
      _
    %p1364 = scmp.le.s32.totalorder 2, %s13
    // Predicated region
    $region53: #{_lambda_.9} parent=5 // pred_check
      %p1365 = pneg %p1364
    $region54: #{_lambda_.9} parent=5 // pred_check_branch
      %1367 = sbr.rel (%p1365) target = $region56
    $region55: #{_lambda_.9} parent=5 // pred_region
      %s1368 = ssub.s32 %s13, 2
      // Predicated region
      $region57: #{_lambda_.9} parent=55 // pred_check
        %p1369 = pneg %p194
      $region58: #{_lambda_.9} parent=55 // pred_check_branch
        %1371 = sbr.rel (%p1369) target = $region60
      $region59: #{_lambda_.9} parent=55 // pred_region
        %p1372 = scmp.lt.s32.totalorder %s19, 3
        %s1373 = scalar_select %p1372, %s19, 3
        %s1374 = smul.addr %s1373, 2
        %s1375 = smul.addr %s1374, 8
        %s1376 = scalar_lea.vmem %s7, %s1375
      $region60: #{_lambda_.9} parent=55 // pred_fallthru
        _
    $region56: #{_lambda_.9} parent=5 // pred_fallthru
      _
  $region6: #{_lambda_.9} parent=0 // loop_footer
    %s17 = sadd.s32 1, %s13
  $region7: #{_lambda_.9} parent=0 // loop_footer_branch
    %12 = sbr.rel target = $region3
  $region8: #{_lambda_.9} parent=0 // loop_exit
    _

// kernel: _lambda_.10
$region0: #{_lambda_.10}
  #allocation0 [shape = 'u32[]', space=smem, size = 0x4, offset = 0x4, fixed_abs, tag = 'smem constant byte address 0x4 - core index']
  #allocation1 [shape = 'u32[72,128]{1,0:T(1,128)}', space=vmem, size = 0x9000, scoped, tag = 'internal scratch']
  #allocation2 [shape = 'f32[3,16,3]{2,1,0:T(8,128)}', space=vmem, size = 0x6000, scoped, tag = 'scratch operand']
  #allocation3 [shape = 'f32[3,16,3]{2,1,0:T(8,128)}', space=vmem, size = 0x6000, scoped, tag = 'scratch operand']
  %s0 = inlined_call_operand.vmem [shape: f32[4,2,4,16,2], index: 0, kind: input, shape index: {}]
  %s1 = inlined_call_operand.vmem [shape: f32[3,3,16,16], index: 1, kind: input, shape index: {}]
  %s2 = inlined_call_operand.vmem [shape: f32[16,1], index: 2, kind: input, shape index: {}, may-alias: {2,4,6}]
  %s3 = inlined_call_operand.vmem [shape: f32[3,3,16,16], index: 3, kind: input, shape index: {}]
  %s4 = inlined_call_operand.vmem [shape: f32[16,1], index: 4, kind: input, shape index: {}, may-alias: {2,4,6}]
  %s5 = inlined_call_operand.vmem [shape: f32[3,3,16,16], index: 5, kind: input, shape index: {}]
  %s6 = inlined_call_operand.vmem [shape: f32[16,1], index: 6, kind: input, shape index: {}, may-alias: {2,4,6}]
  %s7 = inlined_call_operand.vmem [shape: f32[4,1,16,1], index: 7, kind: output, shape index: {}]
  %s8 = sld [smem:[#allocation0]]
  $region61: #{_lambda_.10} parent=0
    _
  %s10 = ssub.s32 1, %s8
  %s11 = scalar_select 0, %s10, %s8
  loop: start=0, step=1, limit=6
  $region2: #{_lambda_.10} parent=0 // loop_pre_header
    _
  $region3: #{_lambda_.10} parent=0 // loop_header
    %s13 = sphi 0, %s17
    %p14 = scmp.ge.s32.totalorder %s13, 6
    %s23 = sphi 0, %s25
    %s26 = sphi 0, %s23
    %s27 = sphi 0, %s26
    %s43 = sphi 0, %s27
    %s47 = sphi 0, %s47
    %s49 = sphi 0, %s47
    %s50 = sphi 0, %s49
    %s64 = sphi 0, %s50
    %s68 = sphi 0, %s68
    %s70 = sphi 0, %s68
    %s71 = sphi 0, %s70
    %s85 = sphi 0, %s71
    %s89 = sphi 0, %s89
    %s91 = sphi 0, %s89
    %s92 = sphi 0, %s91
    %s106 = sphi 0, %s92
    %s110 = sphi 0, %s110
    %s112 = sphi 0, %s110
    %s113 = sphi 0, %s112
    %s127 = sphi 0, %s113
    %s131 = sphi 0, %s131
    %s133 = sphi 0, %s131
    %s134 = sphi 0, %s133
    %s148 = sphi 0, %s134
    %s152 = sphi 0, %s152
    %s154 = sphi 0, %s152
    %s155 = sphi 0, %s154
    %s169 = sphi 0, %s155
    %s175 = sphi 0, %s177
    %s178 = sphi 0, %s175
    %s179 = sphi 0, %s178
    %s195 = sphi 0, %s179
  $region4: #{_lambda_.10} parent=0 // loop_header_branch
    %16 = sbr.rel (%p14) target = $region8
  $region5: #{_lambda_.10} parent=0 // loop_body
    %s18 = ssub.s32 %s13, 1
    %s19 = ssub.s32 %s13, 2
    %s20 = sadd.s32 %s13, 1
    %s21 = ssub.s32 %s13, %s20
    %p22 = scmp.eq.s32.totalorder %s21, 0
    %s24 = sadd.s32 %s23, 1
    %s25 = scalar_select %p22, %s23, %s24
    %p28 = pneg %p22
    %p29 = scmp.eq.s32.totalorder %s13, 3
    %p30 = por %p28, %p29
    %p31 = scmp.ne.s32.totalorder %s23, %s26
    %p32 = scmp.eq.s32.totalorder %s13, 0
    %p33 = por %p31, %p32
    %p34 = scmp.ne.s32.totalorder %s23, %s26
    %p35 = scmp.eq.s32.totalorder %s18, 3
    %p36 = por %p34, %p35
    %p37 = scmp.ne.s32.totalorder %s26, %s27
    %p38 = scmp.eq.s32.totalorder %s18, 0
    %p39 = por %p37, %p38
    %p40 = scmp.ne.s32.totalorder %s26, %s27
    %p41 = scmp.eq.s32.totalorder %s19, 3
    %p42 = por %p40, %p41
    %p44 = scmp.ne.s32.totalorder %s27, %s43
    %p45 = scmp.eq.s32.totalorder %s19, 0
    %p46 = por %p44, %p45
    %s48 = sadd.s32 %s47, 1
    %p51 = scmp.eq.s32.totalorder %s13, 3
    %p52 = scmp.ne.s32.totalorder %s47, %s49
    %p53 = scmp.eq.s32.totalorder %s13, 0
    %p54 = por %p52, %p53
    %p55 = scmp.ne.s32.totalorder %s47, %s49
    %p56 = scmp.eq.s32.totalorder %s18, 3
    %p57 = por %p55, %p56
    %p58 = scmp.ne.s32.totalorder %s49, %s50
    %p59 = scmp.eq.s32.totalorder %s18, 0
    %p60 = por %p58, %p59
    %p61 = scmp.ne.s32.totalorder %s49, %s50
    %p62 = scmp.eq.s32.totalorder %s19, 3
    %p63 = por %p61, %p62
    %p65 = scmp.ne.s32.totalorder %s50, %s64
    %p66 = scmp.eq.s32.totalorder %s19, 0
    %p67 = por %p65, %p66
    %s69 = sadd.s32 %s68, 1
    %p72 = scmp.eq.s32.totalorder %s13, 3
    %p73 = scmp.ne.s32.totalorder %s68, %s70
    %p74 = scmp.eq.s32.totalorder %s13, 0
    %p75 = por %p73, %p74
    %p76 = scmp.ne.s32.totalorder %s68, %s70
    %p77 = scmp.eq.s32.totalorder %s18, 3
    %p78 = por %p76, %p77
    %p79 = scmp.ne.s32.totalorder %s70, %s71
    %p80 = scmp.eq.s32.totalorder %s18, 0
    %p81 = por %p79, %p80
    %p82 = scmp.ne.s32.totalorder %s70, %s71
    %p83 = scmp.eq.s32.totalorder %s19, 3
    %p84 = por %p82, %p83
    %p86 = scmp.ne.s32.totalorder %s71, %s85
    %p87 = scmp.eq.s32.totalorder %s19, 0
    %p88 = por %p86, %p87
    %s90 = sadd.s32 %s89, 1
    %p93 = scmp.eq.s32.totalorder %s13, 3
    %p94 = scmp.ne.s32.totalorder %s89, %s91
    %p95 = scmp.eq.s32.totalorder %s13, 0
    %p96 = por %p94, %p95
    %p97 = scmp.ne.s32.totalorder %s89, %s91
    %p98 = scmp.eq.s32.totalorder %s18, 3
    %p99 = por %p97, %p98
    %p100 = scmp.ne.s32.totalorder %s91, %s92
    %p101 = scmp.eq.s32.totalorder %s18, 0
    %p102 = por %p100, %p101
    %p103 = scmp.ne.s32.totalorder %s91, %s92
    %p104 = scmp.eq.s32.totalorder %s19, 3
    %p105 = por %p103, %p104
    %p107 = scmp.ne.s32.totalorder %s92, %s106
    %p108 = scmp.eq.s32.totalorder %s19, 0
    %p109 = por %p107, %p108
    %s111 = sadd.s32 %s110, 1
    %p114 = scmp.eq.s32.totalorder %s13, 3
    %p115 = scmp.ne.s32.totalorder %s110, %s112
    %p116 = scmp.eq.s32.totalorder %s13, 0
    %p117 = por %p115, %p116
    %p118 = scmp.ne.s32.totalorder %s110, %s112
    %p119 = scmp.eq.s32.totalorder %s18, 3
    %p120 = por %p118, %p119
    %p121 = scmp.ne.s32.totalorder %s112, %s113
    %p122 = scmp.eq.s32.totalorder %s18, 0
    %p123 = por %p121, %p122
    %p124 = scmp.ne.s32.totalorder %s112, %s113
    %p125 = scmp.eq.s32.totalorder %s19, 3
    %p126 = por %p124, %p125
    %p128 = scmp.ne.s32.totalorder %s113, %s127
    %p129 = scmp.eq.s32.totalorder %s19, 0
    %p130 = por %p128, %p129
    %s132 = sadd.s32 %s131, 1
    %p135 = scmp.eq.s32.totalorder %s13, 3
    %p136 = scmp.ne.s32.totalorder %s131, %s133
    %p137 = scmp.eq.s32.totalorder %s13, 0
    %p138 = por %p136, %p137
    %p139 = scmp.ne.s32.totalorder %s131, %s133
    %p140 = scmp.eq.s32.totalorder %s18, 3
    %p141 = por %p139, %p140
    %p142 = scmp.ne.s32.totalorder %s133, %s134
    %p143 = scmp.eq.s32.totalorder %s18, 0
    %p144 = por %p142, %p143
    %p145 = scmp.ne.s32.totalorder %s133, %s134
    %p146 = scmp.eq.s32.totalorder %s19, 3
    %p147 = por %p145, %p146
    %p149 = scmp.ne.s32.totalorder %s134, %s148
    %p150 = scmp.eq.s32.totalorder %s19, 0
    %p151 = por %p149, %p150
    %s153 = sadd.s32 %s152, 1
    %p156 = scmp.eq.s32.totalorder %s13, 3
    %p157 = scmp.ne.s32.totalorder %s152, %s154
    %p158 = scmp.eq.s32.totalorder %s13, 0
    %p159 = por %p157, %p158
    %p160 = scmp.ne.s32.totalorder %s152, %s154
    %p161 = scmp.eq.s32.totalorder %s18, 3
    %p162 = por %p160, %p161
    %p163 = scmp.ne.s32.totalorder %s154, %s155
    %p164 = scmp.eq.s32.totalorder %s18, 0
    %p165 = por %p163, %p164
    %p166 = scmp.ne.s32.totalorder %s154, %s155
    %p167 = scmp.eq.s32.totalorder %s19, 3
    %p168 = por %p166, %p167
    %p170 = scmp.ne.s32.totalorder %s155, %s169
    %p171 = scmp.eq.s32.totalorder %s19, 0
    %p172 = por %p170, %p171
    %s173 = ssub.s32 %s13, %s20
    %p174 = scmp.eq.s32.totalorder %s173, 0
    %s176 = sadd.s32 %s175, 1
    %s177 = scalar_select %p174, %s175, %s176
    %p180 = pneg %p174
    %p181 = scmp.eq.s32.totalorder %s13, 3
    %p182 = por %p180, %p181
    %p183 = scmp.ne.s32.totalorder %s175, %s178
    %p184 = scmp.eq.s32.totalorder %s13, 0
    %p185 = por %p183, %p184
    %p186 = scmp.ne.s32.totalorder %s175, %s178
    %p187 = scmp.eq.s32.totalorder %s18, 3
    %p188 = por %p186, %p187
    %p189 = scmp.ne.s32.totalorder %s178, %s179
    %p190 = scmp.eq.s32.totalorder %s18, 0
    %p191 = por %p189, %p190
    %p192 = scmp.ne.s32.totalorder %s178, %s179
    %p193 = scmp.eq.s32.totalorder %s19, 3
    %p194 = por %p192, %p193
    %p196 = scmp.ne.s32.totalorder %s179, %s195
    %p197 = scmp.eq.s32.totalorder %s19, 0
    %p198 = por %p196, %p197
    %p199 = scmp.le.s32.totalorder 1, %s13
    %p200 = scmp.lt.s32.totalorder %s13, 5
    %p201 = pnand %p199, %p200
    %p202 = pneg %p201
    // Predicated region
    $region9: #{_lambda_.10} parent=5 // pred_check
      _
    $region10: #{_lambda_.10} parent=5 // pred_check_branch
      %204 = sbr.rel (%p201) target = $region12
    $region11: #{_lambda_.10} parent=5 // pred_region
      %s205 = ssub.s32 %s13, 1
      // Predicated region
      $region13: #{_lambda_.10} parent=11 // pred_check
        %p206 = pneg %p60
      $region14: #{_lambda_.10} parent=11 // pred_check_branch
        %208 = sbr.rel (%p206) target = $region16
      $region15: #{_lambda_.10} parent=11 // pred_region
        _
      $region16: #{_lambda_.10} parent=11 // pred_fallthru
        _
      // Predicated region
      $region17: #{_lambda_.10} parent=11 // pred_check
        %p209 = pneg %p81
      $region18: #{_lambda_.10} parent=11 // pred_check_branch
        %211 = sbr.rel (%p209) target = $region20
      $region19: #{_lambda_.10} parent=11 // pred_region
        _
      $region20: #{_lambda_.10} parent=11 // pred_fallthru
        _
      // Predicated region
      $region21: #{_lambda_.10} parent=11 // pred_check
        %p212 = pneg %p102
      $region22: #{_lambda_.10} parent=11 // pred_check_branch
        %214 = sbr.rel (%p212) target = $region24
      $region23: #{_lambda_.10} parent=11 // pred_region
        _
      $region24: #{_lambda_.10} parent=11 // pred_fallthru
        _
      // Predicated region
      $region25: #{_lambda_.10} parent=11 // pred_check
        %p215 = pneg %p123
      $region26: #{_lambda_.10} parent=11 // pred_check_branch
        %217 = sbr.rel (%p215) target = $region28
      $region27: #{_lambda_.10} parent=11 // pred_region
        _
      $region28: #{_lambda_.10} parent=11 // pred_fallthru
        _
      // Predicated region
      $region29: #{_lambda_.10} parent=11 // pred_check
        %p218 = pneg %p144
      $region30: #{_lambda_.10} parent=11 // pred_check_branch
        %220 = sbr.rel (%p218) target = $region32
      $region31: #{_lambda_.10} parent=11 // pred_region
        _
      $region32: #{_lambda_.10} parent=11 // pred_fallthru
        _
      // Predicated region
      $region33: #{_lambda_.10} parent=11 // pred_check
        %p221 = pneg %p165
      $region34: #{_lambda_.10} parent=11 // pred_check_branch
        %223 = sbr.rel (%p221) target = $region36
      $region35: #{_lambda_.10} parent=11 // pred_region
        _
      $region36: #{_lambda_.10} parent=11 // pred_fallthru
        _
    $region12: #{_lambda_.10} parent=5 // pred_fallthru
      _
    %p224 = scmp.lt.s32.totalorder %s13, 4
    // Predicated region
    $region37: #{_lambda_.10} parent=5 // pred_check
      %p225 = pneg %p224
    $region38: #{_lambda_.10} parent=5 // pred_check_branch
      %227 = sbr.rel (%p225) target = $region40
    $region39: #{_lambda_.10} parent=5 // pred_region
      // Predicated region
      $region41: #{_lambda_.10} parent=39 // pred_check
        %p228 = pneg %p33
      $region42: #{_lambda_.10} parent=39 // pred_check_branch
        %230 = sbr.rel (%p228) target = $region44
      $region43: #{_lambda_.10} parent=39 // pred_region
        %p231 = scmp.lt.s32.totalorder %s13, 3
        %s232 = scalar_select %p231, %s13, 3
        %s233 = smul.addr %s232, 16
        %s234 = smul.addr %s233, 8
        %s235 = scalar_lea.vmem %s0, %s234
      $region44: #{_lambda_.10} parent=39 // pred_fallthru
        _
    $region40: #{_lambda_.10} parent=5 // pred_fallthru
      _
    %p236 = scmp.le.s32.totalorder 1, %s13
    %p237 = scmp.lt.s32.totalorder %s13, 5
    %p238 = pnand %p236, %p237
    %p239 = pneg %p238
    // Predicated region
    $region45: #{_lambda_.10} parent=5 // pred_check
      _
    $region46: #{_lambda_.10} parent=5 // pred_check_branch
      %241 = sbr.rel (%p238) target = $region48
    $region47: #{_lambda_.10} parent=5 // pred_region
      %s242 = ssub.s32 %s13, 1
      %p243 = scmp.lt.s32.totalorder %s18, 3
      %s244 = scalar_select %p243, %s18, 3
      %s245 = smul.addr %s244, 16
      %s246 = smul.addr %s245, 8
      %s247 = scalar_lea.vmem %s0, %s246
      %p248 = pneg %p39
      %p249 = pneg %p36
      %p250 = pneg %p60
      %p251 = pneg %p57
      %p252 = pneg %p81
      %p253 = pneg %p78
      %p254 = pneg %p102
      %p255 = pneg %p99
      %p256 = pneg %p123
      %p257 = pneg %p120
      %p258 = pneg %p144
      %p259 = pneg %p141
      %p260 = pneg %p165
      %p261 = pneg %p162
      %p262 = pneg %p191
      %p263 = pneg %p188
      %p264 = scmp.lt.s32.totalorder %s18, 3
      %s265 = scalar_select %p264, %s18, 3
      %s266 = smul.addr %s265, 2
      %s267 = smul.addr %s266, 8
      %s268 = scalar_lea.vmem %s7, %s267
      %p269 = scmp.lt.s32.totalorder %s18, 3
      %s270 = scalar_select %p269, %s18, 3
      %s271 = smul.addr %s270, 16
      %s272 = smul.addr %s271, 8
      %s273 = scalar_lea.vmem %s0, %s272
      %p274 = scmp.lt.s32.totalorder %s18, 3
      %s275 = scalar_select %p274, %s18, 3
      %s276 = smul.addr %s275, 2
      %s277 = smul.addr %s276, 8
      %s278 = scalar_lea.vmem %s7, %s277
      %vm279 = vcmask 23552
      %280 = vst.msk [vmem:[#allocation2] sm:$0xff] %vm279, 0.0
      %281 = vst.msk [vmem:[#allocation2 + $0x8] sm:$0xff] %vm279, 0.0
      %282 = vst.msk [vmem:[#allocation2 + $0x10] sm:$0xff] %vm279, 0.0
      %283 = vst.msk [vmem:[#allocation2 + $0x18] sm:$0xff] %vm279, 0.0
      %284 = vst.msk [vmem:[#allocation2 + $0x20] sm:$0xff] %vm279, 0.0
      %285 = vst.msk [vmem:[#allocation2 + $0x28] sm:$0xff] %vm279, 0.0
      %286 = vst.msk [vmem:[#allocation3] sm:$0xff] %vm279, 0.0
      %287 = vst.msk [vmem:[#allocation3 + $0x8] sm:$0xff] %vm279, 0.0
      %288 = vst.msk [vmem:[#allocation3 + $0x10] sm:$0xff] %vm279, 0.0
      %289 = vst.msk [vmem:[#allocation3 + $0x18] sm:$0xff] %vm279, 0.0
      %290 = vst.msk [vmem:[#allocation3 + $0x20] sm:$0xff] %vm279, 0.0
      %291 = vst.msk [vmem:[#allocation3 + $0x28] sm:$0xff] %vm279, 0.0
      %v292 = vld [vmem:[%s1] sm:$0xff]
      %v293 = vld [vmem:[%s1 + $0x8] sm:$0xff]
      %s294 = scalar_lea.vmem %s1, 16
      %v295 = vld [vmem:[%s294] sm:$0xff]
      %v296 = vld [vmem:[%s294 + $0x8] sm:$0xff]
      %s297 = scalar_lea.vmem %s1, 32
      %v298 = vld [vmem:[%s297] sm:$0xff]
      %v299 = vld [vmem:[%s297 + $0x8] sm:$0xff]
      %s300 = scalar_lea.vmem %s1, 48
      %v301 = vld [vmem:[%s300] sm:$0xff]
      %v302 = vld [vmem:[%s300 + $0x8] sm:$0xff]
      %s303 = scalar_lea.vmem %s1, 64
      %v304 = vld [vmem:[%s303] sm:$0xff]
      %v305 = vld [vmem:[%s303 + $0x8] sm:$0xff]
      %s306 = scalar_lea.vmem %s1, 80
      %v307 = vld [vmem:[%s306] sm:$0xff]
      %v308 = vld [vmem:[%s306 + $0x8] sm:$0xff]
      %s309 = scalar_lea.vmem %s1, 96
      %v310 = vld [vmem:[%s309] sm:$0xff]
      %v311 = vld [vmem:[%s309 + $0x8] sm:$0xff]
      %s312 = scalar_lea.vmem %s1, 112
      %v313 = vld [vmem:[%s312] sm:$0xff]
      %v314 = vld [vmem:[%s312 + $0x8] sm:$0xff]
      %s315 = scalar_lea.vmem %s1, 128
      %v316 = vld [vmem:[%s315] sm:$0xff]
      %v317 = vld [vmem:[%s315 + $0x8] sm:$0xff]
      %v318 = vld [vmem:[%s3] sm:$0xff]
      %v319 = vld [vmem:[%s3 + $0x8] sm:$0xff]
      %s320 = scalar_lea.vmem %s3, 16
      %v321 = vld [vmem:[%s320] sm:$0xff]
      %v322 = vld [vmem:[%s320 + $0x8] sm:$0xff]
      %s323 = scalar_lea.vmem %s3, 32
      %v324 = vld [vmem:[%s323] sm:$0xff]
      %v325 = vld [vmem:[%s323 + $0x8] sm:$0xff]
      %s326 = scalar_lea.vmem %s3, 48
      %v327 = vld [vmem:[%s326] sm:$0xff]
      %v328 = vld [vmem:[%s326 + $0x8] sm:$0xff]
      %s329 = scalar_lea.vmem %s3, 64
      %v330 = vld [vmem:[%s329] sm:$0xff]
      %v331 = vld [vmem:[%s329 + $0x8] sm:$0xff]
      %s332 = scalar_lea.vmem %s3, 80
      %v333 = vld [vmem:[%s332] sm:$0xff]
      %v334 = vld [vmem:[%s332 + $0x8] sm:$0xff]
      %s335 = scalar_lea.vmem %s3, 96
      %v336 = vld [vmem:[%s335] sm:$0xff]
      %v337 = vld [vmem:[%s335 + $0x8] sm:$0xff]
      %s338 = scalar_lea.vmem %s3, 112
      %v339 = vld [vmem:[%s338] sm:$0xff]
      %v340 = vld [vmem:[%s338 + $0x8] sm:$0xff]
      %s341 = scalar_lea.vmem %s3, 128
      %v342 = vld [vmem:[%s341] sm:$0xff]
      %v343 = vld [vmem:[%s341 + $0x8] sm:$0xff]
      %v344 = vld [vmem:[%s5] sm:$0xff]
      %v345 = vld [vmem:[%s5 + $0x8] sm:$0xff]
      %s346 = scalar_lea.vmem %s5, 16
      %v347 = vld [vmem:[%s346] sm:$0xff]
      %v348 = vld [vmem:[%s346 + $0x8] sm:$0xff]
      %s349 = scalar_lea.vmem %s5, 32
      %v350 = vld [vmem:[%s349] sm:$0xff]
      %v351 = vld [vmem:[%s349 + $0x8] sm:$0xff]
      %s352 = scalar_lea.vmem %s5, 48
      %v353 = vld [vmem:[%s352] sm:$0xff]
      %v354 = vld [vmem:[%s352 + $0x8] sm:$0xff]
      %s355 = scalar_lea.vmem %s5, 64
      %v356 = vld [vmem:[%s355] sm:$0xff]
      %v357 = vld [vmem:[%s355 + $0x8] sm:$0xff]
      %s358 = scalar_lea.vmem %s5, 80
      %v359 = vld [vmem:[%s358] sm:$0xff]
      %v360 = vld [vmem:[%s358 + $0x8] sm:$0xff]
      %s361 = scalar_lea.vmem %s5, 96
      %v362 = vld [vmem:[%s361] sm:$0xff]
      %v363 = vld [vmem:[%s361 + $0x8] sm:$0xff]
      %s364 = scalar_lea.vmem %s5, 112
      %v365 = vld [vmem:[%s364] sm:$0xff]
      %v366 = vld [vmem:[%s364 + $0x8] sm:$0xff]
      %s367 = scalar_lea.vmem %s5, 128
      %v368 = vld [vmem:[%s367] sm:$0xff]
      %v369 = vld [vmem:[%s367 + $0x8] sm:$0xff]
      %v370 = vld [vmem:[%s2] sm:$0xff]
      %v371 = vld [vmem:[%s2 + $0x8] sm:$0xff]
      %v372 = vld [vmem:[%s4] sm:$0xff]
      %v373 = vld [vmem:[%s4 + $0x8] sm:$0xff]
      %v374 = vld [vmem:[%s6] sm:$0xff]
      %v375 = vld [vmem:[%s6 + $0x8] sm:$0xff]
      %v376 = vld [vmem:[%s273] sm:$0xff]
      %v377 = vld [vmem:[%s273 + $0x8] sm:$0xff]
      %s378 = scalar_lea.vmem %s273, 16
      %v379 = vld [vmem:[%s378] sm:$0xff]
      %v380 = vld [vmem:[%s378 + $0x8] sm:$0xff]
      %vm381 = vcmask 130048
      %v383 = vsel %vm381, %v295, 0
      %v386 = vsel %vm381, %v296, 0
      %388 = vmatpush.msra.mxu0 0.0
      %389 = vmatpush.msra.mxu0 0.0
      %390 = vmatpush.msra.mxu0 0.0
      %391 = vmatpush.msra.mxu0 0.0
      %392 = vmatpush.msra.mxu0 0.0
      %393 = vmatpush.msra.mxu0 0.0
      %394 = vmatpush.msra.mxu0 0.0
      %395 = vmatpush.msra.mxu0 0.0
      %396 = vmatpush.msra.mxu0 0.0
      %397 = vmatpush.msra.mxu0 0.0
      %398 = vmatpush.msra.mxu0 0.0
      %399 = vmatpush.msra.mxu0 0.0
      %400 = vmatpush.msra.mxu0 0.0
      %401 = vmatpush.msra.mxu0 0.0
      %402 = vmatpush.msra.mxu0 %v380
      %403 = vmatpush.msra.mxu0 %v379
      %404 = vmatmul.f32.gmra.mxu0 %v383
      %v405 = vpop.f32.mrf.mxu0
      %v406 = vadd.f32 0.0, %v405
      %407 = vmatmul.f32.gmra.mxu0 %v386
      %v408 = vpop.f32.mrf.mxu0
      %v409 = vadd.f32 0.0, %v408
      %410 = vdwg.mxu0
      %v412 = vsel %vm381, %v292, 0
      %v415 = vsel %vm381, %v293, 0
      %417 = vmatpush.msra.mxu0 0.0
      %418 = vmatpush.msra.mxu0 0.0
      %419 = vmatpush.msra.mxu0 0.0
      %420 = vmatpush.msra.mxu0 0.0
      %421 = vmatpush.msra.mxu0 0.0
      %422 = vmatpush.msra.mxu0 0.0
      %423 = vmatpush.msra.mxu0 0.0
      %424 = vmatpush.msra.mxu0 0.0
      %425 = vmatpush.msra.mxu0 0.0
      %426 = vmatpush.msra.mxu0 0.0
      %427 = vmatpush.msra.mxu0 0.0
      %428 = vmatpush.msra.mxu0 0.0
      %429 = vmatpush.msra.mxu0 0.0
      %430 = vmatpush.msra.mxu0 0.0
      %431 = vmatpush.msra.mxu0 %v377
      %432 = vmatpush.msra.mxu0 %v376
      %433 = vmatmul.f32.gmra.mxu0 %v412
      %v434 = vpop.f32.mrf.mxu0
      %v435 = vadd.f32 %v406, %v434
      %436 = vmatmul.f32.gmra.mxu0 %v415
      %v437 = vpop.f32.mrf.mxu0
      %v438 = vadd.f32 %v409, %v437
      %439 = vdwg.mxu0
      %442 = vrot.lane.b32.xlu0 %v376, 127
      %v443 = vpop.permute.xlu0 %442
      %444 = vrot.lane.b32.xlu0 %v377, 127
      %v445 = vpop.permute.xlu0 %444
      %v449 = vsel %vm381, %v298, 0
      %v452 = vsel %vm381, %v299, 0
      %454 = vmatpush.msra.mxu0 0.0
      %455 = vmatpush.msra.mxu0 0.0
      %456 = vmatpush.msra.mxu0 0.0
      %457 = vmatpush.msra.mxu0 0.0
      %458 = vmatpush.msra.mxu0 0.0
      %459 = vmatpush.msra.mxu0 0.0
      %460 = vmatpush.msra.mxu0 0.0
      %461 = vmatpush.msra.mxu0 0.0
      %462 = vmatpush.msra.mxu0 0.0
      %463 = vmatpush.msra.mxu0 0.0
      %464 = vmatpush.msra.mxu0 0.0
      %465 = vmatpush.msra.mxu0 0.0
      %466 = vmatpush.msra.mxu0 0.0
      %467 = vmatpush.msra.mxu0 0.0
      %468 = vmatpush.msra.mxu0 %v445
      %469 = vmatpush.msra.mxu0 %v443
      %470 = vmatmul.f32.gmra.mxu0 %v449
      %v471 = vpop.f32.mrf.mxu0
      %v472 = vadd.f32 0.0, %v471
      %473 = vmatmul.f32.gmra.mxu0 %v452
      %v474 = vpop.f32.mrf.mxu0
      %v475 = vadd.f32 0.0, %v474
      %476 = vdwg.mxu0
      %v477 = vadd.f32 %v435, %v472
      %v478 = vadd.f32 %v438, %v475
      %s479 = scalar_lea.vmem %s273, 32
      %v480 = vld [vmem:[%s479] sm:$0xff]
      %v481 = vld [vmem:[%s479 + $0x8] sm:$0xff]
      %v483 = vsel %vm381, %v301, 0
      %v486 = vsel %vm381, %v302, 0
      %488 = vmatpush.msra.mxu0 0.0
      %489 = vmatpush.msra.mxu0 0.0
      %490 = vmatpush.msra.mxu0 0.0
      %491 = vmatpush.msra.mxu0 0.0
      %492 = vmatpush.msra.mxu0 0.0
      %493 = vmatpush.msra.mxu0 0.0
      %494 = vmatpush.msra.mxu0 0.0
      %495 = vmatpush.msra.mxu0 0.0
      %496 = vmatpush.msra.mxu0 0.0
      %497 = vmatpush.msra.mxu0 0.0
      %498 = vmatpush.msra.mxu0 0.0
      %499 = vmatpush.msra.mxu0 0.0
      %500 = vmatpush.msra.mxu0 0.0
      %501 = vmatpush.msra.mxu0 0.0
      %502 = vmatpush.msra.mxu0 %v481
      %503 = vmatpush.msra.mxu0 %v480
      %504 = vmatmul.f32.gmra.mxu0 %v483
      %v505 = vpop.f32.mrf.mxu0
      %v506 = vadd.f32 0.0, %v505
      %507 = vmatmul.f32.gmra.mxu0 %v486
      %v508 = vpop.f32.mrf.mxu0
      %v509 = vadd.f32 0.0, %v508
      %510 = vdwg.mxu0
      %v511 = vadd.f32 %v477, %v506
      %v512 = vadd.f32 %v478, %v509
      %s513 = scalar_lea.vmem %s273, 48
      %v514 = vld [vmem:[%s513] sm:$0xff]
      %v515 = vld [vmem:[%s513 + $0x8] sm:$0xff]
      %v517 = vsel %vm381, %v304, 0
      %v520 = vsel %vm381, %v305, 0
      %522 = vmatpush.msra.mxu0 0.0
      %523 = vmatpush.msra.mxu0 0.0
      %524 = vmatpush.msra.mxu0 0.0
      %525 = vmatpush.msra.mxu0 0.0
      %526 = vmatpush.msra.mxu0 0.0
      %527 = vmatpush.msra.mxu0 0.0
      %528 = vmatpush.msra.mxu0 0.0
      %529 = vmatpush.msra.mxu0 0.0
      %530 = vmatpush.msra.mxu0 0.0
      %531 = vmatpush.msra.mxu0 0.0
      %532 = vmatpush.msra.mxu0 0.0
      %533 = vmatpush.msra.mxu0 0.0
      %534 = vmatpush.msra.mxu0 0.0
      %535 = vmatpush.msra.mxu0 0.0
      %536 = vmatpush.msra.mxu0 %v515
      %537 = vmatpush.msra.mxu0 %v514
      %538 = vmatmul.f32.gmra.mxu0 %v517
      %v539 = vpop.f32.mrf.mxu0
      %v540 = vadd.f32 0.0, %v539
      %541 = vmatmul.f32.gmra.mxu0 %v520
      %v542 = vpop.f32.mrf.mxu0
      %v543 = vadd.f32 0.0, %v542
      %544 = vdwg.mxu0
      %v545 = vadd.f32 %v511, %v540
      %v546 = vadd.f32 %v512, %v543
      %549 = vrot.lane.b32.xlu0 %v480, 127
      %v550 = vpop.permute.xlu0 %549
      %551 = vrot.lane.b32.xlu0 %v481, 127
      %v552 = vpop.permute.xlu0 %551
      %v556 = vsel %vm381, %v307, 0
      %v559 = vsel %vm381, %v308, 0
      %561 = vmatpush.msra.mxu0 0.0
      %562 = vmatpush.msra.mxu0 0.0
      %563 = vmatpush.msra.mxu0 0.0
      %564 = vmatpush.msra.mxu0 0.0
      %565 = vmatpush.msra.mxu0 0.0
      %566 = vmatpush.msra.mxu0 0.0
      %567 = vmatpush.msra.mxu0 0.0
      %568 = vmatpush.msra.mxu0 0.0
      %569 = vmatpush.msra.mxu0 0.0
      %570 = vmatpush.msra.mxu0 0.0
      %571 = vmatpush.msra.mxu0 0.0
      %572 = vmatpush.msra.mxu0 0.0
      %573 = vmatpush.msra.mxu0 0.0
      %574 = vmatpush.msra.mxu0 0.0
      %575 = vmatpush.msra.mxu0 %v552
      %576 = vmatpush.msra.mxu0 %v550
      %577 = vmatmul.f32.gmra.mxu0 %v556
      %v578 = vpop.f32.mrf.mxu0
      %v579 = vadd.f32 0.0, %v578
      %580 = vmatmul.f32.gmra.mxu0 %v559
      %v581 = vpop.f32.mrf.mxu0
      %v582 = vadd.f32 0.0, %v581
      %583 = vdwg.mxu0
      %v584 = vadd.f32 %v545, %v579
      %v585 = vadd.f32 %v546, %v582
      %s586 = scalar_lea.vmem %s273, 64
      %v587 = vld [vmem:[%s586] sm:$0xff]
      %v588 = vld [vmem:[%s586 + $0x8] sm:$0xff]
      %v590 = vsel %vm381, %v310, 0
      %v593 = vsel %vm381, %v311, 0
      %595 = vmatpush.msra.mxu0 0.0
      %596 = vmatpush.msra.mxu0 0.0
      %597 = vmatpush.msra.mxu0 0.0
      %598 = vmatpush.msra.mxu0 0.0
      %599 = vmatpush.msra.mxu0 0.0
      %600 = vmatpush.msra.mxu0 0.0
      %601 = vmatpush.msra.mxu0 0.0
      %602 = vmatpush.msra.mxu0 0.0
      %603 = vmatpush.msra.mxu0 0.0
      %604 = vmatpush.msra.mxu0 0.0
      %605 = vmatpush.msra.mxu0 0.0
      %606 = vmatpush.msra.mxu0 0.0
      %607 = vmatpush.msra.mxu0 0.0
      %608 = vmatpush.msra.mxu0 0.0
      %609 = vmatpush.msra.mxu0 %v588
      %610 = vmatpush.msra.mxu0 %v587
      %611 = vmatmul.f32.gmra.mxu0 %v590
      %v612 = vpop.f32.mrf.mxu0
      %v613 = vadd.f32 0.0, %v612
      %614 = vmatmul.f32.gmra.mxu0 %v593
      %v615 = vpop.f32.mrf.mxu0
      %v616 = vadd.f32 0.0, %v615
      %617 = vdwg.mxu0
      %v618 = vadd.f32 %v584, %v613
      %v619 = vadd.f32 %v585, %v616
      %s620 = scalar_lea.vmem %s273, 80
      %v621 = vld [vmem:[%s620] sm:$0xff]
      %v622 = vld [vmem:[%s620 + $0x8] sm:$0xff]
      %v624 = vsel %vm381, %v313, 0
      %v627 = vsel %vm381, %v314, 0
      %629 = vmatpush.msra.mxu0 0.0
      %630 = vmatpush.msra.mxu0 0.0
      %631 = vmatpush.msra.mxu0 0.0
      %632 = vmatpush.msra.mxu0 0.0
      %633 = vmatpush.msra.mxu0 0.0
      %634 = vmatpush.msra.mxu0 0.0
      %635 = vmatpush.msra.mxu0 0.0
      %636 = vmatpush.msra.mxu0 0.0
      %637 = vmatpush.msra.mxu0 0.0
      %638 = vmatpush.msra.mxu0 0.0
      %639 = vmatpush.msra.mxu0 0.0
      %640 = vmatpush.msra.mxu0 0.0
      %641 = vmatpush.msra.mxu0 0.0
      %642 = vmatpush.msra.mxu0 0.0
      %643 = vmatpush.msra.mxu0 %v622
      %644 = vmatpush.msra.mxu0 %v621
      %645 = vmatmul.f32.gmra.mxu0 %v624
      %v646 = vpop.f32.mrf.mxu0
      %v647 = vadd.f32 0.0, %v646
      %648 = vmatmul.f32.gmra.mxu0 %v627
      %v649 = vpop.f32.mrf.mxu0
      %v650 = vadd.f32 0.0, %v649
      %651 = vdwg.mxu0
      %v652 = vadd.f32 %v618, %v647
      %v653 = vadd.f32 %v619, %v650
      %656 = vrot.lane.b32.xlu0 %v587, 127
      %v657 = vpop.permute.xlu0 %656
      %658 = vrot.lane.b32.xlu0 %v588, 127
      %v659 = vpop.permute.xlu0 %658
      %v663 = vsel %vm381, %v316, 0
      %v666 = vsel %vm381, %v317, 0
      %668 = vmatpush.msra.mxu0 0.0
      %669 = vmatpush.msra.mxu0 0.0
      %670 = vmatpush.msra.mxu0 0.0
      %671 = vmatpush.msra.mxu0 0.0
      %672 = vmatpush.msra.mxu0 0.0
      %673 = vmatpush.msra.mxu0 0.0
      %674 = vmatpush.msra.mxu0 0.0
      %675 = vmatpush.msra.mxu0 0.0
      %676 = vmatpush.msra.mxu0 0.0
      %677 = vmatpush.msra.mxu0 0.0
      %678 = vmatpush.msra.mxu0 0.0
      %679 = vmatpush.msra.mxu0 0.0
      %680 = vmatpush.msra.mxu0 0.0
      %681 = vmatpush.msra.mxu0 0.0
      %682 = vmatpush.msra.mxu0 %v659
      %683 = vmatpush.msra.mxu0 %v657
      %684 = vmatmul.f32.gmra.mxu0 %v663
      %v685 = vpop.f32.mrf.mxu0
      %v686 = vadd.f32 0.0, %v685
      %687 = vmatmul.f32.gmra.mxu0 %v666
      %v688 = vpop.f32.mrf.mxu0
      %v689 = vadd.f32 0.0, %v688
      %690 = vdwg.mxu0
      %v691 = vadd.f32 %v652, %v686
      %v692 = vadd.f32 %v653, %v689
      %v693 = vadd.f32 %v691, %v370
      %v694 = vadd.f32 %v692, %v371
      %697 = vrot.lane.b32.xlu0 %v693, 1
      %v698 = vpop.permute.xlu0 %697
      %699 = vrot.lane.b32.xlu0 %v694, 1
      %v700 = vpop.permute.xlu0 %699
      %s703 = scalar_lea.vmem [#allocation2], 16
      %vm704 = vcmask 15368
      %705 = vst.msk [vmem:[%s703] sm:$0xff] %vm704, %v698
      %706 = vst.msk [vmem:[%s703 + $0x8] sm:$0xff] %vm704, %v700
      %v707 = vld [vmem:[#allocation2] sm:$0xff]
      %v708 = vld [vmem:[#allocation2 + $0x8] sm:$0xff]
      %711 = vrot.lane.b32.xlu0 %v707, 127
      %v712 = vpop.permute.xlu0 %711
      %713 = vrot.lane.b32.xlu0 %v708, 127
      %v714 = vpop.permute.xlu0 %713
      %v718 = vsel %vm381, %v321, 0
      %v721 = vsel %vm381, %v322, 0
      %723 = vmatpush.msra.mxu0 0.0
      %724 = vmatpush.msra.mxu0 0.0
      %725 = vmatpush.msra.mxu0 0.0
      %726 = vmatpush.msra.mxu0 0.0
      %727 = vmatpush.msra.mxu0 0.0
      %728 = vmatpush.msra.mxu0 0.0
      %729 = vmatpush.msra.mxu0 0.0
      %730 = vmatpush.msra.mxu0 0.0
      %731 = vmatpush.msra.mxu0 0.0
      %732 = vmatpush.msra.mxu0 0.0
      %733 = vmatpush.msra.mxu0 0.0
      %734 = vmatpush.msra.mxu0 0.0
      %735 = vmatpush.msra.mxu0 0.0
      %736 = vmatpush.msra.mxu0 0.0
      %737 = vmatpush.msra.mxu0 %v714
      %738 = vmatpush.msra.mxu0 %v712
      %739 = vmatmul.f32.gmra.mxu0 %v718
      %v740 = vpop.f32.mrf.mxu0
      %v741 = vadd.f32 0.0, %v740
      %742 = vmatmul.f32.gmra.mxu0 %v721
      %v743 = vpop.f32.mrf.mxu0
      %v744 = vadd.f32 0.0, %v743
      %745 = vdwg.mxu0
      %v747 = vsel %vm381, %v318, 0
      %v750 = vsel %vm381, %v319, 0
      %752 = vmatpush.msra.mxu0 0.0
      %753 = vmatpush.msra.mxu0 0.0
      %754 = vmatpush.msra.mxu0 0.0
      %755 = vmatpush.msra.mxu0 0.0
      %756 = vmatpush.msra.mxu0 0.0
      %757 = vmatpush.msra.mxu0 0.0
      %758 = vmatpush.msra.mxu0 0.0
      %759 = vmatpush.msra.mxu0 0.0
      %760 = vmatpush.msra.mxu0 0.0
      %761 = vmatpush.msra.mxu0 0.0
      %762 = vmatpush.msra.mxu0 0.0
      %763 = vmatpush.msra.mxu0 0.0
      %764 = vmatpush.msra.mxu0 0.0
      %765 = vmatpush.msra.mxu0 0.0
      %766 = vmatpush.msra.mxu0 %v708
      %767 = vmatpush.msra.mxu0 %v707
      %768 = vmatmul.f32.gmra.mxu0 %v747
      %v769 = vpop.f32.mrf.mxu0
      %v770 = vadd.f32 %v741, %v769
      %771 = vmatmul.f32.gmra.mxu0 %v750
      %v772 = vpop.f32.mrf.mxu0
      %v773 = vadd.f32 %v744, %v772
      %774 = vdwg.mxu0
      %775 = vrot.lane.b32.xlu0 %v707, 126
      %v776 = vpop.permute.xlu0 %775
      %777 = vrot.lane.b32.xlu0 %v708, 126
      %v778 = vpop.permute.xlu0 %777
      %v782 = vsel %vm381, %v324, 0
      %v785 = vsel %vm381, %v325, 0
      %787 = vmatpush.msra.mxu0 0.0
      %788 = vmatpush.msra.mxu0 0.0
      %789 = vmatpush.msra.mxu0 0.0
      %790 = vmatpush.msra.mxu0 0.0
      %791 = vmatpush.msra.mxu0 0.0
      %792 = vmatpush.msra.mxu0 0.0
      %793 = vmatpush.msra.mxu0 0.0
      %794 = vmatpush.msra.mxu0 0.0
      %795 = vmatpush.msra.mxu0 0.0
      %796 = vmatpush.msra.mxu0 0.0
      %797 = vmatpush.msra.mxu0 0.0
      %798 = vmatpush.msra.mxu0 0.0
      %799 = vmatpush.msra.mxu0 0.0
      %800 = vmatpush.msra.mxu0 0.0
      %801 = vmatpush.msra.mxu0 %v778
      %802 = vmatpush.msra.mxu0 %v776
      %803 = vmatmul.f32.gmra.mxu0 %v782
      %v804 = vpop.f32.mrf.mxu0
      %v805 = vadd.f32 0.0, %v804
      %806 = vmatmul.f32.gmra.mxu0 %v785
      %v807 = vpop.f32.mrf.mxu0
      %v808 = vadd.f32 0.0, %v807
      %809 = vdwg.mxu0
      %v810 = vadd.f32 %v770, %v805
      %v811 = vadd.f32 %v773, %v808
      %v812 = vld [vmem:[%s703] sm:$0xff]
      %v813 = vld [vmem:[%s703 + $0x8] sm:$0xff]
      %v815 = vsel %vm381, %v327, 0
      %v818 = vsel %vm381, %v328, 0
      %820 = vmatpush.msra.mxu0 0.0
      %821 = vmatpush.msra.mxu0 0.0
      %822 = vmatpush.msra.mxu0 0.0
      %823 = vmatpush.msra.mxu0 0.0
      %824 = vmatpush.msra.mxu0 0.0
      %825 = vmatpush.msra.mxu0 0.0
      %826 = vmatpush.msra.mxu0 0.0
      %827 = vmatpush.msra.mxu0 0.0
      %828 = vmatpush.msra.mxu0 0.0
      %829 = vmatpush.msra.mxu0 0.0
      %830 = vmatpush.msra.mxu0 0.0
      %831 = vmatpush.msra.mxu0 0.0
      %832 = vmatpush.msra.mxu0 0.0
      %833 = vmatpush.msra.mxu0 0.0
      %834 = vmatpush.msra.mxu0 %v813
      %835 = vmatpush.msra.mxu0 %v812
      %836 = vmatmul.f32.gmra.mxu0 %v815
      %v837 = vpop.f32.mrf.mxu0
      %v838 = vadd.f32 0.0, %v837
      %839 = vmatmul.f32.gmra.mxu0 %v818
      %v840 = vpop.f32.mrf.mxu0
      %v841 = vadd.f32 0.0, %v840
      %842 = vdwg.mxu0
      %v843 = vadd.f32 %v810, %v838
      %v844 = vadd.f32 %v811, %v841
      %847 = vrot.lane.b32.xlu0 %v812, 127
      %v848 = vpop.permute.xlu0 %847
      %849 = vrot.lane.b32.xlu0 %v813, 127
      %v850 = vpop.permute.xlu0 %849
      %v854 = vsel %vm381, %v330, 0
      %v857 = vsel %vm381, %v331, 0
      %859 = vmatpush.msra.mxu0 0.0
      %860 = vmatpush.msra.mxu0 0.0
      %861 = vmatpush.msra.mxu0 0.0
      %862 = vmatpush.msra.mxu0 0.0
      %863 = vmatpush.msra.mxu0 0.0
      %864 = vmatpush.msra.mxu0 0.0
      %865 = vmatpush.msra.mxu0 0.0
      %866 = vmatpush.msra.mxu0 0.0
      %867 = vmatpush.msra.mxu0 0.0
      %868 = vmatpush.msra.mxu0 0.0
      %869 = vmatpush.msra.mxu0 0.0
      %870 = vmatpush.msra.mxu0 0.0
      %871 = vmatpush.msra.mxu0 0.0
      %872 = vmatpush.msra.mxu0 0.0
      %873 = vmatpush.msra.mxu0 %v850
      %874 = vmatpush.msra.mxu0 %v848
      %875 = vmatmul.f32.gmra.mxu0 %v854
      %v876 = vpop.f32.mrf.mxu0
      %v877 = vadd.f32 0.0, %v876
      %878 = vmatmul.f32.gmra.mxu0 %v857
      %v879 = vpop.f32.mrf.mxu0
      %v880 = vadd.f32 0.0, %v879
      %881 = vdwg.mxu0
      %v882 = vadd.f32 %v843, %v877
      %v883 = vadd.f32 %v844, %v880
      %884 = vrot.lane.b32.xlu0 %v812, 126
      %v885 = vpop.permute.xlu0 %884
      %886 = vrot.lane.b32.xlu0 %v813, 126
      %v887 = vpop.permute.xlu0 %886
      %v891 = vsel %vm381, %v333, 0
      %v894 = vsel %vm381, %v334, 0
      %896 = vmatpush.msra.mxu0 0.0
      %897 = vmatpush.msra.mxu0 0.0
      %898 = vmatpush.msra.mxu0 0.0
      %899 = vmatpush.msra.mxu0 0.0
      %900 = vmatpush.msra.mxu0 0.0
      %901 = vmatpush.msra.mxu0 0.0
      %902 = vmatpush.msra.mxu0 0.0
      %903 = vmatpush.msra.mxu0 0.0
      %904 = vmatpush.msra.mxu0 0.0
      %905 = vmatpush.msra.mxu0 0.0
      %906 = vmatpush.msra.mxu0 0.0
      %907 = vmatpush.msra.mxu0 0.0
      %908 = vmatpush.msra.mxu0 0.0
      %909 = vmatpush.msra.mxu0 0.0
      %910 = vmatpush.msra.mxu0 %v887
      %911 = vmatpush.msra.mxu0 %v885
      %912 = vmatmul.f32.gmra.mxu0 %v891
      %v913 = vpop.f32.mrf.mxu0
      %v914 = vadd.f32 0.0, %v913
      %915 = vmatmul.f32.gmra.mxu0 %v894
      %v916 = vpop.f32.mrf.mxu0
      %v917 = vadd.f32 0.0, %v916
      %918 = vdwg.mxu0
      %v919 = vadd.f32 %v882, %v914
      %v920 = vadd.f32 %v883, %v917
      %s921 = scalar_lea.vmem [#allocation2], 32
      %v922 = vld [vmem:[%s921] sm:$0xff]
      %v923 = vld [vmem:[%s921 + $0x8] sm:$0xff]
      %v925 = vsel %vm381, %v336, 0
      %v928 = vsel %vm381, %v337, 0
      %930 = vmatpush.msra.mxu0 0.0
      %931 = vmatpush.msra.mxu0 0.0
      %932 = vmatpush.msra.mxu0 0.0
      %933 = vmatpush.msra.mxu0 0.0
      %934 = vmatpush.msra.mxu0 0.0
      %935 = vmatpush.msra.mxu0 0.0
      %936 = vmatpush.msra.mxu0 0.0
      %937 = vmatpush.msra.mxu0 0.0
      %938 = vmatpush.msra.mxu0 0.0
      %939 = vmatpush.msra.mxu0 0.0
      %940 = vmatpush.msra.mxu0 0.0
      %941 = vmatpush.msra.mxu0 0.0
      %942 = vmatpush.msra.mxu0 0.0
      %943 = vmatpush.msra.mxu0 0.0
      %944 = vmatpush.msra.mxu0 %v923
      %945 = vmatpush.msra.mxu0 %v922
      %946 = vmatmul.f32.gmra.mxu0 %v925
      %v947 = vpop.f32.mrf.mxu0
      %v948 = vadd.f32 0.0, %v947
      %949 = vmatmul.f32.gmra.mxu0 %v928
      %v950 = vpop.f32.mrf.mxu0
      %v951 = vadd.f32 0.0, %v950
      %952 = vdwg.mxu0
      %v953 = vadd.f32 %v919, %v948
      %v954 = vadd.f32 %v920, %v951
      %957 = vrot.lane.b32.xlu0 %v922, 127
      %v958 = vpop.permute.xlu0 %957
      %959 = vrot.lane.b32.xlu0 %v923, 127
      %v960 = vpop.permute.xlu0 %959
      %v964 = vsel %vm381, %v339, 0
      %v967 = vsel %vm381, %v340, 0
      %969 = vmatpush.msra.mxu0 0.0
      %970 = vmatpush.msra.mxu0 0.0
      %971 = vmatpush.msra.mxu0 0.0
      %972 = vmatpush.msra.mxu0 0.0
      %973 = vmatpush.msra.mxu0 0.0
      %974 = vmatpush.msra.mxu0 0.0
      %975 = vmatpush.msra.mxu0 0.0
      %976 = vmatpush.msra.mxu0 0.0
      %977 = vmatpush.msra.mxu0 0.0
      %978 = vmatpush.msra.mxu0 0.0
      %979 = vmatpush.msra.mxu0 0.0
      %980 = vmatpush.msra.mxu0 0.0
      %981 = vmatpush.msra.mxu0 0.0
      %982 = vmatpush.msra.mxu0 0.0
      %983 = vmatpush.msra.mxu0 %v960
      %984 = vmatpush.msra.mxu0 %v958
      %985 = vmatmul.f32.gmra.mxu0 %v964
      %v986 = vpop.f32.mrf.mxu0
      %v987 = vadd.f32 0.0, %v986
      %988 = vmatmul.f32.gmra.mxu0 %v967
      %v989 = vpop.f32.mrf.mxu0
      %v990 = vadd.f32 0.0, %v989
      %991 = vdwg.mxu0
      %v992 = vadd.f32 %v953, %v987
      %v993 = vadd.f32 %v954, %v990
      %994 = vrot.lane.b32.xlu0 %v922, 126
      %v995 = vpop.permute.xlu0 %994
      %996 = vrot.lane.b32.xlu0 %v923, 126
      %v997 = vpop.permute.xlu0 %996
      %v1001 = vsel %vm381, %v342, 0
      %v1004 = vsel %vm381, %v343, 0
      %1006 = vmatpush.msra.mxu0 0.0
      %1007 = vmatpush.msra.mxu0 0.0
      %1008 = vmatpush.msra.mxu0 0.0
      %1009 = vmatpush.msra.mxu0 0.0
      %1010 = vmatpush.msra.mxu0 0.0
      %1011 = vmatpush.msra.mxu0 0.0
      %1012 = vmatpush.msra.mxu0 0.0
      %1013 = vmatpush.msra.mxu0 0.0
      %1014 = vmatpush.msra.mxu0 0.0
      %1015 = vmatpush.msra.mxu0 0.0
      %1016 = vmatpush.msra.mxu0 0.0
      %1017 = vmatpush.msra.mxu0 0.0
      %1018 = vmatpush.msra.mxu0 0.0
      %1019 = vmatpush.msra.mxu0 0.0
      %1020 = vmatpush.msra.mxu0 %v997
      %1021 = vmatpush.msra.mxu0 %v995
      %1022 = vmatmul.f32.gmra.mxu0 %v1001
      %v1023 = vpop.f32.mrf.mxu0
      %v1024 = vadd.f32 0.0, %v1023
      %1025 = vmatmul.f32.gmra.mxu0 %v1004
      %v1026 = vpop.f32.mrf.mxu0
      %v1027 = vadd.f32 0.0, %v1026
      %1028 = vdwg.mxu0
      %v1029 = vadd.f32 %v992, %v1024
      %v1030 = vadd.f32 %v993, %v1027
      %v1031 = vadd.f32 %v1029, %v372
      %v1032 = vadd.f32 %v1030, %v373
      %1035 = vrot.lane.b32.xlu0 %v1031, 1
      %v1036 = vpop.permute.xlu0 %1035
      %1037 = vrot.lane.b32.xlu0 %v1032, 1
      %v1038 = vpop.permute.xlu0 %1037
      %s1041 = scalar_lea.vmem [#allocation3], 16
      %1042 = vst.msk [vmem:[%s1041] sm:$0xff] %vm704, %v1036
      %1043 = vst.msk [vmem:[%s1041 + $0x8] sm:$0xff] %vm704, %v1038
      %v1044 = vld [vmem:[#allocation3] sm:$0xff]
      %v1045 = vld [vmem:[#allocation3 + $0x8] sm:$0xff]
      %1048 = vrot.lane.b32.xlu0 %v1044, 127
      %v1049 = vpop.permute.xlu0 %1048
      %1050 = vrot.lane.b32.xlu0 %v1045, 127
      %v1051 = vpop.permute.xlu0 %1050
      %v1055 = vsel %vm381, %v347, 0
      %v1058 = vsel %vm381, %v348, 0
      %1060 = vmatpush.msra.mxu0 0.0
      %1061 = vmatpush.msra.mxu0 0.0
      %1062 = vmatpush.msra.mxu0 0.0
      %1063 = vmatpush.msra.mxu0 0.0
      %1064 = vmatpush.msra.mxu0 0.0
      %1065 = vmatpush.msra.mxu0 0.0
      %1066 = vmatpush.msra.mxu0 0.0
      %1067 = vmatpush.msra.mxu0 0.0
      %1068 = vmatpush.msra.mxu0 0.0
      %1069 = vmatpush.msra.mxu0 0.0
      %1070 = vmatpush.msra.mxu0 0.0
      %1071 = vmatpush.msra.mxu0 0.0
      %1072 = vmatpush.msra.mxu0 0.0
      %1073 = vmatpush.msra.mxu0 0.0
      %1074 = vmatpush.msra.mxu0 %v1051
      %1075 = vmatpush.msra.mxu0 %v1049
      %1076 = vmatmul.f32.gmra.mxu0 %v1055
      %v1077 = vpop.f32.mrf.mxu0
      %v1078 = vadd.f32 0.0, %v1077
      %1079 = vmatmul.f32.gmra.mxu0 %v1058
      %v1080 = vpop.f32.mrf.mxu0
      %v1081 = vadd.f32 0.0, %v1080
      %1082 = vdwg.mxu0
      %v1084 = vsel %vm381, %v344, 0
      %v1087 = vsel %vm381, %v345, 0
      %1089 = vmatpush.msra.mxu0 0.0
      %1090 = vmatpush.msra.mxu0 0.0
      %1091 = vmatpush.msra.mxu0 0.0
      %1092 = vmatpush.msra.mxu0 0.0
      %1093 = vmatpush.msra.mxu0 0.0
      %1094 = vmatpush.msra.mxu0 0.0
      %1095 = vmatpush.msra.mxu0 0.0
      %1096 = vmatpush.msra.mxu0 0.0
      %1097 = vmatpush.msra.mxu0 0.0
      %1098 = vmatpush.msra.mxu0 0.0
      %1099 = vmatpush.msra.mxu0 0.0
      %1100 = vmatpush.msra.mxu0 0.0
      %1101 = vmatpush.msra.mxu0 0.0
      %1102 = vmatpush.msra.mxu0 0.0
      %1103 = vmatpush.msra.mxu0 %v1045
      %1104 = vmatpush.msra.mxu0 %v1044
      %1105 = vmatmul.f32.gmra.mxu0 %v1084
      %v1106 = vpop.f32.mrf.mxu0
      %v1107 = vadd.f32 %v1078, %v1106
      %1108 = vmatmul.f32.gmra.mxu0 %v1087
      %v1109 = vpop.f32.mrf.mxu0
      %v1110 = vadd.f32 %v1081, %v1109
      %1111 = vdwg.mxu0
      %1112 = vrot.lane.b32.xlu0 %v1044, 126
      %v1113 = vpop.permute.xlu0 %1112
      %1114 = vrot.lane.b32.xlu0 %v1045, 126
      %v1115 = vpop.permute.xlu0 %1114
      %v1119 = vsel %vm381, %v350, 0
      %v1122 = vsel %vm381, %v351, 0
      %1124 = vmatpush.msra.mxu0 0.0
      %1125 = vmatpush.msra.mxu0 0.0
      %1126 = vmatpush.msra.mxu0 0.0
      %1127 = vmatpush.msra.mxu0 0.0
      %1128 = vmatpush.msra.mxu0 0.0
      %1129 = vmatpush.msra.mxu0 0.0
      %1130 = vmatpush.msra.mxu0 0.0
      %1131 = vmatpush.msra.mxu0 0.0
      %1132 = vmatpush.msra.mxu0 0.0
      %1133 = vmatpush.msra.mxu0 0.0
      %1134 = vmatpush.msra.mxu0 0.0
      %1135 = vmatpush.msra.mxu0 0.0
      %1136 = vmatpush.msra.mxu0 0.0
      %1137 = vmatpush.msra.mxu0 0.0
      %1138 = vmatpush.msra.mxu0 %v1115
      %1139 = vmatpush.msra.mxu0 %v1113
      %1140 = vmatmul.f32.gmra.mxu0 %v1119
      %v1141 = vpop.f32.mrf.mxu0
      %v1142 = vadd.f32 0.0, %v1141
      %1143 = vmatmul.f32.gmra.mxu0 %v1122
      %v1144 = vpop.f32.mrf.mxu0
      %v1145 = vadd.f32 0.0, %v1144
      %1146 = vdwg.mxu0
      %v1147 = vadd.f32 %v1107, %v1142
      %v1148 = vadd.f32 %v1110, %v1145
      %v1149 = vld [vmem:[%s1041] sm:$0xff]
      %v1150 = vld [vmem:[%s1041 + $0x8] sm:$0xff]
      %v1152 = vsel %vm381, %v353, 0
      %v1155 = vsel %vm381, %v354, 0
      %1157 = vmatpush.msra.mxu0 0.0
      %1158 = vmatpush.msra.mxu0 0.0
      %1159 = vmatpush.msra.mxu0 0.0
      %1160 = vmatpush.msra.mxu0 0.0
      %1161 = vmatpush.msra.mxu0 0.0
      %1162 = vmatpush.msra.mxu0 0.0
      %1163 = vmatpush.msra.mxu0 0.0
      %1164 = vmatpush.msra.mxu0 0.0
      %1165 = vmatpush.msra.mxu0 0.0
      %1166 = vmatpush.msra.mxu0 0.0
      %1167 = vmatpush.msra.mxu0 0.0
      %1168 = vmatpush.msra.mxu0 0.0
      %1169 = vmatpush.msra.mxu0 0.0
      %1170 = vmatpush.msra.mxu0 0.0
      %1171 = vmatpush.msra.mxu0 %v1150
      %1172 = vmatpush.msra.mxu0 %v1149
      %1173 = vmatmul.f32.gmra.mxu0 %v1152
      %v1174 = vpop.f32.mrf.mxu0
      %v1175 = vadd.f32 0.0, %v1174
      %1176 = vmatmul.f32.gmra.mxu0 %v1155
      %v1177 = vpop.f32.mrf.mxu0
      %v1178 = vadd.f32 0.0, %v1177
      %1179 = vdwg.mxu0
      %v1180 = vadd.f32 %v1147, %v1175
      %v1181 = vadd.f32 %v1148, %v1178
      %1184 = vrot.lane.b32.xlu0 %v1149, 127
      %v1185 = vpop.permute.xlu0 %1184
      %1186 = vrot.lane.b32.xlu0 %v1150, 127
      %v1187 = vpop.permute.xlu0 %1186
      %v1191 = vsel %vm381, %v356, 0
      %v1194 = vsel %vm381, %v357, 0
      %1196 = vmatpush.msra.mxu0 0.0
      %1197 = vmatpush.msra.mxu0 0.0
      %1198 = vmatpush.msra.mxu0 0.0
      %1199 = vmatpush.msra.mxu0 0.0
      %1200 = vmatpush.msra.mxu0 0.0
      %1201 = vmatpush.msra.mxu0 0.0
      %1202 = vmatpush.msra.mxu0 0.0
      %1203 = vmatpush.msra.mxu0 0.0
      %1204 = vmatpush.msra.mxu0 0.0
      %1205 = vmatpush.msra.mxu0 0.0
      %1206 = vmatpush.msra.mxu0 0.0
      %1207 = vmatpush.msra.mxu0 0.0
      %1208 = vmatpush.msra.mxu0 0.0
      %1209 = vmatpush.msra.mxu0 0.0
      %1210 = vmatpush.msra.mxu0 %v1187
      %1211 = vmatpush.msra.mxu0 %v1185
      %1212 = vmatmul.f32.gmra.mxu0 %v1191
      %v1213 = vpop.f32.mrf.mxu0
      %v1214 = vadd.f32 0.0, %v1213
      %1215 = vmatmul.f32.gmra.mxu0 %v1194
      %v1216 = vpop.f32.mrf.mxu0
      %v1217 = vadd.f32 0.0, %v1216
      %1218 = vdwg.mxu0
      %v1219 = vadd.f32 %v1180, %v1214
      %v1220 = vadd.f32 %v1181, %v1217
      %1221 = vrot.lane.b32.xlu0 %v1149, 126
      %v1222 = vpop.permute.xlu0 %1221
      %1223 = vrot.lane.b32.xlu0 %v1150, 126
      %v1224 = vpop.permute.xlu0 %1223
      %v1228 = vsel %vm381, %v359, 0
      %v1231 = vsel %vm381, %v360, 0
      %1233 = vmatpush.msra.mxu0 0.0
      %1234 = vmatpush.msra.mxu0 0.0
      %1235 = vmatpush.msra.mxu0 0.0
      %1236 = vmatpush.msra.mxu0 0.0
      %1237 = vmatpush.msra.mxu0 0.0
      %1238 = vmatpush.msra.mxu0 0.0
      %1239 = vmatpush.msra.mxu0 0.0
      %1240 = vmatpush.msra.mxu0 0.0
      %1241 = vmatpush.msra.mxu0 0.0
      %1242 = vmatpush.msra.mxu0 0.0
      %1243 = vmatpush.msra.mxu0 0.0
      %1244 = vmatpush.msra.mxu0 0.0
      %1245 = vmatpush.msra.mxu0 0.0
      %1246 = vmatpush.msra.mxu0 0.0
      %1247 = vmatpush.msra.mxu0 %v1224
      %1248 = vmatpush.msra.mxu0 %v1222
      %1249 = vmatmul.f32.gmra.mxu0 %v1228
      %v1250 = vpop.f32.mrf.mxu0
      %v1251 = vadd.f32 0.0, %v1250
      %1252 = vmatmul.f32.gmra.mxu0 %v1231
      %v1253 = vpop.f32.mrf.mxu0
      %v1254 = vadd.f32 0.0, %v1253
      %1255 = vdwg.mxu0
      %v1256 = vadd.f32 %v1219, %v1251
      %v1257 = vadd.f32 %v1220, %v1254
      %s1258 = scalar_lea.vmem [#allocation3], 32
      %v1259 = vld [vmem:[%s1258] sm:$0xff]
      %v1260 = vld [vmem:[%s1258 + $0x8] sm:$0xff]
      %v1262 = vsel %vm381, %v362, 0
      %v1265 = vsel %vm381, %v363, 0
      %1267 = vmatpush.msra.mxu0 0.0
      %1268 = vmatpush.msra.mxu0 0.0
      %1269 = vmatpush.msra.mxu0 0.0
      %1270 = vmatpush.msra.mxu0 0.0
      %1271 = vmatpush.msra.mxu0 0.0
      %1272 = vmatpush.msra.mxu0 0.0
      %1273 = vmatpush.msra.mxu0 0.0
      %1274 = vmatpush.msra.mxu0 0.0
      %1275 = vmatpush.msra.mxu0 0.0
      %1276 = vmatpush.msra.mxu0 0.0
      %1277 = vmatpush.msra.mxu0 0.0
      %1278 = vmatpush.msra.mxu0 0.0
      %1279 = vmatpush.msra.mxu0 0.0
      %1280 = vmatpush.msra.mxu0 0.0
      %1281 = vmatpush.msra.mxu0 %v1260
      %1282 = vmatpush.msra.mxu0 %v1259
      %1283 = vmatmul.f32.gmra.mxu0 %v1262
      %v1284 = vpop.f32.mrf.mxu0
      %v1285 = vadd.f32 0.0, %v1284
      %1286 = vmatmul.f32.gmra.mxu0 %v1265
      %v1287 = vpop.f32.mrf.mxu0
      %v1288 = vadd.f32 0.0, %v1287
      %1289 = vdwg.mxu0
      %v1290 = vadd.f32 %v1256, %v1285
      %v1291 = vadd.f32 %v1257, %v1288
      %1294 = vrot.lane.b32.xlu0 %v1259, 127
      %v1295 = vpop.permute.xlu0 %1294
      %1296 = vrot.lane.b32.xlu0 %v1260, 127
      %v1297 = vpop.permute.xlu0 %1296
      %v1301 = vsel %vm381, %v365, 0
      %v1304 = vsel %vm381, %v366, 0
      %1306 = vmatpush.msra.mxu0 0.0
      %1307 = vmatpush.msra.mxu0 0.0
      %1308 = vmatpush.msra.mxu0 0.0
      %1309 = vmatpush.msra.mxu0 0.0
      %1310 = vmatpush.msra.mxu0 0.0
      %1311 = vmatpush.msra.mxu0 0.0
      %1312 = vmatpush.msra.mxu0 0.0
      %1313 = vmatpush.msra.mxu0 0.0
      %1314 = vmatpush.msra.mxu0 0.0
      %1315 = vmatpush.msra.mxu0 0.0
      %1316 = vmatpush.msra.mxu0 0.0
      %1317 = vmatpush.msra.mxu0 0.0
      %1318 = vmatpush.msra.mxu0 0.0
      %1319 = vmatpush.msra.mxu0 0.0
      %1320 = vmatpush.msra.mxu0 %v1297
      %1321 = vmatpush.msra.mxu0 %v1295
      %1322 = vmatmul.f32.gmra.mxu0 %v1301
      %v1323 = vpop.f32.mrf.mxu0
      %v1324 = vadd.f32 0.0, %v1323
      %1325 = vmatmul.f32.gmra.mxu0 %v1304
      %v1326 = vpop.f32.mrf.mxu0
      %v1327 = vadd.f32 0.0, %v1326
      %1328 = vdwg.mxu0
      %v1329 = vadd.f32 %v1290, %v1324
      %v1330 = vadd.f32 %v1291, %v1327
      %1331 = vrot.lane.b32.xlu0 %v1259, 126
      %v1332 = vpop.permute.xlu0 %1331
      %1333 = vrot.lane.b32.xlu0 %v1260, 126
      %v1334 = vpop.permute.xlu0 %1333
      %v1338 = vsel %vm381, %v368, 0
      %v1341 = vsel %vm381, %v369, 0
      %1343 = vmatpush.msra.mxu0 0.0
      %1344 = vmatpush.msra.mxu0 0.0
      %1345 = vmatpush.msra.mxu0 0.0
      %1346 = vmatpush.msra.mxu0 0.0
      %1347 = vmatpush.msra.mxu0 0.0
      %1348 = vmatpush.msra.mxu0 0.0
      %1349 = vmatpush.msra.mxu0 0.0
      %1350 = vmatpush.msra.mxu0 0.0
      %1351 = vmatpush.msra.mxu0 0.0
      %1352 = vmatpush.msra.mxu0 0.0
      %1353 = vmatpush.msra.mxu0 0.0
      %1354 = vmatpush.msra.mxu0 0.0
      %1355 = vmatpush.msra.mxu0 0.0
      %1356 = vmatpush.msra.mxu0 0.0
      %1357 = vmatpush.msra.mxu0 %v1334
      %1358 = vmatpush.msra.mxu0 %v1332
      %1359 = vmatmul.f32.gmra.mxu0 %v1338
      %v1360 = vpop.f32.mrf.mxu0
      %v1361 = vadd.f32 0.0, %v1360
      %1362 = vmatmul.f32.gmra.mxu0 %v1341
      %v1363 = vpop.f32.mrf.mxu0
      %v1364 = vadd.f32 0.0, %v1363
      %1365 = vdwg.mxu0
      %v1366 = vadd.f32 %v1329, %v1361
      %v1367 = vadd.f32 %v1330, %v1364
      %v1368 = vadd.f32 %v1366, %v374
      %v1369 = vadd.f32 %v1367, %v375
      %vm1370 = vcmask 7168
      %1371 = vst.msk [vmem:[%s278] sm:$0xff] %vm1370, %v1368
      %1372 = vst.msk [vmem:[%s278 + $0x8] sm:$0xff] %vm1370, %v1369
      %p1373 = scmp.lt.s32.totalorder %s18, 3
      %s1374 = scalar_select %p1373, %s18, 3
      %s1375 = smul.addr %s1374, 2
      %s1376 = smul.addr %s1375, 8
      %s1377 = scalar_lea.vmem %s7, %s1376
      // Predicated region
      $region49: #{_lambda_.10} parent=47 // pred_check
        %p1378 = pneg %p188
      $region50: #{_lambda_.10} parent=47 // pred_check_branch
        %1380 = sbr.rel (%p1378) target = $region52
      $region51: #{_lambda_.10} parent=47 // pred_region
        _
      $region52: #{_lambda_.10} parent=47 // pred_fallthru
        _
    $region48: #{_lambda_.10} parent=5 // pred_fallthru
      _
    %p1381 = scmp.le.s32.totalorder 2, %s13
    // Predicated region
    $region53: #{_lambda_.10} parent=5 // pred_check
      %p1382 = pneg %p1381
    $region54: #{_lambda_.10} parent=5 // pred_check_branch
      %1384 = sbr.rel (%p1382) target = $region56
    $region55: #{_lambda_.10} parent=5 // pred_region
      %s1385 = ssub.s32 %s13, 2
      // Predicated region
      $region57: #{_lambda_.10} parent=55 // pred_check
        %p1386 = pneg %p194
      $region58: #{_lambda_.10} parent=55 // pred_check_branch
        %1388 = sbr.rel (%p1386) target = $region60
      $region59: #{_lambda_.10} parent=55 // pred_region
        %p1389 = scmp.lt.s32.totalorder %s19, 3
        %s1390 = scalar_select %p1389, %s19, 3
        %s1391 = smul.addr %s1390, 2
        %s1392 = smul.addr %s1391, 8
        %s1393 = scalar_lea.vmem %s7, %s1392
      $region60: #{_lambda_.10} parent=55 // pred_fallthru
        _
    $region56: #{_lambda_.10} parent=5 // pred_fallthru
      _
  $region6: #{_lambda_.10} parent=0 // loop_footer
    %s17 = sadd.s32 1, %s13
  $region7: #{_lambda_.10} parent=0 // loop_footer_branch
    %12 = sbr.rel target = $region3
  $region8: #{_lambda_.10} parent=0 // loop_exit
    _

</llo_original>
